<compile_context>
chip_gen: v7x
topology: tpu7x:2x2x1
jax: 0.10.0
libtpu: 0.0.40
codegen_flags: <defaults>
</compile_context>

<pallas_src>
import functools

import jax
import jax.numpy as jnp
import numpy as np
from jax import lax
from jax.experimental import pallas as pl
from jax.experimental.pallas import tpu as pltpu

WORD_NUM = 15    # T (sequence length)
WORD_LEN = 4     # I (input feature size)
HIDDEN   = 144   # H (LSTM hidden size)
F1_OUT   = 84
F2_OUT   = 2

GATE_PAD = 384   # per-gate lane stride: 288 real (src|dst) + 96 zero pad = 3*128


def dir_lstm_kernel(x_ref, wx_ref, b_ref, wh_ref,
                    fw1_ref, fb1_ref, fw2_ref, fb2_ref,
                    out_ref, *, batch, t_len):
    B, T = batch, t_len
    H2 = wh_ref.shape[0]             # 2*H = 288 (fused src|dst state width)
    G = GATE_PAD                     # 384

    # ---- Prologue: ONE fused input projection for all timesteps, all four
    #      gates, both chains (bf16 operands, f32 accumulate), bias folded in
    #      with a single broadcast add.
    gx = jnp.dot(x_ref[...], wx_ref[...],
                 preferred_element_type=jnp.float32) + b_ref[...]   # [T*B, 4G] f32

    wh = wh_ref[...]                 # [2H, 4G] bf16, loop-invariant (hoisted)

    def sigmoid(v):                  # 1 EUP push instead of exp + reciprocal (2)
        return 0.5 * jnp.tanh(0.5 * v) + 0.5

    h = jnp.zeros((B, H2), jnp.float32)
    c = jnp.zeros((B, H2), jnp.float32)

    # ---- Fused recurrence: both LSTM chains as one [B, 2H] state; a SINGLE
    #      bf16 [B,2H] @ [2H,4G] matmul per step; 128-lane-aligned gate slices.
    #      T=15 -> fully unrolled.
    for t in range(T):
        r = t * B                    # static, sublane-aligned (B == 8)
        gates = gx[r:r + B, :] + jnp.dot(h.astype(jnp.bfloat16), wh,
                                         preferred_element_type=jnp.float32)
        ig = sigmoid(gates[:, 0 * G:0 * G + H2])
        fg = sigmoid(gates[:, 1 * G:1 * G + H2])
        gg = jnp.tanh(gates[:, 2 * G:2 * G + H2])
        og = sigmoid(gates[:, 3 * G:3 * G + H2])
        c = fg * c + ig * gg
        h = og * jnp.tanh(c)

    # h == [h1 | h2] == torch.cat((hn_1, hn_2), dim=1); Dropout(0.3) is identity
    # in eval mode.
    hid = jnp.maximum(
        jnp.dot(h.astype(jnp.bfloat16), fw1_ref[...],
                preferred_element_type=jnp.float32) + fb1_ref[...], 0.0)   # [B, 84]
    out_ref[...] = (jnp.dot(hid.astype(jnp.bfloat16), fw2_ref[...],
                            preferred_element_type=jnp.float32)
                    + fb2_ref[...])                                        # [B, 2]


@jax.jit
def dir_lstm_forward(x, kp):
    """x: [B, 2, T, I] float32 -> [B, 2] float32 (logits)."""
    B, _, T, I = x.shape
    # [B,2,T,I] -> [T,B,2,I] -> [T*B, 2I]: time-major rows so the recurrence
    # slices contiguous, sublane-aligned [B, 2I] blocks per step.  Kept inside
    # this jitted wrapper so XLA fuses the tiny prep with the dispatch.
    x_flat = (jnp.transpose(x, (2, 0, 1, 3))
              .reshape(T * B, 2 * I)
              .astype(jnp.bfloat16))

    args = (x_flat, kp["wx"], kp["bias"], kp["wh"],
            kp["fw1"], kp["fb1"], kp["fw2"], kp["fb2"])
    vmem = pl.BlockSpec(memory_space=pltpu.MemorySpace.VMEM)
    kernel = functools.partial(dir_lstm_kernel, batch=B, t_len=T)
    # Tiny, latency-bound kernel: everything (<2 MiB) lives whole in VMEM,
    # no grid / no pipelining / no vmem_limit override needed.
    return pl.pallas_call(
        kernel,
        out_shape=jax.ShapeDtypeStruct((B, F2_OUT), jnp.float32),
        in_specs=[vmem] * len(args),
        out_specs=vmem,
    )(*args)


# ---------------------------------------------------------------------------
# Deterministic parameter construction (PyTorch-style uniform init ranges).
# Returns (torch-layout params for the reference, fused kernel-layout params).
# ---------------------------------------------------------------------------
def make_params(key):
    ks = jax.random.split(key, 12)
    H, I = HIDDEN, WORD_LEN
    kb = 1.0 / np.sqrt(H)

    def u(k, shape, bound):
        return jax.random.uniform(k, shape, jnp.float32, -bound, bound)

    torch_p = {
        # LSTM 1 (torch shapes: W_ih [4H,I], W_hh [4H,H], b_ih [4H], b_hh [4H])
        "wih1": u(ks[0], (4 * H, I), kb), "whh1": u(ks[1], (4 * H, H), kb),
        "bih1": u(ks[2], (4 * H,), kb),   "bhh1": u(ks[3], (4 * H,), kb),
        # LSTM 2
        "wih2": u(ks[4], (4 * H, I), kb), "whh2": u(ks[5], (4 * H, H), kb),
        "bih2": u(ks[6], (4 * H,), kb),   "bhh2": u(ks[7], (4 * H,), kb),
    }
    k1 = 1.0 / np.sqrt(2 * H)
    torch_p["w1"] = u(ks[8], (F1_OUT, 2 * H), k1)
    torch_p["bf1"] = u(ks[9], (F1_OUT,), k1)
    k2 = 1.0 / np.sqrt(F1_OUT)
    torch_p["w2"] = u(ks[10], (F2_OUT, F1_OUT), k2)
    torch_p["bf2"] = u(ks[11], (F2_OUT,), k2)

    # ---- Fused kernel layouts (PyTorch gate order i, f, g, o). Each gate gets
    #      a 384-wide lane-aligned block: cols [0,H) = src chain, [H,2H) = dst
    #      chain, [2H,384) = zero pad.  Src/dst kept independent via
    #      block-diagonal placement (zero cross blocks).
    G, H2 = GATE_PAD, 2 * H
    wx = np.zeros((2 * I, 4 * G), np.float32)    # input weights  [2I, 4G]
    wh = np.zeros((H2, 4 * G), np.float32)       # hidden weights [2H, 4G]
    bias = np.zeros((1, 4 * G), np.float32)      # fused b_ih + b_hh
    for gidx in range(4):
        sl = slice(gidx * H, (gidx + 1) * H)
        col = gidx * G
        wx[0:I,      col:col + H]          = np.asarray(torch_p["wih1"][sl]).T
        wx[I:2 * I,  col + H:col + 2 * H]  = np.asarray(torch_p["wih2"][sl]).T
        wh[0:H,      col:col + H]          = np.asarray(torch_p["whh1"][sl]).T
        wh[H:2 * H,  col + H:col + 2 * H]  = np.asarray(torch_p["whh2"][sl]).T
        bias[0, col:col + H]         = np.asarray(torch_p["bih1"][sl] + torch_p["bhh1"][sl])
        bias[0, col + H:col + 2 * H] = np.asarray(torch_p["bih2"][sl] + torch_p["bhh2"][sl])

    kp = {
        # bf16 MXU operands; f32 where the value participates in adds only.
        "wx":   jnp.asarray(wx, jnp.bfloat16),
        "wh":   jnp.asarray(wh, jnp.bfloat16),
        "bias": jnp.asarray(bias, jnp.float32),
        "fw1":  jnp.asarray(np.asarray(torch_p["w1"]).T, jnp.bfloat16),   # [2H, 84]
        "fb1":  jnp.asarray(np.asarray(torch_p["bf1"])[None, :], jnp.float32),
        "fw2":  jnp.asarray(np.asarray(torch_p["w2"]).T, jnp.bfloat16),   # [84, 2]
        "fb2":  jnp.asarray(np.asarray(torch_p["bf2"])[None, :], jnp.float32),
    }
    return torch_p, kp


# ---------------------------------------------------------------------------
# Pure-JAX reference (mirrors the PyTorch forward), precision=HIGHEST f32.
# ---------------------------------------------------------------------------
def reference_forward(x, tp):
    H = HIDDEN
    B = x.shape[0]
    hp = lax.Precision.HIGHEST

    def mm(a, b):
        return jnp.dot(a, b, precision=hp)

    def run_lstm(seq, wih, whh, bih, bhh):
        def step(carry, x_t):
            h, c = carry
            gates = mm(x_t, wih.T) + mm(h, whh.T) + bih + bhh
            i = jax.nn.sigmoid(gates[:, 0 * H:1 * H])
            f = jax.nn.sigmoid(gates[:, 1 * H:2 * H])
            g = jnp.tanh(gates[:, 2 * H:3 * H])
            o = jax.nn.sigmoid(gates[:, 3 * H:4 * H])
            c_new = f * c + i * g
            h_new = o * jnp.tanh(c_new)
            return (h_new, c_new), None

        init = (jnp.zeros((B, H), jnp.float32), jnp.zeros((B, H), jnp.float32))
        (h, _), _ = lax.scan(step, init, jnp.transpose(seq, (1, 0, 2)))
        return h

    h1 = run_lstm(x[:, 0], tp["wih1"], tp["whh1"], tp["bih1"], tp["bhh1"])
    h2 = run_lstm(x[:, 1], tp["wih2"], tp["whh2"], tp["bih2"], tp["bhh2"])
    emb = jnp.concatenate([h1, h2], axis=1)
    hid = jnp.maximum(mm(emb, tp["w1"].T) + tp["bf1"], 0.0)
    return mm(hid, tp["w2"].T) + tp["bf2"]


if __name__ == "__main__":
    key = jax.random.PRNGKey(0)
    k_x, k_p = jax.random.split(key)

    B = 8
    # Input layout matches the PyTorch module: [batch, 2 (src/dst), word_num, word_len]
    x = jax.random.normal(k_x, (B, 2, WORD_NUM, WORD_LEN), jnp.float32)
    torch_p, kp = make_params(k_p)

    out = jax.block_until_ready(dir_lstm_forward(x, kp))
    ref = jax.block_until_ready(reference_forward(x, torch_p))

    # Kernel uses bf16 MXU operands (deliberate, per perf review); tolerance is
    # sized for bf16 operand error propagated through the 15-step recurrence,
    # compared against a precision=HIGHEST f32 reference.
    np.testing.assert_allclose(np.asarray(out), np.asarray(ref), rtol=2e-2, atol=2e-2)
    assert out.shape == (B, F2_OUT)
    print("KERNEL_OK")
</pallas_src>

<mosaic_0001>
module attributes {stable_mosaic.version = 11 : i64} {
  func.func @dir_lstm_kernel(%arg0: memref<120x8xbf16, #tpu.memory_space<vmem>>, %arg1: memref<8x1536xbf16, #tpu.memory_space<vmem>>, %arg2: memref<1x1536xf32, #tpu.memory_space<vmem>>, %arg3: memref<288x1536xbf16, #tpu.memory_space<vmem>>, %arg4: memref<288x84xbf16, #tpu.memory_space<vmem>>, %arg5: memref<1x84xf32, #tpu.memory_space<vmem>>, %arg6: memref<84x2xbf16, #tpu.memory_space<vmem>>, %arg7: memref<1x2xf32, #tpu.memory_space<vmem>>, %arg8: memref<8x2xf32, #tpu.memory_space<vmem>>) attributes {dimension_semantics = [], scalar_prefetch = 0 : i64, scratch_operands = 0 : i64, tpu.core_type = #tpu.core_type<tc>} {
    %c0 = arith.constant 0 : index
    %c0_0 = arith.constant 0 : index
    %0 = vector.load %arg0[%c0, %c0_0] : memref<120x8xbf16, #tpu.memory_space<vmem>>, vector<120x8xbf16>
    %c0_1 = arith.constant 0 : index
    %c0_2 = arith.constant 0 : index
    %1 = vector.load %arg1[%c0_1, %c0_2] : memref<8x1536xbf16, #tpu.memory_space<vmem>>, vector<8x1536xbf16>
    %cst = arith.constant dense<0.000000e+00> : vector<120x1536xf32>
    %2 = tpu.matmul %0, %1, %cst {dimension_numbers = #tpu.dot_dimension_numbers<[1], [0], [0], [1], [0, 0, 1, 1], [], []>} : vector<120x8xbf16>, vector<8x1536xbf16>, vector<120x1536xf32> -> vector<120x1536xf32>
    %c0_3 = arith.constant 0 : index
    %c0_4 = arith.constant 0 : index
    %3 = vector.load %arg2[%c0_3, %c0_4] : memref<1x1536xf32, #tpu.memory_space<vmem>>, vector<1x1536xf32>
    %4 = vector.broadcast %3 : vector<1x1536xf32> to vector<120x1536xf32>
    %5 = arith.addf %2, %4 : vector<120x1536xf32>
    %c0_5 = arith.constant 0 : index
    %c0_6 = arith.constant 0 : index
    %6 = vector.load %arg3[%c0_5, %c0_6] : memref<288x1536xbf16, #tpu.memory_space<vmem>>, vector<288x1536xbf16>
    %cst_7 = arith.constant 0.000000e+00 : f32
    %7 = vector.broadcast %cst_7 : f32 to vector<8x288xf32>
    %cst_8 = arith.constant 0.000000e+00 : f32
    %8 = vector.broadcast %cst_8 : f32 to vector<8x288xf32>
    %9 = vector.extract_strided_slice %5 {offsets = [0, 0], sizes = [8, 1536], strides = [1, 1]} : vector<120x1536xf32> to vector<8x1536xf32>
    %10 = arith.truncf %7 : vector<8x288xf32> to vector<8x288xbf16>
    %cst_9 = arith.constant dense<0.000000e+00> : vector<8x1536xf32>
    %11 = tpu.matmul %10, %6, %cst_9 {dimension_numbers = #tpu.dot_dimension_numbers<[1], [0], [0], [1], [0, 0, 1, 1], [], []>} : vector<8x288xbf16>, vector<288x1536xbf16>, vector<8x1536xf32> -> vector<8x1536xf32>
    %12 = arith.addf %9, %11 : vector<8x1536xf32>
    %13 = vector.extract_strided_slice %12 {offsets = [0, 0], sizes = [8, 288], strides = [1, 1]} : vector<8x1536xf32> to vector<8x288xf32>
    %cst_10 = arith.constant 5.000000e-01 : f32
    %14 = vector.broadcast %cst_10 : f32 to vector<8x288xf32>
    %15 = arith.mulf %14, %13 : vector<8x288xf32>
    %16 = math.tanh %15 : vector<8x288xf32>
    %cst_11 = arith.constant 5.000000e-01 : f32
    %17 = vector.broadcast %cst_11 : f32 to vector<8x288xf32>
    %18 = arith.mulf %17, %16 : vector<8x288xf32>
    %cst_12 = arith.constant 5.000000e-01 : f32
    %19 = vector.broadcast %cst_12 : f32 to vector<8x288xf32>
    %20 = arith.addf %18, %19 : vector<8x288xf32>
    %21 = vector.extract_strided_slice %12 {offsets = [0, 384], sizes = [8, 288], strides = [1, 1]} : vector<8x1536xf32> to vector<8x288xf32>
    %cst_13 = arith.constant 5.000000e-01 : f32
    %22 = vector.broadcast %cst_13 : f32 to vector<8x288xf32>
    %23 = arith.mulf %22, %21 : vector<8x288xf32>
    %24 = math.tanh %23 : vector<8x288xf32>
    %cst_14 = arith.constant 5.000000e-01 : f32
    %25 = vector.broadcast %cst_14 : f32 to vector<8x288xf32>
    %26 = arith.mulf %25, %24 : vector<8x288xf32>
    %cst_15 = arith.constant 5.000000e-01 : f32
    %27 = vector.broadcast %cst_15 : f32 to vector<8x288xf32>
    %28 = arith.addf %26, %27 : vector<8x288xf32>
    %29 = vector.extract_strided_slice %12 {offsets = [0, 768], sizes = [8, 288], strides = [1, 1]} : vector<8x1536xf32> to vector<8x288xf32>
    %30 = math.tanh %29 : vector<8x288xf32>
    %31 = vector.extract_strided_slice %12 {offsets = [0, 1152], sizes = [8, 288], strides = [1, 1]} : vector<8x1536xf32> to vector<8x288xf32>
    %cst_16 = arith.constant 5.000000e-01 : f32
    %32 = vector.broadcast %cst_16 : f32 to vector<8x288xf32>
    %33 = arith.mulf %32, %31 : vector<8x288xf32>
    %34 = math.tanh %33 : vector<8x288xf32>
    %cst_17 = arith.constant 5.000000e-01 : f32
    %35 = vector.broadcast %cst_17 : f32 to vector<8x288xf32>
    %36 = arith.mulf %35, %34 : vector<8x288xf32>
    %cst_18 = arith.constant 5.000000e-01 : f32
    %37 = vector.broadcast %cst_18 : f32 to vector<8x288xf32>
    %38 = arith.addf %36, %37 : vector<8x288xf32>
    %39 = arith.mulf %28, %8 : vector<8x288xf32>
    %40 = arith.mulf %20, %30 : vector<8x288xf32>
    %41 = arith.addf %39, %40 : vector<8x288xf32>
    %42 = math.tanh %41 : vector<8x288xf32>
    %43 = arith.mulf %38, %42 : vector<8x288xf32>
    %44 = vector.extract_strided_slice %5 {offsets = [8, 0], sizes = [8, 1536], strides = [1, 1]} : vector<120x1536xf32> to vector<8x1536xf32>
    %45 = arith.truncf %43 : vector<8x288xf32> to vector<8x288xbf16>
    %cst_19 = arith.constant dense<0.000000e+00> : vector<8x1536xf32>
    %46 = tpu.matmul %45, %6, %cst_19 {dimension_numbers = #tpu.dot_dimension_numbers<[1], [0], [0], [1], [0, 0, 1, 1], [], []>} : vector<8x288xbf16>, vector<288x1536xbf16>, vector<8x1536xf32> -> vector<8x1536xf32>
    %47 = arith.addf %44, %46 : vector<8x1536xf32>
    %48 = vector.extract_strided_slice %47 {offsets = [0, 0], sizes = [8, 288], strides = [1, 1]} : vector<8x1536xf32> to vector<8x288xf32>
    %cst_20 = arith.constant 5.000000e-01 : f32
    %49 = vector.broadcast %cst_20 : f32 to vector<8x288xf32>
    %50 = arith.mulf %49, %48 : vector<8x288xf32>
    %51 = math.tanh %50 : vector<8x288xf32>
    %cst_21 = arith.constant 5.000000e-01 : f32
    %52 = vector.broadcast %cst_21 : f32 to vector<8x288xf32>
    %53 = arith.mulf %52, %51 : vector<8x288xf32>
    %cst_22 = arith.constant 5.000000e-01 : f32
    %54 = vector.broadcast %cst_22 : f32 to vector<8x288xf32>
    %55 = arith.addf %53, %54 : vector<8x288xf32>
    %56 = vector.extract_strided_slice %47 {offsets = [0, 384], sizes = [8, 288], strides = [1, 1]} : vector<8x1536xf32> to vector<8x288xf32>
    %cst_23 = arith.constant 5.000000e-01 : f32
    %57 = vector.broadcast %cst_23 : f32 to vector<8x288xf32>
    %58 = arith.mulf %57, %56 : vector<8x288xf32>
    %59 = math.tanh %58 : vector<8x288xf32>
    %cst_24 = arith.constant 5.000000e-01 : f32
    %60 = vector.broadcast %cst_24 : f32 to vector<8x288xf32>
    %61 = arith.mulf %60, %59 : vector<8x288xf32>
    %cst_25 = arith.constant 5.000000e-01 : f32
    %62 = vector.broadcast %cst_25 : f32 to vector<8x288xf32>
    %63 = arith.addf %61, %62 : vector<8x288xf32>
    %64 = vector.extract_strided_slice %47 {offsets = [0, 768], sizes = [8, 288], strides = [1, 1]} : vector<8x1536xf32> to vector<8x288xf32>
    %65 = math.tanh %64 : vector<8x288xf32>
    %66 = vector.extract_strided_slice %47 {offsets = [0, 1152], sizes = [8, 288], strides = [1, 1]} : vector<8x1536xf32> to vector<8x288xf32>
    %cst_26 = arith.constant 5.000000e-01 : f32
    %67 = vector.broadcast %cst_26 : f32 to vector<8x288xf32>
    %68 = arith.mulf %67, %66 : vector<8x288xf32>
    %69 = math.tanh %68 : vector<8x288xf32>
    %cst_27 = arith.constant 5.000000e-01 : f32
    %70 = vector.broadcast %cst_27 : f32 to vector<8x288xf32>
    %71 = arith.mulf %70, %69 : vector<8x288xf32>
    %cst_28 = arith.constant 5.000000e-01 : f32
    %72 = vector.broadcast %cst_28 : f32 to vector<8x288xf32>
    %73 = arith.addf %71, %72 : vector<8x288xf32>
    %74 = arith.mulf %63, %41 : vector<8x288xf32>
    %75 = arith.mulf %55, %65 : vector<8x288xf32>
    %76 = arith.addf %74, %75 : vector<8x288xf32>
    %77 = math.tanh %76 : vector<8x288xf32>
    %78 = arith.mulf %73, %77 : vector<8x288xf32>
    %79 = vector.extract_strided_slice %5 {offsets = [16, 0], sizes = [8, 1536], strides = [1, 1]} : vector<120x1536xf32> to vector<8x1536xf32>
    %80 = arith.truncf %78 : vector<8x288xf32> to vector<8x288xbf16>
    %cst_29 = arith.constant dense<0.000000e+00> : vector<8x1536xf32>
    %81 = tpu.matmul %80, %6, %cst_29 {dimension_numbers = #tpu.dot_dimension_numbers<[1], [0], [0], [1], [0, 0, 1, 1], [], []>} : vector<8x288xbf16>, vector<288x1536xbf16>, vector<8x1536xf32> -> vector<8x1536xf32>
    %82 = arith.addf %79, %81 : vector<8x1536xf32>
    %83 = vector.extract_strided_slice %82 {offsets = [0, 0], sizes = [8, 288], strides = [1, 1]} : vector<8x1536xf32> to vector<8x288xf32>
    %cst_30 = arith.constant 5.000000e-01 : f32
    %84 = vector.broadcast %cst_30 : f32 to vector<8x288xf32>
    %85 = arith.mulf %84, %83 : vector<8x288xf32>
    %86 = math.tanh %85 : vector<8x288xf32>
    %cst_31 = arith.constant 5.000000e-01 : f32
    %87 = vector.broadcast %cst_31 : f32 to vector<8x288xf32>
    %88 = arith.mulf %87, %86 : vector<8x288xf32>
    %cst_32 = arith.constant 5.000000e-01 : f32
    %89 = vector.broadcast %cst_32 : f32 to vector<8x288xf32>
    %90 = arith.addf %88, %89 : vector<8x288xf32>
    %91 = vector.extract_strided_slice %82 {offsets = [0, 384], sizes = [8, 288], strides = [1, 1]} : vector<8x1536xf32> to vector<8x288xf32>
    %cst_33 = arith.constant 5.000000e-01 : f32
    %92 = vector.broadcast %cst_33 : f32 to vector<8x288xf32>
    %93 = arith.mulf %92, %91 : vector<8x288xf32>
    %94 = math.tanh %93 : vector<8x288xf32>
    %cst_34 = arith.constant 5.000000e-01 : f32
    %95 = vector.broadcast %cst_34 : f32 to vector<8x288xf32>
    %96 = arith.mulf %95, %94 : vector<8x288xf32>
    %cst_35 = arith.constant 5.000000e-01 : f32
    %97 = vector.broadcast %cst_35 : f32 to vector<8x288xf32>
    %98 = arith.addf %96, %97 : vector<8x288xf32>
    %99 = vector.extract_strided_slice %82 {offsets = [0, 768], sizes = [8, 288], strides = [1, 1]} : vector<8x1536xf32> to vector<8x288xf32>
    %100 = math.tanh %99 : vector<8x288xf32>
    %101 = vector.extract_strided_slice %82 {offsets = [0, 1152], sizes = [8, 288], strides = [1, 1]} : vector<8x1536xf32> to vector<8x288xf32>
    %cst_36 = arith.constant 5.000000e-01 : f32
    %102 = vector.broadcast %cst_36 : f32 to vector<8x288xf32>
    %103 = arith.mulf %102, %101 : vector<8x288xf32>
    %104 = math.tanh %103 : vector<8x288xf32>
    %cst_37 = arith.constant 5.000000e-01 : f32
    %105 = vector.broadcast %cst_37 : f32 to vector<8x288xf32>
    %106 = arith.mulf %105, %104 : vector<8x288xf32>
    %cst_38 = arith.constant 5.000000e-01 : f32
    %107 = vector.broadcast %cst_38 : f32 to vector<8x288xf32>
    %108 = arith.addf %106, %107 : vector<8x288xf32>
    %109 = arith.mulf %98, %76 : vector<8x288xf32>
    %110 = arith.mulf %90, %100 : vector<8x288xf32>
    %111 = arith.addf %109, %110 : vector<8x288xf32>
    %112 = math.tanh %111 : vector<8x288xf32>
    %113 = arith.mulf %108, %112 : vector<8x288xf32>
    %114 = vector.extract_strided_slice %5 {offsets = [24, 0], sizes = [8, 1536], strides = [1, 1]} : vector<120x1536xf32> to vector<8x1536xf32>
    %115 = arith.truncf %113 : vector<8x288xf32> to vector<8x288xbf16>
    %cst_39 = arith.constant dense<0.000000e+00> : vector<8x1536xf32>
    %116 = tpu.matmul %115, %6, %cst_39 {dimension_numbers = #tpu.dot_dimension_numbers<[1], [0], [0], [1], [0, 0, 1, 1], [], []>} : vector<8x288xbf16>, vector<288x1536xbf16>, vector<8x1536xf32> -> vector<8x1536xf32>
    %117 = arith.addf %114, %116 : vector<8x1536xf32>
    %118 = vector.extract_strided_slice %117 {offsets = [0, 0], sizes = [8, 288], strides = [1, 1]} : vector<8x1536xf32> to vector<8x288xf32>
    %cst_40 = arith.constant 5.000000e-01 : f32
    %119 = vector.broadcast %cst_40 : f32 to vector<8x288xf32>
    %120 = arith.mulf %119, %118 : vector<8x288xf32>
    %121 = math.tanh %120 : vector<8x288xf32>
    %cst_41 = arith.constant 5.000000e-01 : f32
    %122 = vector.broadcast %cst_41 : f32 to vector<8x288xf32>
    %123 = arith.mulf %122, %121 : vector<8x288xf32>
    %cst_42 = arith.constant 5.000000e-01 : f32
    %124 = vector.broadcast %cst_42 : f32 to vector<8x288xf32>
    %125 = arith.addf %123, %124 : vector<8x288xf32>
    %126 = vector.extract_strided_slice %117 {offsets = [0, 384], sizes = [8, 288], strides = [1, 1]} : vector<8x1536xf32> to vector<8x288xf32>
    %cst_43 = arith.constant 5.000000e-01 : f32
    %127 = vector.broadcast %cst_43 : f32 to vector<8x288xf32>
    %128 = arith.mulf %127, %126 : vector<8x288xf32>
    %129 = math.tanh %128 : vector<8x288xf32>
    %cst_44 = arith.constant 5.000000e-01 : f32
    %130 = vector.broadcast %cst_44 : f32 to vector<8x288xf32>
    %131 = arith.mulf %130, %129 : vector<8x288xf32>
    %cst_45 = arith.constant 5.000000e-01 : f32
    %132 = vector.broadcast %cst_45 : f32 to vector<8x288xf32>
    %133 = arith.addf %131, %132 : vector<8x288xf32>
    %134 = vector.extract_strided_slice %117 {offsets = [0, 768], sizes = [8, 288], strides = [1, 1]} : vector<8x1536xf32> to vector<8x288xf32>
    %135 = math.tanh %134 : vector<8x288xf32>
    %136 = vector.extract_strided_slice %117 {offsets = [0, 1152], sizes = [8, 288], strides = [1, 1]} : vector<8x1536xf32> to vector<8x288xf32>
    %cst_46 = arith.constant 5.000000e-01 : f32
    %137 = vector.broadcast %cst_46 : f32 to vector<8x288xf32>
    %138 = arith.mulf %137, %136 : vector<8x288xf32>
    %139 = math.tanh %138 : vector<8x288xf32>
    %cst_47 = arith.constant 5.000000e-01 : f32
    %140 = vector.broadcast %cst_47 : f32 to vector<8x288xf32>
    %141 = arith.mulf %140, %139 : vector<8x288xf32>
    %cst_48 = arith.constant 5.000000e-01 : f32
    %142 = vector.broadcast %cst_48 : f32 to vector<8x288xf32>
    %143 = arith.addf %141, %142 : vector<8x288xf32>
    %144 = arith.mulf %133, %111 : vector<8x288xf32>
    %145 = arith.mulf %125, %135 : vector<8x288xf32>
    %146 = arith.addf %144, %145 : vector<8x288xf32>
    %147 = math.tanh %146 : vector<8x288xf32>
    %148 = arith.mulf %143, %147 : vector<8x288xf32>
    %149 = vector.extract_strided_slice %5 {offsets = [32, 0], sizes = [8, 1536], strides = [1, 1]} : vector<120x1536xf32> to vector<8x1536xf32>
    %150 = arith.truncf %148 : vector<8x288xf32> to vector<8x288xbf16>
    %cst_49 = arith.constant dense<0.000000e+00> : vector<8x1536xf32>
    %151 = tpu.matmul %150, %6, %cst_49 {dimension_numbers = #tpu.dot_dimension_numbers<[1], [0], [0], [1], [0, 0, 1, 1], [], []>} : vector<8x288xbf16>, vector<288x1536xbf16>, vector<8x1536xf32> -> vector<8x1536xf32>
    %152 = arith.addf %149, %151 : vector<8x1536xf32>
    %153 = vector.extract_strided_slice %152 {offsets = [0, 0], sizes = [8, 288], strides = [1, 1]} : vector<8x1536xf32> to vector<8x288xf32>
    %cst_50 = arith.constant 5.000000e-01 : f32
    %154 = vector.broadcast %cst_50 : f32 to vector<8x288xf32>
    %155 = arith.mulf %154, %153 : vector<8x288xf32>
    %156 = math.tanh %155 : vector<8x288xf32>
    %cst_51 = arith.constant 5.000000e-01 : f32
    %157 = vector.broadcast %cst_51 : f32 to vector<8x288xf32>
    %158 = arith.mulf %157, %156 : vector<8x288xf32>
    %cst_52 = arith.constant 5.000000e-01 : f32
    %159 = vector.broadcast %cst_52 : f32 to vector<8x288xf32>
    %160 = arith.addf %158, %159 : vector<8x288xf32>
    %161 = vector.extract_strided_slice %152 {offsets = [0, 384], sizes = [8, 288], strides = [1, 1]} : vector<8x1536xf32> to vector<8x288xf32>
    %cst_53 = arith.constant 5.000000e-01 : f32
    %162 = vector.broadcast %cst_53 : f32 to vector<8x288xf32>
    %163 = arith.mulf %162, %161 : vector<8x288xf32>
    %164 = math.tanh %163 : vector<8x288xf32>
    %cst_54 = arith.constant 5.000000e-01 : f32
    %165 = vector.broadcast %cst_54 : f32 to vector<8x288xf32>
    %166 = arith.mulf %165, %164 : vector<8x288xf32>
    %cst_55 = arith.constant 5.000000e-01 : f32
    %167 = vector.broadcast %cst_55 : f32 to vector<8x288xf32>
    %168 = arith.addf %166, %167 : vector<8x288xf32>
    %169 = vector.extract_strided_slice %152 {offsets = [0, 768], sizes = [8, 288], strides = [1, 1]} : vector<8x1536xf32> to vector<8x288xf32>
    %170 = math.tanh %169 : vector<8x288xf32>
    %171 = vector.extract_strided_slice %152 {offsets = [0, 1152], sizes = [8, 288], strides = [1, 1]} : vector<8x1536xf32> to vector<8x288xf32>
    %cst_56 = arith.constant 5.000000e-01 : f32
    %172 = vector.broadcast %cst_56 : f32 to vector<8x288xf32>
    %173 = arith.mulf %172, %171 : vector<8x288xf32>
    %174 = math.tanh %173 : vector<8x288xf32>
    %cst_57 = arith.constant 5.000000e-01 : f32
    %175 = vector.broadcast %cst_57 : f32 to vector<8x288xf32>
    %176 = arith.mulf %175, %174 : vector<8x288xf32>
    %cst_58 = arith.constant 5.000000e-01 : f32
    %177 = vector.broadcast %cst_58 : f32 to vector<8x288xf32>
    %178 = arith.addf %176, %177 : vector<8x288xf32>
    %179 = arith.mulf %168, %146 : vector<8x288xf32>
    %180 = arith.mulf %160, %170 : vector<8x288xf32>
    %181 = arith.addf %179, %180 : vector<8x288xf32>
    %182 = math.tanh %181 : vector<8x288xf32>
    %183 = arith.mulf %178, %182 : vector<8x288xf32>
    %184 = vector.extract_strided_slice %5 {offsets = [40, 0], sizes = [8, 1536], strides = [1, 1]} : vector<120x1536xf32> to vector<8x1536xf32>
    %185 = arith.truncf %183 : vector<8x288xf32> to vector<8x288xbf16>
    %cst_59 = arith.constant dense<0.000000e+00> : vector<8x1536xf32>
    %186 = tpu.matmul %185, %6, %cst_59 {dimension_numbers = #tpu.dot_dimension_numbers<[1], [0], [0], [1], [0, 0, 1, 1], [], []>} : vector<8x288xbf16>, vector<288x1536xbf16>, vector<8x1536xf32> -> vector<8x1536xf32>
    %187 = arith.addf %184, %186 : vector<8x1536xf32>
    %188 = vector.extract_strided_slice %187 {offsets = [0, 0], sizes = [8, 288], strides = [1, 1]} : vector<8x1536xf32> to vector<8x288xf32>
    %cst_60 = arith.constant 5.000000e-01 : f32
    %189 = vector.broadcast %cst_60 : f32 to vector<8x288xf32>
    %190 = arith.mulf %189, %188 : vector<8x288xf32>
    %191 = math.tanh %190 : vector<8x288xf32>
    %cst_61 = arith.constant 5.000000e-01 : f32
    %192 = vector.broadcast %cst_61 : f32 to vector<8x288xf32>
    %193 = arith.mulf %192, %191 : vector<8x288xf32>
    %cst_62 = arith.constant 5.000000e-01 : f32
    %194 = vector.broadcast %cst_62 : f32 to vector<8x288xf32>
    %195 = arith.addf %193, %194 : vector<8x288xf32>
    %196 = vector.extract_strided_slice %187 {offsets = [0, 384], sizes = [8, 288], strides = [1, 1]} : vector<8x1536xf32> to vector<8x288xf32>
    %cst_63 = arith.constant 5.000000e-01 : f32
    %197 = vector.broadcast %cst_63 : f32 to vector<8x288xf32>
    %198 = arith.mulf %197, %196 : vector<8x288xf32>
    %199 = math.tanh %198 : vector<8x288xf32>
    %cst_64 = arith.constant 5.000000e-01 : f32
    %200 = vector.broadcast %cst_64 : f32 to vector<8x288xf32>
    %201 = arith.mulf %200, %199 : vector<8x288xf32>
    %cst_65 = arith.constant 5.000000e-01 : f32
    %202 = vector.broadcast %cst_65 : f32 to vector<8x288xf32>
    %203 = arith.addf %201, %202 : vector<8x288xf32>
    %204 = vector.extract_strided_slice %187 {offsets = [0, 768], sizes = [8, 288], strides = [1, 1]} : vector<8x1536xf32> to vector<8x288xf32>
    %205 = math.tanh %204 : vector<8x288xf32>
    %206 = vector.extract_strided_slice %187 {offsets = [0, 1152], sizes = [8, 288], strides = [1, 1]} : vector<8x1536xf32> to vector<8x288xf32>
    %cst_66 = arith.constant 5.000000e-01 : f32
    %207 = vector.broadcast %cst_66 : f32 to vector<8x288xf32>
    %208 = arith.mulf %207, %206 : vector<8x288xf32>
    %209 = math.tanh %208 : vector<8x288xf32>
    %cst_67 = arith.constant 5.000000e-01 : f32
    %210 = vector.broadcast %cst_67 : f32 to vector<8x288xf32>
    %211 = arith.mulf %210, %209 : vector<8x288xf32>
    %cst_68 = arith.constant 5.000000e-01 : f32
    %212 = vector.broadcast %cst_68 : f32 to vector<8x288xf32>
    %213 = arith.addf %211, %212 : vector<8x288xf32>
    %214 = arith.mulf %203, %181 : vector<8x288xf32>
    %215 = arith.mulf %195, %205 : vector<8x288xf32>
    %216 = arith.addf %214, %215 : vector<8x288xf32>
    %217 = math.tanh %216 : vector<8x288xf32>
    %218 = arith.mulf %213, %217 : vector<8x288xf32>
    %219 = vector.extract_strided_slice %5 {offsets = [48, 0], sizes = [8, 1536], strides = [1, 1]} : vector<120x1536xf32> to vector<8x1536xf32>
    %220 = arith.truncf %218 : vector<8x288xf32> to vector<8x288xbf16>
    %cst_69 = arith.constant dense<0.000000e+00> : vector<8x1536xf32>
    %221 = tpu.matmul %220, %6, %cst_69 {dimension_numbers = #tpu.dot_dimension_numbers<[1], [0], [0], [1], [0, 0, 1, 1], [], []>} : vector<8x288xbf16>, vector<288x1536xbf16>, vector<8x1536xf32> -> vector<8x1536xf32>
    %222 = arith.addf %219, %221 : vector<8x1536xf32>
    %223 = vector.extract_strided_slice %222 {offsets = [0, 0], sizes = [8, 288], strides = [1, 1]} : vector<8x1536xf32> to vector<8x288xf32>
    %cst_70 = arith.constant 5.000000e-01 : f32
    %224 = vector.broadcast %cst_70 : f32 to vector<8x288xf32>
    %225 = arith.mulf %224, %223 : vector<8x288xf32>
    %226 = math.tanh %225 : vector<8x288xf32>
    %cst_71 = arith.constant 5.000000e-01 : f32
    %227 = vector.broadcast %cst_71 : f32 to vector<8x288xf32>
    %228 = arith.mulf %227, %226 : vector<8x288xf32>
    %cst_72 = arith.constant 5.000000e-01 : f32
    %229 = vector.broadcast %cst_72 : f32 to vector<8x288xf32>
    %230 = arith.addf %228, %229 : vector<8x288xf32>
    %231 = vector.extract_strided_slice %222 {offsets = [0, 384], sizes = [8, 288], strides = [1, 1]} : vector<8x1536xf32> to vector<8x288xf32>
    %cst_73 = arith.constant 5.000000e-01 : f32
    %232 = vector.broadcast %cst_73 : f32 to vector<8x288xf32>
    %233 = arith.mulf %232, %231 : vector<8x288xf32>
    %234 = math.tanh %233 : vector<8x288xf32>
    %cst_74 = arith.constant 5.000000e-01 : f32
    %235 = vector.broadcast %cst_74 : f32 to vector<8x288xf32>
    %236 = arith.mulf %235, %234 : vector<8x288xf32>
    %cst_75 = arith.constant 5.000000e-01 : f32
    %237 = vector.broadcast %cst_75 : f32 to vector<8x288xf32>
    %238 = arith.addf %236, %237 : vector<8x288xf32>
    %239 = vector.extract_strided_slice %222 {offsets = [0, 768], sizes = [8, 288], strides = [1, 1]} : vector<8x1536xf32> to vector<8x288xf32>
    %240 = math.tanh %239 : vector<8x288xf32>
    %241 = vector.extract_strided_slice %222 {offsets = [0, 1152], sizes = [8, 288], strides = [1, 1]} : vector<8x1536xf32> to vector<8x288xf32>
    %cst_76 = arith.constant 5.000000e-01 : f32
    %242 = vector.broadcast %cst_76 : f32 to vector<8x288xf32>
    %243 = arith.mulf %242, %241 : vector<8x288xf32>
    %244 = math.tanh %243 : vector<8x288xf32>
    %cst_77 = arith.constant 5.000000e-01 : f32
    %245 = vector.broadcast %cst_77 : f32 to vector<8x288xf32>
    %246 = arith.mulf %245, %244 : vector<8x288xf32>
    %cst_78 = arith.constant 5.000000e-01 : f32
    %247 = vector.broadcast %cst_78 : f32 to vector<8x288xf32>
    %248 = arith.addf %246, %247 : vector<8x288xf32>
    %249 = arith.mulf %238, %216 : vector<8x288xf32>
    %250 = arith.mulf %230, %240 : vector<8x288xf32>
    %251 = arith.addf %249, %250 : vector<8x288xf32>
    %252 = math.tanh %251 : vector<8x288xf32>
    %253 = arith.mulf %248, %252 : vector<8x288xf32>
    %254 = vector.extract_strided_slice %5 {offsets = [56, 0], sizes = [8, 1536], strides = [1, 1]} : vector<120x1536xf32> to vector<8x1536xf32>
    %255 = arith.truncf %253 : vector<8x288xf32> to vector<8x288xbf16>
    %cst_79 = arith.constant dense<0.000000e+00> : vector<8x1536xf32>
    %256 = tpu.matmul %255, %6, %cst_79 {dimension_numbers = #tpu.dot_dimension_numbers<[1], [0], [0], [1], [0, 0, 1, 1], [], []>} : vector<8x288xbf16>, vector<288x1536xbf16>, vector<8x1536xf32> -> vector<8x1536xf32>
    %257 = arith.addf %254, %256 : vector<8x1536xf32>
    %258 = vector.extract_strided_slice %257 {offsets = [0, 0], sizes = [8, 288], strides = [1, 1]} : vector<8x1536xf32> to vector<8x288xf32>
    %cst_80 = arith.constant 5.000000e-01 : f32
    %259 = vector.broadcast %cst_80 : f32 to vector<8x288xf32>
    %260 = arith.mulf %259, %258 : vector<8x288xf32>
    %261 = math.tanh %260 : vector<8x288xf32>
    %cst_81 = arith.constant 5.000000e-01 : f32
    %262 = vector.broadcast %cst_81 : f32 to vector<8x288xf32>
    %263 = arith.mulf %262, %261 : vector<8x288xf32>
    %cst_82 = arith.constant 5.000000e-01 : f32
    %264 = vector.broadcast %cst_82 : f32 to vector<8x288xf32>
    %265 = arith.addf %263, %264 : vector<8x288xf32>
    %266 = vector.extract_strided_slice %257 {offsets = [0, 384], sizes = [8, 288], strides = [1, 1]} : vector<8x1536xf32> to vector<8x288xf32>
    %cst_83 = arith.constant 5.000000e-01 : f32
    %267 = vector.broadcast %cst_83 : f32 to vector<8x288xf32>
    %268 = arith.mulf %267, %266 : vector<8x288xf32>
    %269 = math.tanh %268 : vector<8x288xf32>
    %cst_84 = arith.constant 5.000000e-01 : f32
    %270 = vector.broadcast %cst_84 : f32 to vector<8x288xf32>
    %271 = arith.mulf %270, %269 : vector<8x288xf32>
    %cst_85 = arith.constant 5.000000e-01 : f32
    %272 = vector.broadcast %cst_85 : f32 to vector<8x288xf32>
    %273 = arith.addf %271, %272 : vector<8x288xf32>
    %274 = vector.extract_strided_slice %257 {offsets = [0, 768], sizes = [8, 288], strides = [1, 1]} : vector<8x1536xf32> to vector<8x288xf32>
    %275 = math.tanh %274 : vector<8x288xf32>
    %276 = vector.extract_strided_slice %257 {offsets = [0, 1152], sizes = [8, 288], strides = [1, 1]} : vector<8x1536xf32> to vector<8x288xf32>
    %cst_86 = arith.constant 5.000000e-01 : f32
    %277 = vector.broadcast %cst_86 : f32 to vector<8x288xf32>
    %278 = arith.mulf %277, %276 : vector<8x288xf32>
    %279 = math.tanh %278 : vector<8x288xf32>
    %cst_87 = arith.constant 5.000000e-01 : f32
    %280 = vector.broadcast %cst_87 : f32 to vector<8x288xf32>
    %281 = arith.mulf %280, %279 : vector<8x288xf32>
    %cst_88 = arith.constant 5.000000e-01 : f32
    %282 = vector.broadcast %cst_88 : f32 to vector<8x288xf32>
    %283 = arith.addf %281, %282 : vector<8x288xf32>
    %284 = arith.mulf %273, %251 : vector<8x288xf32>
    %285 = arith.mulf %265, %275 : vector<8x288xf32>
    %286 = arith.addf %284, %285 : vector<8x288xf32>
    %287 = math.tanh %286 : vector<8x288xf32>
    %288 = arith.mulf %283, %287 : vector<8x288xf32>
    %289 = vector.extract_strided_slice %5 {offsets = [64, 0], sizes = [8, 1536], strides = [1, 1]} : vector<120x1536xf32> to vector<8x1536xf32>
    %290 = arith.truncf %288 : vector<8x288xf32> to vector<8x288xbf16>
    %cst_89 = arith.constant dense<0.000000e+00> : vector<8x1536xf32>
    %291 = tpu.matmul %290, %6, %cst_89 {dimension_numbers = #tpu.dot_dimension_numbers<[1], [0], [0], [1], [0, 0, 1, 1], [], []>} : vector<8x288xbf16>, vector<288x1536xbf16>, vector<8x1536xf32> -> vector<8x1536xf32>
    %292 = arith.addf %289, %291 : vector<8x1536xf32>
    %293 = vector.extract_strided_slice %292 {offsets = [0, 0], sizes = [8, 288], strides = [1, 1]} : vector<8x1536xf32> to vector<8x288xf32>
    %cst_90 = arith.constant 5.000000e-01 : f32
    %294 = vector.broadcast %cst_90 : f32 to vector<8x288xf32>
    %295 = arith.mulf %294, %293 : vector<8x288xf32>
    %296 = math.tanh %295 : vector<8x288xf32>
    %cst_91 = arith.constant 5.000000e-01 : f32
    %297 = vector.broadcast %cst_91 : f32 to vector<8x288xf32>
    %298 = arith.mulf %297, %296 : vector<8x288xf32>
    %cst_92 = arith.constant 5.000000e-01 : f32
    %299 = vector.broadcast %cst_92 : f32 to vector<8x288xf32>
    %300 = arith.addf %298, %299 : vector<8x288xf32>
    %301 = vector.extract_strided_slice %292 {offsets = [0, 384], sizes = [8, 288], strides = [1, 1]} : vector<8x1536xf32> to vector<8x288xf32>
    %cst_93 = arith.constant 5.000000e-01 : f32
    %302 = vector.broadcast %cst_93 : f32 to vector<8x288xf32>
    %303 = arith.mulf %302, %301 : vector<8x288xf32>
    %304 = math.tanh %303 : vector<8x288xf32>
    %cst_94 = arith.constant 5.000000e-01 : f32
    %305 = vector.broadcast %cst_94 : f32 to vector<8x288xf32>
    %306 = arith.mulf %305, %304 : vector<8x288xf32>
    %cst_95 = arith.constant 5.000000e-01 : f32
    %307 = vector.broadcast %cst_95 : f32 to vector<8x288xf32>
    %308 = arith.addf %306, %307 : vector<8x288xf32>
    %309 = vector.extract_strided_slice %292 {offsets = [0, 768], sizes = [8, 288], strides = [1, 1]} : vector<8x1536xf32> to vector<8x288xf32>
    %310 = math.tanh %309 : vector<8x288xf32>
    %311 = vector.extract_strided_slice %292 {offsets = [0, 1152], sizes = [8, 288], strides = [1, 1]} : vector<8x1536xf32> to vector<8x288xf32>
    %cst_96 = arith.constant 5.000000e-01 : f32
    %312 = vector.broadcast %cst_96 : f32 to vector<8x288xf32>
    %313 = arith.mulf %312, %311 : vector<8x288xf32>
    %314 = math.tanh %313 : vector<8x288xf32>
    %cst_97 = arith.constant 5.000000e-01 : f32
    %315 = vector.broadcast %cst_97 : f32 to vector<8x288xf32>
    %316 = arith.mulf %315, %314 : vector<8x288xf32>
    %cst_98 = arith.constant 5.000000e-01 : f32
    %317 = vector.broadcast %cst_98 : f32 to vector<8x288xf32>
    %318 = arith.addf %316, %317 : vector<8x288xf32>
    %319 = arith.mulf %308, %286 : vector<8x288xf32>
    %320 = arith.mulf %300, %310 : vector<8x288xf32>
    %321 = arith.addf %319, %320 : vector<8x288xf32>
    %322 = math.tanh %321 : vector<8x288xf32>
    %323 = arith.mulf %318, %322 : vector<8x288xf32>
    %324 = vector.extract_strided_slice %5 {offsets = [72, 0], sizes = [8, 1536], strides = [1, 1]} : vector<120x1536xf32> to vector<8x1536xf32>
    %325 = arith.truncf %323 : vector<8x288xf32> to vector<8x288xbf16>
    %cst_99 = arith.constant dense<0.000000e+00> : vector<8x1536xf32>
    %326 = tpu.matmul %325, %6, %cst_99 {dimension_numbers = #tpu.dot_dimension_numbers<[1], [0], [0], [1], [0, 0, 1, 1], [], []>} : vector<8x288xbf16>, vector<288x1536xbf16>, vector<8x1536xf32> -> vector<8x1536xf32>
    %327 = arith.addf %324, %326 : vector<8x1536xf32>
    %328 = vector.extract_strided_slice %327 {offsets = [0, 0], sizes = [8, 288], strides = [1, 1]} : vector<8x1536xf32> to vector<8x288xf32>
    %cst_100 = arith.constant 5.000000e-01 : f32
    %329 = vector.broadcast %cst_100 : f32 to vector<8x288xf32>
    %330 = arith.mulf %329, %328 : vector<8x288xf32>
    %331 = math.tanh %330 : vector<8x288xf32>
    %cst_101 = arith.constant 5.000000e-01 : f32
    %332 = vector.broadcast %cst_101 : f32 to vector<8x288xf32>
    %333 = arith.mulf %332, %331 : vector<8x288xf32>
    %cst_102 = arith.constant 5.000000e-01 : f32
    %334 = vector.broadcast %cst_102 : f32 to vector<8x288xf32>
    %335 = arith.addf %333, %334 : vector<8x288xf32>
    %336 = vector.extract_strided_slice %327 {offsets = [0, 384], sizes = [8, 288], strides = [1, 1]} : vector<8x1536xf32> to vector<8x288xf32>
    %cst_103 = arith.constant 5.000000e-01 : f32
    %337 = vector.broadcast %cst_103 : f32 to vector<8x288xf32>
    %338 = arith.mulf %337, %336 : vector<8x288xf32>
    %339 = math.tanh %338 : vector<8x288xf32>
    %cst_104 = arith.constant 5.000000e-01 : f32
    %340 = vector.broadcast %cst_104 : f32 to vector<8x288xf32>
    %341 = arith.mulf %340, %339 : vector<8x288xf32>
    %cst_105 = arith.constant 5.000000e-01 : f32
    %342 = vector.broadcast %cst_105 : f32 to vector<8x288xf32>
    %343 = arith.addf %341, %342 : vector<8x288xf32>
    %344 = vector.extract_strided_slice %327 {offsets = [0, 768], sizes = [8, 288], strides = [1, 1]} : vector<8x1536xf32> to vector<8x288xf32>
    %345 = math.tanh %344 : vector<8x288xf32>
    %346 = vector.extract_strided_slice %327 {offsets = [0, 1152], sizes = [8, 288], strides = [1, 1]} : vector<8x1536xf32> to vector<8x288xf32>
    %cst_106 = arith.constant 5.000000e-01 : f32
    %347 = vector.broadcast %cst_106 : f32 to vector<8x288xf32>
    %348 = arith.mulf %347, %346 : vector<8x288xf32>
    %349 = math.tanh %348 : vector<8x288xf32>
    %cst_107 = arith.constant 5.000000e-01 : f32
    %350 = vector.broadcast %cst_107 : f32 to vector<8x288xf32>
    %351 = arith.mulf %350, %349 : vector<8x288xf32>
    %cst_108 = arith.constant 5.000000e-01 : f32
    %352 = vector.broadcast %cst_108 : f32 to vector<8x288xf32>
    %353 = arith.addf %351, %352 : vector<8x288xf32>
    %354 = arith.mulf %343, %321 : vector<8x288xf32>
    %355 = arith.mulf %335, %345 : vector<8x288xf32>
    %356 = arith.addf %354, %355 : vector<8x288xf32>
    %357 = math.tanh %356 : vector<8x288xf32>
    %358 = arith.mulf %353, %357 : vector<8x288xf32>
    %359 = vector.extract_strided_slice %5 {offsets = [80, 0], sizes = [8, 1536], strides = [1, 1]} : vector<120x1536xf32> to vector<8x1536xf32>
    %360 = arith.truncf %358 : vector<8x288xf32> to vector<8x288xbf16>
    %cst_109 = arith.constant dense<0.000000e+00> : vector<8x1536xf32>
    %361 = tpu.matmul %360, %6, %cst_109 {dimension_numbers = #tpu.dot_dimension_numbers<[1], [0], [0], [1], [0, 0, 1, 1], [], []>} : vector<8x288xbf16>, vector<288x1536xbf16>, vector<8x1536xf32> -> vector<8x1536xf32>
    %362 = arith.addf %359, %361 : vector<8x1536xf32>
    %363 = vector.extract_strided_slice %362 {offsets = [0, 0], sizes = [8, 288], strides = [1, 1]} : vector<8x1536xf32> to vector<8x288xf32>
    %cst_110 = arith.constant 5.000000e-01 : f32
    %364 = vector.broadcast %cst_110 : f32 to vector<8x288xf32>
    %365 = arith.mulf %364, %363 : vector<8x288xf32>
    %366 = math.tanh %365 : vector<8x288xf32>
    %cst_111 = arith.constant 5.000000e-01 : f32
    %367 = vector.broadcast %cst_111 : f32 to vector<8x288xf32>
    %368 = arith.mulf %367, %366 : vector<8x288xf32>
    %cst_112 = arith.constant 5.000000e-01 : f32
    %369 = vector.broadcast %cst_112 : f32 to vector<8x288xf32>
    %370 = arith.addf %368, %369 : vector<8x288xf32>
    %371 = vector.extract_strided_slice %362 {offsets = [0, 384], sizes = [8, 288], strides = [1, 1]} : vector<8x1536xf32> to vector<8x288xf32>
    %cst_113 = arith.constant 5.000000e-01 : f32
    %372 = vector.broadcast %cst_113 : f32 to vector<8x288xf32>
    %373 = arith.mulf %372, %371 : vector<8x288xf32>
    %374 = math.tanh %373 : vector<8x288xf32>
    %cst_114 = arith.constant 5.000000e-01 : f32
    %375 = vector.broadcast %cst_114 : f32 to vector<8x288xf32>
    %376 = arith.mulf %375, %374 : vector<8x288xf32>
    %cst_115 = arith.constant 5.000000e-01 : f32
    %377 = vector.broadcast %cst_115 : f32 to vector<8x288xf32>
    %378 = arith.addf %376, %377 : vector<8x288xf32>
    %379 = vector.extract_strided_slice %362 {offsets = [0, 768], sizes = [8, 288], strides = [1, 1]} : vector<8x1536xf32> to vector<8x288xf32>
    %380 = math.tanh %379 : vector<8x288xf32>
    %381 = vector.extract_strided_slice %362 {offsets = [0, 1152], sizes = [8, 288], strides = [1, 1]} : vector<8x1536xf32> to vector<8x288xf32>
    %cst_116 = arith.constant 5.000000e-01 : f32
    %382 = vector.broadcast %cst_116 : f32 to vector<8x288xf32>
    %383 = arith.mulf %382, %381 : vector<8x288xf32>
    %384 = math.tanh %383 : vector<8x288xf32>
    %cst_117 = arith.constant 5.000000e-01 : f32
    %385 = vector.broadcast %cst_117 : f32 to vector<8x288xf32>
    %386 = arith.mulf %385, %384 : vector<8x288xf32>
    %cst_118 = arith.constant 5.000000e-01 : f32
    %387 = vector.broadcast %cst_118 : f32 to vector<8x288xf32>
    %388 = arith.addf %386, %387 : vector<8x288xf32>
    %389 = arith.mulf %378, %356 : vector<8x288xf32>
    %390 = arith.mulf %370, %380 : vector<8x288xf32>
    %391 = arith.addf %389, %390 : vector<8x288xf32>
    %392 = math.tanh %391 : vector<8x288xf32>
    %393 = arith.mulf %388, %392 : vector<8x288xf32>
    %394 = vector.extract_strided_slice %5 {offsets = [88, 0], sizes = [8, 1536], strides = [1, 1]} : vector<120x1536xf32> to vector<8x1536xf32>
    %395 = arith.truncf %393 : vector<8x288xf32> to vector<8x288xbf16>
    %cst_119 = arith.constant dense<0.000000e+00> : vector<8x1536xf32>
    %396 = tpu.matmul %395, %6, %cst_119 {dimension_numbers = #tpu.dot_dimension_numbers<[1], [0], [0], [1], [0, 0, 1, 1], [], []>} : vector<8x288xbf16>, vector<288x1536xbf16>, vector<8x1536xf32> -> vector<8x1536xf32>
    %397 = arith.addf %394, %396 : vector<8x1536xf32>
    %398 = vector.extract_strided_slice %397 {offsets = [0, 0], sizes = [8, 288], strides = [1, 1]} : vector<8x1536xf32> to vector<8x288xf32>
    %cst_120 = arith.constant 5.000000e-01 : f32
    %399 = vector.broadcast %cst_120 : f32 to vector<8x288xf32>
    %400 = arith.mulf %399, %398 : vector<8x288xf32>
    %401 = math.tanh %400 : vector<8x288xf32>
    %cst_121 = arith.constant 5.000000e-01 : f32
    %402 = vector.broadcast %cst_121 : f32 to vector<8x288xf32>
    %403 = arith.mulf %402, %401 : vector<8x288xf32>
    %cst_122 = arith.constant 5.000000e-01 : f32
    %404 = vector.broadcast %cst_122 : f32 to vector<8x288xf32>
    %405 = arith.addf %403, %404 : vector<8x288xf32>
    %406 = vector.extract_strided_slice %397 {offsets = [0, 384], sizes = [8, 288], strides = [1, 1]} : vector<8x1536xf32> to vector<8x288xf32>
    %cst_123 = arith.constant 5.000000e-01 : f32
    %407 = vector.broadcast %cst_123 : f32 to vector<8x288xf32>
    %408 = arith.mulf %407, %406 : vector<8x288xf32>
    %409 = math.tanh %408 : vector<8x288xf32>
    %cst_124 = arith.constant 5.000000e-01 : f32
    %410 = vector.broadcast %cst_124 : f32 to vector<8x288xf32>
    %411 = arith.mulf %410, %409 : vector<8x288xf32>
    %cst_125 = arith.constant 5.000000e-01 : f32
    %412 = vector.broadcast %cst_125 : f32 to vector<8x288xf32>
    %413 = arith.addf %411, %412 : vector<8x288xf32>
    %414 = vector.extract_strided_slice %397 {offsets = [0, 768], sizes = [8, 288], strides = [1, 1]} : vector<8x1536xf32> to vector<8x288xf32>
    %415 = math.tanh %414 : vector<8x288xf32>
    %416 = vector.extract_strided_slice %397 {offsets = [0, 1152], sizes = [8, 288], strides = [1, 1]} : vector<8x1536xf32> to vector<8x288xf32>
    %cst_126 = arith.constant 5.000000e-01 : f32
    %417 = vector.broadcast %cst_126 : f32 to vector<8x288xf32>
    %418 = arith.mulf %417, %416 : vector<8x288xf32>
    %419 = math.tanh %418 : vector<8x288xf32>
    %cst_127 = arith.constant 5.000000e-01 : f32
    %420 = vector.broadcast %cst_127 : f32 to vector<8x288xf32>
    %421 = arith.mulf %420, %419 : vector<8x288xf32>
    %cst_128 = arith.constant 5.000000e-01 : f32
    %422 = vector.broadcast %cst_128 : f32 to vector<8x288xf32>
    %423 = arith.addf %421, %422 : vector<8x288xf32>
    %424 = arith.mulf %413, %391 : vector<8x288xf32>
    %425 = arith.mulf %405, %415 : vector<8x288xf32>
    %426 = arith.addf %424, %425 : vector<8x288xf32>
    %427 = math.tanh %426 : vector<8x288xf32>
    %428 = arith.mulf %423, %427 : vector<8x288xf32>
    %429 = vector.extract_strided_slice %5 {offsets = [96, 0], sizes = [8, 1536], strides = [1, 1]} : vector<120x1536xf32> to vector<8x1536xf32>
    %430 = arith.truncf %428 : vector<8x288xf32> to vector<8x288xbf16>
    %cst_129 = arith.constant dense<0.000000e+00> : vector<8x1536xf32>
    %431 = tpu.matmul %430, %6, %cst_129 {dimension_numbers = #tpu.dot_dimension_numbers<[1], [0], [0], [1], [0, 0, 1, 1], [], []>} : vector<8x288xbf16>, vector<288x1536xbf16>, vector<8x1536xf32> -> vector<8x1536xf32>
    %432 = arith.addf %429, %431 : vector<8x1536xf32>
    %433 = vector.extract_strided_slice %432 {offsets = [0, 0], sizes = [8, 288], strides = [1, 1]} : vector<8x1536xf32> to vector<8x288xf32>
    %cst_130 = arith.constant 5.000000e-01 : f32
    %434 = vector.broadcast %cst_130 : f32 to vector<8x288xf32>
    %435 = arith.mulf %434, %433 : vector<8x288xf32>
    %436 = math.tanh %435 : vector<8x288xf32>
    %cst_131 = arith.constant 5.000000e-01 : f32
    %437 = vector.broadcast %cst_131 : f32 to vector<8x288xf32>
    %438 = arith.mulf %437, %436 : vector<8x288xf32>
    %cst_132 = arith.constant 5.000000e-01 : f32
    %439 = vector.broadcast %cst_132 : f32 to vector<8x288xf32>
    %440 = arith.addf %438, %439 : vector<8x288xf32>
    %441 = vector.extract_strided_slice %432 {offsets = [0, 384], sizes = [8, 288], strides = [1, 1]} : vector<8x1536xf32> to vector<8x288xf32>
    %cst_133 = arith.constant 5.000000e-01 : f32
    %442 = vector.broadcast %cst_133 : f32 to vector<8x288xf32>
    %443 = arith.mulf %442, %441 : vector<8x288xf32>
    %444 = math.tanh %443 : vector<8x288xf32>
    %cst_134 = arith.constant 5.000000e-01 : f32
    %445 = vector.broadcast %cst_134 : f32 to vector<8x288xf32>
    %446 = arith.mulf %445, %444 : vector<8x288xf32>
    %cst_135 = arith.constant 5.000000e-01 : f32
    %447 = vector.broadcast %cst_135 : f32 to vector<8x288xf32>
    %448 = arith.addf %446, %447 : vector<8x288xf32>
    %449 = vector.extract_strided_slice %432 {offsets = [0, 768], sizes = [8, 288], strides = [1, 1]} : vector<8x1536xf32> to vector<8x288xf32>
    %450 = math.tanh %449 : vector<8x288xf32>
    %451 = vector.extract_strided_slice %432 {offsets = [0, 1152], sizes = [8, 288], strides = [1, 1]} : vector<8x1536xf32> to vector<8x288xf32>
    %cst_136 = arith.constant 5.000000e-01 : f32
    %452 = vector.broadcast %cst_136 : f32 to vector<8x288xf32>
    %453 = arith.mulf %452, %451 : vector<8x288xf32>
    %454 = math.tanh %453 : vector<8x288xf32>
    %cst_137 = arith.constant 5.000000e-01 : f32
    %455 = vector.broadcast %cst_137 : f32 to vector<8x288xf32>
    %456 = arith.mulf %455, %454 : vector<8x288xf32>
    %cst_138 = arith.constant 5.000000e-01 : f32
    %457 = vector.broadcast %cst_138 : f32 to vector<8x288xf32>
    %458 = arith.addf %456, %457 : vector<8x288xf32>
    %459 = arith.mulf %448, %426 : vector<8x288xf32>
    %460 = arith.mulf %440, %450 : vector<8x288xf32>
    %461 = arith.addf %459, %460 : vector<8x288xf32>
    %462 = math.tanh %461 : vector<8x288xf32>
    %463 = arith.mulf %458, %462 : vector<8x288xf32>
    %464 = vector.extract_strided_slice %5 {offsets = [104, 0], sizes = [8, 1536], strides = [1, 1]} : vector<120x1536xf32> to vector<8x1536xf32>
    %465 = arith.truncf %463 : vector<8x288xf32> to vector<8x288xbf16>
    %cst_139 = arith.constant dense<0.000000e+00> : vector<8x1536xf32>
    %466 = tpu.matmul %465, %6, %cst_139 {dimension_numbers = #tpu.dot_dimension_numbers<[1], [0], [0], [1], [0, 0, 1, 1], [], []>} : vector<8x288xbf16>, vector<288x1536xbf16>, vector<8x1536xf32> -> vector<8x1536xf32>
    %467 = arith.addf %464, %466 : vector<8x1536xf32>
    %468 = vector.extract_strided_slice %467 {offsets = [0, 0], sizes = [8, 288], strides = [1, 1]} : vector<8x1536xf32> to vector<8x288xf32>
    %cst_140 = arith.constant 5.000000e-01 : f32
    %469 = vector.broadcast %cst_140 : f32 to vector<8x288xf32>
    %470 = arith.mulf %469, %468 : vector<8x288xf32>
    %471 = math.tanh %470 : vector<8x288xf32>
    %cst_141 = arith.constant 5.000000e-01 : f32
    %472 = vector.broadcast %cst_141 : f32 to vector<8x288xf32>
    %473 = arith.mulf %472, %471 : vector<8x288xf32>
    %cst_142 = arith.constant 5.000000e-01 : f32
    %474 = vector.broadcast %cst_142 : f32 to vector<8x288xf32>
    %475 = arith.addf %473, %474 : vector<8x288xf32>
    %476 = vector.extract_strided_slice %467 {offsets = [0, 384], sizes = [8, 288], strides = [1, 1]} : vector<8x1536xf32> to vector<8x288xf32>
    %cst_143 = arith.constant 5.000000e-01 : f32
    %477 = vector.broadcast %cst_143 : f32 to vector<8x288xf32>
    %478 = arith.mulf %477, %476 : vector<8x288xf32>
    %479 = math.tanh %478 : vector<8x288xf32>
    %cst_144 = arith.constant 5.000000e-01 : f32
    %480 = vector.broadcast %cst_144 : f32 to vector<8x288xf32>
    %481 = arith.mulf %480, %479 : vector<8x288xf32>
    %cst_145 = arith.constant 5.000000e-01 : f32
    %482 = vector.broadcast %cst_145 : f32 to vector<8x288xf32>
    %483 = arith.addf %481, %482 : vector<8x288xf32>
    %484 = vector.extract_strided_slice %467 {offsets = [0, 768], sizes = [8, 288], strides = [1, 1]} : vector<8x1536xf32> to vector<8x288xf32>
    %485 = math.tanh %484 : vector<8x288xf32>
    %486 = vector.extract_strided_slice %467 {offsets = [0, 1152], sizes = [8, 288], strides = [1, 1]} : vector<8x1536xf32> to vector<8x288xf32>
    %cst_146 = arith.constant 5.000000e-01 : f32
    %487 = vector.broadcast %cst_146 : f32 to vector<8x288xf32>
    %488 = arith.mulf %487, %486 : vector<8x288xf32>
    %489 = math.tanh %488 : vector<8x288xf32>
    %cst_147 = arith.constant 5.000000e-01 : f32
    %490 = vector.broadcast %cst_147 : f32 to vector<8x288xf32>
    %491 = arith.mulf %490, %489 : vector<8x288xf32>
    %cst_148 = arith.constant 5.000000e-01 : f32
    %492 = vector.broadcast %cst_148 : f32 to vector<8x288xf32>
    %493 = arith.addf %491, %492 : vector<8x288xf32>
    %494 = arith.mulf %483, %461 : vector<8x288xf32>
    %495 = arith.mulf %475, %485 : vector<8x288xf32>
    %496 = arith.addf %494, %495 : vector<8x288xf32>
    %497 = math.tanh %496 : vector<8x288xf32>
    %498 = arith.mulf %493, %497 : vector<8x288xf32>
    %499 = vector.extract_strided_slice %5 {offsets = [112, 0], sizes = [8, 1536], strides = [1, 1]} : vector<120x1536xf32> to vector<8x1536xf32>
    %500 = arith.truncf %498 : vector<8x288xf32> to vector<8x288xbf16>
    %cst_149 = arith.constant dense<0.000000e+00> : vector<8x1536xf32>
    %501 = tpu.matmul %500, %6, %cst_149 {dimension_numbers = #tpu.dot_dimension_numbers<[1], [0], [0], [1], [0, 0, 1, 1], [], []>} : vector<8x288xbf16>, vector<288x1536xbf16>, vector<8x1536xf32> -> vector<8x1536xf32>
    %502 = arith.addf %499, %501 : vector<8x1536xf32>
    %503 = vector.extract_strided_slice %502 {offsets = [0, 0], sizes = [8, 288], strides = [1, 1]} : vector<8x1536xf32> to vector<8x288xf32>
    %cst_150 = arith.constant 5.000000e-01 : f32
    %504 = vector.broadcast %cst_150 : f32 to vector<8x288xf32>
    %505 = arith.mulf %504, %503 : vector<8x288xf32>
    %506 = math.tanh %505 : vector<8x288xf32>
    %cst_151 = arith.constant 5.000000e-01 : f32
    %507 = vector.broadcast %cst_151 : f32 to vector<8x288xf32>
    %508 = arith.mulf %507, %506 : vector<8x288xf32>
    %cst_152 = arith.constant 5.000000e-01 : f32
    %509 = vector.broadcast %cst_152 : f32 to vector<8x288xf32>
    %510 = arith.addf %508, %509 : vector<8x288xf32>
    %511 = vector.extract_strided_slice %502 {offsets = [0, 384], sizes = [8, 288], strides = [1, 1]} : vector<8x1536xf32> to vector<8x288xf32>
    %cst_153 = arith.constant 5.000000e-01 : f32
    %512 = vector.broadcast %cst_153 : f32 to vector<8x288xf32>
    %513 = arith.mulf %512, %511 : vector<8x288xf32>
    %514 = math.tanh %513 : vector<8x288xf32>
    %cst_154 = arith.constant 5.000000e-01 : f32
    %515 = vector.broadcast %cst_154 : f32 to vector<8x288xf32>
    %516 = arith.mulf %515, %514 : vector<8x288xf32>
    %cst_155 = arith.constant 5.000000e-01 : f32
    %517 = vector.broadcast %cst_155 : f32 to vector<8x288xf32>
    %518 = arith.addf %516, %517 : vector<8x288xf32>
    %519 = vector.extract_strided_slice %502 {offsets = [0, 768], sizes = [8, 288], strides = [1, 1]} : vector<8x1536xf32> to vector<8x288xf32>
    %520 = math.tanh %519 : vector<8x288xf32>
    %521 = vector.extract_strided_slice %502 {offsets = [0, 1152], sizes = [8, 288], strides = [1, 1]} : vector<8x1536xf32> to vector<8x288xf32>
    %cst_156 = arith.constant 5.000000e-01 : f32
    %522 = vector.broadcast %cst_156 : f32 to vector<8x288xf32>
    %523 = arith.mulf %522, %521 : vector<8x288xf32>
    %524 = math.tanh %523 : vector<8x288xf32>
    %cst_157 = arith.constant 5.000000e-01 : f32
    %525 = vector.broadcast %cst_157 : f32 to vector<8x288xf32>
    %526 = arith.mulf %525, %524 : vector<8x288xf32>
    %cst_158 = arith.constant 5.000000e-01 : f32
    %527 = vector.broadcast %cst_158 : f32 to vector<8x288xf32>
    %528 = arith.addf %526, %527 : vector<8x288xf32>
    %529 = arith.mulf %518, %496 : vector<8x288xf32>
    %530 = arith.mulf %510, %520 : vector<8x288xf32>
    %531 = arith.addf %529, %530 : vector<8x288xf32>
    %532 = math.tanh %531 : vector<8x288xf32>
    %533 = arith.mulf %528, %532 : vector<8x288xf32>
    %534 = arith.truncf %533 : vector<8x288xf32> to vector<8x288xbf16>
    %c0_159 = arith.constant 0 : index
    %c0_160 = arith.constant 0 : index
    %535 = vector.load %arg4[%c0_159, %c0_160] : memref<288x84xbf16, #tpu.memory_space<vmem>>, vector<288x84xbf16>
    %cst_161 = arith.constant dense<0.000000e+00> : vector<8x84xf32>
    %536 = tpu.matmul %534, %535, %cst_161 {dimension_numbers = #tpu.dot_dimension_numbers<[1], [0], [0], [1], [0, 0, 1, 1], [], []>} : vector<8x288xbf16>, vector<288x84xbf16>, vector<8x84xf32> -> vector<8x84xf32>
    %c0_162 = arith.constant 0 : index
    %c0_163 = arith.constant 0 : index
    %537 = vector.load %arg5[%c0_162, %c0_163] : memref<1x84xf32, #tpu.memory_space<vmem>>, vector<1x84xf32>
    %538 = vector.broadcast %537 : vector<1x84xf32> to vector<8x84xf32>
    %539 = arith.addf %536, %538 : vector<8x84xf32>
    %cst_164 = arith.constant 0.000000e+00 : f32
    %540 = vector.broadcast %cst_164 : f32 to vector<8x84xf32>
    %541 = arith.maximumf %539, %540 : vector<8x84xf32>
    %542 = arith.truncf %541 : vector<8x84xf32> to vector<8x84xbf16>
    %c0_165 = arith.constant 0 : index
    %c0_166 = arith.constant 0 : index
    %543 = vector.load %arg6[%c0_165, %c0_166] : memref<84x2xbf16, #tpu.memory_space<vmem>>, vector<84x2xbf16>
    %cst_167 = arith.constant dense<0.000000e+00> : vector<8x2xf32>
    %544 = tpu.matmul %542, %543, %cst_167 {dimension_numbers = #tpu.dot_dimension_numbers<[1], [0], [0], [1], [0, 0, 1, 1], [], []>} : vector<8x84xbf16>, vector<84x2xbf16>, vector<8x2xf32> -> vector<8x2xf32>
    %c0_168 = arith.constant 0 : index
    %c0_169 = arith.constant 0 : index
    %545 = vector.load %arg7[%c0_168, %c0_169] : memref<1x2xf32, #tpu.memory_space<vmem>>, vector<1x2xf32>
    %546 = vector.broadcast %545 : vector<1x2xf32> to vector<8x2xf32>
    %547 = arith.addf %544, %546 : vector<8x2xf32>
    %c0_170 = arith.constant 0 : index
    %c0_171 = arith.constant 0 : index
    %548 = vector.load %arg8[%c0_170, %c0_171] : memref<8x2xf32, #tpu.memory_space<vmem>>, vector<8x2xf32>
    tpu.vector_store %arg8[%c0_170, %c0_171], %547 {strides = array<i32>} : memref<8x2xf32, #tpu.memory_space<vmem>>, vector<8x2xf32>,
    return
  }
}

</mosaic_0001>

<llo_original>
// kernel: dir_lstm_forward.1
$region0: #{dir_lstm_forward.1}
  #allocation0 [shape = 'u32[]', space=smem, size = 0x4, offset = 0x4, fixed_abs, tag = 'smem constant byte address 0x4 - core index']
  #allocation1 [shape = 'u32[144,128]{1,0:T(1,128)}', space=vmem, size = 0x12000, scoped, tag = 'internal scratch']
  %s0 = inlined_call_operand.vmem [shape: bf16[120,8], index: 0, kind: input, shape index: {}]
  %s1 = inlined_call_operand.vmem [shape: bf16[8,1536], index: 1, kind: input, shape index: {}]
  %s2 = inlined_call_operand.vmem [shape: f32[1,1536], index: 2, kind: input, shape index: {}]
  %s3 = inlined_call_operand.hbm [shape: bf16[288,1536], index: 3, kind: input, shape index: {}]
  %s4 = inlined_call_operand.vmem [shape: bf16[288,84], index: 4, kind: input, shape index: {}]
  %s5 = inlined_call_operand.vmem [shape: f32[1,84], index: 5, kind: input, shape index: {}]
  %s6 = inlined_call_operand.vmem [shape: bf16[84,2], index: 6, kind: input, shape index: {}]
  %s7 = inlined_call_operand.vmem [shape: f32[1,2], index: 7, kind: input, shape index: {}]
  %s8 = inlined_call_operand.vmem [shape: f32[8,2], index: 8, kind: output, shape index: {}]
  %s9 = sld [smem:[#allocation0]]
  $region46: #{dir_lstm_forward.1} parent=0
    _
  %s11 = ssub.s32 1, %s9
  %s12 = scalar_select 0, %s11, %s9
  $region1: #{dir_lstm_forward.1} parent=0
    #allocation2 [shape = 'u8[884736]{0}', space=vmem, size = 0xd8000, scoped, tag = 'input window, operand 3, single buffered']
    #allocation3 [shape = 's32[1]{0}', space=sflag, size = 0x4, scoped, tag = 'scoped memory for dir_lstm_forward.1']
    %13 = vsyncpa [#allocation3], 0
    // Predicated region
    $region2: #{dir_lstm_forward.1} parent=1 // pred_check
      _
    $region3: #{dir_lstm_forward.1} parent=1 // pred_check_branch
      %15 = sbr.rel (0) target = $region5
    $region4: #{dir_lstm_forward.1} parent=1 // pred_region
      _
    $region5: #{dir_lstm_forward.1} parent=1 // pred_fallthru
      _
    // Predicated region
    $region6: #{dir_lstm_forward.1} parent=1 // pred_check
      _
    $region7: #{dir_lstm_forward.1} parent=1 // pred_check_branch
      %17 = sbr.rel (0) target = $region9
    $region8: #{dir_lstm_forward.1} parent=1 // pred_region
      _
    $region9: #{dir_lstm_forward.1} parent=1 // pred_fallthru
      _
    // Predicated region
    $region10: #{dir_lstm_forward.1} parent=1 // pred_check
      _
    $region11: #{dir_lstm_forward.1} parent=1 // pred_check_branch
      %19 = sbr.rel (0) target = $region13
    $region12: #{dir_lstm_forward.1} parent=1 // pred_region
      _
    $region13: #{dir_lstm_forward.1} parent=1 // pred_fallthru
      _
    // Predicated region
    $region14: #{dir_lstm_forward.1} parent=1 // pred_check
      _
    $region15: #{dir_lstm_forward.1} parent=1 // pred_check_branch
      %21 = sbr.rel (0) target = $region17
    $region16: #{dir_lstm_forward.1} parent=1 // pred_region
      %s23 = ssub.s32 27648, 27648
      %24 = vsyncadd [#allocation3], %s23
      %s25 = sshll.u32 [#allocation2], 4
      %s26 = int_to_ptr.vmem [resolvable:$true] %s25
      %31 = dma.hbm_to_vmem [thread:$0]  %s3, 27648, %s26, [#allocation3], 768, 768, 48
    $region17: #{dir_lstm_forward.1} parent=1 // pred_fallthru
      _
    // Predicated region
    $region18: #{dir_lstm_forward.1} parent=1 // pred_check
      _
    $region19: #{dir_lstm_forward.1} parent=1 // pred_check_branch
      %33 = sbr.rel (0) target = $region21
    $region20: #{dir_lstm_forward.1} parent=1 // pred_region
      _
    $region21: #{dir_lstm_forward.1} parent=1 // pred_fallthru
      _
    // Predicated region
    $region22: #{dir_lstm_forward.1} parent=1 // pred_check
      _
    $region23: #{dir_lstm_forward.1} parent=1 // pred_check_branch
      %35 = sbr.rel (0) target = $region25
    $region24: #{dir_lstm_forward.1} parent=1 // pred_region
      _
    $region25: #{dir_lstm_forward.1} parent=1 // pred_fallthru
      _
    // Predicated region
    $region26: #{dir_lstm_forward.1} parent=1 // pred_check
      _
    $region27: #{dir_lstm_forward.1} parent=1 // pred_check_branch
      %37 = sbr.rel (0) target = $region29
    $region28: #{dir_lstm_forward.1} parent=1 // pred_region
      _
    $region29: #{dir_lstm_forward.1} parent=1 // pred_fallthru
      _
    // Predicated region
    $region30: #{dir_lstm_forward.1} parent=1 // pred_check
      _
    $region31: #{dir_lstm_forward.1} parent=1 // pred_check_branch
      %39 = sbr.rel (0) target = $region33
    $region32: #{dir_lstm_forward.1} parent=1 // pred_region
      _
    $region33: #{dir_lstm_forward.1} parent=1 // pred_fallthru
      _
    // Predicated region
    $region34: #{dir_lstm_forward.1} parent=1 // pred_check
      _
    $region35: #{dir_lstm_forward.1} parent=1 // pred_check_branch
      %41 = sbr.rel (0) target = $region37
    $region36: #{dir_lstm_forward.1} parent=1 // pred_region
      %42 = dma.done [#allocation3], 27648
    $region37: #{dir_lstm_forward.1} parent=1 // pred_fallthru
      _
    %v44 = vld [vmem:[%s0] sm:$0xf]
    %v45 = vld [vmem:[%s0 + $0x4] sm:$0xf]
    %v46 = vld [vmem:[%s0 + $0x8] sm:$0xf]
    %v47 = vld [vmem:[%s0 + $0xc] sm:$0xf]
    %v48 = vld [vmem:[%s0 + $0x10] sm:$0xf]
    %v49 = vld [vmem:[%s0 + $0x14] sm:$0xf]
    %v50 = vld [vmem:[%s0 + $0x18] sm:$0xf]
    %v51 = vld [vmem:[%s0 + $0x1c] sm:$0xf]
    %v52 = vld [vmem:[%s0 + $0x20] sm:$0xf]
    %v53 = vld [vmem:[%s0 + $0x24] sm:$0xf]
    %v54 = vld [vmem:[%s0 + $0x28] sm:$0xf]
    %v55 = vld [vmem:[%s0 + $0x2c] sm:$0xf]
    %v56 = vld [vmem:[%s0 + $0x30] sm:$0xf]
    %v57 = vld [vmem:[%s0 + $0x34] sm:$0xf]
    %v58 = vld [vmem:[%s0 + $0x38] sm:$0xf]
    %v59 = vld [vmem:[%s1] sm:$0xff]
    %v60 = vld [vmem:[%s1 + $0x8] sm:$0xff]
    %v61 = vld [vmem:[%s1 + $0x10] sm:$0xff]
    %v62 = vld [vmem:[%s1 + $0x18] sm:$0xff]
    %v63 = vld [vmem:[%s1 + $0x20] sm:$0xff]
    %v64 = vld [vmem:[%s1 + $0x28] sm:$0xff]
    %v65 = vld [vmem:[%s2] sm:$0xff]
    %v66 = vld [vmem:[%s2 + $0x8] sm:$0xf]
    %v69 = vlaneseq
    %v70 = vshrl.u32 %v69, 7
    %v71 = vsub.s32 0, %v70
    %v72 = vrot.slane %v65, %v71
    %v73 = vlaneseq
    %v74 = vshrl.u32 %v73, 7
    %v75 = vsub.s32 1, %v74
    %v76 = vrot.slane %v65, %v75
    %v77 = vlaneseq
    %v78 = vshrl.u32 %v77, 7
    %v79 = vsub.s32 2, %v78
    %v80 = vrot.slane %v65, %v79
    %v81 = vlaneseq
    %v82 = vshrl.u32 %v81, 7
    %v83 = vsub.s32 3, %v82
    %v84 = vrot.slane %v65, %v83
    %v85 = vlaneseq
    %v86 = vshrl.u32 %v85, 7
    %v87 = vsub.s32 4, %v86
    %v88 = vrot.slane %v65, %v87
    %v89 = vlaneseq
    %v90 = vshrl.u32 %v89, 7
    %v91 = vsub.s32 5, %v90
    %v92 = vrot.slane %v65, %v91
    %v93 = vlaneseq
    %v94 = vshrl.u32 %v93, 7
    %v95 = vsub.s32 6, %v94
    %v96 = vrot.slane %v65, %v95
    %v97 = vlaneseq
    %v98 = vshrl.u32 %v97, 7
    %v99 = vsub.s32 7, %v98
    %v100 = vrot.slane %v65, %v99
    %v101 = vlaneseq
    %v102 = vshrl.u32 %v101, 7
    %v103 = vsub.s32 0, %v102
    %v104 = vrot.slane %v66, %v103
    %v105 = vlaneseq
    %v106 = vshrl.u32 %v105, 7
    %v107 = vsub.s32 1, %v106
    %v108 = vrot.slane %v66, %v107
    %v109 = vlaneseq
    %v110 = vshrl.u32 %v109, 7
    %v111 = vsub.s32 2, %v110
    %v112 = vrot.slane %v66, %v111
    %v113 = vlaneseq
    %v114 = vshrl.u32 %v113, 7
    %v115 = vsub.s32 3, %v114
    %v116 = vrot.slane %v66, %v115
    %v144 = vunpack.c.l.b16 %v44
    %v145 = vunpack.c.l.b16 %v45
    %v146 = vunpack.c.l.b16 %v46
    %v147 = vunpack.c.l.b16 %v47
    %v148 = vunpack.c.l.b16 %v48
    %v149 = vunpack.c.l.b16 %v49
    %v150 = vunpack.c.l.b16 %v50
    %v151 = vunpack.c.l.b16 %v51
    %v152 = vunpack.c.l.b16 %v52
    %v153 = vunpack.c.l.b16 %v53
    %v154 = vunpack.c.l.b16 %v54
    %v155 = vunpack.c.l.b16 %v55
    %v156 = vunpack.c.l.b16 %v56
    %v157 = vunpack.c.l.b16 %v57
    %v158 = vunpack.c.l.b16 %v58
    %v159 = vpack.c.b16 %v145, %v144
    %v160 = vpack.c.b16 %v147, %v146
    %v161 = vpack.c.b16 %v149, %v148
    %v162 = vpack.c.b16 %v151, %v150
    %v163 = vpack.c.b16 %v153, %v152
    %v164 = vpack.c.b16 %v155, %v154
    %v165 = vpack.c.b16 %v157, %v156
    %v166 = vpack.c.b16 %v158, %v158
    %v173 = vunpack.c.l.b16 %v59
    %v174 = vunpack.c.h.b16 %v59
    %v175 = vunpack.c.l.b16 %v60
    %v176 = vunpack.c.h.b16 %v60
    %v177 = vunpack.c.l.b16 %v61
    %v178 = vunpack.c.h.b16 %v61
    %v179 = vunpack.c.l.b16 %v62
    %v180 = vunpack.c.h.b16 %v62
    %v181 = vunpack.c.l.b16 %v63
    %v182 = vunpack.c.h.b16 %v63
    %v183 = vunpack.c.l.b16 %v64
    %v184 = vunpack.c.h.b16 %v64
    %v185 = vpack.c.b16 %v173, %v173
    %v186 = vpack.c.b16 %v174, %v174
    %v187 = vpack.c.b16 %v175, %v175
    %v188 = vpack.c.b16 %v176, %v176
    %v189 = vpack.c.b16 %v177, %v177
    %v190 = vpack.c.b16 %v178, %v178
    %v191 = vpack.c.b16 %v179, %v179
    %v192 = vpack.c.b16 %v180, %v180
    %v193 = vpack.c.b16 %v181, %v181
    %v194 = vpack.c.b16 %v182, %v182
    %v195 = vpack.c.b16 %v183, %v183
    %v196 = vpack.c.b16 %v184, %v184
    %vm197 = vcmask 64512
    %v199 = vsel %vm197, %v159, 0
    %v202 = vsel %vm197, %v160, 0
    %v205 = vsel %vm197, %v161, 0
    %v208 = vsel %vm197, %v162, 0
    %v211 = vsel %vm197, %v163, 0
    %v214 = vsel %vm197, %v164, 0
    %v217 = vsel %vm197, %v165, 0
    %v220 = vsel %vm197, %v166, 0
    %vm222 = vcmask 1043456
    %v224 = vsel %vm222, %v185, 0
    %v227 = vsel %vm222, %v186, 0
    %v230 = vsel %vm222, %v187, 0
    %v233 = vsel %vm222, %v188, 0
    %v236 = vsel %vm222, %v189, 0
    %v239 = vsel %vm222, %v190, 0
    %v242 = vsel %vm222, %v191, 0
    %v245 = vsel %vm222, %v192, 0
    %v248 = vsel %vm222, %v193, 0
    %v251 = vsel %vm222, %v194, 0
    %v254 = vsel %vm222, %v195, 0
    %v257 = vsel %vm222, %v196, 0
    %259 = vmatprep.subr.bf16.mxu0 %v227
    %260 = vmatpush1.bf16.msra.mxu0 %v224
    %261 = vmatprep.subr.bf16.mxu0 0
    %262 = vmatpush1.bf16.msra.mxu0 0
    %263 = vmatprep.subr.bf16.mxu0 0
    %264 = vmatpush1.bf16.msra.mxu0 0
    %265 = vmatprep.subr.bf16.mxu0 0
    %266 = vmatpush1.bf16.msra.mxu0 0
    %267 = vmatprep.subr.bf16.mxu0 0
    %268 = vmatpush1.bf16.msra.mxu0 0
    %269 = vmatprep.subr.bf16.mxu0 0
    %270 = vmatpush1.bf16.msra.mxu0 0
    %271 = vmatprep.subr.bf16.mxu0 0
    %272 = vmatpush1.bf16.msra.mxu0 0
    %273 = vmatprep.subr.bf16.mxu0 0
    %274 = vmatpush1.bf16.msra.mxu0 0
    %275 = vmatprep.subr.bf16.mxu0 0
    %276 = vmatpush1.bf16.msra.mxu0 0
    %277 = vmatprep.subr.bf16.mxu0 0
    %278 = vmatpush1.bf16.msra.mxu0 0
    %279 = vmatprep.subr.bf16.mxu0 0
    %280 = vmatpush1.bf16.msra.mxu0 0
    %281 = vmatprep.subr.bf16.mxu0 0
    %282 = vmatpush1.bf16.msra.mxu0 0
    %283 = vmatprep.subr.bf16.mxu0 0
    %284 = vmatpush1.bf16.msra.mxu0 0
    %285 = vmatprep.subr.bf16.mxu0 0
    %286 = vmatpush1.bf16.msra.mxu0 0
    %287 = vmatprep.subr.bf16.mxu0 0
    %288 = vmatpush1.bf16.msra.mxu0 0
    %289 = vmatprep.subr.bf16.mxu0 0
    %290 = vmatpush1.bf16.msra.mxu0 0
    %291 = vmatprep.mubr.bf16.mxu0 0
    %292 = vmatmul.mubr.bf16.gmra.mrb[0].mxu0 %v199
    %v293 = vpop.f32.mrb[0].mxu0
    %v294 = vadd.f32 %v72, %v293
    %v295 = vpop.f32.mrb[0].mxu0
    %v296 = vadd.f32 %v76, %v295
    %v297 = vpop.f32.mrb[0].mxu0
    %v298 = vadd.f32 %v72, %v297
    %v299 = vpop.f32.mrb[0].mxu0
    %v300 = vadd.f32 %v76, %v299
    %301 = vmatprep.mubr.bf16.mxu0 0
    %302 = vmatmul.mubr.bf16.gmra.mrb[0].mxu0 %v202
    %v303 = vpop.f32.mrb[0].mxu0
    %v304 = vadd.f32 %v72, %v303
    %v305 = vpop.f32.mrb[0].mxu0
    %v306 = vadd.f32 %v76, %v305
    %v307 = vpop.f32.mrb[0].mxu0
    %v308 = vadd.f32 %v72, %v307
    %v309 = vpop.f32.mrb[0].mxu0
    %v310 = vadd.f32 %v76, %v309
    %311 = vmatprep.mubr.bf16.mxu0 0
    %312 = vmatmul.mubr.bf16.gmra.mrb[0].mxu0 %v205
    %v313 = vpop.f32.mrb[0].mxu0
    %v314 = vadd.f32 %v72, %v313
    %v315 = vpop.f32.mrb[0].mxu0
    %v316 = vadd.f32 %v76, %v315
    %v317 = vpop.f32.mrb[0].mxu0
    %v318 = vadd.f32 %v72, %v317
    %v319 = vpop.f32.mrb[0].mxu0
    %v320 = vadd.f32 %v76, %v319
    %321 = vmatprep.mubr.bf16.mxu0 0
    %322 = vmatmul.mubr.bf16.gmra.mrb[0].mxu0 %v208
    %v323 = vpop.f32.mrb[0].mxu0
    %v324 = vadd.f32 %v72, %v323
    %v325 = vpop.f32.mrb[0].mxu0
    %v326 = vadd.f32 %v76, %v325
    %v327 = vpop.f32.mrb[0].mxu0
    %v328 = vadd.f32 %v72, %v327
    %v329 = vpop.f32.mrb[0].mxu0
    %v330 = vadd.f32 %v76, %v329
    %331 = vmatprep.mubr.bf16.mxu0 0
    %332 = vmatmul.mubr.bf16.gmra.mrb[0].mxu0 %v211
    %v333 = vpop.f32.mrb[0].mxu0
    %v334 = vadd.f32 %v72, %v333
    %v335 = vpop.f32.mrb[0].mxu0
    %v336 = vadd.f32 %v76, %v335
    %v337 = vpop.f32.mrb[0].mxu0
    %v338 = vadd.f32 %v72, %v337
    %v339 = vpop.f32.mrb[0].mxu0
    %v340 = vadd.f32 %v76, %v339
    %341 = vmatprep.mubr.bf16.mxu0 0
    %342 = vmatmul.mubr.bf16.gmra.mrb[0].mxu0 %v214
    %v343 = vpop.f32.mrb[0].mxu0
    %v344 = vadd.f32 %v72, %v343
    %v345 = vpop.f32.mrb[0].mxu0
    %v346 = vadd.f32 %v76, %v345
    %v347 = vpop.f32.mrb[0].mxu0
    %v348 = vadd.f32 %v72, %v347
    %v349 = vpop.f32.mrb[0].mxu0
    %v350 = vadd.f32 %v76, %v349
    %351 = vmatprep.mubr.bf16.mxu0 0
    %352 = vmatmul.mubr.bf16.gmra.mrb[0].mxu0 %v217
    %v353 = vpop.f32.mrb[0].mxu0
    %v354 = vadd.f32 %v72, %v353
    %v355 = vpop.f32.mrb[0].mxu0
    %v356 = vadd.f32 %v76, %v355
    %v357 = vpop.f32.mrb[0].mxu0
    %v358 = vadd.f32 %v72, %v357
    %v359 = vpop.f32.mrb[0].mxu0
    %v360 = vadd.f32 %v76, %v359
    %361 = vmatprep.mubr.bf16.mxu0 0
    %362 = vmatmul.mubr.bf16.gmra.mrb[0].mxu0 %v220
    %v363 = vpop.f32.mrb[0].mxu0
    %v364 = vadd.f32 %v72, %v363
    %v365 = vpop.f32.mrb[0].mxu0
    %v366 = vadd.f32 %v76, %v365
    %v367 = vpop.f32.mrb[0].mxu0
    %v368 = vpop.f32.mrb[0].mxu0
    %369 = vdwg.mxu0
    %370 = vmatprep.subr.bf16.mxu0 %v233
    %371 = vmatpush1.bf16.msra.mxu0 %v230
    %372 = vmatprep.subr.bf16.mxu0 0
    %373 = vmatpush1.bf16.msra.mxu0 0
    %374 = vmatprep.subr.bf16.mxu0 0
    %375 = vmatpush1.bf16.msra.mxu0 0
    %376 = vmatprep.subr.bf16.mxu0 0
    %377 = vmatpush1.bf16.msra.mxu0 0
    %378 = vmatprep.subr.bf16.mxu0 0
    %379 = vmatpush1.bf16.msra.mxu0 0
    %380 = vmatprep.subr.bf16.mxu0 0
    %381 = vmatpush1.bf16.msra.mxu0 0
    %382 = vmatprep.subr.bf16.mxu0 0
    %383 = vmatpush1.bf16.msra.mxu0 0
    %384 = vmatprep.subr.bf16.mxu0 0
    %385 = vmatpush1.bf16.msra.mxu0 0
    %386 = vmatprep.subr.bf16.mxu0 0
    %387 = vmatpush1.bf16.msra.mxu0 0
    %388 = vmatprep.subr.bf16.mxu0 0
    %389 = vmatpush1.bf16.msra.mxu0 0
    %390 = vmatprep.subr.bf16.mxu0 0
    %391 = vmatpush1.bf16.msra.mxu0 0
    %392 = vmatprep.subr.bf16.mxu0 0
    %393 = vmatpush1.bf16.msra.mxu0 0
    %394 = vmatprep.subr.bf16.mxu0 0
    %395 = vmatpush1.bf16.msra.mxu0 0
    %396 = vmatprep.subr.bf16.mxu0 0
    %397 = vmatpush1.bf16.msra.mxu0 0
    %398 = vmatprep.subr.bf16.mxu0 0
    %399 = vmatpush1.bf16.msra.mxu0 0
    %400 = vmatprep.subr.bf16.mxu0 0
    %401 = vmatpush1.bf16.msra.mxu0 0
    %402 = vmatprep.mubr.bf16.mxu0 0
    %403 = vmatmul.mubr.bf16.gmra.mrb[0].mxu0 %v199
    %v404 = vpop.f32.mrb[0].mxu0
    %v405 = vadd.f32 %v80, %v404
    %v406 = vpop.f32.mrb[0].mxu0
    %v407 = vadd.f32 %v84, %v406
    %v408 = vpop.f32.mrb[0].mxu0
    %v409 = vadd.f32 %v80, %v408
    %v410 = vpop.f32.mrb[0].mxu0
    %v411 = vadd.f32 %v84, %v410
    %412 = vmatprep.mubr.bf16.mxu0 0
    %413 = vmatmul.mubr.bf16.gmra.mrb[0].mxu0 %v202
    %v414 = vpop.f32.mrb[0].mxu0
    %v415 = vadd.f32 %v80, %v414
    %v416 = vpop.f32.mrb[0].mxu0
    %v417 = vadd.f32 %v84, %v416
    %v418 = vpop.f32.mrb[0].mxu0
    %v419 = vadd.f32 %v80, %v418
    %v420 = vpop.f32.mrb[0].mxu0
    %v421 = vadd.f32 %v84, %v420
    %422 = vmatprep.mubr.bf16.mxu0 0
    %423 = vmatmul.mubr.bf16.gmra.mrb[0].mxu0 %v205
    %v424 = vpop.f32.mrb[0].mxu0
    %v425 = vadd.f32 %v80, %v424
    %v426 = vpop.f32.mrb[0].mxu0
    %v427 = vadd.f32 %v84, %v426
    %v428 = vpop.f32.mrb[0].mxu0
    %v429 = vadd.f32 %v80, %v428
    %v430 = vpop.f32.mrb[0].mxu0
    %v431 = vadd.f32 %v84, %v430
    %432 = vmatprep.mubr.bf16.mxu0 0
    %433 = vmatmul.mubr.bf16.gmra.mrb[0].mxu0 %v208
    %v434 = vpop.f32.mrb[0].mxu0
    %v435 = vadd.f32 %v80, %v434
    %v436 = vpop.f32.mrb[0].mxu0
    %v437 = vadd.f32 %v84, %v436
    %v438 = vpop.f32.mrb[0].mxu0
    %v439 = vadd.f32 %v80, %v438
    %v440 = vpop.f32.mrb[0].mxu0
    %v441 = vadd.f32 %v84, %v440
    %442 = vmatprep.mubr.bf16.mxu0 0
    %443 = vmatmul.mubr.bf16.gmra.mrb[0].mxu0 %v211
    %v444 = vpop.f32.mrb[0].mxu0
    %v445 = vadd.f32 %v80, %v444
    %v446 = vpop.f32.mrb[0].mxu0
    %v447 = vadd.f32 %v84, %v446
    %v448 = vpop.f32.mrb[0].mxu0
    %v449 = vadd.f32 %v80, %v448
    %v450 = vpop.f32.mrb[0].mxu0
    %v451 = vadd.f32 %v84, %v450
    %452 = vmatprep.mubr.bf16.mxu0 0
    %453 = vmatmul.mubr.bf16.gmra.mrb[0].mxu0 %v214
    %v454 = vpop.f32.mrb[0].mxu0
    %v455 = vadd.f32 %v80, %v454
    %v456 = vpop.f32.mrb[0].mxu0
    %v457 = vadd.f32 %v84, %v456
    %v458 = vpop.f32.mrb[0].mxu0
    %v459 = vadd.f32 %v80, %v458
    %v460 = vpop.f32.mrb[0].mxu0
    %v461 = vadd.f32 %v84, %v460
    %462 = vmatprep.mubr.bf16.mxu0 0
    %463 = vmatmul.mubr.bf16.gmra.mrb[0].mxu0 %v217
    %v464 = vpop.f32.mrb[0].mxu0
    %v465 = vadd.f32 %v80, %v464
    %v466 = vpop.f32.mrb[0].mxu0
    %v467 = vadd.f32 %v84, %v466
    %v468 = vpop.f32.mrb[0].mxu0
    %v469 = vadd.f32 %v80, %v468
    %v470 = vpop.f32.mrb[0].mxu0
    %v471 = vadd.f32 %v84, %v470
    %472 = vmatprep.mubr.bf16.mxu0 0
    %473 = vmatmul.mubr.bf16.gmra.mrb[0].mxu0 %v220
    %v474 = vpop.f32.mrb[0].mxu0
    %v475 = vadd.f32 %v80, %v474
    %v476 = vpop.f32.mrb[0].mxu0
    %v477 = vadd.f32 %v84, %v476
    %v478 = vpop.f32.mrb[0].mxu0
    %v479 = vpop.f32.mrb[0].mxu0
    %480 = vdwg.mxu0
    %481 = vmatprep.subr.bf16.mxu0 %v239
    %482 = vmatpush1.bf16.msra.mxu0 %v236
    %483 = vmatprep.subr.bf16.mxu0 0
    %484 = vmatpush1.bf16.msra.mxu0 0
    %485 = vmatprep.subr.bf16.mxu0 0
    %486 = vmatpush1.bf16.msra.mxu0 0
    %487 = vmatprep.subr.bf16.mxu0 0
    %488 = vmatpush1.bf16.msra.mxu0 0
    %489 = vmatprep.subr.bf16.mxu0 0
    %490 = vmatpush1.bf16.msra.mxu0 0
    %491 = vmatprep.subr.bf16.mxu0 0
    %492 = vmatpush1.bf16.msra.mxu0 0
    %493 = vmatprep.subr.bf16.mxu0 0
    %494 = vmatpush1.bf16.msra.mxu0 0
    %495 = vmatprep.subr.bf16.mxu0 0
    %496 = vmatpush1.bf16.msra.mxu0 0
    %497 = vmatprep.subr.bf16.mxu0 0
    %498 = vmatpush1.bf16.msra.mxu0 0
    %499 = vmatprep.subr.bf16.mxu0 0
    %500 = vmatpush1.bf16.msra.mxu0 0
    %501 = vmatprep.subr.bf16.mxu0 0
    %502 = vmatpush1.bf16.msra.mxu0 0
    %503 = vmatprep.subr.bf16.mxu0 0
    %504 = vmatpush1.bf16.msra.mxu0 0
    %505 = vmatprep.subr.bf16.mxu0 0
    %506 = vmatpush1.bf16.msra.mxu0 0
    %507 = vmatprep.subr.bf16.mxu0 0
    %508 = vmatpush1.bf16.msra.mxu0 0
    %509 = vmatprep.subr.bf16.mxu0 0
    %510 = vmatpush1.bf16.msra.mxu0 0
    %511 = vmatprep.subr.bf16.mxu0 0
    %512 = vmatpush1.bf16.msra.mxu0 0
    %513 = vmatprep.mubr.bf16.mxu0 0
    %514 = vmatmul.mubr.bf16.gmra.mrb[0].mxu0 %v199
    %v515 = vpop.f32.mrb[0].mxu0
    %v516 = vadd.f32 %v88, %v515
    %v517 = vpop.f32.mrb[0].mxu0
    %v518 = vadd.f32 %v92, %v517
    %v519 = vpop.f32.mrb[0].mxu0
    %v520 = vadd.f32 %v88, %v519
    %v521 = vpop.f32.mrb[0].mxu0
    %v522 = vadd.f32 %v92, %v521
    %523 = vmatprep.mubr.bf16.mxu0 0
    %524 = vmatmul.mubr.bf16.gmra.mrb[0].mxu0 %v202
    %v525 = vpop.f32.mrb[0].mxu0
    %v526 = vadd.f32 %v88, %v525
    %v527 = vpop.f32.mrb[0].mxu0
    %v528 = vadd.f32 %v92, %v527
    %v529 = vpop.f32.mrb[0].mxu0
    %v530 = vadd.f32 %v88, %v529
    %v531 = vpop.f32.mrb[0].mxu0
    %v532 = vadd.f32 %v92, %v531
    %533 = vmatprep.mubr.bf16.mxu0 0
    %534 = vmatmul.mubr.bf16.gmra.mrb[0].mxu0 %v205
    %v535 = vpop.f32.mrb[0].mxu0
    %v536 = vadd.f32 %v88, %v535
    %v537 = vpop.f32.mrb[0].mxu0
    %v538 = vadd.f32 %v92, %v537
    %v539 = vpop.f32.mrb[0].mxu0
    %v540 = vadd.f32 %v88, %v539
    %v541 = vpop.f32.mrb[0].mxu0
    %v542 = vadd.f32 %v92, %v541
    %543 = vmatprep.mubr.bf16.mxu0 0
    %544 = vmatmul.mubr.bf16.gmra.mrb[0].mxu0 %v208
    %v545 = vpop.f32.mrb[0].mxu0
    %v546 = vadd.f32 %v88, %v545
    %v547 = vpop.f32.mrb[0].mxu0
    %v548 = vadd.f32 %v92, %v547
    %v549 = vpop.f32.mrb[0].mxu0
    %v550 = vadd.f32 %v88, %v549
    %v551 = vpop.f32.mrb[0].mxu0
    %v552 = vadd.f32 %v92, %v551
    %553 = vmatprep.mubr.bf16.mxu0 0
    %554 = vmatmul.mubr.bf16.gmra.mrb[0].mxu0 %v211
    %v555 = vpop.f32.mrb[0].mxu0
    %v556 = vadd.f32 %v88, %v555
    %v557 = vpop.f32.mrb[0].mxu0
    %v558 = vadd.f32 %v92, %v557
    %v559 = vpop.f32.mrb[0].mxu0
    %v560 = vadd.f32 %v88, %v559
    %v561 = vpop.f32.mrb[0].mxu0
    %v562 = vadd.f32 %v92, %v561
    %563 = vmatprep.mubr.bf16.mxu0 0
    %564 = vmatmul.mubr.bf16.gmra.mrb[0].mxu0 %v214
    %v565 = vpop.f32.mrb[0].mxu0
    %v566 = vadd.f32 %v88, %v565
    %v567 = vpop.f32.mrb[0].mxu0
    %v568 = vadd.f32 %v92, %v567
    %v569 = vpop.f32.mrb[0].mxu0
    %v570 = vadd.f32 %v88, %v569
    %v571 = vpop.f32.mrb[0].mxu0
    %v572 = vadd.f32 %v92, %v571
    %573 = vmatprep.mubr.bf16.mxu0 0
    %574 = vmatmul.mubr.bf16.gmra.mrb[0].mxu0 %v217
    %v575 = vpop.f32.mrb[0].mxu0
    %v576 = vadd.f32 %v88, %v575
    %v577 = vpop.f32.mrb[0].mxu0
    %v578 = vadd.f32 %v92, %v577
    %v579 = vpop.f32.mrb[0].mxu0
    %v580 = vadd.f32 %v88, %v579
    %v581 = vpop.f32.mrb[0].mxu0
    %v582 = vadd.f32 %v92, %v581
    %583 = vmatprep.mubr.bf16.mxu0 0
    %584 = vmatmul.mubr.bf16.gmra.mrb[0].mxu0 %v220
    %v585 = vpop.f32.mrb[0].mxu0
    %v586 = vadd.f32 %v88, %v585
    %v587 = vpop.f32.mrb[0].mxu0
    %v588 = vadd.f32 %v92, %v587
    %v589 = vpop.f32.mrb[0].mxu0
    %v590 = vpop.f32.mrb[0].mxu0
    %591 = vdwg.mxu0
    %592 = vmatprep.subr.bf16.mxu0 %v245
    %593 = vmatpush1.bf16.msra.mxu0 %v242
    %594 = vmatprep.subr.bf16.mxu0 0
    %595 = vmatpush1.bf16.msra.mxu0 0
    %596 = vmatprep.subr.bf16.mxu0 0
    %597 = vmatpush1.bf16.msra.mxu0 0
    %598 = vmatprep.subr.bf16.mxu0 0
    %599 = vmatpush1.bf16.msra.mxu0 0
    %600 = vmatprep.subr.bf16.mxu0 0
    %601 = vmatpush1.bf16.msra.mxu0 0
    %602 = vmatprep.subr.bf16.mxu0 0
    %603 = vmatpush1.bf16.msra.mxu0 0
    %604 = vmatprep.subr.bf16.mxu0 0
    %605 = vmatpush1.bf16.msra.mxu0 0
    %606 = vmatprep.subr.bf16.mxu0 0
    %607 = vmatpush1.bf16.msra.mxu0 0
    %608 = vmatprep.subr.bf16.mxu0 0
    %609 = vmatpush1.bf16.msra.mxu0 0
    %610 = vmatprep.subr.bf16.mxu0 0
    %611 = vmatpush1.bf16.msra.mxu0 0
    %612 = vmatprep.subr.bf16.mxu0 0
    %613 = vmatpush1.bf16.msra.mxu0 0
    %614 = vmatprep.subr.bf16.mxu0 0
    %615 = vmatpush1.bf16.msra.mxu0 0
    %616 = vmatprep.subr.bf16.mxu0 0
    %617 = vmatpush1.bf16.msra.mxu0 0
    %618 = vmatprep.subr.bf16.mxu0 0
    %619 = vmatpush1.bf16.msra.mxu0 0
    %620 = vmatprep.subr.bf16.mxu0 0
    %621 = vmatpush1.bf16.msra.mxu0 0
    %622 = vmatprep.subr.bf16.mxu0 0
    %623 = vmatpush1.bf16.msra.mxu0 0
    %624 = vmatprep.mubr.bf16.mxu0 0
    %625 = vmatmul.mubr.bf16.gmra.mrb[0].mxu0 %v199
    %v626 = vpop.f32.mrb[0].mxu0
    %v627 = vadd.f32 %v96, %v626
    %v628 = vpop.f32.mrb[0].mxu0
    %v629 = vadd.f32 %v100, %v628
    %v630 = vpop.f32.mrb[0].mxu0
    %v631 = vadd.f32 %v96, %v630
    %v632 = vpop.f32.mrb[0].mxu0
    %v633 = vadd.f32 %v100, %v632
    %634 = vmatprep.mubr.bf16.mxu0 0
    %635 = vmatmul.mubr.bf16.gmra.mrb[0].mxu0 %v202
    %v636 = vpop.f32.mrb[0].mxu0
    %v637 = vadd.f32 %v96, %v636
    %v638 = vpop.f32.mrb[0].mxu0
    %v639 = vadd.f32 %v100, %v638
    %v640 = vpop.f32.mrb[0].mxu0
    %v641 = vadd.f32 %v96, %v640
    %v642 = vpop.f32.mrb[0].mxu0
    %v643 = vadd.f32 %v100, %v642
    %644 = vmatprep.mubr.bf16.mxu0 0
    %645 = vmatmul.mubr.bf16.gmra.mrb[0].mxu0 %v205
    %v646 = vpop.f32.mrb[0].mxu0
    %v647 = vadd.f32 %v96, %v646
    %v648 = vpop.f32.mrb[0].mxu0
    %v649 = vadd.f32 %v100, %v648
    %v650 = vpop.f32.mrb[0].mxu0
    %v651 = vadd.f32 %v96, %v650
    %v652 = vpop.f32.mrb[0].mxu0
    %v653 = vadd.f32 %v100, %v652
    %654 = vmatprep.mubr.bf16.mxu0 0
    %655 = vmatmul.mubr.bf16.gmra.mrb[0].mxu0 %v208
    %v656 = vpop.f32.mrb[0].mxu0
    %v657 = vadd.f32 %v96, %v656
    %v658 = vpop.f32.mrb[0].mxu0
    %v659 = vadd.f32 %v100, %v658
    %v660 = vpop.f32.mrb[0].mxu0
    %v661 = vadd.f32 %v96, %v660
    %v662 = vpop.f32.mrb[0].mxu0
    %v663 = vadd.f32 %v100, %v662
    %664 = vmatprep.mubr.bf16.mxu0 0
    %665 = vmatmul.mubr.bf16.gmra.mrb[0].mxu0 %v211
    %v666 = vpop.f32.mrb[0].mxu0
    %v667 = vadd.f32 %v96, %v666
    %v668 = vpop.f32.mrb[0].mxu0
    %v669 = vadd.f32 %v100, %v668
    %v670 = vpop.f32.mrb[0].mxu0
    %v671 = vadd.f32 %v96, %v670
    %v672 = vpop.f32.mrb[0].mxu0
    %v673 = vadd.f32 %v100, %v672
    %674 = vmatprep.mubr.bf16.mxu0 0
    %675 = vmatmul.mubr.bf16.gmra.mrb[0].mxu0 %v214
    %v676 = vpop.f32.mrb[0].mxu0
    %v677 = vadd.f32 %v96, %v676
    %v678 = vpop.f32.mrb[0].mxu0
    %v679 = vadd.f32 %v100, %v678
    %v680 = vpop.f32.mrb[0].mxu0
    %v681 = vadd.f32 %v96, %v680
    %v682 = vpop.f32.mrb[0].mxu0
    %v683 = vadd.f32 %v100, %v682
    %684 = vmatprep.mubr.bf16.mxu0 0
    %685 = vmatmul.mubr.bf16.gmra.mrb[0].mxu0 %v217
    %v686 = vpop.f32.mrb[0].mxu0
    %v687 = vadd.f32 %v96, %v686
    %v688 = vpop.f32.mrb[0].mxu0
    %v689 = vadd.f32 %v100, %v688
    %v690 = vpop.f32.mrb[0].mxu0
    %v691 = vadd.f32 %v96, %v690
    %v692 = vpop.f32.mrb[0].mxu0
    %v693 = vadd.f32 %v100, %v692
    %694 = vmatprep.mubr.bf16.mxu0 0
    %695 = vmatmul.mubr.bf16.gmra.mrb[0].mxu0 %v220
    %v696 = vpop.f32.mrb[0].mxu0
    %v697 = vadd.f32 %v96, %v696
    %v698 = vpop.f32.mrb[0].mxu0
    %v699 = vadd.f32 %v100, %v698
    %v700 = vpop.f32.mrb[0].mxu0
    %v701 = vpop.f32.mrb[0].mxu0
    %702 = vdwg.mxu0
    %703 = vmatprep.subr.bf16.mxu0 %v251
    %704 = vmatpush1.bf16.msra.mxu0 %v248
    %705 = vmatprep.subr.bf16.mxu0 0
    %706 = vmatpush1.bf16.msra.mxu0 0
    %707 = vmatprep.subr.bf16.mxu0 0
    %708 = vmatpush1.bf16.msra.mxu0 0
    %709 = vmatprep.subr.bf16.mxu0 0
    %710 = vmatpush1.bf16.msra.mxu0 0
    %711 = vmatprep.subr.bf16.mxu0 0
    %712 = vmatpush1.bf16.msra.mxu0 0
    %713 = vmatprep.subr.bf16.mxu0 0
    %714 = vmatpush1.bf16.msra.mxu0 0
    %715 = vmatprep.subr.bf16.mxu0 0
    %716 = vmatpush1.bf16.msra.mxu0 0
    %717 = vmatprep.subr.bf16.mxu0 0
    %718 = vmatpush1.bf16.msra.mxu0 0
    %719 = vmatprep.subr.bf16.mxu0 0
    %720 = vmatpush1.bf16.msra.mxu0 0
    %721 = vmatprep.subr.bf16.mxu0 0
    %722 = vmatpush1.bf16.msra.mxu0 0
    %723 = vmatprep.subr.bf16.mxu0 0
    %724 = vmatpush1.bf16.msra.mxu0 0
    %725 = vmatprep.subr.bf16.mxu0 0
    %726 = vmatpush1.bf16.msra.mxu0 0
    %727 = vmatprep.subr.bf16.mxu0 0
    %728 = vmatpush1.bf16.msra.mxu0 0
    %729 = vmatprep.subr.bf16.mxu0 0
    %730 = vmatpush1.bf16.msra.mxu0 0
    %731 = vmatprep.subr.bf16.mxu0 0
    %732 = vmatpush1.bf16.msra.mxu0 0
    %733 = vmatprep.subr.bf16.mxu0 0
    %734 = vmatpush1.bf16.msra.mxu0 0
    %735 = vmatprep.mubr.bf16.mxu0 0
    %736 = vmatmul.mubr.bf16.gmra.mrb[0].mxu0 %v199
    %v737 = vpop.f32.mrb[0].mxu0
    %v738 = vadd.f32 %v104, %v737
    %v739 = vpop.f32.mrb[0].mxu0
    %v740 = vadd.f32 %v108, %v739
    %v741 = vpop.f32.mrb[0].mxu0
    %v742 = vadd.f32 %v104, %v741
    %v743 = vpop.f32.mrb[0].mxu0
    %v744 = vadd.f32 %v108, %v743
    %745 = vmatprep.mubr.bf16.mxu0 0
    %746 = vmatmul.mubr.bf16.gmra.mrb[0].mxu0 %v202
    %v747 = vpop.f32.mrb[0].mxu0
    %v748 = vadd.f32 %v104, %v747
    %v749 = vpop.f32.mrb[0].mxu0
    %v750 = vadd.f32 %v108, %v749
    %v751 = vpop.f32.mrb[0].mxu0
    %v752 = vadd.f32 %v104, %v751
    %v753 = vpop.f32.mrb[0].mxu0
    %v754 = vadd.f32 %v108, %v753
    %755 = vmatprep.mubr.bf16.mxu0 0
    %756 = vmatmul.mubr.bf16.gmra.mrb[0].mxu0 %v205
    %v757 = vpop.f32.mrb[0].mxu0
    %v758 = vadd.f32 %v104, %v757
    %v759 = vpop.f32.mrb[0].mxu0
    %v760 = vadd.f32 %v108, %v759
    %v761 = vpop.f32.mrb[0].mxu0
    %v762 = vadd.f32 %v104, %v761
    %v763 = vpop.f32.mrb[0].mxu0
    %v764 = vadd.f32 %v108, %v763
    %765 = vmatprep.mubr.bf16.mxu0 0
    %766 = vmatmul.mubr.bf16.gmra.mrb[0].mxu0 %v208
    %v767 = vpop.f32.mrb[0].mxu0
    %v768 = vadd.f32 %v104, %v767
    %v769 = vpop.f32.mrb[0].mxu0
    %v770 = vadd.f32 %v108, %v769
    %v771 = vpop.f32.mrb[0].mxu0
    %v772 = vadd.f32 %v104, %v771
    %v773 = vpop.f32.mrb[0].mxu0
    %v774 = vadd.f32 %v108, %v773
    %775 = vmatprep.mubr.bf16.mxu0 0
    %776 = vmatmul.mubr.bf16.gmra.mrb[0].mxu0 %v211
    %v777 = vpop.f32.mrb[0].mxu0
    %v778 = vadd.f32 %v104, %v777
    %v779 = vpop.f32.mrb[0].mxu0
    %v780 = vadd.f32 %v108, %v779
    %v781 = vpop.f32.mrb[0].mxu0
    %v782 = vadd.f32 %v104, %v781
    %v783 = vpop.f32.mrb[0].mxu0
    %v784 = vadd.f32 %v108, %v783
    %785 = vmatprep.mubr.bf16.mxu0 0
    %786 = vmatmul.mubr.bf16.gmra.mrb[0].mxu0 %v214
    %v787 = vpop.f32.mrb[0].mxu0
    %v788 = vadd.f32 %v104, %v787
    %v789 = vpop.f32.mrb[0].mxu0
    %v790 = vadd.f32 %v108, %v789
    %v791 = vpop.f32.mrb[0].mxu0
    %v792 = vadd.f32 %v104, %v791
    %v793 = vpop.f32.mrb[0].mxu0
    %v794 = vadd.f32 %v108, %v793
    %795 = vmatprep.mubr.bf16.mxu0 0
    %796 = vmatmul.mubr.bf16.gmra.mrb[0].mxu0 %v217
    %v797 = vpop.f32.mrb[0].mxu0
    %v798 = vadd.f32 %v104, %v797
    %v799 = vpop.f32.mrb[0].mxu0
    %v800 = vadd.f32 %v108, %v799
    %v801 = vpop.f32.mrb[0].mxu0
    %v802 = vadd.f32 %v104, %v801
    %v803 = vpop.f32.mrb[0].mxu0
    %v804 = vadd.f32 %v108, %v803
    %805 = vmatprep.mubr.bf16.mxu0 0
    %806 = vmatmul.mubr.bf16.gmra.mrb[0].mxu0 %v220
    %v807 = vpop.f32.mrb[0].mxu0
    %v808 = vadd.f32 %v104, %v807
    %v809 = vpop.f32.mrb[0].mxu0
    %v810 = vadd.f32 %v108, %v809
    %v811 = vpop.f32.mrb[0].mxu0
    %v812 = vpop.f32.mrb[0].mxu0
    %813 = vdwg.mxu0
    %814 = vmatprep.subr.bf16.mxu0 %v257
    %815 = vmatpush1.bf16.msra.mxu0 %v254
    %816 = vmatprep.subr.bf16.mxu0 0
    %817 = vmatpush1.bf16.msra.mxu0 0
    %818 = vmatprep.subr.bf16.mxu0 0
    %819 = vmatpush1.bf16.msra.mxu0 0
    %820 = vmatprep.subr.bf16.mxu0 0
    %821 = vmatpush1.bf16.msra.mxu0 0
    %822 = vmatprep.subr.bf16.mxu0 0
    %823 = vmatpush1.bf16.msra.mxu0 0
    %824 = vmatprep.subr.bf16.mxu0 0
    %825 = vmatpush1.bf16.msra.mxu0 0
    %826 = vmatprep.subr.bf16.mxu0 0
    %827 = vmatpush1.bf16.msra.mxu0 0
    %828 = vmatprep.subr.bf16.mxu0 0
    %829 = vmatpush1.bf16.msra.mxu0 0
    %830 = vmatprep.subr.bf16.mxu0 0
    %831 = vmatpush1.bf16.msra.mxu0 0
    %832 = vmatprep.subr.bf16.mxu0 0
    %833 = vmatpush1.bf16.msra.mxu0 0
    %834 = vmatprep.subr.bf16.mxu0 0
    %835 = vmatpush1.bf16.msra.mxu0 0
    %836 = vmatprep.subr.bf16.mxu0 0
    %837 = vmatpush1.bf16.msra.mxu0 0
    %838 = vmatprep.subr.bf16.mxu0 0
    %839 = vmatpush1.bf16.msra.mxu0 0
    %840 = vmatprep.subr.bf16.mxu0 0
    %841 = vmatpush1.bf16.msra.mxu0 0
    %842 = vmatprep.subr.bf16.mxu0 0
    %843 = vmatpush1.bf16.msra.mxu0 0
    %844 = vmatprep.subr.bf16.mxu0 0
    %845 = vmatpush1.bf16.msra.mxu0 0
    %846 = vmatprep.mubr.bf16.mxu0 0
    %847 = vmatmul.mubr.bf16.gmra.mrb[0].mxu0 %v199
    %v848 = vpop.f32.mrb[0].mxu0
    %v849 = vadd.f32 %v112, %v848
    %v850 = vpop.f32.mrb[0].mxu0
    %v851 = vadd.f32 %v116, %v850
    %v852 = vpop.f32.mrb[0].mxu0
    %v853 = vadd.f32 %v112, %v852
    %v854 = vpop.f32.mrb[0].mxu0
    %v855 = vadd.f32 %v116, %v854
    %856 = vmatprep.mubr.bf16.mxu0 0
    %857 = vmatmul.mubr.bf16.gmra.mrb[0].mxu0 %v202
    %v858 = vpop.f32.mrb[0].mxu0
    %v859 = vadd.f32 %v112, %v858
    %v860 = vpop.f32.mrb[0].mxu0
    %v861 = vadd.f32 %v116, %v860
    %v862 = vpop.f32.mrb[0].mxu0
    %v863 = vadd.f32 %v112, %v862
    %v864 = vpop.f32.mrb[0].mxu0
    %v865 = vadd.f32 %v116, %v864
    %866 = vmatprep.mubr.bf16.mxu0 0
    %867 = vmatmul.mubr.bf16.gmra.mrb[0].mxu0 %v205
    %v868 = vpop.f32.mrb[0].mxu0
    %v869 = vadd.f32 %v112, %v868
    %v870 = vpop.f32.mrb[0].mxu0
    %v871 = vadd.f32 %v116, %v870
    %v872 = vpop.f32.mrb[0].mxu0
    %v873 = vadd.f32 %v112, %v872
    %v874 = vpop.f32.mrb[0].mxu0
    %v875 = vadd.f32 %v116, %v874
    %876 = vmatprep.mubr.bf16.mxu0 0
    %877 = vmatmul.mubr.bf16.gmra.mrb[0].mxu0 %v208
    %v878 = vpop.f32.mrb[0].mxu0
    %v879 = vadd.f32 %v112, %v878
    %v880 = vpop.f32.mrb[0].mxu0
    %v881 = vadd.f32 %v116, %v880
    %v882 = vpop.f32.mrb[0].mxu0
    %v883 = vadd.f32 %v112, %v882
    %v884 = vpop.f32.mrb[0].mxu0
    %v885 = vadd.f32 %v116, %v884
    %886 = vmatprep.mubr.bf16.mxu0 0
    %887 = vmatmul.mubr.bf16.gmra.mrb[0].mxu0 %v211
    %v888 = vpop.f32.mrb[0].mxu0
    %v889 = vadd.f32 %v112, %v888
    %v890 = vpop.f32.mrb[0].mxu0
    %v891 = vadd.f32 %v116, %v890
    %v892 = vpop.f32.mrb[0].mxu0
    %v893 = vadd.f32 %v112, %v892
    %v894 = vpop.f32.mrb[0].mxu0
    %v895 = vadd.f32 %v116, %v894
    %896 = vmatprep.mubr.bf16.mxu0 0
    %897 = vmatmul.mubr.bf16.gmra.mrb[0].mxu0 %v214
    %v898 = vpop.f32.mrb[0].mxu0
    %v899 = vadd.f32 %v112, %v898
    %v900 = vpop.f32.mrb[0].mxu0
    %v901 = vadd.f32 %v116, %v900
    %v902 = vpop.f32.mrb[0].mxu0
    %v903 = vadd.f32 %v112, %v902
    %v904 = vpop.f32.mrb[0].mxu0
    %v905 = vadd.f32 %v116, %v904
    %906 = vmatprep.mubr.bf16.mxu0 0
    %907 = vmatmul.mubr.bf16.gmra.mrb[0].mxu0 %v217
    %v908 = vpop.f32.mrb[0].mxu0
    %v909 = vadd.f32 %v112, %v908
    %v910 = vpop.f32.mrb[0].mxu0
    %v911 = vadd.f32 %v116, %v910
    %v912 = vpop.f32.mrb[0].mxu0
    %v913 = vadd.f32 %v112, %v912
    %v914 = vpop.f32.mrb[0].mxu0
    %v915 = vadd.f32 %v116, %v914
    %916 = vmatprep.mubr.bf16.mxu0 0
    %917 = vmatmul.mubr.bf16.gmra.mrb[0].mxu0 %v220
    %v918 = vpop.f32.mrb[0].mxu0
    %v919 = vadd.f32 %v112, %v918
    %v920 = vpop.f32.mrb[0].mxu0
    %v921 = vadd.f32 %v116, %v920
    %v922 = vpop.f32.mrb[0].mxu0
    %v923 = vpop.f32.mrb[0].mxu0
    %924 = vdwg.mxu0
    %v925 = vld [vmem:[#allocation2] sm:$0xff]
    %v926 = vld [vmem:[#allocation2 + $0x8] sm:$0xff]
    %v927 = vld [vmem:[#allocation2 + $0x10] sm:$0xff]
    %v928 = vld [vmem:[#allocation2 + $0x18] sm:$0xff]
    %v929 = vld [vmem:[#allocation2 + $0x20] sm:$0xff]
    %v930 = vld [vmem:[#allocation2 + $0x28] sm:$0xff]
    %v931 = vld [vmem:[#allocation2 + $0x30] sm:$0xff]
    %v932 = vld [vmem:[#allocation2 + $0x38] sm:$0xff]
    %v933 = vld [vmem:[#allocation2 + $0x40] sm:$0xff]
    %v934 = vld [vmem:[#allocation2 + $0x48] sm:$0xff]
    %v935 = vld [vmem:[#allocation2 + $0x50] sm:$0xff]
    %v936 = vld [vmem:[#allocation2 + $0x58] sm:$0xff]
    %v937 = vld [vmem:[#allocation2 + $0x60] sm:$0xff]
    %v938 = vld [vmem:[#allocation2 + $0x68] sm:$0xff]
    %v939 = vld [vmem:[#allocation2 + $0x70] sm:$0xff]
    %v940 = vld [vmem:[#allocation2 + $0x78] sm:$0xff]
    %v941 = vld [vmem:[#allocation2 + $0x80] sm:$0xff]
    %v942 = vld [vmem:[#allocation2 + $0x88] sm:$0xff]
    %v943 = vld [vmem:[#allocation2 + $0x90] sm:$0xff]
    %v944 = vld [vmem:[#allocation2 + $0x98] sm:$0xff]
    %v945 = vld [vmem:[#allocation2 + $0xa0] sm:$0xff]
    %v946 = vld [vmem:[#allocation2 + $0xa8] sm:$0xff]
    %v947 = vld [vmem:[#allocation2 + $0xb0] sm:$0xff]
    %v948 = vld [vmem:[#allocation2 + $0xb8] sm:$0xff]
    %v949 = vld [vmem:[#allocation2 + $0xc0] sm:$0xff]
    %v950 = vld [vmem:[#allocation2 + $0xc8] sm:$0xff]
    %v951 = vld [vmem:[#allocation2 + $0xd0] sm:$0xff]
    %v952 = vld [vmem:[#allocation2 + $0xd8] sm:$0xff]
    %v953 = vld [vmem:[#allocation2 + $0xe0] sm:$0xff]
    %v954 = vld [vmem:[#allocation2 + $0xe8] sm:$0xff]
    %v955 = vld [vmem:[#allocation2 + $0xf0] sm:$0xff]
    %v956 = vld [vmem:[#allocation2 + $0xf8] sm:$0xff]
    %v957 = vld [vmem:[#allocation2 + $0x100] sm:$0xff]
    %v958 = vld [vmem:[#allocation2 + $0x108] sm:$0xff]
    %v959 = vld [vmem:[#allocation2 + $0x110] sm:$0xff]
    %v960 = vld [vmem:[#allocation2 + $0x118] sm:$0xff]
    %v961 = vld [vmem:[#allocation2 + $0x120] sm:$0xff]
    %v962 = vld [vmem:[#allocation2 + $0x128] sm:$0xff]
    %v963 = vld [vmem:[#allocation2 + $0x130] sm:$0xff]
    %v964 = vld [vmem:[#allocation2 + $0x138] sm:$0xff]
    %v965 = vld [vmem:[#allocation2 + $0x140] sm:$0xff]
    %v966 = vld [vmem:[#allocation2 + $0x148] sm:$0xff]
    %v967 = vld [vmem:[#allocation2 + $0x150] sm:$0xff]
    %v968 = vld [vmem:[#allocation2 + $0x158] sm:$0xff]
    %v969 = vld [vmem:[#allocation2 + $0x160] sm:$0xff]
    %v970 = vld [vmem:[#allocation2 + $0x168] sm:$0xff]
    %v971 = vld [vmem:[#allocation2 + $0x170] sm:$0xff]
    %v972 = vld [vmem:[#allocation2 + $0x178] sm:$0xff]
    %v973 = vld [vmem:[#allocation2 + $0x180] sm:$0xff]
    %v974 = vld [vmem:[#allocation2 + $0x188] sm:$0xff]
    %v975 = vld [vmem:[#allocation2 + $0x190] sm:$0xff]
    %v976 = vld [vmem:[#allocation2 + $0x198] sm:$0xff]
    %v977 = vld [vmem:[#allocation2 + $0x1a0] sm:$0xff]
    %v978 = vld [vmem:[#allocation2 + $0x1a8] sm:$0xff]
    %v979 = vld [vmem:[#allocation2 + $0x1b0] sm:$0xff]
    %v980 = vld [vmem:[#allocation2 + $0x1b8] sm:$0xff]
    %v981 = vld [vmem:[#allocation2 + $0x1c0] sm:$0xff]
    %v982 = vld [vmem:[#allocation2 + $0x1c8] sm:$0xff]
    %v983 = vld [vmem:[#allocation2 + $0x1d0] sm:$0xff]
    %v984 = vld [vmem:[#allocation2 + $0x1d8] sm:$0xff]
    %v985 = vld [vmem:[#allocation2 + $0x1e0] sm:$0xff]
    %v986 = vld [vmem:[#allocation2 + $0x1e8] sm:$0xff]
    %v987 = vld [vmem:[#allocation2 + $0x1f0] sm:$0xff]
    %v988 = vld [vmem:[#allocation2 + $0x1f8] sm:$0xff]
    %v989 = vld [vmem:[#allocation2 + $0x200] sm:$0xff]
    %v990 = vld [vmem:[#allocation2 + $0x208] sm:$0xff]
    %v991 = vld [vmem:[#allocation2 + $0x210] sm:$0xff]
    %v992 = vld [vmem:[#allocation2 + $0x218] sm:$0xff]
    %v993 = vld [vmem:[#allocation2 + $0x220] sm:$0xff]
    %v994 = vld [vmem:[#allocation2 + $0x228] sm:$0xff]
    %v995 = vld [vmem:[#allocation2 + $0x230] sm:$0xff]
    %v996 = vld [vmem:[#allocation2 + $0x238] sm:$0xff]
    %v997 = vld [vmem:[#allocation2 + $0x240] sm:$0xff]
    %v998 = vld [vmem:[#allocation2 + $0x248] sm:$0xff]
    %v999 = vld [vmem:[#allocation2 + $0x250] sm:$0xff]
    %v1000 = vld [vmem:[#allocation2 + $0x258] sm:$0xff]
    %v1001 = vld [vmem:[#allocation2 + $0x260] sm:$0xff]
    %v1002 = vld [vmem:[#allocation2 + $0x268] sm:$0xff]
    %v1003 = vld [vmem:[#allocation2 + $0x270] sm:$0xff]
    %v1004 = vld [vmem:[#allocation2 + $0x278] sm:$0xff]
    %v1005 = vld [vmem:[#allocation2 + $0x280] sm:$0xff]
    %v1006 = vld [vmem:[#allocation2 + $0x288] sm:$0xff]
    %v1007 = vld [vmem:[#allocation2 + $0x290] sm:$0xff]
    %v1008 = vld [vmem:[#allocation2 + $0x298] sm:$0xff]
    %v1009 = vld [vmem:[#allocation2 + $0x2a0] sm:$0xff]
    %v1010 = vld [vmem:[#allocation2 + $0x2a8] sm:$0xff]
    %v1011 = vld [vmem:[#allocation2 + $0x2b0] sm:$0xff]
    %v1012 = vld [vmem:[#allocation2 + $0x2b8] sm:$0xff]
    %v1013 = vld [vmem:[#allocation2 + $0x2c0] sm:$0xff]
    %v1014 = vld [vmem:[#allocation2 + $0x2c8] sm:$0xff]
    %v1015 = vld [vmem:[#allocation2 + $0x2d0] sm:$0xff]
    %v1016 = vld [vmem:[#allocation2 + $0x2d8] sm:$0xff]
    %v1017 = vld [vmem:[#allocation2 + $0x2e0] sm:$0xff]
    %v1018 = vld [vmem:[#allocation2 + $0x2e8] sm:$0xff]
    %v1019 = vld [vmem:[#allocation2 + $0x2f0] sm:$0xff]
    %v1020 = vld [vmem:[#allocation2 + $0x2f8] sm:$0xff]
    %v1021 = vld [vmem:[#allocation2 + $0x300] sm:$0xff]
    %v1022 = vld [vmem:[#allocation2 + $0x308] sm:$0xff]
    %v1023 = vld [vmem:[#allocation2 + $0x310] sm:$0xff]
    %v1024 = vld [vmem:[#allocation2 + $0x318] sm:$0xff]
    %v1025 = vld [vmem:[#allocation2 + $0x320] sm:$0xff]
    %v1026 = vld [vmem:[#allocation2 + $0x328] sm:$0xff]
    %v1027 = vld [vmem:[#allocation2 + $0x330] sm:$0xff]
    %v1028 = vld [vmem:[#allocation2 + $0x338] sm:$0xff]
    %v1029 = vld [vmem:[#allocation2 + $0x340] sm:$0xff]
    %v1030 = vld [vmem:[#allocation2 + $0x348] sm:$0xff]
    %v1031 = vld [vmem:[#allocation2 + $0x350] sm:$0xff]
    %v1032 = vld [vmem:[#allocation2 + $0x358] sm:$0xff]
    %v1033 = vld [vmem:[#allocation2 + $0x360] sm:$0xff]
    %v1034 = vld [vmem:[#allocation2 + $0x368] sm:$0xff]
    %v1035 = vld [vmem:[#allocation2 + $0x370] sm:$0xff]
    %v1036 = vld [vmem:[#allocation2 + $0x378] sm:$0xff]
    %v1037 = vld [vmem:[#allocation2 + $0x380] sm:$0xff]
    %v1038 = vld [vmem:[#allocation2 + $0x388] sm:$0xff]
    %v1039 = vld [vmem:[#allocation2 + $0x390] sm:$0xff]
    %v1040 = vld [vmem:[#allocation2 + $0x398] sm:$0xff]
    %v1041 = vld [vmem:[#allocation2 + $0x3a0] sm:$0xff]
    %v1042 = vld [vmem:[#allocation2 + $0x3a8] sm:$0xff]
    %v1043 = vld [vmem:[#allocation2 + $0x3b0] sm:$0xff]
    %v1044 = vld [vmem:[#allocation2 + $0x3b8] sm:$0xff]
    %v1045 = vld [vmem:[#allocation2 + $0x3c0] sm:$0xff]
    %v1046 = vld [vmem:[#allocation2 + $0x3c8] sm:$0xff]
    %v1047 = vld [vmem:[#allocation2 + $0x3d0] sm:$0xff]
    %v1048 = vld [vmem:[#allocation2 + $0x3d8] sm:$0xff]
    %v1049 = vld [vmem:[#allocation2 + $0x3e0] sm:$0xff]
    %v1050 = vld [vmem:[#allocation2 + $0x3e8] sm:$0xff]
    %v1051 = vld [vmem:[#allocation2 + $0x3f0] sm:$0xff]
    %v1052 = vld [vmem:[#allocation2 + $0x3f8] sm:$0xff]
    %v1053 = vld [vmem:[#allocation2 + $0x400] sm:$0xff]
    %v1054 = vld [vmem:[#allocation2 + $0x408] sm:$0xff]
    %v1055 = vld [vmem:[#allocation2 + $0x410] sm:$0xff]
    %v1056 = vld [vmem:[#allocation2 + $0x418] sm:$0xff]
    %v1057 = vld [vmem:[#allocation2 + $0x420] sm:$0xff]
    %v1058 = vld [vmem:[#allocation2 + $0x428] sm:$0xff]
    %v1059 = vld [vmem:[#allocation2 + $0x430] sm:$0xff]
    %v1060 = vld [vmem:[#allocation2 + $0x438] sm:$0xff]
    %v1061 = vld [vmem:[#allocation2 + $0x440] sm:$0xff]
    %v1062 = vld [vmem:[#allocation2 + $0x448] sm:$0xff]
    %v1063 = vld [vmem:[#allocation2 + $0x450] sm:$0xff]
    %v1064 = vld [vmem:[#allocation2 + $0x458] sm:$0xff]
    %v1065 = vld [vmem:[#allocation2 + $0x460] sm:$0xff]
    %v1066 = vld [vmem:[#allocation2 + $0x468] sm:$0xff]
    %v1067 = vld [vmem:[#allocation2 + $0x470] sm:$0xff]
    %v1068 = vld [vmem:[#allocation2 + $0x478] sm:$0xff]
    %v1069 = vld [vmem:[#allocation2 + $0x480] sm:$0xff]
    %v1070 = vld [vmem:[#allocation2 + $0x488] sm:$0xff]
    %v1071 = vld [vmem:[#allocation2 + $0x490] sm:$0xff]
    %v1072 = vld [vmem:[#allocation2 + $0x498] sm:$0xff]
    %v1073 = vld [vmem:[#allocation2 + $0x4a0] sm:$0xff]
    %v1074 = vld [vmem:[#allocation2 + $0x4a8] sm:$0xff]
    %v1075 = vld [vmem:[#allocation2 + $0x4b0] sm:$0xff]
    %v1076 = vld [vmem:[#allocation2 + $0x4b8] sm:$0xff]
    %v1077 = vld [vmem:[#allocation2 + $0x4c0] sm:$0xff]
    %v1078 = vld [vmem:[#allocation2 + $0x4c8] sm:$0xff]
    %v1079 = vld [vmem:[#allocation2 + $0x4d0] sm:$0xff]
    %v1080 = vld [vmem:[#allocation2 + $0x4d8] sm:$0xff]
    %v1081 = vld [vmem:[#allocation2 + $0x4e0] sm:$0xff]
    %v1082 = vld [vmem:[#allocation2 + $0x4e8] sm:$0xff]
    %v1083 = vld [vmem:[#allocation2 + $0x4f0] sm:$0xff]
    %v1084 = vld [vmem:[#allocation2 + $0x4f8] sm:$0xff]
    %v1085 = vld [vmem:[#allocation2 + $0x500] sm:$0xff]
    %v1086 = vld [vmem:[#allocation2 + $0x508] sm:$0xff]
    %v1087 = vld [vmem:[#allocation2 + $0x510] sm:$0xff]
    %v1088 = vld [vmem:[#allocation2 + $0x518] sm:$0xff]
    %v1089 = vld [vmem:[#allocation2 + $0x520] sm:$0xff]
    %v1090 = vld [vmem:[#allocation2 + $0x528] sm:$0xff]
    %v1091 = vld [vmem:[#allocation2 + $0x530] sm:$0xff]
    %v1092 = vld [vmem:[#allocation2 + $0x538] sm:$0xff]
    %v1093 = vld [vmem:[#allocation2 + $0x540] sm:$0xff]
    %v1094 = vld [vmem:[#allocation2 + $0x548] sm:$0xff]
    %v1095 = vld [vmem:[#allocation2 + $0x550] sm:$0xff]
    %v1096 = vld [vmem:[#allocation2 + $0x558] sm:$0xff]
    %v1097 = vld [vmem:[#allocation2 + $0x560] sm:$0xff]
    %v1098 = vld [vmem:[#allocation2 + $0x568] sm:$0xff]
    %v1099 = vld [vmem:[#allocation2 + $0x570] sm:$0xff]
    %v1100 = vld [vmem:[#allocation2 + $0x578] sm:$0xff]
    %v1101 = vld [vmem:[#allocation2 + $0x580] sm:$0xff]
    %v1102 = vld [vmem:[#allocation2 + $0x588] sm:$0xff]
    %v1103 = vld [vmem:[#allocation2 + $0x590] sm:$0xff]
    %v1104 = vld [vmem:[#allocation2 + $0x598] sm:$0xff]
    %v1105 = vld [vmem:[#allocation2 + $0x5a0] sm:$0xff]
    %v1106 = vld [vmem:[#allocation2 + $0x5a8] sm:$0xff]
    %v1107 = vld [vmem:[#allocation2 + $0x5b0] sm:$0xff]
    %v1108 = vld [vmem:[#allocation2 + $0x5b8] sm:$0xff]
    %v1109 = vld [vmem:[#allocation2 + $0x5c0] sm:$0xff]
    %v1110 = vld [vmem:[#allocation2 + $0x5c8] sm:$0xff]
    %v1111 = vld [vmem:[#allocation2 + $0x5d0] sm:$0xff]
    %v1112 = vld [vmem:[#allocation2 + $0x5d8] sm:$0xff]
    %v1113 = vld [vmem:[#allocation2 + $0x5e0] sm:$0xff]
    %v1114 = vld [vmem:[#allocation2 + $0x5e8] sm:$0xff]
    %v1115 = vld [vmem:[#allocation2 + $0x5f0] sm:$0xff]
    %v1116 = vld [vmem:[#allocation2 + $0x5f8] sm:$0xff]
    %v1117 = vld [vmem:[#allocation2 + $0x600] sm:$0xff]
    %v1118 = vld [vmem:[#allocation2 + $0x608] sm:$0xff]
    %v1119 = vld [vmem:[#allocation2 + $0x610] sm:$0xff]
    %v1120 = vld [vmem:[#allocation2 + $0x618] sm:$0xff]
    %v1121 = vld [vmem:[#allocation2 + $0x620] sm:$0xff]
    %v1122 = vld [vmem:[#allocation2 + $0x628] sm:$0xff]
    %v1123 = vld [vmem:[#allocation2 + $0x630] sm:$0xff]
    %v1124 = vld [vmem:[#allocation2 + $0x638] sm:$0xff]
    %v1125 = vld [vmem:[#allocation2 + $0x640] sm:$0xff]
    %v1126 = vld [vmem:[#allocation2 + $0x648] sm:$0xff]
    %v1127 = vld [vmem:[#allocation2 + $0x650] sm:$0xff]
    %v1128 = vld [vmem:[#allocation2 + $0x658] sm:$0xff]
    %v1129 = vld [vmem:[#allocation2 + $0x660] sm:$0xff]
    %v1130 = vld [vmem:[#allocation2 + $0x668] sm:$0xff]
    %v1131 = vld [vmem:[#allocation2 + $0x670] sm:$0xff]
    %v1132 = vld [vmem:[#allocation2 + $0x678] sm:$0xff]
    %v1133 = vld [vmem:[#allocation2 + $0x680] sm:$0xff]
    %v1134 = vld [vmem:[#allocation2 + $0x688] sm:$0xff]
    %v1135 = vld [vmem:[#allocation2 + $0x690] sm:$0xff]
    %v1136 = vld [vmem:[#allocation2 + $0x698] sm:$0xff]
    %v1137 = vld [vmem:[#allocation2 + $0x6a0] sm:$0xff]
    %v1138 = vld [vmem:[#allocation2 + $0x6a8] sm:$0xff]
    %v1139 = vld [vmem:[#allocation2 + $0x6b0] sm:$0xff]
    %v1140 = vld [vmem:[#allocation2 + $0x6b8] sm:$0xff]
    %v1357 = vunpack.c.l.b16 %v925
    %v1358 = vunpack.c.h.b16 %v925
    %v1359 = vunpack.c.l.b16 %v926
    %v1360 = vunpack.c.h.b16 %v926
    %v1361 = vunpack.c.l.b16 %v927
    %v1362 = vunpack.c.h.b16 %v927
    %v1363 = vunpack.c.l.b16 %v928
    %v1364 = vunpack.c.h.b16 %v928
    %v1365 = vunpack.c.l.b16 %v929
    %v1366 = vunpack.c.h.b16 %v929
    %v1367 = vunpack.c.l.b16 %v930
    %v1368 = vunpack.c.h.b16 %v930
    %v1369 = vunpack.c.l.b16 %v931
    %v1370 = vunpack.c.h.b16 %v931
    %v1371 = vunpack.c.l.b16 %v932
    %v1372 = vunpack.c.h.b16 %v932
    %v1373 = vunpack.c.l.b16 %v933
    %v1374 = vunpack.c.h.b16 %v933
    %v1375 = vunpack.c.l.b16 %v934
    %v1376 = vunpack.c.h.b16 %v934
    %v1377 = vunpack.c.l.b16 %v935
    %v1378 = vunpack.c.h.b16 %v935
    %v1379 = vunpack.c.l.b16 %v936
    %v1380 = vunpack.c.h.b16 %v936
    %v1381 = vunpack.c.l.b16 %v937
    %v1382 = vunpack.c.h.b16 %v937
    %v1383 = vunpack.c.l.b16 %v938
    %v1384 = vunpack.c.h.b16 %v938
    %v1385 = vunpack.c.l.b16 %v939
    %v1386 = vunpack.c.h.b16 %v939
    %v1387 = vunpack.c.l.b16 %v940
    %v1388 = vunpack.c.h.b16 %v940
    %v1389 = vunpack.c.l.b16 %v941
    %v1390 = vunpack.c.h.b16 %v941
    %v1391 = vunpack.c.l.b16 %v942
    %v1392 = vunpack.c.h.b16 %v942
    %v1393 = vunpack.c.l.b16 %v943
    %v1394 = vunpack.c.h.b16 %v943
    %v1395 = vunpack.c.l.b16 %v944
    %v1396 = vunpack.c.h.b16 %v944
    %v1397 = vunpack.c.l.b16 %v945
    %v1398 = vunpack.c.h.b16 %v945
    %v1399 = vunpack.c.l.b16 %v946
    %v1400 = vunpack.c.h.b16 %v946
    %v1401 = vunpack.c.l.b16 %v947
    %v1402 = vunpack.c.h.b16 %v947
    %v1403 = vunpack.c.l.b16 %v948
    %v1404 = vunpack.c.h.b16 %v948
    %v1405 = vunpack.c.l.b16 %v949
    %v1406 = vunpack.c.h.b16 %v949
    %v1407 = vunpack.c.l.b16 %v950
    %v1408 = vunpack.c.h.b16 %v950
    %v1409 = vunpack.c.l.b16 %v951
    %v1410 = vunpack.c.h.b16 %v951
    %v1411 = vunpack.c.l.b16 %v952
    %v1412 = vunpack.c.h.b16 %v952
    %v1413 = vunpack.c.l.b16 %v953
    %v1414 = vunpack.c.h.b16 %v953
    %v1415 = vunpack.c.l.b16 %v954
    %v1416 = vunpack.c.h.b16 %v954
    %v1417 = vunpack.c.l.b16 %v955
    %v1418 = vunpack.c.h.b16 %v955
    %v1419 = vunpack.c.l.b16 %v956
    %v1420 = vunpack.c.h.b16 %v956
    %v1421 = vunpack.c.l.b16 %v957
    %v1422 = vunpack.c.h.b16 %v957
    %v1423 = vunpack.c.l.b16 %v958
    %v1424 = vunpack.c.h.b16 %v958
    %v1425 = vunpack.c.l.b16 %v959
    %v1426 = vunpack.c.h.b16 %v959
    %v1427 = vunpack.c.l.b16 %v960
    %v1428 = vunpack.c.h.b16 %v960
    %v1429 = vunpack.c.l.b16 %v961
    %v1430 = vunpack.c.h.b16 %v961
    %v1431 = vunpack.c.l.b16 %v962
    %v1432 = vunpack.c.h.b16 %v962
    %v1433 = vunpack.c.l.b16 %v963
    %v1434 = vunpack.c.h.b16 %v963
    %v1435 = vunpack.c.l.b16 %v964
    %v1436 = vunpack.c.h.b16 %v964
    %v1437 = vunpack.c.l.b16 %v965
    %v1438 = vunpack.c.h.b16 %v965
    %v1439 = vunpack.c.l.b16 %v966
    %v1440 = vunpack.c.h.b16 %v966
    %v1441 = vunpack.c.l.b16 %v967
    %v1442 = vunpack.c.h.b16 %v967
    %v1443 = vunpack.c.l.b16 %v968
    %v1444 = vunpack.c.h.b16 %v968
    %v1445 = vunpack.c.l.b16 %v969
    %v1446 = vunpack.c.h.b16 %v969
    %v1447 = vunpack.c.l.b16 %v970
    %v1448 = vunpack.c.h.b16 %v970
    %v1449 = vunpack.c.l.b16 %v971
    %v1450 = vunpack.c.h.b16 %v971
    %v1451 = vunpack.c.l.b16 %v972
    %v1452 = vunpack.c.h.b16 %v972
    %v1453 = vunpack.c.l.b16 %v973
    %v1454 = vunpack.c.h.b16 %v973
    %v1455 = vunpack.c.l.b16 %v974
    %v1456 = vunpack.c.h.b16 %v974
    %v1457 = vunpack.c.l.b16 %v975
    %v1458 = vunpack.c.h.b16 %v975
    %v1459 = vunpack.c.l.b16 %v976
    %v1460 = vunpack.c.h.b16 %v976
    %v1461 = vunpack.c.l.b16 %v977
    %v1462 = vunpack.c.h.b16 %v977
    %v1463 = vunpack.c.l.b16 %v978
    %v1464 = vunpack.c.h.b16 %v978
    %v1465 = vunpack.c.l.b16 %v979
    %v1466 = vunpack.c.h.b16 %v979
    %v1467 = vunpack.c.l.b16 %v980
    %v1468 = vunpack.c.h.b16 %v980
    %v1469 = vunpack.c.l.b16 %v981
    %v1470 = vunpack.c.h.b16 %v981
    %v1471 = vunpack.c.l.b16 %v982
    %v1472 = vunpack.c.h.b16 %v982
    %v1473 = vunpack.c.l.b16 %v983
    %v1474 = vunpack.c.h.b16 %v983
    %v1475 = vunpack.c.l.b16 %v984
    %v1476 = vunpack.c.h.b16 %v984
    %v1477 = vunpack.c.l.b16 %v985
    %v1478 = vunpack.c.h.b16 %v985
    %v1479 = vunpack.c.l.b16 %v986
    %v1480 = vunpack.c.h.b16 %v986
    %v1481 = vunpack.c.l.b16 %v987
    %v1482 = vunpack.c.h.b16 %v987
    %v1483 = vunpack.c.l.b16 %v988
    %v1484 = vunpack.c.h.b16 %v988
    %v1485 = vunpack.c.l.b16 %v989
    %v1486 = vunpack.c.h.b16 %v989
    %v1487 = vunpack.c.l.b16 %v990
    %v1488 = vunpack.c.h.b16 %v990
    %v1489 = vunpack.c.l.b16 %v991
    %v1490 = vunpack.c.h.b16 %v991
    %v1491 = vunpack.c.l.b16 %v992
    %v1492 = vunpack.c.h.b16 %v992
    %v1493 = vunpack.c.l.b16 %v993
    %v1494 = vunpack.c.h.b16 %v993
    %v1495 = vunpack.c.l.b16 %v994
    %v1496 = vunpack.c.h.b16 %v994
    %v1497 = vunpack.c.l.b16 %v995
    %v1498 = vunpack.c.h.b16 %v995
    %v1499 = vunpack.c.l.b16 %v996
    %v1500 = vunpack.c.h.b16 %v996
    %v1501 = vunpack.c.l.b16 %v997
    %v1502 = vunpack.c.h.b16 %v997
    %v1503 = vunpack.c.l.b16 %v998
    %v1504 = vunpack.c.h.b16 %v998
    %v1505 = vunpack.c.l.b16 %v999
    %v1506 = vunpack.c.h.b16 %v999
    %v1507 = vunpack.c.l.b16 %v1000
    %v1508 = vunpack.c.h.b16 %v1000
    %v1509 = vunpack.c.l.b16 %v1001
    %v1510 = vunpack.c.h.b16 %v1001
    %v1511 = vunpack.c.l.b16 %v1002
    %v1512 = vunpack.c.h.b16 %v1002
    %v1513 = vunpack.c.l.b16 %v1003
    %v1514 = vunpack.c.h.b16 %v1003
    %v1515 = vunpack.c.l.b16 %v1004
    %v1516 = vunpack.c.h.b16 %v1004
    %v1517 = vunpack.c.l.b16 %v1005
    %v1518 = vunpack.c.h.b16 %v1005
    %v1519 = vunpack.c.l.b16 %v1006
    %v1520 = vunpack.c.h.b16 %v1006
    %v1521 = vunpack.c.l.b16 %v1007
    %v1522 = vunpack.c.h.b16 %v1007
    %v1523 = vunpack.c.l.b16 %v1008
    %v1524 = vunpack.c.h.b16 %v1008
    %v1525 = vunpack.c.l.b16 %v1009
    %v1526 = vunpack.c.h.b16 %v1009
    %v1527 = vunpack.c.l.b16 %v1010
    %v1528 = vunpack.c.h.b16 %v1010
    %v1529 = vunpack.c.l.b16 %v1011
    %v1530 = vunpack.c.h.b16 %v1011
    %v1531 = vunpack.c.l.b16 %v1012
    %v1532 = vunpack.c.h.b16 %v1012
    %v1533 = vunpack.c.l.b16 %v1013
    %v1534 = vunpack.c.h.b16 %v1013
    %v1535 = vunpack.c.l.b16 %v1014
    %v1536 = vunpack.c.h.b16 %v1014
    %v1537 = vunpack.c.l.b16 %v1015
    %v1538 = vunpack.c.h.b16 %v1015
    %v1539 = vunpack.c.l.b16 %v1016
    %v1540 = vunpack.c.h.b16 %v1016
    %v1541 = vunpack.c.l.b16 %v1017
    %v1542 = vunpack.c.h.b16 %v1017
    %v1543 = vunpack.c.l.b16 %v1018
    %v1544 = vunpack.c.h.b16 %v1018
    %v1545 = vunpack.c.l.b16 %v1019
    %v1546 = vunpack.c.h.b16 %v1019
    %v1547 = vunpack.c.l.b16 %v1020
    %v1548 = vunpack.c.h.b16 %v1020
    %v1549 = vunpack.c.l.b16 %v1021
    %v1550 = vunpack.c.h.b16 %v1021
    %v1551 = vunpack.c.l.b16 %v1022
    %v1552 = vunpack.c.h.b16 %v1022
    %v1553 = vunpack.c.l.b16 %v1023
    %v1554 = vunpack.c.h.b16 %v1023
    %v1555 = vunpack.c.l.b16 %v1024
    %v1556 = vunpack.c.h.b16 %v1024
    %v1557 = vunpack.c.l.b16 %v1025
    %v1558 = vunpack.c.h.b16 %v1025
    %v1559 = vunpack.c.l.b16 %v1026
    %v1560 = vunpack.c.h.b16 %v1026
    %v1561 = vunpack.c.l.b16 %v1027
    %v1562 = vunpack.c.h.b16 %v1027
    %v1563 = vunpack.c.l.b16 %v1028
    %v1564 = vunpack.c.h.b16 %v1028
    %v1565 = vunpack.c.l.b16 %v1029
    %v1566 = vunpack.c.h.b16 %v1029
    %v1567 = vunpack.c.l.b16 %v1030
    %v1568 = vunpack.c.h.b16 %v1030
    %v1569 = vunpack.c.l.b16 %v1031
    %v1570 = vunpack.c.h.b16 %v1031
    %v1571 = vunpack.c.l.b16 %v1032
    %v1572 = vunpack.c.h.b16 %v1032
    %v1573 = vunpack.c.l.b16 %v1033
    %v1574 = vunpack.c.h.b16 %v1033
    %v1575 = vunpack.c.l.b16 %v1034
    %v1576 = vunpack.c.h.b16 %v1034
    %v1577 = vunpack.c.l.b16 %v1035
    %v1578 = vunpack.c.h.b16 %v1035
    %v1579 = vunpack.c.l.b16 %v1036
    %v1580 = vunpack.c.h.b16 %v1036
    %v1581 = vunpack.c.l.b16 %v1037
    %v1582 = vunpack.c.h.b16 %v1037
    %v1583 = vunpack.c.l.b16 %v1038
    %v1584 = vunpack.c.h.b16 %v1038
    %v1585 = vunpack.c.l.b16 %v1039
    %v1586 = vunpack.c.h.b16 %v1039
    %v1587 = vunpack.c.l.b16 %v1040
    %v1588 = vunpack.c.h.b16 %v1040
    %v1589 = vunpack.c.l.b16 %v1041
    %v1590 = vunpack.c.h.b16 %v1041
    %v1591 = vunpack.c.l.b16 %v1042
    %v1592 = vunpack.c.h.b16 %v1042
    %v1593 = vunpack.c.l.b16 %v1043
    %v1594 = vunpack.c.h.b16 %v1043
    %v1595 = vunpack.c.l.b16 %v1044
    %v1596 = vunpack.c.h.b16 %v1044
    %v1597 = vunpack.c.l.b16 %v1045
    %v1598 = vunpack.c.h.b16 %v1045
    %v1599 = vunpack.c.l.b16 %v1046
    %v1600 = vunpack.c.h.b16 %v1046
    %v1601 = vunpack.c.l.b16 %v1047
    %v1602 = vunpack.c.h.b16 %v1047
    %v1603 = vunpack.c.l.b16 %v1048
    %v1604 = vunpack.c.h.b16 %v1048
    %v1605 = vunpack.c.l.b16 %v1049
    %v1606 = vunpack.c.h.b16 %v1049
    %v1607 = vunpack.c.l.b16 %v1050
    %v1608 = vunpack.c.h.b16 %v1050
    %v1609 = vunpack.c.l.b16 %v1051
    %v1610 = vunpack.c.h.b16 %v1051
    %v1611 = vunpack.c.l.b16 %v1052
    %v1612 = vunpack.c.h.b16 %v1052
    %v1613 = vunpack.c.l.b16 %v1053
    %v1614 = vunpack.c.h.b16 %v1053
    %v1615 = vunpack.c.l.b16 %v1054
    %v1616 = vunpack.c.h.b16 %v1054
    %v1617 = vunpack.c.l.b16 %v1055
    %v1618 = vunpack.c.h.b16 %v1055
    %v1619 = vunpack.c.l.b16 %v1056
    %v1620 = vunpack.c.h.b16 %v1056
    %v1621 = vunpack.c.l.b16 %v1057
    %v1622 = vunpack.c.h.b16 %v1057
    %v1623 = vunpack.c.l.b16 %v1058
    %v1624 = vunpack.c.h.b16 %v1058
    %v1625 = vunpack.c.l.b16 %v1059
    %v1626 = vunpack.c.h.b16 %v1059
    %v1627 = vunpack.c.l.b16 %v1060
    %v1628 = vunpack.c.h.b16 %v1060
    %v1629 = vunpack.c.l.b16 %v1061
    %v1630 = vunpack.c.h.b16 %v1061
    %v1631 = vunpack.c.l.b16 %v1062
    %v1632 = vunpack.c.h.b16 %v1062
    %v1633 = vunpack.c.l.b16 %v1063
    %v1634 = vunpack.c.h.b16 %v1063
    %v1635 = vunpack.c.l.b16 %v1064
    %v1636 = vunpack.c.h.b16 %v1064
    %v1637 = vunpack.c.l.b16 %v1065
    %v1638 = vunpack.c.h.b16 %v1065
    %v1639 = vunpack.c.l.b16 %v1066
    %v1640 = vunpack.c.h.b16 %v1066
    %v1641 = vunpack.c.l.b16 %v1067
    %v1642 = vunpack.c.h.b16 %v1067
    %v1643 = vunpack.c.l.b16 %v1068
    %v1644 = vunpack.c.h.b16 %v1068
    %v1645 = vunpack.c.l.b16 %v1069
    %v1646 = vunpack.c.h.b16 %v1069
    %v1647 = vunpack.c.l.b16 %v1070
    %v1648 = vunpack.c.h.b16 %v1070
    %v1649 = vunpack.c.l.b16 %v1071
    %v1650 = vunpack.c.h.b16 %v1071
    %v1651 = vunpack.c.l.b16 %v1072
    %v1652 = vunpack.c.h.b16 %v1072
    %v1653 = vunpack.c.l.b16 %v1073
    %v1654 = vunpack.c.h.b16 %v1073
    %v1655 = vunpack.c.l.b16 %v1074
    %v1656 = vunpack.c.h.b16 %v1074
    %v1657 = vunpack.c.l.b16 %v1075
    %v1658 = vunpack.c.h.b16 %v1075
    %v1659 = vunpack.c.l.b16 %v1076
    %v1660 = vunpack.c.h.b16 %v1076
    %v1661 = vunpack.c.l.b16 %v1077
    %v1662 = vunpack.c.h.b16 %v1077
    %v1663 = vunpack.c.l.b16 %v1078
    %v1664 = vunpack.c.h.b16 %v1078
    %v1665 = vunpack.c.l.b16 %v1079
    %v1666 = vunpack.c.h.b16 %v1079
    %v1667 = vunpack.c.l.b16 %v1080
    %v1668 = vunpack.c.h.b16 %v1080
    %v1669 = vunpack.c.l.b16 %v1081
    %v1670 = vunpack.c.h.b16 %v1081
    %v1671 = vunpack.c.l.b16 %v1082
    %v1672 = vunpack.c.h.b16 %v1082
    %v1673 = vunpack.c.l.b16 %v1083
    %v1674 = vunpack.c.h.b16 %v1083
    %v1675 = vunpack.c.l.b16 %v1084
    %v1676 = vunpack.c.h.b16 %v1084
    %v1677 = vunpack.c.l.b16 %v1085
    %v1678 = vunpack.c.h.b16 %v1085
    %v1679 = vunpack.c.l.b16 %v1086
    %v1680 = vunpack.c.h.b16 %v1086
    %v1681 = vunpack.c.l.b16 %v1087
    %v1682 = vunpack.c.h.b16 %v1087
    %v1683 = vunpack.c.l.b16 %v1088
    %v1684 = vunpack.c.h.b16 %v1088
    %v1685 = vunpack.c.l.b16 %v1089
    %v1686 = vunpack.c.h.b16 %v1089
    %v1687 = vunpack.c.l.b16 %v1090
    %v1688 = vunpack.c.h.b16 %v1090
    %v1689 = vunpack.c.l.b16 %v1091
    %v1690 = vunpack.c.h.b16 %v1091
    %v1691 = vunpack.c.l.b16 %v1092
    %v1692 = vunpack.c.h.b16 %v1092
    %v1693 = vunpack.c.l.b16 %v1093
    %v1694 = vunpack.c.h.b16 %v1093
    %v1695 = vunpack.c.l.b16 %v1094
    %v1696 = vunpack.c.h.b16 %v1094
    %v1697 = vunpack.c.l.b16 %v1095
    %v1698 = vunpack.c.h.b16 %v1095
    %v1699 = vunpack.c.l.b16 %v1096
    %v1700 = vunpack.c.h.b16 %v1096
    %v1701 = vunpack.c.l.b16 %v1097
    %v1702 = vunpack.c.h.b16 %v1097
    %v1703 = vunpack.c.l.b16 %v1098
    %v1704 = vunpack.c.h.b16 %v1098
    %v1705 = vunpack.c.l.b16 %v1099
    %v1706 = vunpack.c.h.b16 %v1099
    %v1707 = vunpack.c.l.b16 %v1100
    %v1708 = vunpack.c.h.b16 %v1100
    %v1709 = vunpack.c.l.b16 %v1101
    %v1710 = vunpack.c.h.b16 %v1101
    %v1711 = vunpack.c.l.b16 %v1102
    %v1712 = vunpack.c.h.b16 %v1102
    %v1713 = vunpack.c.l.b16 %v1103
    %v1714 = vunpack.c.h.b16 %v1103
    %v1715 = vunpack.c.l.b16 %v1104
    %v1716 = vunpack.c.h.b16 %v1104
    %v1717 = vunpack.c.l.b16 %v1105
    %v1718 = vunpack.c.h.b16 %v1105
    %v1719 = vunpack.c.l.b16 %v1106
    %v1720 = vunpack.c.h.b16 %v1106
    %v1721 = vunpack.c.l.b16 %v1107
    %v1722 = vunpack.c.h.b16 %v1107
    %v1723 = vunpack.c.l.b16 %v1108
    %v1724 = vunpack.c.h.b16 %v1108
    %v1725 = vunpack.c.l.b16 %v1109
    %v1726 = vunpack.c.h.b16 %v1109
    %v1727 = vunpack.c.l.b16 %v1110
    %v1728 = vunpack.c.h.b16 %v1110
    %v1729 = vunpack.c.l.b16 %v1111
    %v1730 = vunpack.c.h.b16 %v1111
    %v1731 = vunpack.c.l.b16 %v1112
    %v1732 = vunpack.c.h.b16 %v1112
    %v1733 = vunpack.c.l.b16 %v1113
    %v1734 = vunpack.c.h.b16 %v1113
    %v1735 = vunpack.c.l.b16 %v1114
    %v1736 = vunpack.c.h.b16 %v1114
    %v1737 = vunpack.c.l.b16 %v1115
    %v1738 = vunpack.c.h.b16 %v1115
    %v1739 = vunpack.c.l.b16 %v1116
    %v1740 = vunpack.c.h.b16 %v1116
    %v1741 = vunpack.c.l.b16 %v1117
    %v1742 = vunpack.c.h.b16 %v1117
    %v1743 = vunpack.c.l.b16 %v1118
    %v1744 = vunpack.c.h.b16 %v1118
    %v1745 = vunpack.c.l.b16 %v1119
    %v1746 = vunpack.c.h.b16 %v1119
    %v1747 = vunpack.c.l.b16 %v1120
    %v1748 = vunpack.c.h.b16 %v1120
    %v1749 = vunpack.c.l.b16 %v1121
    %v1750 = vunpack.c.h.b16 %v1121
    %v1751 = vunpack.c.l.b16 %v1122
    %v1752 = vunpack.c.h.b16 %v1122
    %v1753 = vunpack.c.l.b16 %v1123
    %v1754 = vunpack.c.h.b16 %v1123
    %v1755 = vunpack.c.l.b16 %v1124
    %v1756 = vunpack.c.h.b16 %v1124
    %v1757 = vunpack.c.l.b16 %v1125
    %v1758 = vunpack.c.h.b16 %v1125
    %v1759 = vunpack.c.l.b16 %v1126
    %v1760 = vunpack.c.h.b16 %v1126
    %v1761 = vunpack.c.l.b16 %v1127
    %v1762 = vunpack.c.h.b16 %v1127
    %v1763 = vunpack.c.l.b16 %v1128
    %v1764 = vunpack.c.h.b16 %v1128
    %v1765 = vunpack.c.l.b16 %v1129
    %v1766 = vunpack.c.h.b16 %v1129
    %v1767 = vunpack.c.l.b16 %v1130
    %v1768 = vunpack.c.h.b16 %v1130
    %v1769 = vunpack.c.l.b16 %v1131
    %v1770 = vunpack.c.h.b16 %v1131
    %v1771 = vunpack.c.l.b16 %v1132
    %v1772 = vunpack.c.h.b16 %v1132
    %v1773 = vunpack.c.l.b16 %v1133
    %v1774 = vunpack.c.h.b16 %v1133
    %v1775 = vunpack.c.l.b16 %v1134
    %v1776 = vunpack.c.h.b16 %v1134
    %v1777 = vunpack.c.l.b16 %v1135
    %v1778 = vunpack.c.h.b16 %v1135
    %v1779 = vunpack.c.l.b16 %v1136
    %v1780 = vunpack.c.h.b16 %v1136
    %v1781 = vunpack.c.l.b16 %v1137
    %v1782 = vunpack.c.h.b16 %v1137
    %v1783 = vunpack.c.l.b16 %v1138
    %v1784 = vunpack.c.h.b16 %v1138
    %v1785 = vunpack.c.l.b16 %v1139
    %v1786 = vunpack.c.h.b16 %v1139
    %v1787 = vunpack.c.l.b16 %v1140
    %v1788 = vunpack.c.h.b16 %v1140
    %v1789 = vpack.c.b16 %v1369, %v1357
    %v1790 = vpack.c.b16 %v1370, %v1358
    %v1791 = vpack.c.b16 %v1371, %v1359
    %v1792 = vpack.c.b16 %v1372, %v1360
    %v1793 = vpack.c.b16 %v1373, %v1361
    %v1794 = vpack.c.b16 %v1374, %v1362
    %v1795 = vpack.c.b16 %v1375, %v1363
    %v1796 = vpack.c.b16 %v1376, %v1364
    %v1797 = vpack.c.b16 %v1377, %v1365
    %v1798 = vpack.c.b16 %v1378, %v1366
    %v1799 = vpack.c.b16 %v1379, %v1367
    %v1800 = vpack.c.b16 %v1380, %v1368
    %v1801 = vpack.c.b16 %v1393, %v1381
    %v1802 = vpack.c.b16 %v1394, %v1382
    %v1803 = vpack.c.b16 %v1395, %v1383
    %v1804 = vpack.c.b16 %v1396, %v1384
    %v1805 = vpack.c.b16 %v1397, %v1385
    %v1806 = vpack.c.b16 %v1398, %v1386
    %v1807 = vpack.c.b16 %v1399, %v1387
    %v1808 = vpack.c.b16 %v1400, %v1388
    %v1809 = vpack.c.b16 %v1401, %v1389
    %v1810 = vpack.c.b16 %v1402, %v1390
    %v1811 = vpack.c.b16 %v1403, %v1391
    %v1812 = vpack.c.b16 %v1404, %v1392
    %v1813 = vpack.c.b16 %v1417, %v1405
    %v1814 = vpack.c.b16 %v1418, %v1406
    %v1815 = vpack.c.b16 %v1419, %v1407
    %v1816 = vpack.c.b16 %v1420, %v1408
    %v1817 = vpack.c.b16 %v1421, %v1409
    %v1818 = vpack.c.b16 %v1422, %v1410
    %v1819 = vpack.c.b16 %v1423, %v1411
    %v1820 = vpack.c.b16 %v1424, %v1412
    %v1821 = vpack.c.b16 %v1425, %v1413
    %v1822 = vpack.c.b16 %v1426, %v1414
    %v1823 = vpack.c.b16 %v1427, %v1415
    %v1824 = vpack.c.b16 %v1428, %v1416
    %v1825 = vpack.c.b16 %v1441, %v1429
    %v1826 = vpack.c.b16 %v1442, %v1430
    %v1827 = vpack.c.b16 %v1443, %v1431
    %v1828 = vpack.c.b16 %v1444, %v1432
    %v1829 = vpack.c.b16 %v1445, %v1433
    %v1830 = vpack.c.b16 %v1446, %v1434
    %v1831 = vpack.c.b16 %v1447, %v1435
    %v1832 = vpack.c.b16 %v1448, %v1436
    %v1833 = vpack.c.b16 %v1449, %v1437
    %v1834 = vpack.c.b16 %v1450, %v1438
    %v1835 = vpack.c.b16 %v1451, %v1439
    %v1836 = vpack.c.b16 %v1452, %v1440
    %v1837 = vpack.c.b16 %v1465, %v1453
    %v1838 = vpack.c.b16 %v1466, %v1454
    %v1839 = vpack.c.b16 %v1467, %v1455
    %v1840 = vpack.c.b16 %v1468, %v1456
    %v1841 = vpack.c.b16 %v1469, %v1457
    %v1842 = vpack.c.b16 %v1470, %v1458
    %v1843 = vpack.c.b16 %v1471, %v1459
    %v1844 = vpack.c.b16 %v1472, %v1460
    %v1845 = vpack.c.b16 %v1473, %v1461
    %v1846 = vpack.c.b16 %v1474, %v1462
    %v1847 = vpack.c.b16 %v1475, %v1463
    %v1848 = vpack.c.b16 %v1476, %v1464
    %v1849 = vpack.c.b16 %v1489, %v1477
    %v1850 = vpack.c.b16 %v1490, %v1478
    %v1851 = vpack.c.b16 %v1491, %v1479
    %v1852 = vpack.c.b16 %v1492, %v1480
    %v1853 = vpack.c.b16 %v1493, %v1481
    %v1854 = vpack.c.b16 %v1494, %v1482
    %v1855 = vpack.c.b16 %v1495, %v1483
    %v1856 = vpack.c.b16 %v1496, %v1484
    %v1857 = vpack.c.b16 %v1497, %v1485
    %v1858 = vpack.c.b16 %v1498, %v1486
    %v1859 = vpack.c.b16 %v1499, %v1487
    %v1860 = vpack.c.b16 %v1500, %v1488
    %v1861 = vpack.c.b16 %v1513, %v1501
    %v1862 = vpack.c.b16 %v1514, %v1502
    %v1863 = vpack.c.b16 %v1515, %v1503
    %v1864 = vpack.c.b16 %v1516, %v1504
    %v1865 = vpack.c.b16 %v1517, %v1505
    %v1866 = vpack.c.b16 %v1518, %v1506
    %v1867 = vpack.c.b16 %v1519, %v1507
    %v1868 = vpack.c.b16 %v1520, %v1508
    %v1869 = vpack.c.b16 %v1521, %v1509
    %v1870 = vpack.c.b16 %v1522, %v1510
    %v1871 = vpack.c.b16 %v1523, %v1511
    %v1872 = vpack.c.b16 %v1524, %v1512
    %v1873 = vpack.c.b16 %v1537, %v1525
    %v1874 = vpack.c.b16 %v1538, %v1526
    %v1875 = vpack.c.b16 %v1539, %v1527
    %v1876 = vpack.c.b16 %v1540, %v1528
    %v1877 = vpack.c.b16 %v1541, %v1529
    %v1878 = vpack.c.b16 %v1542, %v1530
    %v1879 = vpack.c.b16 %v1543, %v1531
    %v1880 = vpack.c.b16 %v1544, %v1532
    %v1881 = vpack.c.b16 %v1545, %v1533
    %v1882 = vpack.c.b16 %v1546, %v1534
    %v1883 = vpack.c.b16 %v1547, %v1535
    %v1884 = vpack.c.b16 %v1548, %v1536
    %v1885 = vpack.c.b16 %v1561, %v1549
    %v1886 = vpack.c.b16 %v1562, %v1550
    %v1887 = vpack.c.b16 %v1563, %v1551
    %v1888 = vpack.c.b16 %v1564, %v1552
    %v1889 = vpack.c.b16 %v1565, %v1553
    %v1890 = vpack.c.b16 %v1566, %v1554
    %v1891 = vpack.c.b16 %v1567, %v1555
    %v1892 = vpack.c.b16 %v1568, %v1556
    %v1893 = vpack.c.b16 %v1569, %v1557
    %v1894 = vpack.c.b16 %v1570, %v1558
    %v1895 = vpack.c.b16 %v1571, %v1559
    %v1896 = vpack.c.b16 %v1572, %v1560
    %v1897 = vpack.c.b16 %v1585, %v1573
    %v1898 = vpack.c.b16 %v1586, %v1574
    %v1899 = vpack.c.b16 %v1587, %v1575
    %v1900 = vpack.c.b16 %v1588, %v1576
    %v1901 = vpack.c.b16 %v1589, %v1577
    %v1902 = vpack.c.b16 %v1590, %v1578
    %v1903 = vpack.c.b16 %v1591, %v1579
    %v1904 = vpack.c.b16 %v1592, %v1580
    %v1905 = vpack.c.b16 %v1593, %v1581
    %v1906 = vpack.c.b16 %v1594, %v1582
    %v1907 = vpack.c.b16 %v1595, %v1583
    %v1908 = vpack.c.b16 %v1596, %v1584
    %v1909 = vpack.c.b16 %v1609, %v1597
    %v1910 = vpack.c.b16 %v1610, %v1598
    %v1911 = vpack.c.b16 %v1611, %v1599
    %v1912 = vpack.c.b16 %v1612, %v1600
    %v1913 = vpack.c.b16 %v1613, %v1601
    %v1914 = vpack.c.b16 %v1614, %v1602
    %v1915 = vpack.c.b16 %v1615, %v1603
    %v1916 = vpack.c.b16 %v1616, %v1604
    %v1917 = vpack.c.b16 %v1617, %v1605
    %v1918 = vpack.c.b16 %v1618, %v1606
    %v1919 = vpack.c.b16 %v1619, %v1607
    %v1920 = vpack.c.b16 %v1620, %v1608
    %v1921 = vpack.c.b16 %v1633, %v1621
    %v1922 = vpack.c.b16 %v1634, %v1622
    %v1923 = vpack.c.b16 %v1635, %v1623
    %v1924 = vpack.c.b16 %v1636, %v1624
    %v1925 = vpack.c.b16 %v1637, %v1625
    %v1926 = vpack.c.b16 %v1638, %v1626
    %v1927 = vpack.c.b16 %v1639, %v1627
    %v1928 = vpack.c.b16 %v1640, %v1628
    %v1929 = vpack.c.b16 %v1641, %v1629
    %v1930 = vpack.c.b16 %v1642, %v1630
    %v1931 = vpack.c.b16 %v1643, %v1631
    %v1932 = vpack.c.b16 %v1644, %v1632
    %v1933 = vpack.c.b16 %v1657, %v1645
    %v1934 = vpack.c.b16 %v1658, %v1646
    %v1935 = vpack.c.b16 %v1659, %v1647
    %v1936 = vpack.c.b16 %v1660, %v1648
    %v1937 = vpack.c.b16 %v1661, %v1649
    %v1938 = vpack.c.b16 %v1662, %v1650
    %v1939 = vpack.c.b16 %v1663, %v1651
    %v1940 = vpack.c.b16 %v1664, %v1652
    %v1941 = vpack.c.b16 %v1665, %v1653
    %v1942 = vpack.c.b16 %v1666, %v1654
    %v1943 = vpack.c.b16 %v1667, %v1655
    %v1944 = vpack.c.b16 %v1668, %v1656
    %v1945 = vpack.c.b16 %v1681, %v1669
    %v1946 = vpack.c.b16 %v1682, %v1670
    %v1947 = vpack.c.b16 %v1683, %v1671
    %v1948 = vpack.c.b16 %v1684, %v1672
    %v1949 = vpack.c.b16 %v1685, %v1673
    %v1950 = vpack.c.b16 %v1686, %v1674
    %v1951 = vpack.c.b16 %v1687, %v1675
    %v1952 = vpack.c.b16 %v1688, %v1676
    %v1953 = vpack.c.b16 %v1689, %v1677
    %v1954 = vpack.c.b16 %v1690, %v1678
    %v1955 = vpack.c.b16 %v1691, %v1679
    %v1956 = vpack.c.b16 %v1692, %v1680
    %v1957 = vpack.c.b16 %v1705, %v1693
    %v1958 = vpack.c.b16 %v1706, %v1694
    %v1959 = vpack.c.b16 %v1707, %v1695
    %v1960 = vpack.c.b16 %v1708, %v1696
    %v1961 = vpack.c.b16 %v1709, %v1697
    %v1962 = vpack.c.b16 %v1710, %v1698
    %v1963 = vpack.c.b16 %v1711, %v1699
    %v1964 = vpack.c.b16 %v1712, %v1700
    %v1965 = vpack.c.b16 %v1713, %v1701
    %v1966 = vpack.c.b16 %v1714, %v1702
    %v1967 = vpack.c.b16 %v1715, %v1703
    %v1968 = vpack.c.b16 %v1716, %v1704
    %v1969 = vpack.c.b16 %v1729, %v1717
    %v1970 = vpack.c.b16 %v1730, %v1718
    %v1971 = vpack.c.b16 %v1731, %v1719
    %v1972 = vpack.c.b16 %v1732, %v1720
    %v1973 = vpack.c.b16 %v1733, %v1721
    %v1974 = vpack.c.b16 %v1734, %v1722
    %v1975 = vpack.c.b16 %v1735, %v1723
    %v1976 = vpack.c.b16 %v1736, %v1724
    %v1977 = vpack.c.b16 %v1737, %v1725
    %v1978 = vpack.c.b16 %v1738, %v1726
    %v1979 = vpack.c.b16 %v1739, %v1727
    %v1980 = vpack.c.b16 %v1740, %v1728
    %v1981 = vpack.c.b16 %v1753, %v1741
    %v1982 = vpack.c.b16 %v1754, %v1742
    %v1983 = vpack.c.b16 %v1755, %v1743
    %v1984 = vpack.c.b16 %v1756, %v1744
    %v1985 = vpack.c.b16 %v1757, %v1745
    %v1986 = vpack.c.b16 %v1758, %v1746
    %v1987 = vpack.c.b16 %v1759, %v1747
    %v1988 = vpack.c.b16 %v1760, %v1748
    %v1989 = vpack.c.b16 %v1761, %v1749
    %v1990 = vpack.c.b16 %v1762, %v1750
    %v1991 = vpack.c.b16 %v1763, %v1751
    %v1992 = vpack.c.b16 %v1764, %v1752
    %v1993 = vpack.c.b16 %v1777, %v1765
    %v1994 = vpack.c.b16 %v1778, %v1766
    %v1995 = vpack.c.b16 %v1779, %v1767
    %v1996 = vpack.c.b16 %v1780, %v1768
    %v1997 = vpack.c.b16 %v1781, %v1769
    %v1998 = vpack.c.b16 %v1782, %v1770
    %v1999 = vpack.c.b16 %v1783, %v1771
    %v2000 = vpack.c.b16 %v1784, %v1772
    %v2001 = vpack.c.b16 %v1785, %v1773
    %v2002 = vpack.c.b16 %v1786, %v1774
    %v2003 = vpack.c.b16 %v1787, %v1775
    %v2004 = vpack.c.b16 %v1788, %v1776
    %vm2221 = vcmask 261120
    %v2223 = vsel %vm2221, 0, 0
    %2225 = vmatprep.subr.bf16.mxu0 %v1790
    %2226 = vmatpush1.bf16.msra.mxu0 %v1789
    %2227 = vmatprep.subr.bf16.mxu0 %v1802
    %2228 = vmatpush1.bf16.msra.mxu0 %v1801
    %2229 = vmatprep.subr.bf16.mxu0 %v1814
    %2230 = vmatpush1.bf16.msra.mxu0 %v1813
    %2231 = vmatprep.subr.bf16.mxu0 %v1826
    %2232 = vmatpush1.bf16.msra.mxu0 %v1825
    %2233 = vmatprep.subr.bf16.mxu0 %v1838
    %2234 = vmatpush1.bf16.msra.mxu0 %v1837
    %2235 = vmatprep.subr.bf16.mxu0 %v1850
    %2236 = vmatpush1.bf16.msra.mxu0 %v1849
    %2237 = vmatprep.subr.bf16.mxu0 %v1862
    %2238 = vmatpush1.bf16.msra.mxu0 %v1861
    %2239 = vmatprep.subr.bf16.mxu0 %v1874
    %2240 = vmatpush1.bf16.msra.mxu0 %v1873
    %2241 = vmatprep.subr.bf16.mxu0 %v1886
    %2242 = vmatpush1.bf16.msra.mxu0 %v1885
    %2243 = vmatprep.subr.bf16.mxu0 %v1898
    %2244 = vmatpush1.bf16.msra.mxu0 %v1897
    %2245 = vmatprep.subr.bf16.mxu0 %v1910
    %2246 = vmatpush1.bf16.msra.mxu0 %v1909
    %2247 = vmatprep.subr.bf16.mxu0 %v1922
    %2248 = vmatpush1.bf16.msra.mxu0 %v1921
    %2249 = vmatprep.subr.bf16.mxu0 %v1934
    %2250 = vmatpush1.bf16.msra.mxu0 %v1933
    %2251 = vmatprep.subr.bf16.mxu0 %v1946
    %2252 = vmatpush1.bf16.msra.mxu0 %v1945
    %2253 = vmatprep.subr.bf16.mxu0 %v1958
    %2254 = vmatpush1.bf16.msra.mxu0 %v1957
    %2255 = vmatprep.subr.bf16.mxu0 %v1970
    %2256 = vmatpush1.bf16.msra.mxu0 %v1969
    %2257 = vmatprep.mubr.bf16.mxu0 0
    %2258 = vmatmul.mubr.bf16.gmra.mrb[0].mxu0 0
    %v2259 = vpop.f32.mrb[0].mxu0
    %v2260 = vadd.f32 0.0, %v2259
    %v2261 = vpop.f32.mrb[0].mxu0
    %v2262 = vadd.f32 0.0, %v2261
    %v2263 = vpop.f32.mrb[0].mxu0
    %v2264 = vpop.f32.mrb[0].mxu0
    %2265 = vdwg.mxu0
    %2266 = vmatprep.subr.bf16.mxu0 %v1982
    %2267 = vmatpush1.bf16.msra.mxu0 %v1981
    %2268 = vmatprep.subr.bf16.mxu0 %v1994
    %2269 = vmatpush1.bf16.msra.mxu0 %v1993
    %2270 = vmatprep.subr.bf16.mxu0 0
    %2271 = vmatpush1.bf16.msra.mxu0 0
    %2272 = vmatprep.subr.bf16.mxu0 0
    %2273 = vmatpush1.bf16.msra.mxu0 0
    %2274 = vmatprep.subr.bf16.mxu0 0
    %2275 = vmatpush1.bf16.msra.mxu0 0
    %2276 = vmatprep.subr.bf16.mxu0 0
    %2277 = vmatpush1.bf16.msra.mxu0 0
    %2278 = vmatprep.subr.bf16.mxu0 0
    %2279 = vmatpush1.bf16.msra.mxu0 0
    %2280 = vmatprep.subr.bf16.mxu0 0
    %2281 = vmatpush1.bf16.msra.mxu0 0
    %2282 = vmatprep.subr.bf16.mxu0 0
    %2283 = vmatpush1.bf16.msra.mxu0 0
    %2284 = vmatprep.subr.bf16.mxu0 0
    %2285 = vmatpush1.bf16.msra.mxu0 0
    %2286 = vmatprep.subr.bf16.mxu0 0
    %2287 = vmatpush1.bf16.msra.mxu0 0
    %2288 = vmatprep.subr.bf16.mxu0 0
    %2289 = vmatpush1.bf16.msra.mxu0 0
    %2290 = vmatprep.subr.bf16.mxu0 0
    %2291 = vmatpush1.bf16.msra.mxu0 0
    %2292 = vmatprep.subr.bf16.mxu0 0
    %2293 = vmatpush1.bf16.msra.mxu0 0
    %2294 = vmatprep.subr.bf16.mxu0 0
    %2295 = vmatpush1.bf16.msra.mxu0 0
    %2296 = vmatprep.subr.bf16.mxu0 0
    %2297 = vmatpush1.bf16.msra.mxu0 0
    %2298 = vmatprep.mubr.bf16.mxu0 0
    %2299 = vmatmul.mubr.bf16.gmra.mrb[0].mxu0 %v2223
    %v2300 = vpop.f32.mrb[0].mxu0
    %v2301 = vadd.f32 %v2260, %v2300
    %v2302 = vpop.f32.mrb[0].mxu0
    %v2303 = vadd.f32 %v2262, %v2302
    %v2304 = vpop.f32.mrb[0].mxu0
    %v2305 = vpop.f32.mrb[0].mxu0
    %2306 = vdwg.mxu0
    %2307 = vmatprep.subr.bf16.mxu0 %v1792
    %2308 = vmatpush1.bf16.msra.mxu0 %v1791
    %2309 = vmatprep.subr.bf16.mxu0 %v1804
    %2310 = vmatpush1.bf16.msra.mxu0 %v1803
    %2311 = vmatprep.subr.bf16.mxu0 %v1816
    %2312 = vmatpush1.bf16.msra.mxu0 %v1815
    %2313 = vmatprep.subr.bf16.mxu0 %v1828
    %2314 = vmatpush1.bf16.msra.mxu0 %v1827
    %2315 = vmatprep.subr.bf16.mxu0 %v1840
    %2316 = vmatpush1.bf16.msra.mxu0 %v1839
    %2317 = vmatprep.subr.bf16.mxu0 %v1852
    %2318 = vmatpush1.bf16.msra.mxu0 %v1851
    %2319 = vmatprep.subr.bf16.mxu0 %v1864
    %2320 = vmatpush1.bf16.msra.mxu0 %v1863
    %2321 = vmatprep.subr.bf16.mxu0 %v1876
    %2322 = vmatpush1.bf16.msra.mxu0 %v1875
    %2323 = vmatprep.subr.bf16.mxu0 %v1888
    %2324 = vmatpush1.bf16.msra.mxu0 %v1887
    %2325 = vmatprep.subr.bf16.mxu0 %v1900
    %2326 = vmatpush1.bf16.msra.mxu0 %v1899
    %2327 = vmatprep.subr.bf16.mxu0 %v1912
    %2328 = vmatpush1.bf16.msra.mxu0 %v1911
    %2329 = vmatprep.subr.bf16.mxu0 %v1924
    %2330 = vmatpush1.bf16.msra.mxu0 %v1923
    %2331 = vmatprep.subr.bf16.mxu0 %v1936
    %2332 = vmatpush1.bf16.msra.mxu0 %v1935
    %2333 = vmatprep.subr.bf16.mxu0 %v1948
    %2334 = vmatpush1.bf16.msra.mxu0 %v1947
    %2335 = vmatprep.subr.bf16.mxu0 %v1960
    %2336 = vmatpush1.bf16.msra.mxu0 %v1959
    %2337 = vmatprep.subr.bf16.mxu0 %v1972
    %2338 = vmatpush1.bf16.msra.mxu0 %v1971
    %2339 = vmatprep.mubr.bf16.mxu0 0
    %2340 = vmatmul.mubr.bf16.gmra.mrb[0].mxu0 0
    %v2341 = vpop.f32.mrb[0].mxu0
    %v2342 = vadd.f32 0.0, %v2341
    %v2343 = vpop.f32.mrb[0].mxu0
    %v2344 = vadd.f32 0.0, %v2343
    %v2345 = vpop.f32.mrb[0].mxu0
    %v2346 = vpop.f32.mrb[0].mxu0
    %2347 = vdwg.mxu0
    %2348 = vmatprep.subr.bf16.mxu0 %v1984
    %2349 = vmatpush1.bf16.msra.mxu0 %v1983
    %2350 = vmatprep.subr.bf16.mxu0 %v1996
    %2351 = vmatpush1.bf16.msra.mxu0 %v1995
    %2352 = vmatprep.subr.bf16.mxu0 0
    %2353 = vmatpush1.bf16.msra.mxu0 0
    %2354 = vmatprep.subr.bf16.mxu0 0
    %2355 = vmatpush1.bf16.msra.mxu0 0
    %2356 = vmatprep.subr.bf16.mxu0 0
    %2357 = vmatpush1.bf16.msra.mxu0 0
    %2358 = vmatprep.subr.bf16.mxu0 0
    %2359 = vmatpush1.bf16.msra.mxu0 0
    %2360 = vmatprep.subr.bf16.mxu0 0
    %2361 = vmatpush1.bf16.msra.mxu0 0
    %2362 = vmatprep.subr.bf16.mxu0 0
    %2363 = vmatpush1.bf16.msra.mxu0 0
    %2364 = vmatprep.subr.bf16.mxu0 0
    %2365 = vmatpush1.bf16.msra.mxu0 0
    %2366 = vmatprep.subr.bf16.mxu0 0
    %2367 = vmatpush1.bf16.msra.mxu0 0
    %2368 = vmatprep.subr.bf16.mxu0 0
    %2369 = vmatpush1.bf16.msra.mxu0 0
    %2370 = vmatprep.subr.bf16.mxu0 0
    %2371 = vmatpush1.bf16.msra.mxu0 0
    %2372 = vmatprep.subr.bf16.mxu0 0
    %2373 = vmatpush1.bf16.msra.mxu0 0
    %2374 = vmatprep.subr.bf16.mxu0 0
    %2375 = vmatpush1.bf16.msra.mxu0 0
    %2376 = vmatprep.subr.bf16.mxu0 0
    %2377 = vmatpush1.bf16.msra.mxu0 0
    %2378 = vmatprep.subr.bf16.mxu0 0
    %2379 = vmatpush1.bf16.msra.mxu0 0
    %2380 = vmatprep.mubr.bf16.mxu0 0
    %2381 = vmatmul.mubr.bf16.gmra.mrb[0].mxu0 %v2223
    %v2382 = vpop.f32.mrb[0].mxu0
    %v2383 = vadd.f32 %v2342, %v2382
    %v2384 = vpop.f32.mrb[0].mxu0
    %v2385 = vadd.f32 %v2344, %v2384
    %v2386 = vpop.f32.mrb[0].mxu0
    %v2387 = vpop.f32.mrb[0].mxu0
    %2388 = vdwg.mxu0
    %2389 = vmatprep.subr.bf16.mxu0 %v1794
    %2390 = vmatpush1.bf16.msra.mxu0 %v1793
    %2391 = vmatprep.subr.bf16.mxu0 %v1806
    %2392 = vmatpush1.bf16.msra.mxu0 %v1805
    %2393 = vmatprep.subr.bf16.mxu0 %v1818
    %2394 = vmatpush1.bf16.msra.mxu0 %v1817
    %2395 = vmatprep.subr.bf16.mxu0 %v1830
    %2396 = vmatpush1.bf16.msra.mxu0 %v1829
    %2397 = vmatprep.subr.bf16.mxu0 %v1842
    %2398 = vmatpush1.bf16.msra.mxu0 %v1841
    %2399 = vmatprep.subr.bf16.mxu0 %v1854
    %2400 = vmatpush1.bf16.msra.mxu0 %v1853
    %2401 = vmatprep.subr.bf16.mxu0 %v1866
    %2402 = vmatpush1.bf16.msra.mxu0 %v1865
    %2403 = vmatprep.subr.bf16.mxu0 %v1878
    %2404 = vmatpush1.bf16.msra.mxu0 %v1877
    %2405 = vmatprep.subr.bf16.mxu0 %v1890
    %2406 = vmatpush1.bf16.msra.mxu0 %v1889
    %2407 = vmatprep.subr.bf16.mxu0 %v1902
    %2408 = vmatpush1.bf16.msra.mxu0 %v1901
    %2409 = vmatprep.subr.bf16.mxu0 %v1914
    %2410 = vmatpush1.bf16.msra.mxu0 %v1913
    %2411 = vmatprep.subr.bf16.mxu0 %v1926
    %2412 = vmatpush1.bf16.msra.mxu0 %v1925
    %2413 = vmatprep.subr.bf16.mxu0 %v1938
    %2414 = vmatpush1.bf16.msra.mxu0 %v1937
    %2415 = vmatprep.subr.bf16.mxu0 %v1950
    %2416 = vmatpush1.bf16.msra.mxu0 %v1949
    %2417 = vmatprep.subr.bf16.mxu0 %v1962
    %2418 = vmatpush1.bf16.msra.mxu0 %v1961
    %2419 = vmatprep.subr.bf16.mxu0 %v1974
    %2420 = vmatpush1.bf16.msra.mxu0 %v1973
    %2421 = vmatprep.mubr.bf16.mxu0 0
    %2422 = vmatmul.mubr.bf16.gmra.mrb[0].mxu0 0
    %v2423 = vpop.f32.mrb[0].mxu0
    %v2424 = vadd.f32 0.0, %v2423
    %v2425 = vpop.f32.mrb[0].mxu0
    %v2426 = vadd.f32 0.0, %v2425
    %v2427 = vpop.f32.mrb[0].mxu0
    %v2428 = vpop.f32.mrb[0].mxu0
    %2429 = vdwg.mxu0
    %2430 = vmatprep.subr.bf16.mxu0 %v1986
    %2431 = vmatpush1.bf16.msra.mxu0 %v1985
    %2432 = vmatprep.subr.bf16.mxu0 %v1998
    %2433 = vmatpush1.bf16.msra.mxu0 %v1997
    %2434 = vmatprep.subr.bf16.mxu0 0
    %2435 = vmatpush1.bf16.msra.mxu0 0
    %2436 = vmatprep.subr.bf16.mxu0 0
    %2437 = vmatpush1.bf16.msra.mxu0 0
    %2438 = vmatprep.subr.bf16.mxu0 0
    %2439 = vmatpush1.bf16.msra.mxu0 0
    %2440 = vmatprep.subr.bf16.mxu0 0
    %2441 = vmatpush1.bf16.msra.mxu0 0
    %2442 = vmatprep.subr.bf16.mxu0 0
    %2443 = vmatpush1.bf16.msra.mxu0 0
    %2444 = vmatprep.subr.bf16.mxu0 0
    %2445 = vmatpush1.bf16.msra.mxu0 0
    %2446 = vmatprep.subr.bf16.mxu0 0
    %2447 = vmatpush1.bf16.msra.mxu0 0
    %2448 = vmatprep.subr.bf16.mxu0 0
    %2449 = vmatpush1.bf16.msra.mxu0 0
    %2450 = vmatprep.subr.bf16.mxu0 0
    %2451 = vmatpush1.bf16.msra.mxu0 0
    %2452 = vmatprep.subr.bf16.mxu0 0
    %2453 = vmatpush1.bf16.msra.mxu0 0
    %2454 = vmatprep.subr.bf16.mxu0 0
    %2455 = vmatpush1.bf16.msra.mxu0 0
    %2456 = vmatprep.subr.bf16.mxu0 0
    %2457 = vmatpush1.bf16.msra.mxu0 0
    %2458 = vmatprep.subr.bf16.mxu0 0
    %2459 = vmatpush1.bf16.msra.mxu0 0
    %2460 = vmatprep.subr.bf16.mxu0 0
    %2461 = vmatpush1.bf16.msra.mxu0 0
    %2462 = vmatprep.mubr.bf16.mxu0 0
    %2463 = vmatmul.mubr.bf16.gmra.mrb[0].mxu0 %v2223
    %v2464 = vpop.f32.mrb[0].mxu0
    %v2465 = vadd.f32 %v2424, %v2464
    %v2466 = vpop.f32.mrb[0].mxu0
    %v2467 = vadd.f32 %v2426, %v2466
    %v2468 = vpop.f32.mrb[0].mxu0
    %v2469 = vpop.f32.mrb[0].mxu0
    %2470 = vdwg.mxu0
    %2471 = vmatprep.subr.bf16.mxu0 %v1796
    %2472 = vmatpush1.bf16.msra.mxu0 %v1795
    %2473 = vmatprep.subr.bf16.mxu0 %v1808
    %2474 = vmatpush1.bf16.msra.mxu0 %v1807
    %2475 = vmatprep.subr.bf16.mxu0 %v1820
    %2476 = vmatpush1.bf16.msra.mxu0 %v1819
    %2477 = vmatprep.subr.bf16.mxu0 %v1832
    %2478 = vmatpush1.bf16.msra.mxu0 %v1831
    %2479 = vmatprep.subr.bf16.mxu0 %v1844
    %2480 = vmatpush1.bf16.msra.mxu0 %v1843
    %2481 = vmatprep.subr.bf16.mxu0 %v1856
    %2482 = vmatpush1.bf16.msra.mxu0 %v1855
    %2483 = vmatprep.subr.bf16.mxu0 %v1868
    %2484 = vmatpush1.bf16.msra.mxu0 %v1867
    %2485 = vmatprep.subr.bf16.mxu0 %v1880
    %2486 = vmatpush1.bf16.msra.mxu0 %v1879
    %2487 = vmatprep.subr.bf16.mxu0 %v1892
    %2488 = vmatpush1.bf16.msra.mxu0 %v1891
    %2489 = vmatprep.subr.bf16.mxu0 %v1904
    %2490 = vmatpush1.bf16.msra.mxu0 %v1903
    %2491 = vmatprep.subr.bf16.mxu0 %v1916
    %2492 = vmatpush1.bf16.msra.mxu0 %v1915
    %2493 = vmatprep.subr.bf16.mxu0 %v1928
    %2494 = vmatpush1.bf16.msra.mxu0 %v1927
    %2495 = vmatprep.subr.bf16.mxu0 %v1940
    %2496 = vmatpush1.bf16.msra.mxu0 %v1939
    %2497 = vmatprep.subr.bf16.mxu0 %v1952
    %2498 = vmatpush1.bf16.msra.mxu0 %v1951
    %2499 = vmatprep.subr.bf16.mxu0 %v1964
    %2500 = vmatpush1.bf16.msra.mxu0 %v1963
    %2501 = vmatprep.subr.bf16.mxu0 %v1976
    %2502 = vmatpush1.bf16.msra.mxu0 %v1975
    %2503 = vmatprep.mubr.bf16.mxu0 0
    %2504 = vmatmul.mubr.bf16.gmra.mrb[0].mxu0 0
    %v2505 = vpop.f32.mrb[0].mxu0
    %v2506 = vadd.f32 0.0, %v2505
    %v2507 = vpop.f32.mrb[0].mxu0
    %v2508 = vadd.f32 0.0, %v2507
    %v2509 = vpop.f32.mrb[0].mxu0
    %v2510 = vpop.f32.mrb[0].mxu0
    %2511 = vdwg.mxu0
    %2512 = vmatprep.subr.bf16.mxu0 %v1988
    %2513 = vmatpush1.bf16.msra.mxu0 %v1987
    %2514 = vmatprep.subr.bf16.mxu0 %v2000
    %2515 = vmatpush1.bf16.msra.mxu0 %v1999
    %2516 = vmatprep.subr.bf16.mxu0 0
    %2517 = vmatpush1.bf16.msra.mxu0 0
    %2518 = vmatprep.subr.bf16.mxu0 0
    %2519 = vmatpush1.bf16.msra.mxu0 0
    %2520 = vmatprep.subr.bf16.mxu0 0
    %2521 = vmatpush1.bf16.msra.mxu0 0
    %2522 = vmatprep.subr.bf16.mxu0 0
    %2523 = vmatpush1.bf16.msra.mxu0 0
    %2524 = vmatprep.subr.bf16.mxu0 0
    %2525 = vmatpush1.bf16.msra.mxu0 0
    %2526 = vmatprep.subr.bf16.mxu0 0
    %2527 = vmatpush1.bf16.msra.mxu0 0
    %2528 = vmatprep.subr.bf16.mxu0 0
    %2529 = vmatpush1.bf16.msra.mxu0 0
    %2530 = vmatprep.subr.bf16.mxu0 0
    %2531 = vmatpush1.bf16.msra.mxu0 0
    %2532 = vmatprep.subr.bf16.mxu0 0
    %2533 = vmatpush1.bf16.msra.mxu0 0
    %2534 = vmatprep.subr.bf16.mxu0 0
    %2535 = vmatpush1.bf16.msra.mxu0 0
    %2536 = vmatprep.subr.bf16.mxu0 0
    %2537 = vmatpush1.bf16.msra.mxu0 0
    %2538 = vmatprep.subr.bf16.mxu0 0
    %2539 = vmatpush1.bf16.msra.mxu0 0
    %2540 = vmatprep.subr.bf16.mxu0 0
    %2541 = vmatpush1.bf16.msra.mxu0 0
    %2542 = vmatprep.subr.bf16.mxu0 0
    %2543 = vmatpush1.bf16.msra.mxu0 0
    %2544 = vmatprep.mubr.bf16.mxu0 0
    %2545 = vmatmul.mubr.bf16.gmra.mrb[0].mxu0 %v2223
    %v2546 = vpop.f32.mrb[0].mxu0
    %v2547 = vadd.f32 %v2506, %v2546
    %v2548 = vpop.f32.mrb[0].mxu0
    %v2549 = vadd.f32 %v2508, %v2548
    %v2550 = vpop.f32.mrb[0].mxu0
    %v2551 = vpop.f32.mrb[0].mxu0
    %2552 = vdwg.mxu0
    %2553 = vmatprep.subr.bf16.mxu0 %v1798
    %2554 = vmatpush1.bf16.msra.mxu0 %v1797
    %2555 = vmatprep.subr.bf16.mxu0 %v1810
    %2556 = vmatpush1.bf16.msra.mxu0 %v1809
    %2557 = vmatprep.subr.bf16.mxu0 %v1822
    %2558 = vmatpush1.bf16.msra.mxu0 %v1821
    %2559 = vmatprep.subr.bf16.mxu0 %v1834
    %2560 = vmatpush1.bf16.msra.mxu0 %v1833
    %2561 = vmatprep.subr.bf16.mxu0 %v1846
    %2562 = vmatpush1.bf16.msra.mxu0 %v1845
    %2563 = vmatprep.subr.bf16.mxu0 %v1858
    %2564 = vmatpush1.bf16.msra.mxu0 %v1857
    %2565 = vmatprep.subr.bf16.mxu0 %v1870
    %2566 = vmatpush1.bf16.msra.mxu0 %v1869
    %2567 = vmatprep.subr.bf16.mxu0 %v1882
    %2568 = vmatpush1.bf16.msra.mxu0 %v1881
    %2569 = vmatprep.subr.bf16.mxu0 %v1894
    %2570 = vmatpush1.bf16.msra.mxu0 %v1893
    %2571 = vmatprep.subr.bf16.mxu0 %v1906
    %2572 = vmatpush1.bf16.msra.mxu0 %v1905
    %2573 = vmatprep.subr.bf16.mxu0 %v1918
    %2574 = vmatpush1.bf16.msra.mxu0 %v1917
    %2575 = vmatprep.subr.bf16.mxu0 %v1930
    %2576 = vmatpush1.bf16.msra.mxu0 %v1929
    %2577 = vmatprep.subr.bf16.mxu0 %v1942
    %2578 = vmatpush1.bf16.msra.mxu0 %v1941
    %2579 = vmatprep.subr.bf16.mxu0 %v1954
    %2580 = vmatpush1.bf16.msra.mxu0 %v1953
    %2581 = vmatprep.subr.bf16.mxu0 %v1966
    %2582 = vmatpush1.bf16.msra.mxu0 %v1965
    %2583 = vmatprep.subr.bf16.mxu0 %v1978
    %2584 = vmatpush1.bf16.msra.mxu0 %v1977
    %2585 = vmatprep.mubr.bf16.mxu0 0
    %2586 = vmatmul.mubr.bf16.gmra.mrb[0].mxu0 0
    %v2587 = vpop.f32.mrb[0].mxu0
    %v2588 = vadd.f32 0.0, %v2587
    %v2589 = vpop.f32.mrb[0].mxu0
    %v2590 = vadd.f32 0.0, %v2589
    %v2591 = vpop.f32.mrb[0].mxu0
    %v2592 = vpop.f32.mrb[0].mxu0
    %2593 = vdwg.mxu0
    %2594 = vmatprep.subr.bf16.mxu0 %v1990
    %2595 = vmatpush1.bf16.msra.mxu0 %v1989
    %2596 = vmatprep.subr.bf16.mxu0 %v2002
    %2597 = vmatpush1.bf16.msra.mxu0 %v2001
    %2598 = vmatprep.subr.bf16.mxu0 0
    %2599 = vmatpush1.bf16.msra.mxu0 0
    %2600 = vmatprep.subr.bf16.mxu0 0
    %2601 = vmatpush1.bf16.msra.mxu0 0
    %2602 = vmatprep.subr.bf16.mxu0 0
    %2603 = vmatpush1.bf16.msra.mxu0 0
    %2604 = vmatprep.subr.bf16.mxu0 0
    %2605 = vmatpush1.bf16.msra.mxu0 0
    %2606 = vmatprep.subr.bf16.mxu0 0
    %2607 = vmatpush1.bf16.msra.mxu0 0
    %2608 = vmatprep.subr.bf16.mxu0 0
    %2609 = vmatpush1.bf16.msra.mxu0 0
    %2610 = vmatprep.subr.bf16.mxu0 0
    %2611 = vmatpush1.bf16.msra.mxu0 0
    %2612 = vmatprep.subr.bf16.mxu0 0
    %2613 = vmatpush1.bf16.msra.mxu0 0
    %2614 = vmatprep.subr.bf16.mxu0 0
    %2615 = vmatpush1.bf16.msra.mxu0 0
    %2616 = vmatprep.subr.bf16.mxu0 0
    %2617 = vmatpush1.bf16.msra.mxu0 0
    %2618 = vmatprep.subr.bf16.mxu0 0
    %2619 = vmatpush1.bf16.msra.mxu0 0
    %2620 = vmatprep.subr.bf16.mxu0 0
    %2621 = vmatpush1.bf16.msra.mxu0 0
    %2622 = vmatprep.subr.bf16.mxu0 0
    %2623 = vmatpush1.bf16.msra.mxu0 0
    %2624 = vmatprep.subr.bf16.mxu0 0
    %2625 = vmatpush1.bf16.msra.mxu0 0
    %2626 = vmatprep.mubr.bf16.mxu0 0
    %2627 = vmatmul.mubr.bf16.gmra.mrb[0].mxu0 %v2223
    %v2628 = vpop.f32.mrb[0].mxu0
    %v2629 = vadd.f32 %v2588, %v2628
    %v2630 = vpop.f32.mrb[0].mxu0
    %v2631 = vadd.f32 %v2590, %v2630
    %v2632 = vpop.f32.mrb[0].mxu0
    %v2633 = vpop.f32.mrb[0].mxu0
    %2634 = vdwg.mxu0
    %2635 = vmatprep.subr.bf16.mxu0 %v1800
    %2636 = vmatpush1.bf16.msra.mxu0 %v1799
    %2637 = vmatprep.subr.bf16.mxu0 %v1812
    %2638 = vmatpush1.bf16.msra.mxu0 %v1811
    %2639 = vmatprep.subr.bf16.mxu0 %v1824
    %2640 = vmatpush1.bf16.msra.mxu0 %v1823
    %2641 = vmatprep.subr.bf16.mxu0 %v1836
    %2642 = vmatpush1.bf16.msra.mxu0 %v1835
    %2643 = vmatprep.subr.bf16.mxu0 %v1848
    %2644 = vmatpush1.bf16.msra.mxu0 %v1847
    %2645 = vmatprep.subr.bf16.mxu0 %v1860
    %2646 = vmatpush1.bf16.msra.mxu0 %v1859
    %2647 = vmatprep.subr.bf16.mxu0 %v1872
    %2648 = vmatpush1.bf16.msra.mxu0 %v1871
    %2649 = vmatprep.subr.bf16.mxu0 %v1884
    %2650 = vmatpush1.bf16.msra.mxu0 %v1883
    %2651 = vmatprep.subr.bf16.mxu0 %v1896
    %2652 = vmatpush1.bf16.msra.mxu0 %v1895
    %2653 = vmatprep.subr.bf16.mxu0 %v1908
    %2654 = vmatpush1.bf16.msra.mxu0 %v1907
    %2655 = vmatprep.subr.bf16.mxu0 %v1920
    %2656 = vmatpush1.bf16.msra.mxu0 %v1919
    %2657 = vmatprep.subr.bf16.mxu0 %v1932
    %2658 = vmatpush1.bf16.msra.mxu0 %v1931
    %2659 = vmatprep.subr.bf16.mxu0 %v1944
    %2660 = vmatpush1.bf16.msra.mxu0 %v1943
    %2661 = vmatprep.subr.bf16.mxu0 %v1956
    %2662 = vmatpush1.bf16.msra.mxu0 %v1955
    %2663 = vmatprep.subr.bf16.mxu0 %v1968
    %2664 = vmatpush1.bf16.msra.mxu0 %v1967
    %2665 = vmatprep.subr.bf16.mxu0 %v1980
    %2666 = vmatpush1.bf16.msra.mxu0 %v1979
    %2667 = vmatprep.mubr.bf16.mxu0 0
    %2668 = vmatmul.mubr.bf16.gmra.mrb[0].mxu0 0
    %v2669 = vpop.f32.mrb[0].mxu0
    %v2670 = vadd.f32 0.0, %v2669
    %v2671 = vpop.f32.mrb[0].mxu0
    %v2672 = vadd.f32 0.0, %v2671
    %v2673 = vpop.f32.mrb[0].mxu0
    %v2674 = vpop.f32.mrb[0].mxu0
    %2675 = vdwg.mxu0
    %2676 = vmatprep.subr.bf16.mxu0 %v1992
    %2677 = vmatpush1.bf16.msra.mxu0 %v1991
    %2678 = vmatprep.subr.bf16.mxu0 %v2004
    %2679 = vmatpush1.bf16.msra.mxu0 %v2003
    %2680 = vmatprep.subr.bf16.mxu0 0
    %2681 = vmatpush1.bf16.msra.mxu0 0
    %2682 = vmatprep.subr.bf16.mxu0 0
    %2683 = vmatpush1.bf16.msra.mxu0 0
    %2684 = vmatprep.subr.bf16.mxu0 0
    %2685 = vmatpush1.bf16.msra.mxu0 0
    %2686 = vmatprep.subr.bf16.mxu0 0
    %2687 = vmatpush1.bf16.msra.mxu0 0
    %2688 = vmatprep.subr.bf16.mxu0 0
    %2689 = vmatpush1.bf16.msra.mxu0 0
    %2690 = vmatprep.subr.bf16.mxu0 0
    %2691 = vmatpush1.bf16.msra.mxu0 0
    %2692 = vmatprep.subr.bf16.mxu0 0
    %2693 = vmatpush1.bf16.msra.mxu0 0
    %2694 = vmatprep.subr.bf16.mxu0 0
    %2695 = vmatpush1.bf16.msra.mxu0 0
    %2696 = vmatprep.subr.bf16.mxu0 0
    %2697 = vmatpush1.bf16.msra.mxu0 0
    %2698 = vmatprep.subr.bf16.mxu0 0
    %2699 = vmatpush1.bf16.msra.mxu0 0
    %2700 = vmatprep.subr.bf16.mxu0 0
    %2701 = vmatpush1.bf16.msra.mxu0 0
    %2702 = vmatprep.subr.bf16.mxu0 0
    %2703 = vmatpush1.bf16.msra.mxu0 0
    %2704 = vmatprep.subr.bf16.mxu0 0
    %2705 = vmatpush1.bf16.msra.mxu0 0
    %2706 = vmatprep.subr.bf16.mxu0 0
    %2707 = vmatpush1.bf16.msra.mxu0 0
    %2708 = vmatprep.mubr.bf16.mxu0 0
    %2709 = vmatmul.mubr.bf16.gmra.mrb[0].mxu0 %v2223
    %v2710 = vpop.f32.mrb[0].mxu0
    %v2711 = vadd.f32 %v2670, %v2710
    %v2712 = vpop.f32.mrb[0].mxu0
    %v2713 = vadd.f32 %v2672, %v2712
    %v2714 = vpop.f32.mrb[0].mxu0
    %v2715 = vpop.f32.mrb[0].mxu0
    %2716 = vdwg.mxu0
    %v2717 = vadd.f32 %v294, %v2301
    %v2718 = vadd.f32 %v296, %v2303
    %v2719 = vadd.f32 %v405, %v2383
    %v2720 = vadd.f32 %v407, %v2385
    %v2721 = vadd.f32 %v516, %v2465
    %v2722 = vadd.f32 %v518, %v2467
    %v2723 = vadd.f32 %v627, %v2547
    %v2724 = vadd.f32 %v629, %v2549
    %v2725 = vadd.f32 %v738, %v2629
    %v2726 = vadd.f32 %v740, %v2631
    %v2727 = vadd.f32 %v849, %v2711
    %v2728 = vadd.f32 %v851, %v2713
    %v2729 = vmul.f32 %v2717, 0.5
    %v2730 = vmul.f32 %v2718, 0.5
    %v2731 = vmul.f32 %v2719, 0.5
    %v2732 = vtanh.pop %v2729
    %v2733 = vtanh.pop %v2730
    %v2734 = vtanh.pop %v2731
    %v2735 = vmul.f32 %v2732, 0.5
    %v2736 = vmul.f32 %v2733, 0.5
    %v2737 = vmul.f32 %v2734, 0.5
    %v2738 = vadd.f32 %v2735, 0.5
    %v2739 = vadd.f32 %v2736, 0.5
    %v2740 = vadd.f32 %v2737, 0.5
    %v2741 = vmul.f32 %v2720, 0.5
    %v2742 = vmul.f32 %v2721, 0.5
    %v2743 = vmul.f32 %v2722, 0.5
    %v2744 = vtanh.pop %v2741
    %v2745 = vtanh.pop %v2742
    %v2746 = vtanh.pop %v2743
    %v2747 = vmul.f32 %v2744, 0.5
    %v2748 = vmul.f32 %v2745, 0.5
    %v2749 = vmul.f32 %v2746, 0.5
    %v2750 = vadd.f32 %v2747, 0.5
    %v2751 = vadd.f32 %v2748, 0.5
    %v2752 = vadd.f32 %v2749, 0.5
    %v2753 = vtanh.pop %v2723
    %v2754 = vtanh.pop %v2724
    %v2755 = vtanh.pop %v2725
    %v2756 = vmul.f32 %v2726, 0.5
    %v2757 = vmul.f32 %v2727, 0.5
    %v2758 = vmul.f32 %v2728, 0.5
    %v2759 = vtanh.pop %v2756
    %v2760 = vtanh.pop %v2757
    %v2761 = vtanh.pop %v2758
    %v2762 = vmul.f32 %v2759, 0.5
    %v2763 = vmul.f32 %v2760, 0.5
    %v2764 = vmul.f32 %v2761, 0.5
    %v2765 = vadd.f32 %v2762, 0.5
    %v2766 = vadd.f32 %v2763, 0.5
    %v2767 = vadd.f32 %v2764, 0.5
    %v2768 = vmul.f32 %v2750, 0.0
    %v2769 = vmul.f32 %v2751, 0.0
    %v2770 = vmul.f32 %v2752, 0.0
    %v2771 = vmul.f32 %v2738, %v2753
    %v2772 = vmul.f32 %v2739, %v2754
    %v2773 = vmul.f32 %v2740, %v2755
    %v2774 = vadd.f32 %v2768, %v2771
    %v2775 = vadd.f32 %v2769, %v2772
    %v2776 = vadd.f32 %v2770, %v2773
    %v2777 = vtanh.pop %v2774
    %v2778 = vtanh.pop %v2775
    %v2779 = vtanh.pop %v2776
    %v2780 = vmul.f32 %v2765, %v2777
    %v2781 = vmul.f32 %v2766, %v2778
    %v2782 = vmul.f32 %v2767, %v2779
    %v2783 = vpack.c.bf16 %v2780, %v2780
    %v2784 = vpack.c.bf16 %v2781, %v2781
    %v2785 = vpack.c.bf16 %v2782, %v2782
    %v2787 = vsel %vm2221, %v2785, 0
    %2789 = vmatprep.subr.bf16.mxu0 %v1790
    %2790 = vmatpush1.bf16.msra.mxu0 %v1789
    %2791 = vmatprep.subr.bf16.mxu0 %v1802
    %2792 = vmatpush1.bf16.msra.mxu0 %v1801
    %2793 = vmatprep.subr.bf16.mxu0 %v1814
    %2794 = vmatpush1.bf16.msra.mxu0 %v1813
    %2795 = vmatprep.subr.bf16.mxu0 %v1826
    %2796 = vmatpush1.bf16.msra.mxu0 %v1825
    %2797 = vmatprep.subr.bf16.mxu0 %v1838
    %2798 = vmatpush1.bf16.msra.mxu0 %v1837
    %2799 = vmatprep.subr.bf16.mxu0 %v1850
    %2800 = vmatpush1.bf16.msra.mxu0 %v1849
    %2801 = vmatprep.subr.bf16.mxu0 %v1862
    %2802 = vmatpush1.bf16.msra.mxu0 %v1861
    %2803 = vmatprep.subr.bf16.mxu0 %v1874
    %2804 = vmatpush1.bf16.msra.mxu0 %v1873
    %2805 = vmatprep.subr.bf16.mxu0 %v1886
    %2806 = vmatpush1.bf16.msra.mxu0 %v1885
    %2807 = vmatprep.subr.bf16.mxu0 %v1898
    %2808 = vmatpush1.bf16.msra.mxu0 %v1897
    %2809 = vmatprep.subr.bf16.mxu0 %v1910
    %2810 = vmatpush1.bf16.msra.mxu0 %v1909
    %2811 = vmatprep.subr.bf16.mxu0 %v1922
    %2812 = vmatpush1.bf16.msra.mxu0 %v1921
    %2813 = vmatprep.subr.bf16.mxu0 %v1934
    %2814 = vmatpush1.bf16.msra.mxu0 %v1933
    %2815 = vmatprep.subr.bf16.mxu0 %v1946
    %2816 = vmatpush1.bf16.msra.mxu0 %v1945
    %2817 = vmatprep.subr.bf16.mxu0 %v1958
    %2818 = vmatpush1.bf16.msra.mxu0 %v1957
    %2819 = vmatprep.subr.bf16.mxu0 %v1970
    %2820 = vmatpush1.bf16.msra.mxu0 %v1969
    %2821 = vmatprep.mubr.bf16.mxu0 %v2784
    %2822 = vmatmul.mubr.bf16.gmra.mrb[0].mxu0 %v2783
    %v2823 = vpop.f32.mrb[0].mxu0
    %v2824 = vadd.f32 0.0, %v2823
    %v2825 = vpop.f32.mrb[0].mxu0
    %v2826 = vadd.f32 0.0, %v2825
    %v2827 = vpop.f32.mrb[0].mxu0
    %v2828 = vpop.f32.mrb[0].mxu0
    %2829 = vdwg.mxu0
    %2830 = vmatprep.subr.bf16.mxu0 %v1982
    %2831 = vmatpush1.bf16.msra.mxu0 %v1981
    %2832 = vmatprep.subr.bf16.mxu0 %v1994
    %2833 = vmatpush1.bf16.msra.mxu0 %v1993
    %2834 = vmatprep.subr.bf16.mxu0 0
    %2835 = vmatpush1.bf16.msra.mxu0 0
    %2836 = vmatprep.subr.bf16.mxu0 0
    %2837 = vmatpush1.bf16.msra.mxu0 0
    %2838 = vmatprep.subr.bf16.mxu0 0
    %2839 = vmatpush1.bf16.msra.mxu0 0
    %2840 = vmatprep.subr.bf16.mxu0 0
    %2841 = vmatpush1.bf16.msra.mxu0 0
    %2842 = vmatprep.subr.bf16.mxu0 0
    %2843 = vmatpush1.bf16.msra.mxu0 0
    %2844 = vmatprep.subr.bf16.mxu0 0
    %2845 = vmatpush1.bf16.msra.mxu0 0
    %2846 = vmatprep.subr.bf16.mxu0 0
    %2847 = vmatpush1.bf16.msra.mxu0 0
    %2848 = vmatprep.subr.bf16.mxu0 0
    %2849 = vmatpush1.bf16.msra.mxu0 0
    %2850 = vmatprep.subr.bf16.mxu0 0
    %2851 = vmatpush1.bf16.msra.mxu0 0
    %2852 = vmatprep.subr.bf16.mxu0 0
    %2853 = vmatpush1.bf16.msra.mxu0 0
    %2854 = vmatprep.subr.bf16.mxu0 0
    %2855 = vmatpush1.bf16.msra.mxu0 0
    %2856 = vmatprep.subr.bf16.mxu0 0
    %2857 = vmatpush1.bf16.msra.mxu0 0
    %2858 = vmatprep.subr.bf16.mxu0 0
    %2859 = vmatpush1.bf16.msra.mxu0 0
    %2860 = vmatprep.subr.bf16.mxu0 0
    %2861 = vmatpush1.bf16.msra.mxu0 0
    %2862 = vmatprep.mubr.bf16.mxu0 0
    %2863 = vmatmul.mubr.bf16.gmra.mrb[0].mxu0 %v2787
    %v2864 = vpop.f32.mrb[0].mxu0
    %v2865 = vadd.f32 %v2824, %v2864
    %v2866 = vpop.f32.mrb[0].mxu0
    %v2867 = vadd.f32 %v2826, %v2866
    %v2868 = vpop.f32.mrb[0].mxu0
    %v2869 = vpop.f32.mrb[0].mxu0
    %2870 = vdwg.mxu0
    %2871 = vmatprep.subr.bf16.mxu0 %v1792
    %2872 = vmatpush1.bf16.msra.mxu0 %v1791
    %2873 = vmatprep.subr.bf16.mxu0 %v1804
    %2874 = vmatpush1.bf16.msra.mxu0 %v1803
    %2875 = vmatprep.subr.bf16.mxu0 %v1816
    %2876 = vmatpush1.bf16.msra.mxu0 %v1815
    %2877 = vmatprep.subr.bf16.mxu0 %v1828
    %2878 = vmatpush1.bf16.msra.mxu0 %v1827
    %2879 = vmatprep.subr.bf16.mxu0 %v1840
    %2880 = vmatpush1.bf16.msra.mxu0 %v1839
    %2881 = vmatprep.subr.bf16.mxu0 %v1852
    %2882 = vmatpush1.bf16.msra.mxu0 %v1851
    %2883 = vmatprep.subr.bf16.mxu0 %v1864
    %2884 = vmatpush1.bf16.msra.mxu0 %v1863
    %2885 = vmatprep.subr.bf16.mxu0 %v1876
    %2886 = vmatpush1.bf16.msra.mxu0 %v1875
    %2887 = vmatprep.subr.bf16.mxu0 %v1888
    %2888 = vmatpush1.bf16.msra.mxu0 %v1887
    %2889 = vmatprep.subr.bf16.mxu0 %v1900
    %2890 = vmatpush1.bf16.msra.mxu0 %v1899
    %2891 = vmatprep.subr.bf16.mxu0 %v1912
    %2892 = vmatpush1.bf16.msra.mxu0 %v1911
    %2893 = vmatprep.subr.bf16.mxu0 %v1924
    %2894 = vmatpush1.bf16.msra.mxu0 %v1923
    %2895 = vmatprep.subr.bf16.mxu0 %v1936
    %2896 = vmatpush1.bf16.msra.mxu0 %v1935
    %2897 = vmatprep.subr.bf16.mxu0 %v1948
    %2898 = vmatpush1.bf16.msra.mxu0 %v1947
    %2899 = vmatprep.subr.bf16.mxu0 %v1960
    %2900 = vmatpush1.bf16.msra.mxu0 %v1959
    %2901 = vmatprep.subr.bf16.mxu0 %v1972
    %2902 = vmatpush1.bf16.msra.mxu0 %v1971
    %2903 = vmatprep.mubr.bf16.mxu0 %v2784
    %2904 = vmatmul.mubr.bf16.gmra.mrb[0].mxu0 %v2783
    %v2905 = vpop.f32.mrb[0].mxu0
    %v2906 = vadd.f32 0.0, %v2905
    %v2907 = vpop.f32.mrb[0].mxu0
    %v2908 = vadd.f32 0.0, %v2907
    %v2909 = vpop.f32.mrb[0].mxu0
    %v2910 = vpop.f32.mrb[0].mxu0
    %2911 = vdwg.mxu0
    %2912 = vmatprep.subr.bf16.mxu0 %v1984
    %2913 = vmatpush1.bf16.msra.mxu0 %v1983
    %2914 = vmatprep.subr.bf16.mxu0 %v1996
    %2915 = vmatpush1.bf16.msra.mxu0 %v1995
    %2916 = vmatprep.subr.bf16.mxu0 0
    %2917 = vmatpush1.bf16.msra.mxu0 0
    %2918 = vmatprep.subr.bf16.mxu0 0
    %2919 = vmatpush1.bf16.msra.mxu0 0
    %2920 = vmatprep.subr.bf16.mxu0 0
    %2921 = vmatpush1.bf16.msra.mxu0 0
    %2922 = vmatprep.subr.bf16.mxu0 0
    %2923 = vmatpush1.bf16.msra.mxu0 0
    %2924 = vmatprep.subr.bf16.mxu0 0
    %2925 = vmatpush1.bf16.msra.mxu0 0
    %2926 = vmatprep.subr.bf16.mxu0 0
    %2927 = vmatpush1.bf16.msra.mxu0 0
    %2928 = vmatprep.subr.bf16.mxu0 0
    %2929 = vmatpush1.bf16.msra.mxu0 0
    %2930 = vmatprep.subr.bf16.mxu0 0
    %2931 = vmatpush1.bf16.msra.mxu0 0
    %2932 = vmatprep.subr.bf16.mxu0 0
    %2933 = vmatpush1.bf16.msra.mxu0 0
    %2934 = vmatprep.subr.bf16.mxu0 0
    %2935 = vmatpush1.bf16.msra.mxu0 0
    %2936 = vmatprep.subr.bf16.mxu0 0
    %2937 = vmatpush1.bf16.msra.mxu0 0
    %2938 = vmatprep.subr.bf16.mxu0 0
    %2939 = vmatpush1.bf16.msra.mxu0 0
    %2940 = vmatprep.subr.bf16.mxu0 0
    %2941 = vmatpush1.bf16.msra.mxu0 0
    %2942 = vmatprep.subr.bf16.mxu0 0
    %2943 = vmatpush1.bf16.msra.mxu0 0
    %2944 = vmatprep.mubr.bf16.mxu0 0
    %2945 = vmatmul.mubr.bf16.gmra.mrb[0].mxu0 %v2787
    %v2946 = vpop.f32.mrb[0].mxu0
    %v2947 = vadd.f32 %v2906, %v2946
    %v2948 = vpop.f32.mrb[0].mxu0
    %v2949 = vadd.f32 %v2908, %v2948
    %v2950 = vpop.f32.mrb[0].mxu0
    %v2951 = vpop.f32.mrb[0].mxu0
    %2952 = vdwg.mxu0
    %2953 = vmatprep.subr.bf16.mxu0 %v1794
    %2954 = vmatpush1.bf16.msra.mxu0 %v1793
    %2955 = vmatprep.subr.bf16.mxu0 %v1806
    %2956 = vmatpush1.bf16.msra.mxu0 %v1805
    %2957 = vmatprep.subr.bf16.mxu0 %v1818
    %2958 = vmatpush1.bf16.msra.mxu0 %v1817
    %2959 = vmatprep.subr.bf16.mxu0 %v1830
    %2960 = vmatpush1.bf16.msra.mxu0 %v1829
    %2961 = vmatprep.subr.bf16.mxu0 %v1842
    %2962 = vmatpush1.bf16.msra.mxu0 %v1841
    %2963 = vmatprep.subr.bf16.mxu0 %v1854
    %2964 = vmatpush1.bf16.msra.mxu0 %v1853
    %2965 = vmatprep.subr.bf16.mxu0 %v1866
    %2966 = vmatpush1.bf16.msra.mxu0 %v1865
    %2967 = vmatprep.subr.bf16.mxu0 %v1878
    %2968 = vmatpush1.bf16.msra.mxu0 %v1877
    %2969 = vmatprep.subr.bf16.mxu0 %v1890
    %2970 = vmatpush1.bf16.msra.mxu0 %v1889
    %2971 = vmatprep.subr.bf16.mxu0 %v1902
    %2972 = vmatpush1.bf16.msra.mxu0 %v1901
    %2973 = vmatprep.subr.bf16.mxu0 %v1914
    %2974 = vmatpush1.bf16.msra.mxu0 %v1913
    %2975 = vmatprep.subr.bf16.mxu0 %v1926
    %2976 = vmatpush1.bf16.msra.mxu0 %v1925
    %2977 = vmatprep.subr.bf16.mxu0 %v1938
    %2978 = vmatpush1.bf16.msra.mxu0 %v1937
    %2979 = vmatprep.subr.bf16.mxu0 %v1950
    %2980 = vmatpush1.bf16.msra.mxu0 %v1949
    %2981 = vmatprep.subr.bf16.mxu0 %v1962
    %2982 = vmatpush1.bf16.msra.mxu0 %v1961
    %2983 = vmatprep.subr.bf16.mxu0 %v1974
    %2984 = vmatpush1.bf16.msra.mxu0 %v1973
    %2985 = vmatprep.mubr.bf16.mxu0 %v2784
    %2986 = vmatmul.mubr.bf16.gmra.mrb[0].mxu0 %v2783
    %v2987 = vpop.f32.mrb[0].mxu0
    %v2988 = vadd.f32 0.0, %v2987
    %v2989 = vpop.f32.mrb[0].mxu0
    %v2990 = vadd.f32 0.0, %v2989
    %v2991 = vpop.f32.mrb[0].mxu0
    %v2992 = vpop.f32.mrb[0].mxu0
    %2993 = vdwg.mxu0
    %2994 = vmatprep.subr.bf16.mxu0 %v1986
    %2995 = vmatpush1.bf16.msra.mxu0 %v1985
    %2996 = vmatprep.subr.bf16.mxu0 %v1998
    %2997 = vmatpush1.bf16.msra.mxu0 %v1997
    %2998 = vmatprep.subr.bf16.mxu0 0
    %2999 = vmatpush1.bf16.msra.mxu0 0
    %3000 = vmatprep.subr.bf16.mxu0 0
    %3001 = vmatpush1.bf16.msra.mxu0 0
    %3002 = vmatprep.subr.bf16.mxu0 0
    %3003 = vmatpush1.bf16.msra.mxu0 0
    %3004 = vmatprep.subr.bf16.mxu0 0
    %3005 = vmatpush1.bf16.msra.mxu0 0
    %3006 = vmatprep.subr.bf16.mxu0 0
    %3007 = vmatpush1.bf16.msra.mxu0 0
    %3008 = vmatprep.subr.bf16.mxu0 0
    %3009 = vmatpush1.bf16.msra.mxu0 0
    %3010 = vmatprep.subr.bf16.mxu0 0
    %3011 = vmatpush1.bf16.msra.mxu0 0
    %3012 = vmatprep.subr.bf16.mxu0 0
    %3013 = vmatpush1.bf16.msra.mxu0 0
    %3014 = vmatprep.subr.bf16.mxu0 0
    %3015 = vmatpush1.bf16.msra.mxu0 0
    %3016 = vmatprep.subr.bf16.mxu0 0
    %3017 = vmatpush1.bf16.msra.mxu0 0
    %3018 = vmatprep.subr.bf16.mxu0 0
    %3019 = vmatpush1.bf16.msra.mxu0 0
    %3020 = vmatprep.subr.bf16.mxu0 0
    %3021 = vmatpush1.bf16.msra.mxu0 0
    %3022 = vmatprep.subr.bf16.mxu0 0
    %3023 = vmatpush1.bf16.msra.mxu0 0
    %3024 = vmatprep.subr.bf16.mxu0 0
    %3025 = vmatpush1.bf16.msra.mxu0 0
    %3026 = vmatprep.mubr.bf16.mxu0 0
    %3027 = vmatmul.mubr.bf16.gmra.mrb[0].mxu0 %v2787
    %v3028 = vpop.f32.mrb[0].mxu0
    %v3029 = vadd.f32 %v2988, %v3028
    %v3030 = vpop.f32.mrb[0].mxu0
    %v3031 = vadd.f32 %v2990, %v3030
    %v3032 = vpop.f32.mrb[0].mxu0
    %v3033 = vpop.f32.mrb[0].mxu0
    %3034 = vdwg.mxu0
    %3035 = vmatprep.subr.bf16.mxu0 %v1796
    %3036 = vmatpush1.bf16.msra.mxu0 %v1795
    %3037 = vmatprep.subr.bf16.mxu0 %v1808
    %3038 = vmatpush1.bf16.msra.mxu0 %v1807
    %3039 = vmatprep.subr.bf16.mxu0 %v1820
    %3040 = vmatpush1.bf16.msra.mxu0 %v1819
    %3041 = vmatprep.subr.bf16.mxu0 %v1832
    %3042 = vmatpush1.bf16.msra.mxu0 %v1831
    %3043 = vmatprep.subr.bf16.mxu0 %v1844
    %3044 = vmatpush1.bf16.msra.mxu0 %v1843
    %3045 = vmatprep.subr.bf16.mxu0 %v1856
    %3046 = vmatpush1.bf16.msra.mxu0 %v1855
    %3047 = vmatprep.subr.bf16.mxu0 %v1868
    %3048 = vmatpush1.bf16.msra.mxu0 %v1867
    %3049 = vmatprep.subr.bf16.mxu0 %v1880
    %3050 = vmatpush1.bf16.msra.mxu0 %v1879
    %3051 = vmatprep.subr.bf16.mxu0 %v1892
    %3052 = vmatpush1.bf16.msra.mxu0 %v1891
    %3053 = vmatprep.subr.bf16.mxu0 %v1904
    %3054 = vmatpush1.bf16.msra.mxu0 %v1903
    %3055 = vmatprep.subr.bf16.mxu0 %v1916
    %3056 = vmatpush1.bf16.msra.mxu0 %v1915
    %3057 = vmatprep.subr.bf16.mxu0 %v1928
    %3058 = vmatpush1.bf16.msra.mxu0 %v1927
    %3059 = vmatprep.subr.bf16.mxu0 %v1940
    %3060 = vmatpush1.bf16.msra.mxu0 %v1939
    %3061 = vmatprep.subr.bf16.mxu0 %v1952
    %3062 = vmatpush1.bf16.msra.mxu0 %v1951
    %3063 = vmatprep.subr.bf16.mxu0 %v1964
    %3064 = vmatpush1.bf16.msra.mxu0 %v1963
    %3065 = vmatprep.subr.bf16.mxu0 %v1976
    %3066 = vmatpush1.bf16.msra.mxu0 %v1975
    %3067 = vmatprep.mubr.bf16.mxu0 %v2784
    %3068 = vmatmul.mubr.bf16.gmra.mrb[0].mxu0 %v2783
    %v3069 = vpop.f32.mrb[0].mxu0
    %v3070 = vadd.f32 0.0, %v3069
    %v3071 = vpop.f32.mrb[0].mxu0
    %v3072 = vadd.f32 0.0, %v3071
    %v3073 = vpop.f32.mrb[0].mxu0
    %v3074 = vpop.f32.mrb[0].mxu0
    %3075 = vdwg.mxu0
    %3076 = vmatprep.subr.bf16.mxu0 %v1988
    %3077 = vmatpush1.bf16.msra.mxu0 %v1987
    %3078 = vmatprep.subr.bf16.mxu0 %v2000
    %3079 = vmatpush1.bf16.msra.mxu0 %v1999
    %3080 = vmatprep.subr.bf16.mxu0 0
    %3081 = vmatpush1.bf16.msra.mxu0 0
    %3082 = vmatprep.subr.bf16.mxu0 0
    %3083 = vmatpush1.bf16.msra.mxu0 0
    %3084 = vmatprep.subr.bf16.mxu0 0
    %3085 = vmatpush1.bf16.msra.mxu0 0
    %3086 = vmatprep.subr.bf16.mxu0 0
    %3087 = vmatpush1.bf16.msra.mxu0 0
    %3088 = vmatprep.subr.bf16.mxu0 0
    %3089 = vmatpush1.bf16.msra.mxu0 0
    %3090 = vmatprep.subr.bf16.mxu0 0
    %3091 = vmatpush1.bf16.msra.mxu0 0
    %3092 = vmatprep.subr.bf16.mxu0 0
    %3093 = vmatpush1.bf16.msra.mxu0 0
    %3094 = vmatprep.subr.bf16.mxu0 0
    %3095 = vmatpush1.bf16.msra.mxu0 0
    %3096 = vmatprep.subr.bf16.mxu0 0
    %3097 = vmatpush1.bf16.msra.mxu0 0
    %3098 = vmatprep.subr.bf16.mxu0 0
    %3099 = vmatpush1.bf16.msra.mxu0 0
    %3100 = vmatprep.subr.bf16.mxu0 0
    %3101 = vmatpush1.bf16.msra.mxu0 0
    %3102 = vmatprep.subr.bf16.mxu0 0
    %3103 = vmatpush1.bf16.msra.mxu0 0
    %3104 = vmatprep.subr.bf16.mxu0 0
    %3105 = vmatpush1.bf16.msra.mxu0 0
    %3106 = vmatprep.subr.bf16.mxu0 0
    %3107 = vmatpush1.bf16.msra.mxu0 0
    %3108 = vmatprep.mubr.bf16.mxu0 0
    %3109 = vmatmul.mubr.bf16.gmra.mrb[0].mxu0 %v2787
    %v3110 = vpop.f32.mrb[0].mxu0
    %v3111 = vadd.f32 %v3070, %v3110
    %v3112 = vpop.f32.mrb[0].mxu0
    %v3113 = vadd.f32 %v3072, %v3112
    %v3114 = vpop.f32.mrb[0].mxu0
    %v3115 = vpop.f32.mrb[0].mxu0
    %3116 = vdwg.mxu0
    %3117 = vmatprep.subr.bf16.mxu0 %v1798
    %3118 = vmatpush1.bf16.msra.mxu0 %v1797
    %3119 = vmatprep.subr.bf16.mxu0 %v1810
    %3120 = vmatpush1.bf16.msra.mxu0 %v1809
    %3121 = vmatprep.subr.bf16.mxu0 %v1822
    %3122 = vmatpush1.bf16.msra.mxu0 %v1821
    %3123 = vmatprep.subr.bf16.mxu0 %v1834
    %3124 = vmatpush1.bf16.msra.mxu0 %v1833
    %3125 = vmatprep.subr.bf16.mxu0 %v1846
    %3126 = vmatpush1.bf16.msra.mxu0 %v1845
    %3127 = vmatprep.subr.bf16.mxu0 %v1858
    %3128 = vmatpush1.bf16.msra.mxu0 %v1857
    %3129 = vmatprep.subr.bf16.mxu0 %v1870
    %3130 = vmatpush1.bf16.msra.mxu0 %v1869
    %3131 = vmatprep.subr.bf16.mxu0 %v1882
    %3132 = vmatpush1.bf16.msra.mxu0 %v1881
    %3133 = vmatprep.subr.bf16.mxu0 %v1894
    %3134 = vmatpush1.bf16.msra.mxu0 %v1893
    %3135 = vmatprep.subr.bf16.mxu0 %v1906
    %3136 = vmatpush1.bf16.msra.mxu0 %v1905
    %3137 = vmatprep.subr.bf16.mxu0 %v1918
    %3138 = vmatpush1.bf16.msra.mxu0 %v1917
    %3139 = vmatprep.subr.bf16.mxu0 %v1930
    %3140 = vmatpush1.bf16.msra.mxu0 %v1929
    %3141 = vmatprep.subr.bf16.mxu0 %v1942
    %3142 = vmatpush1.bf16.msra.mxu0 %v1941
    %3143 = vmatprep.subr.bf16.mxu0 %v1954
    %3144 = vmatpush1.bf16.msra.mxu0 %v1953
    %3145 = vmatprep.subr.bf16.mxu0 %v1966
    %3146 = vmatpush1.bf16.msra.mxu0 %v1965
    %3147 = vmatprep.subr.bf16.mxu0 %v1978
    %3148 = vmatpush1.bf16.msra.mxu0 %v1977
    %3149 = vmatprep.mubr.bf16.mxu0 %v2784
    %3150 = vmatmul.mubr.bf16.gmra.mrb[0].mxu0 %v2783
    %v3151 = vpop.f32.mrb[0].mxu0
    %v3152 = vadd.f32 0.0, %v3151
    %v3153 = vpop.f32.mrb[0].mxu0
    %v3154 = vadd.f32 0.0, %v3153
    %v3155 = vpop.f32.mrb[0].mxu0
    %v3156 = vpop.f32.mrb[0].mxu0
    %3157 = vdwg.mxu0
    %3158 = vmatprep.subr.bf16.mxu0 %v1990
    %3159 = vmatpush1.bf16.msra.mxu0 %v1989
    %3160 = vmatprep.subr.bf16.mxu0 %v2002
    %3161 = vmatpush1.bf16.msra.mxu0 %v2001
    %3162 = vmatprep.subr.bf16.mxu0 0
    %3163 = vmatpush1.bf16.msra.mxu0 0
    %3164 = vmatprep.subr.bf16.mxu0 0
    %3165 = vmatpush1.bf16.msra.mxu0 0
    %3166 = vmatprep.subr.bf16.mxu0 0
    %3167 = vmatpush1.bf16.msra.mxu0 0
    %3168 = vmatprep.subr.bf16.mxu0 0
    %3169 = vmatpush1.bf16.msra.mxu0 0
    %3170 = vmatprep.subr.bf16.mxu0 0
    %3171 = vmatpush1.bf16.msra.mxu0 0
    %3172 = vmatprep.subr.bf16.mxu0 0
    %3173 = vmatpush1.bf16.msra.mxu0 0
    %3174 = vmatprep.subr.bf16.mxu0 0
    %3175 = vmatpush1.bf16.msra.mxu0 0
    %3176 = vmatprep.subr.bf16.mxu0 0
    %3177 = vmatpush1.bf16.msra.mxu0 0
    %3178 = vmatprep.subr.bf16.mxu0 0
    %3179 = vmatpush1.bf16.msra.mxu0 0
    %3180 = vmatprep.subr.bf16.mxu0 0
    %3181 = vmatpush1.bf16.msra.mxu0 0
    %3182 = vmatprep.subr.bf16.mxu0 0
    %3183 = vmatpush1.bf16.msra.mxu0 0
    %3184 = vmatprep.subr.bf16.mxu0 0
    %3185 = vmatpush1.bf16.msra.mxu0 0
    %3186 = vmatprep.subr.bf16.mxu0 0
    %3187 = vmatpush1.bf16.msra.mxu0 0
    %3188 = vmatprep.subr.bf16.mxu0 0
    %3189 = vmatpush1.bf16.msra.mxu0 0
    %3190 = vmatprep.mubr.bf16.mxu0 0
    %3191 = vmatmul.mubr.bf16.gmra.mrb[0].mxu0 %v2787
    %v3192 = vpop.f32.mrb[0].mxu0
    %v3193 = vadd.f32 %v3152, %v3192
    %v3194 = vpop.f32.mrb[0].mxu0
    %v3195 = vadd.f32 %v3154, %v3194
    %v3196 = vpop.f32.mrb[0].mxu0
    %v3197 = vpop.f32.mrb[0].mxu0
    %3198 = vdwg.mxu0
    %3199 = vmatprep.subr.bf16.mxu0 %v1800
    %3200 = vmatpush1.bf16.msra.mxu0 %v1799
    %3201 = vmatprep.subr.bf16.mxu0 %v1812
    %3202 = vmatpush1.bf16.msra.mxu0 %v1811
    %3203 = vmatprep.subr.bf16.mxu0 %v1824
    %3204 = vmatpush1.bf16.msra.mxu0 %v1823
    %3205 = vmatprep.subr.bf16.mxu0 %v1836
    %3206 = vmatpush1.bf16.msra.mxu0 %v1835
    %3207 = vmatprep.subr.bf16.mxu0 %v1848
    %3208 = vmatpush1.bf16.msra.mxu0 %v1847
    %3209 = vmatprep.subr.bf16.mxu0 %v1860
    %3210 = vmatpush1.bf16.msra.mxu0 %v1859
    %3211 = vmatprep.subr.bf16.mxu0 %v1872
    %3212 = vmatpush1.bf16.msra.mxu0 %v1871
    %3213 = vmatprep.subr.bf16.mxu0 %v1884
    %3214 = vmatpush1.bf16.msra.mxu0 %v1883
    %3215 = vmatprep.subr.bf16.mxu0 %v1896
    %3216 = vmatpush1.bf16.msra.mxu0 %v1895
    %3217 = vmatprep.subr.bf16.mxu0 %v1908
    %3218 = vmatpush1.bf16.msra.mxu0 %v1907
    %3219 = vmatprep.subr.bf16.mxu0 %v1920
    %3220 = vmatpush1.bf16.msra.mxu0 %v1919
    %3221 = vmatprep.subr.bf16.mxu0 %v1932
    %3222 = vmatpush1.bf16.msra.mxu0 %v1931
    %3223 = vmatprep.subr.bf16.mxu0 %v1944
    %3224 = vmatpush1.bf16.msra.mxu0 %v1943
    %3225 = vmatprep.subr.bf16.mxu0 %v1956
    %3226 = vmatpush1.bf16.msra.mxu0 %v1955
    %3227 = vmatprep.subr.bf16.mxu0 %v1968
    %3228 = vmatpush1.bf16.msra.mxu0 %v1967
    %3229 = vmatprep.subr.bf16.mxu0 %v1980
    %3230 = vmatpush1.bf16.msra.mxu0 %v1979
    %3231 = vmatprep.mubr.bf16.mxu0 %v2784
    %3232 = vmatmul.mubr.bf16.gmra.mrb[0].mxu0 %v2783
    %v3233 = vpop.f32.mrb[0].mxu0
    %v3234 = vadd.f32 0.0, %v3233
    %v3235 = vpop.f32.mrb[0].mxu0
    %v3236 = vadd.f32 0.0, %v3235
    %v3237 = vpop.f32.mrb[0].mxu0
    %v3238 = vpop.f32.mrb[0].mxu0
    %3239 = vdwg.mxu0
    %3240 = vmatprep.subr.bf16.mxu0 %v1992
    %3241 = vmatpush1.bf16.msra.mxu0 %v1991
    %3242 = vmatprep.subr.bf16.mxu0 %v2004
    %3243 = vmatpush1.bf16.msra.mxu0 %v2003
    %3244 = vmatprep.subr.bf16.mxu0 0
    %3245 = vmatpush1.bf16.msra.mxu0 0
    %3246 = vmatprep.subr.bf16.mxu0 0
    %3247 = vmatpush1.bf16.msra.mxu0 0
    %3248 = vmatprep.subr.bf16.mxu0 0
    %3249 = vmatpush1.bf16.msra.mxu0 0
    %3250 = vmatprep.subr.bf16.mxu0 0
    %3251 = vmatpush1.bf16.msra.mxu0 0
    %3252 = vmatprep.subr.bf16.mxu0 0
    %3253 = vmatpush1.bf16.msra.mxu0 0
    %3254 = vmatprep.subr.bf16.mxu0 0
    %3255 = vmatpush1.bf16.msra.mxu0 0
    %3256 = vmatprep.subr.bf16.mxu0 0
    %3257 = vmatpush1.bf16.msra.mxu0 0
    %3258 = vmatprep.subr.bf16.mxu0 0
    %3259 = vmatpush1.bf16.msra.mxu0 0
    %3260 = vmatprep.subr.bf16.mxu0 0
    %3261 = vmatpush1.bf16.msra.mxu0 0
    %3262 = vmatprep.subr.bf16.mxu0 0
    %3263 = vmatpush1.bf16.msra.mxu0 0
    %3264 = vmatprep.subr.bf16.mxu0 0
    %3265 = vmatpush1.bf16.msra.mxu0 0
    %3266 = vmatprep.subr.bf16.mxu0 0
    %3267 = vmatpush1.bf16.msra.mxu0 0
    %3268 = vmatprep.subr.bf16.mxu0 0
    %3269 = vmatpush1.bf16.msra.mxu0 0
    %3270 = vmatprep.subr.bf16.mxu0 0
    %3271 = vmatpush1.bf16.msra.mxu0 0
    %3272 = vmatprep.mubr.bf16.mxu0 0
    %3273 = vmatmul.mubr.bf16.gmra.mrb[0].mxu0 %v2787
    %v3274 = vpop.f32.mrb[0].mxu0
    %v3275 = vadd.f32 %v3234, %v3274
    %v3276 = vpop.f32.mrb[0].mxu0
    %v3277 = vadd.f32 %v3236, %v3276
    %v3278 = vpop.f32.mrb[0].mxu0
    %v3279 = vpop.f32.mrb[0].mxu0
    %3280 = vdwg.mxu0
    %v3281 = vadd.f32 %v298, %v2865
    %v3282 = vadd.f32 %v300, %v2867
    %v3283 = vadd.f32 %v409, %v2947
    %v3284 = vadd.f32 %v411, %v2949
    %v3285 = vadd.f32 %v520, %v3029
    %v3286 = vadd.f32 %v522, %v3031
    %v3287 = vadd.f32 %v631, %v3111
    %v3288 = vadd.f32 %v633, %v3113
    %v3289 = vadd.f32 %v742, %v3193
    %v3290 = vadd.f32 %v744, %v3195
    %v3291 = vadd.f32 %v853, %v3275
    %v3292 = vadd.f32 %v855, %v3277
    %v3293 = vmul.f32 %v3281, 0.5
    %v3294 = vmul.f32 %v3282, 0.5
    %v3295 = vmul.f32 %v3283, 0.5
    %v3296 = vtanh.pop %v3293
    %v3297 = vtanh.pop %v3294
    %v3298 = vtanh.pop %v3295
    %v3299 = vmul.f32 %v3296, 0.5
    %v3300 = vmul.f32 %v3297, 0.5
    %v3301 = vmul.f32 %v3298, 0.5
    %v3302 = vadd.f32 %v3299, 0.5
    %v3303 = vadd.f32 %v3300, 0.5
    %v3304 = vadd.f32 %v3301, 0.5
    %v3305 = vmul.f32 %v3284, 0.5
    %v3306 = vmul.f32 %v3285, 0.5
    %v3307 = vmul.f32 %v3286, 0.5
    %v3308 = vtanh.pop %v3305
    %v3309 = vtanh.pop %v3306
    %v3310 = vtanh.pop %v3307
    %v3311 = vmul.f32 %v3308, 0.5
    %v3312 = vmul.f32 %v3309, 0.5
    %v3313 = vmul.f32 %v3310, 0.5
    %v3314 = vadd.f32 %v3311, 0.5
    %v3315 = vadd.f32 %v3312, 0.5
    %v3316 = vadd.f32 %v3313, 0.5
    %v3317 = vtanh.pop %v3287
    %v3318 = vtanh.pop %v3288
    %v3319 = vtanh.pop %v3289
    %v3320 = vmul.f32 %v3290, 0.5
    %v3321 = vmul.f32 %v3291, 0.5
    %v3322 = vmul.f32 %v3292, 0.5
    %v3323 = vtanh.pop %v3320
    %v3324 = vtanh.pop %v3321
    %v3325 = vtanh.pop %v3322
    %v3326 = vmul.f32 %v3323, 0.5
    %v3327 = vmul.f32 %v3324, 0.5
    %v3328 = vmul.f32 %v3325, 0.5
    %v3329 = vadd.f32 %v3326, 0.5
    %v3330 = vadd.f32 %v3327, 0.5
    %v3331 = vadd.f32 %v3328, 0.5
    %v3332 = vmul.f32 %v3314, %v2774
    %v3333 = vmul.f32 %v3315, %v2775
    %v3334 = vmul.f32 %v3316, %v2776
    %v3335 = vmul.f32 %v3302, %v3317
    %v3336 = vmul.f32 %v3303, %v3318
    %v3337 = vmul.f32 %v3304, %v3319
    %v3338 = vadd.f32 %v3332, %v3335
    %v3339 = vadd.f32 %v3333, %v3336
    %v3340 = vadd.f32 %v3334, %v3337
    %v3341 = vtanh.pop %v3338
    %v3342 = vtanh.pop %v3339
    %v3343 = vtanh.pop %v3340
    %v3344 = vmul.f32 %v3329, %v3341
    %v3345 = vmul.f32 %v3330, %v3342
    %v3346 = vmul.f32 %v3331, %v3343
    %v3347 = vpack.c.bf16 %v3344, %v3344
    %v3348 = vpack.c.bf16 %v3345, %v3345
    %v3349 = vpack.c.bf16 %v3346, %v3346
    %v3351 = vsel %vm2221, %v3349, 0
    %3353 = vmatprep.subr.bf16.mxu0 %v1790
    %3354 = vmatpush1.bf16.msra.mxu0 %v1789
    %3355 = vmatprep.subr.bf16.mxu0 %v1802
    %3356 = vmatpush1.bf16.msra.mxu0 %v1801
    %3357 = vmatprep.subr.bf16.mxu0 %v1814
    %3358 = vmatpush1.bf16.msra.mxu0 %v1813
    %3359 = vmatprep.subr.bf16.mxu0 %v1826
    %3360 = vmatpush1.bf16.msra.mxu0 %v1825
    %3361 = vmatprep.subr.bf16.mxu0 %v1838
    %3362 = vmatpush1.bf16.msra.mxu0 %v1837
    %3363 = vmatprep.subr.bf16.mxu0 %v1850
    %3364 = vmatpush1.bf16.msra.mxu0 %v1849
    %3365 = vmatprep.subr.bf16.mxu0 %v1862
    %3366 = vmatpush1.bf16.msra.mxu0 %v1861
    %3367 = vmatprep.subr.bf16.mxu0 %v1874
    %3368 = vmatpush1.bf16.msra.mxu0 %v1873
    %3369 = vmatprep.subr.bf16.mxu0 %v1886
    %3370 = vmatpush1.bf16.msra.mxu0 %v1885
    %3371 = vmatprep.subr.bf16.mxu0 %v1898
    %3372 = vmatpush1.bf16.msra.mxu0 %v1897
    %3373 = vmatprep.subr.bf16.mxu0 %v1910
    %3374 = vmatpush1.bf16.msra.mxu0 %v1909
    %3375 = vmatprep.subr.bf16.mxu0 %v1922
    %3376 = vmatpush1.bf16.msra.mxu0 %v1921
    %3377 = vmatprep.subr.bf16.mxu0 %v1934
    %3378 = vmatpush1.bf16.msra.mxu0 %v1933
    %3379 = vmatprep.subr.bf16.mxu0 %v1946
    %3380 = vmatpush1.bf16.msra.mxu0 %v1945
    %3381 = vmatprep.subr.bf16.mxu0 %v1958
    %3382 = vmatpush1.bf16.msra.mxu0 %v1957
    %3383 = vmatprep.subr.bf16.mxu0 %v1970
    %3384 = vmatpush1.bf16.msra.mxu0 %v1969
    %3385 = vmatprep.mubr.bf16.mxu0 %v3348
    %3386 = vmatmul.mubr.bf16.gmra.mrb[0].mxu0 %v3347
    %v3387 = vpop.f32.mrb[0].mxu0
    %v3388 = vadd.f32 0.0, %v3387
    %v3389 = vpop.f32.mrb[0].mxu0
    %v3390 = vadd.f32 0.0, %v3389
    %v3391 = vpop.f32.mrb[0].mxu0
    %v3392 = vpop.f32.mrb[0].mxu0
    %3393 = vdwg.mxu0
    %3394 = vmatprep.subr.bf16.mxu0 %v1982
    %3395 = vmatpush1.bf16.msra.mxu0 %v1981
    %3396 = vmatprep.subr.bf16.mxu0 %v1994
    %3397 = vmatpush1.bf16.msra.mxu0 %v1993
    %3398 = vmatprep.subr.bf16.mxu0 0
    %3399 = vmatpush1.bf16.msra.mxu0 0
    %3400 = vmatprep.subr.bf16.mxu0 0
    %3401 = vmatpush1.bf16.msra.mxu0 0
    %3402 = vmatprep.subr.bf16.mxu0 0
    %3403 = vmatpush1.bf16.msra.mxu0 0
    %3404 = vmatprep.subr.bf16.mxu0 0
    %3405 = vmatpush1.bf16.msra.mxu0 0
    %3406 = vmatprep.subr.bf16.mxu0 0
    %3407 = vmatpush1.bf16.msra.mxu0 0
    %3408 = vmatprep.subr.bf16.mxu0 0
    %3409 = vmatpush1.bf16.msra.mxu0 0
    %3410 = vmatprep.subr.bf16.mxu0 0
    %3411 = vmatpush1.bf16.msra.mxu0 0
    %3412 = vmatprep.subr.bf16.mxu0 0
    %3413 = vmatpush1.bf16.msra.mxu0 0
    %3414 = vmatprep.subr.bf16.mxu0 0
    %3415 = vmatpush1.bf16.msra.mxu0 0
    %3416 = vmatprep.subr.bf16.mxu0 0
    %3417 = vmatpush1.bf16.msra.mxu0 0
    %3418 = vmatprep.subr.bf16.mxu0 0
    %3419 = vmatpush1.bf16.msra.mxu0 0
    %3420 = vmatprep.subr.bf16.mxu0 0
    %3421 = vmatpush1.bf16.msra.mxu0 0
    %3422 = vmatprep.subr.bf16.mxu0 0
    %3423 = vmatpush1.bf16.msra.mxu0 0
    %3424 = vmatprep.subr.bf16.mxu0 0
    %3425 = vmatpush1.bf16.msra.mxu0 0
    %3426 = vmatprep.mubr.bf16.mxu0 0
    %3427 = vmatmul.mubr.bf16.gmra.mrb[0].mxu0 %v3351
    %v3428 = vpop.f32.mrb[0].mxu0
    %v3429 = vadd.f32 %v3388, %v3428
    %v3430 = vpop.f32.mrb[0].mxu0
    %v3431 = vadd.f32 %v3390, %v3430
    %v3432 = vpop.f32.mrb[0].mxu0
    %v3433 = vpop.f32.mrb[0].mxu0
    %3434 = vdwg.mxu0
    %3435 = vmatprep.subr.bf16.mxu0 %v1792
    %3436 = vmatpush1.bf16.msra.mxu0 %v1791
    %3437 = vmatprep.subr.bf16.mxu0 %v1804
    %3438 = vmatpush1.bf16.msra.mxu0 %v1803
    %3439 = vmatprep.subr.bf16.mxu0 %v1816
    %3440 = vmatpush1.bf16.msra.mxu0 %v1815
    %3441 = vmatprep.subr.bf16.mxu0 %v1828
    %3442 = vmatpush1.bf16.msra.mxu0 %v1827
    %3443 = vmatprep.subr.bf16.mxu0 %v1840
    %3444 = vmatpush1.bf16.msra.mxu0 %v1839
    %3445 = vmatprep.subr.bf16.mxu0 %v1852
    %3446 = vmatpush1.bf16.msra.mxu0 %v1851
    %3447 = vmatprep.subr.bf16.mxu0 %v1864
    %3448 = vmatpush1.bf16.msra.mxu0 %v1863
    %3449 = vmatprep.subr.bf16.mxu0 %v1876
    %3450 = vmatpush1.bf16.msra.mxu0 %v1875
    %3451 = vmatprep.subr.bf16.mxu0 %v1888
    %3452 = vmatpush1.bf16.msra.mxu0 %v1887
    %3453 = vmatprep.subr.bf16.mxu0 %v1900
    %3454 = vmatpush1.bf16.msra.mxu0 %v1899
    %3455 = vmatprep.subr.bf16.mxu0 %v1912
    %3456 = vmatpush1.bf16.msra.mxu0 %v1911
    %3457 = vmatprep.subr.bf16.mxu0 %v1924
    %3458 = vmatpush1.bf16.msra.mxu0 %v1923
    %3459 = vmatprep.subr.bf16.mxu0 %v1936
    %3460 = vmatpush1.bf16.msra.mxu0 %v1935
    %3461 = vmatprep.subr.bf16.mxu0 %v1948
    %3462 = vmatpush1.bf16.msra.mxu0 %v1947
    %3463 = vmatprep.subr.bf16.mxu0 %v1960
    %3464 = vmatpush1.bf16.msra.mxu0 %v1959
    %3465 = vmatprep.subr.bf16.mxu0 %v1972
    %3466 = vmatpush1.bf16.msra.mxu0 %v1971
    %3467 = vmatprep.mubr.bf16.mxu0 %v3348
    %3468 = vmatmul.mubr.bf16.gmra.mrb[0].mxu0 %v3347
    %v3469 = vpop.f32.mrb[0].mxu0
    %v3470 = vadd.f32 0.0, %v3469
    %v3471 = vpop.f32.mrb[0].mxu0
    %v3472 = vadd.f32 0.0, %v3471
    %v3473 = vpop.f32.mrb[0].mxu0
    %v3474 = vpop.f32.mrb[0].mxu0
    %3475 = vdwg.mxu0
    %3476 = vmatprep.subr.bf16.mxu0 %v1984
    %3477 = vmatpush1.bf16.msra.mxu0 %v1983
    %3478 = vmatprep.subr.bf16.mxu0 %v1996
    %3479 = vmatpush1.bf16.msra.mxu0 %v1995
    %3480 = vmatprep.subr.bf16.mxu0 0
    %3481 = vmatpush1.bf16.msra.mxu0 0
    %3482 = vmatprep.subr.bf16.mxu0 0
    %3483 = vmatpush1.bf16.msra.mxu0 0
    %3484 = vmatprep.subr.bf16.mxu0 0
    %3485 = vmatpush1.bf16.msra.mxu0 0
    %3486 = vmatprep.subr.bf16.mxu0 0
    %3487 = vmatpush1.bf16.msra.mxu0 0
    %3488 = vmatprep.subr.bf16.mxu0 0
    %3489 = vmatpush1.bf16.msra.mxu0 0
    %3490 = vmatprep.subr.bf16.mxu0 0
    %3491 = vmatpush1.bf16.msra.mxu0 0
    %3492 = vmatprep.subr.bf16.mxu0 0
    %3493 = vmatpush1.bf16.msra.mxu0 0
    %3494 = vmatprep.subr.bf16.mxu0 0
    %3495 = vmatpush1.bf16.msra.mxu0 0
    %3496 = vmatprep.subr.bf16.mxu0 0
    %3497 = vmatpush1.bf16.msra.mxu0 0
    %3498 = vmatprep.subr.bf16.mxu0 0
    %3499 = vmatpush1.bf16.msra.mxu0 0
    %3500 = vmatprep.subr.bf16.mxu0 0
    %3501 = vmatpush1.bf16.msra.mxu0 0
    %3502 = vmatprep.subr.bf16.mxu0 0
    %3503 = vmatpush1.bf16.msra.mxu0 0
    %3504 = vmatprep.subr.bf16.mxu0 0
    %3505 = vmatpush1.bf16.msra.mxu0 0
    %3506 = vmatprep.subr.bf16.mxu0 0
    %3507 = vmatpush1.bf16.msra.mxu0 0
    %3508 = vmatprep.mubr.bf16.mxu0 0
    %3509 = vmatmul.mubr.bf16.gmra.mrb[0].mxu0 %v3351
    %v3510 = vpop.f32.mrb[0].mxu0
    %v3511 = vadd.f32 %v3470, %v3510
    %v3512 = vpop.f32.mrb[0].mxu0
    %v3513 = vadd.f32 %v3472, %v3512
    %v3514 = vpop.f32.mrb[0].mxu0
    %v3515 = vpop.f32.mrb[0].mxu0
    %3516 = vdwg.mxu0
    %3517 = vmatprep.subr.bf16.mxu0 %v1794
    %3518 = vmatpush1.bf16.msra.mxu0 %v1793
    %3519 = vmatprep.subr.bf16.mxu0 %v1806
    %3520 = vmatpush1.bf16.msra.mxu0 %v1805
    %3521 = vmatprep.subr.bf16.mxu0 %v1818
    %3522 = vmatpush1.bf16.msra.mxu0 %v1817
    %3523 = vmatprep.subr.bf16.mxu0 %v1830
    %3524 = vmatpush1.bf16.msra.mxu0 %v1829
    %3525 = vmatprep.subr.bf16.mxu0 %v1842
    %3526 = vmatpush1.bf16.msra.mxu0 %v1841
    %3527 = vmatprep.subr.bf16.mxu0 %v1854
    %3528 = vmatpush1.bf16.msra.mxu0 %v1853
    %3529 = vmatprep.subr.bf16.mxu0 %v1866
    %3530 = vmatpush1.bf16.msra.mxu0 %v1865
    %3531 = vmatprep.subr.bf16.mxu0 %v1878
    %3532 = vmatpush1.bf16.msra.mxu0 %v1877
    %3533 = vmatprep.subr.bf16.mxu0 %v1890
    %3534 = vmatpush1.bf16.msra.mxu0 %v1889
    %3535 = vmatprep.subr.bf16.mxu0 %v1902
    %3536 = vmatpush1.bf16.msra.mxu0 %v1901
    %3537 = vmatprep.subr.bf16.mxu0 %v1914
    %3538 = vmatpush1.bf16.msra.mxu0 %v1913
    %3539 = vmatprep.subr.bf16.mxu0 %v1926
    %3540 = vmatpush1.bf16.msra.mxu0 %v1925
    %3541 = vmatprep.subr.bf16.mxu0 %v1938
    %3542 = vmatpush1.bf16.msra.mxu0 %v1937
    %3543 = vmatprep.subr.bf16.mxu0 %v1950
    %3544 = vmatpush1.bf16.msra.mxu0 %v1949
    %3545 = vmatprep.subr.bf16.mxu0 %v1962
    %3546 = vmatpush1.bf16.msra.mxu0 %v1961
    %3547 = vmatprep.subr.bf16.mxu0 %v1974
    %3548 = vmatpush1.bf16.msra.mxu0 %v1973
    %3549 = vmatprep.mubr.bf16.mxu0 %v3348
    %3550 = vmatmul.mubr.bf16.gmra.mrb[0].mxu0 %v3347
    %v3551 = vpop.f32.mrb[0].mxu0
    %v3552 = vadd.f32 0.0, %v3551
    %v3553 = vpop.f32.mrb[0].mxu0
    %v3554 = vadd.f32 0.0, %v3553
    %v3555 = vpop.f32.mrb[0].mxu0
    %v3556 = vpop.f32.mrb[0].mxu0
    %3557 = vdwg.mxu0
    %3558 = vmatprep.subr.bf16.mxu0 %v1986
    %3559 = vmatpush1.bf16.msra.mxu0 %v1985
    %3560 = vmatprep.subr.bf16.mxu0 %v1998
    %3561 = vmatpush1.bf16.msra.mxu0 %v1997
    %3562 = vmatprep.subr.bf16.mxu0 0
    %3563 = vmatpush1.bf16.msra.mxu0 0
    %3564 = vmatprep.subr.bf16.mxu0 0
    %3565 = vmatpush1.bf16.msra.mxu0 0
    %3566 = vmatprep.subr.bf16.mxu0 0
    %3567 = vmatpush1.bf16.msra.mxu0 0
    %3568 = vmatprep.subr.bf16.mxu0 0
    %3569 = vmatpush1.bf16.msra.mxu0 0
    %3570 = vmatprep.subr.bf16.mxu0 0
    %3571 = vmatpush1.bf16.msra.mxu0 0
    %3572 = vmatprep.subr.bf16.mxu0 0
    %3573 = vmatpush1.bf16.msra.mxu0 0
    %3574 = vmatprep.subr.bf16.mxu0 0
    %3575 = vmatpush1.bf16.msra.mxu0 0
    %3576 = vmatprep.subr.bf16.mxu0 0
    %3577 = vmatpush1.bf16.msra.mxu0 0
    %3578 = vmatprep.subr.bf16.mxu0 0
    %3579 = vmatpush1.bf16.msra.mxu0 0
    %3580 = vmatprep.subr.bf16.mxu0 0
    %3581 = vmatpush1.bf16.msra.mxu0 0
    %3582 = vmatprep.subr.bf16.mxu0 0
    %3583 = vmatpush1.bf16.msra.mxu0 0
    %3584 = vmatprep.subr.bf16.mxu0 0
    %3585 = vmatpush1.bf16.msra.mxu0 0
    %3586 = vmatprep.subr.bf16.mxu0 0
    %3587 = vmatpush1.bf16.msra.mxu0 0
    %3588 = vmatprep.subr.bf16.mxu0 0
    %3589 = vmatpush1.bf16.msra.mxu0 0
    %3590 = vmatprep.mubr.bf16.mxu0 0
    %3591 = vmatmul.mubr.bf16.gmra.mrb[0].mxu0 %v3351
    %v3592 = vpop.f32.mrb[0].mxu0
    %v3593 = vadd.f32 %v3552, %v3592
    %v3594 = vpop.f32.mrb[0].mxu0
    %v3595 = vadd.f32 %v3554, %v3594
    %v3596 = vpop.f32.mrb[0].mxu0
    %v3597 = vpop.f32.mrb[0].mxu0
    %3598 = vdwg.mxu0
    %3599 = vmatprep.subr.bf16.mxu0 %v1796
    %3600 = vmatpush1.bf16.msra.mxu0 %v1795
    %3601 = vmatprep.subr.bf16.mxu0 %v1808
    %3602 = vmatpush1.bf16.msra.mxu0 %v1807
    %3603 = vmatprep.subr.bf16.mxu0 %v1820
    %3604 = vmatpush1.bf16.msra.mxu0 %v1819
    %3605 = vmatprep.subr.bf16.mxu0 %v1832
    %3606 = vmatpush1.bf16.msra.mxu0 %v1831
    %3607 = vmatprep.subr.bf16.mxu0 %v1844
    %3608 = vmatpush1.bf16.msra.mxu0 %v1843
    %3609 = vmatprep.subr.bf16.mxu0 %v1856
    %3610 = vmatpush1.bf16.msra.mxu0 %v1855
    %3611 = vmatprep.subr.bf16.mxu0 %v1868
    %3612 = vmatpush1.bf16.msra.mxu0 %v1867
    %3613 = vmatprep.subr.bf16.mxu0 %v1880
    %3614 = vmatpush1.bf16.msra.mxu0 %v1879
    %3615 = vmatprep.subr.bf16.mxu0 %v1892
    %3616 = vmatpush1.bf16.msra.mxu0 %v1891
    %3617 = vmatprep.subr.bf16.mxu0 %v1904
    %3618 = vmatpush1.bf16.msra.mxu0 %v1903
    %3619 = vmatprep.subr.bf16.mxu0 %v1916
    %3620 = vmatpush1.bf16.msra.mxu0 %v1915
    %3621 = vmatprep.subr.bf16.mxu0 %v1928
    %3622 = vmatpush1.bf16.msra.mxu0 %v1927
    %3623 = vmatprep.subr.bf16.mxu0 %v1940
    %3624 = vmatpush1.bf16.msra.mxu0 %v1939
    %3625 = vmatprep.subr.bf16.mxu0 %v1952
    %3626 = vmatpush1.bf16.msra.mxu0 %v1951
    %3627 = vmatprep.subr.bf16.mxu0 %v1964
    %3628 = vmatpush1.bf16.msra.mxu0 %v1963
    %3629 = vmatprep.subr.bf16.mxu0 %v1976
    %3630 = vmatpush1.bf16.msra.mxu0 %v1975
    %3631 = vmatprep.mubr.bf16.mxu0 %v3348
    %3632 = vmatmul.mubr.bf16.gmra.mrb[0].mxu0 %v3347
    %v3633 = vpop.f32.mrb[0].mxu0
    %v3634 = vadd.f32 0.0, %v3633
    %v3635 = vpop.f32.mrb[0].mxu0
    %v3636 = vadd.f32 0.0, %v3635
    %v3637 = vpop.f32.mrb[0].mxu0
    %v3638 = vpop.f32.mrb[0].mxu0
    %3639 = vdwg.mxu0
    %3640 = vmatprep.subr.bf16.mxu0 %v1988
    %3641 = vmatpush1.bf16.msra.mxu0 %v1987
    %3642 = vmatprep.subr.bf16.mxu0 %v2000
    %3643 = vmatpush1.bf16.msra.mxu0 %v1999
    %3644 = vmatprep.subr.bf16.mxu0 0
    %3645 = vmatpush1.bf16.msra.mxu0 0
    %3646 = vmatprep.subr.bf16.mxu0 0
    %3647 = vmatpush1.bf16.msra.mxu0 0
    %3648 = vmatprep.subr.bf16.mxu0 0
    %3649 = vmatpush1.bf16.msra.mxu0 0
    %3650 = vmatprep.subr.bf16.mxu0 0
    %3651 = vmatpush1.bf16.msra.mxu0 0
    %3652 = vmatprep.subr.bf16.mxu0 0
    %3653 = vmatpush1.bf16.msra.mxu0 0
    %3654 = vmatprep.subr.bf16.mxu0 0
    %3655 = vmatpush1.bf16.msra.mxu0 0
    %3656 = vmatprep.subr.bf16.mxu0 0
    %3657 = vmatpush1.bf16.msra.mxu0 0
    %3658 = vmatprep.subr.bf16.mxu0 0
    %3659 = vmatpush1.bf16.msra.mxu0 0
    %3660 = vmatprep.subr.bf16.mxu0 0
    %3661 = vmatpush1.bf16.msra.mxu0 0
    %3662 = vmatprep.subr.bf16.mxu0 0
    %3663 = vmatpush1.bf16.msra.mxu0 0
    %3664 = vmatprep.subr.bf16.mxu0 0
    %3665 = vmatpush1.bf16.msra.mxu0 0
    %3666 = vmatprep.subr.bf16.mxu0 0
    %3667 = vmatpush1.bf16.msra.mxu0 0
    %3668 = vmatprep.subr.bf16.mxu0 0
    %3669 = vmatpush1.bf16.msra.mxu0 0
    %3670 = vmatprep.subr.bf16.mxu0 0
    %3671 = vmatpush1.bf16.msra.mxu0 0
    %3672 = vmatprep.mubr.bf16.mxu0 0
    %3673 = vmatmul.mubr.bf16.gmra.mrb[0].mxu0 %v3351
    %v3674 = vpop.f32.mrb[0].mxu0
    %v3675 = vadd.f32 %v3634, %v3674
    %v3676 = vpop.f32.mrb[0].mxu0
    %v3677 = vadd.f32 %v3636, %v3676
    %v3678 = vpop.f32.mrb[0].mxu0
    %v3679 = vpop.f32.mrb[0].mxu0
    %3680 = vdwg.mxu0
    %3681 = vmatprep.subr.bf16.mxu0 %v1798
    %3682 = vmatpush1.bf16.msra.mxu0 %v1797
    %3683 = vmatprep.subr.bf16.mxu0 %v1810
    %3684 = vmatpush1.bf16.msra.mxu0 %v1809
    %3685 = vmatprep.subr.bf16.mxu0 %v1822
    %3686 = vmatpush1.bf16.msra.mxu0 %v1821
    %3687 = vmatprep.subr.bf16.mxu0 %v1834
    %3688 = vmatpush1.bf16.msra.mxu0 %v1833
    %3689 = vmatprep.subr.bf16.mxu0 %v1846
    %3690 = vmatpush1.bf16.msra.mxu0 %v1845
    %3691 = vmatprep.subr.bf16.mxu0 %v1858
    %3692 = vmatpush1.bf16.msra.mxu0 %v1857
    %3693 = vmatprep.subr.bf16.mxu0 %v1870
    %3694 = vmatpush1.bf16.msra.mxu0 %v1869
    %3695 = vmatprep.subr.bf16.mxu0 %v1882
    %3696 = vmatpush1.bf16.msra.mxu0 %v1881
    %3697 = vmatprep.subr.bf16.mxu0 %v1894
    %3698 = vmatpush1.bf16.msra.mxu0 %v1893
    %3699 = vmatprep.subr.bf16.mxu0 %v1906
    %3700 = vmatpush1.bf16.msra.mxu0 %v1905
    %3701 = vmatprep.subr.bf16.mxu0 %v1918
    %3702 = vmatpush1.bf16.msra.mxu0 %v1917
    %3703 = vmatprep.subr.bf16.mxu0 %v1930
    %3704 = vmatpush1.bf16.msra.mxu0 %v1929
    %3705 = vmatprep.subr.bf16.mxu0 %v1942
    %3706 = vmatpush1.bf16.msra.mxu0 %v1941
    %3707 = vmatprep.subr.bf16.mxu0 %v1954
    %3708 = vmatpush1.bf16.msra.mxu0 %v1953
    %3709 = vmatprep.subr.bf16.mxu0 %v1966
    %3710 = vmatpush1.bf16.msra.mxu0 %v1965
    %3711 = vmatprep.subr.bf16.mxu0 %v1978
    %3712 = vmatpush1.bf16.msra.mxu0 %v1977
    %3713 = vmatprep.mubr.bf16.mxu0 %v3348
    %3714 = vmatmul.mubr.bf16.gmra.mrb[0].mxu0 %v3347
    %v3715 = vpop.f32.mrb[0].mxu0
    %v3716 = vadd.f32 0.0, %v3715
    %v3717 = vpop.f32.mrb[0].mxu0
    %v3718 = vadd.f32 0.0, %v3717
    %v3719 = vpop.f32.mrb[0].mxu0
    %v3720 = vpop.f32.mrb[0].mxu0
    %3721 = vdwg.mxu0
    %3722 = vmatprep.subr.bf16.mxu0 %v1990
    %3723 = vmatpush1.bf16.msra.mxu0 %v1989
    %3724 = vmatprep.subr.bf16.mxu0 %v2002
    %3725 = vmatpush1.bf16.msra.mxu0 %v2001
    %3726 = vmatprep.subr.bf16.mxu0 0
    %3727 = vmatpush1.bf16.msra.mxu0 0
    %3728 = vmatprep.subr.bf16.mxu0 0
    %3729 = vmatpush1.bf16.msra.mxu0 0
    %3730 = vmatprep.subr.bf16.mxu0 0
    %3731 = vmatpush1.bf16.msra.mxu0 0
    %3732 = vmatprep.subr.bf16.mxu0 0
    %3733 = vmatpush1.bf16.msra.mxu0 0
    %3734 = vmatprep.subr.bf16.mxu0 0
    %3735 = vmatpush1.bf16.msra.mxu0 0
    %3736 = vmatprep.subr.bf16.mxu0 0
    %3737 = vmatpush1.bf16.msra.mxu0 0
    %3738 = vmatprep.subr.bf16.mxu0 0
    %3739 = vmatpush1.bf16.msra.mxu0 0
    %3740 = vmatprep.subr.bf16.mxu0 0
    %3741 = vmatpush1.bf16.msra.mxu0 0
    %3742 = vmatprep.subr.bf16.mxu0 0
    %3743 = vmatpush1.bf16.msra.mxu0 0
    %3744 = vmatprep.subr.bf16.mxu0 0
    %3745 = vmatpush1.bf16.msra.mxu0 0
    %3746 = vmatprep.subr.bf16.mxu0 0
    %3747 = vmatpush1.bf16.msra.mxu0 0
    %3748 = vmatprep.subr.bf16.mxu0 0
    %3749 = vmatpush1.bf16.msra.mxu0 0
    %3750 = vmatprep.subr.bf16.mxu0 0
    %3751 = vmatpush1.bf16.msra.mxu0 0
    %3752 = vmatprep.subr.bf16.mxu0 0
    %3753 = vmatpush1.bf16.msra.mxu0 0
    %3754 = vmatprep.mubr.bf16.mxu0 0
    %3755 = vmatmul.mubr.bf16.gmra.mrb[0].mxu0 %v3351
    %v3756 = vpop.f32.mrb[0].mxu0
    %v3757 = vadd.f32 %v3716, %v3756
    %v3758 = vpop.f32.mrb[0].mxu0
    %v3759 = vadd.f32 %v3718, %v3758
    %v3760 = vpop.f32.mrb[0].mxu0
    %v3761 = vpop.f32.mrb[0].mxu0
    %3762 = vdwg.mxu0
    %3763 = vmatprep.subr.bf16.mxu0 %v1800
    %3764 = vmatpush1.bf16.msra.mxu0 %v1799
    %3765 = vmatprep.subr.bf16.mxu0 %v1812
    %3766 = vmatpush1.bf16.msra.mxu0 %v1811
    %3767 = vmatprep.subr.bf16.mxu0 %v1824
    %3768 = vmatpush1.bf16.msra.mxu0 %v1823
    %3769 = vmatprep.subr.bf16.mxu0 %v1836
    %3770 = vmatpush1.bf16.msra.mxu0 %v1835
    %3771 = vmatprep.subr.bf16.mxu0 %v1848
    %3772 = vmatpush1.bf16.msra.mxu0 %v1847
    %3773 = vmatprep.subr.bf16.mxu0 %v1860
    %3774 = vmatpush1.bf16.msra.mxu0 %v1859
    %3775 = vmatprep.subr.bf16.mxu0 %v1872
    %3776 = vmatpush1.bf16.msra.mxu0 %v1871
    %3777 = vmatprep.subr.bf16.mxu0 %v1884
    %3778 = vmatpush1.bf16.msra.mxu0 %v1883
    %3779 = vmatprep.subr.bf16.mxu0 %v1896
    %3780 = vmatpush1.bf16.msra.mxu0 %v1895
    %3781 = vmatprep.subr.bf16.mxu0 %v1908
    %3782 = vmatpush1.bf16.msra.mxu0 %v1907
    %3783 = vmatprep.subr.bf16.mxu0 %v1920
    %3784 = vmatpush1.bf16.msra.mxu0 %v1919
    %3785 = vmatprep.subr.bf16.mxu0 %v1932
    %3786 = vmatpush1.bf16.msra.mxu0 %v1931
    %3787 = vmatprep.subr.bf16.mxu0 %v1944
    %3788 = vmatpush1.bf16.msra.mxu0 %v1943
    %3789 = vmatprep.subr.bf16.mxu0 %v1956
    %3790 = vmatpush1.bf16.msra.mxu0 %v1955
    %3791 = vmatprep.subr.bf16.mxu0 %v1968
    %3792 = vmatpush1.bf16.msra.mxu0 %v1967
    %3793 = vmatprep.subr.bf16.mxu0 %v1980
    %3794 = vmatpush1.bf16.msra.mxu0 %v1979
    %3795 = vmatprep.mubr.bf16.mxu0 %v3348
    %3796 = vmatmul.mubr.bf16.gmra.mrb[0].mxu0 %v3347
    %v3797 = vpop.f32.mrb[0].mxu0
    %v3798 = vadd.f32 0.0, %v3797
    %v3799 = vpop.f32.mrb[0].mxu0
    %v3800 = vadd.f32 0.0, %v3799
    %v3801 = vpop.f32.mrb[0].mxu0
    %v3802 = vpop.f32.mrb[0].mxu0
    %3803 = vdwg.mxu0
    %3804 = vmatprep.subr.bf16.mxu0 %v1992
    %3805 = vmatpush1.bf16.msra.mxu0 %v1991
    %3806 = vmatprep.subr.bf16.mxu0 %v2004
    %3807 = vmatpush1.bf16.msra.mxu0 %v2003
    %3808 = vmatprep.subr.bf16.mxu0 0
    %3809 = vmatpush1.bf16.msra.mxu0 0
    %3810 = vmatprep.subr.bf16.mxu0 0
    %3811 = vmatpush1.bf16.msra.mxu0 0
    %3812 = vmatprep.subr.bf16.mxu0 0
    %3813 = vmatpush1.bf16.msra.mxu0 0
    %3814 = vmatprep.subr.bf16.mxu0 0
    %3815 = vmatpush1.bf16.msra.mxu0 0
    %3816 = vmatprep.subr.bf16.mxu0 0
    %3817 = vmatpush1.bf16.msra.mxu0 0
    %3818 = vmatprep.subr.bf16.mxu0 0
    %3819 = vmatpush1.bf16.msra.mxu0 0
    %3820 = vmatprep.subr.bf16.mxu0 0
    %3821 = vmatpush1.bf16.msra.mxu0 0
    %3822 = vmatprep.subr.bf16.mxu0 0
    %3823 = vmatpush1.bf16.msra.mxu0 0
    %3824 = vmatprep.subr.bf16.mxu0 0
    %3825 = vmatpush1.bf16.msra.mxu0 0
    %3826 = vmatprep.subr.bf16.mxu0 0
    %3827 = vmatpush1.bf16.msra.mxu0 0
    %3828 = vmatprep.subr.bf16.mxu0 0
    %3829 = vmatpush1.bf16.msra.mxu0 0
    %3830 = vmatprep.subr.bf16.mxu0 0
    %3831 = vmatpush1.bf16.msra.mxu0 0
    %3832 = vmatprep.subr.bf16.mxu0 0
    %3833 = vmatpush1.bf16.msra.mxu0 0
    %3834 = vmatprep.subr.bf16.mxu0 0
    %3835 = vmatpush1.bf16.msra.mxu0 0
    %3836 = vmatprep.mubr.bf16.mxu0 0
    %3837 = vmatmul.mubr.bf16.gmra.mrb[0].mxu0 %v3351
    %v3838 = vpop.f32.mrb[0].mxu0
    %v3839 = vadd.f32 %v3798, %v3838
    %v3840 = vpop.f32.mrb[0].mxu0
    %v3841 = vadd.f32 %v3800, %v3840
    %v3842 = vpop.f32.mrb[0].mxu0
    %v3843 = vpop.f32.mrb[0].mxu0
    %3844 = vdwg.mxu0
    %v3845 = vadd.f32 %v304, %v3429
    %v3846 = vadd.f32 %v306, %v3431
    %v3847 = vadd.f32 %v415, %v3511
    %v3848 = vadd.f32 %v417, %v3513
    %v3849 = vadd.f32 %v526, %v3593
    %v3850 = vadd.f32 %v528, %v3595
    %v3851 = vadd.f32 %v637, %v3675
    %v3852 = vadd.f32 %v639, %v3677
    %v3853 = vadd.f32 %v748, %v3757
    %v3854 = vadd.f32 %v750, %v3759
    %v3855 = vadd.f32 %v859, %v3839
    %v3856 = vadd.f32 %v861, %v3841
    %v3857 = vmul.f32 %v3845, 0.5
    %v3858 = vmul.f32 %v3846, 0.5
    %v3859 = vmul.f32 %v3847, 0.5
    %v3860 = vtanh.pop %v3857
    %v3861 = vtanh.pop %v3858
    %v3862 = vtanh.pop %v3859
    %v3863 = vmul.f32 %v3860, 0.5
    %v3864 = vmul.f32 %v3861, 0.5
    %v3865 = vmul.f32 %v3862, 0.5
    %v3866 = vadd.f32 %v3863, 0.5
    %v3867 = vadd.f32 %v3864, 0.5
    %v3868 = vadd.f32 %v3865, 0.5
    %v3869 = vmul.f32 %v3848, 0.5
    %v3870 = vmul.f32 %v3849, 0.5
    %v3871 = vmul.f32 %v3850, 0.5
    %v3872 = vtanh.pop %v3869
    %v3873 = vtanh.pop %v3870
    %v3874 = vtanh.pop %v3871
    %v3875 = vmul.f32 %v3872, 0.5
    %v3876 = vmul.f32 %v3873, 0.5
    %v3877 = vmul.f32 %v3874, 0.5
    %v3878 = vadd.f32 %v3875, 0.5
    %v3879 = vadd.f32 %v3876, 0.5
    %v3880 = vadd.f32 %v3877, 0.5
    %v3881 = vtanh.pop %v3851
    %v3882 = vtanh.pop %v3852
    %v3883 = vtanh.pop %v3853
    %v3884 = vmul.f32 %v3854, 0.5
    %v3885 = vmul.f32 %v3855, 0.5
    %v3886 = vmul.f32 %v3856, 0.5
    %v3887 = vtanh.pop %v3884
    %v3888 = vtanh.pop %v3885
    %v3889 = vtanh.pop %v3886
    %v3890 = vmul.f32 %v3887, 0.5
    %v3891 = vmul.f32 %v3888, 0.5
    %v3892 = vmul.f32 %v3889, 0.5
    %v3893 = vadd.f32 %v3890, 0.5
    %v3894 = vadd.f32 %v3891, 0.5
    %v3895 = vadd.f32 %v3892, 0.5
    %v3896 = vmul.f32 %v3878, %v3338
    %v3897 = vmul.f32 %v3879, %v3339
    %v3898 = vmul.f32 %v3880, %v3340
    %v3899 = vmul.f32 %v3866, %v3881
    %v3900 = vmul.f32 %v3867, %v3882
    %v3901 = vmul.f32 %v3868, %v3883
    %v3902 = vadd.f32 %v3896, %v3899
    %v3903 = vadd.f32 %v3897, %v3900
    %v3904 = vadd.f32 %v3898, %v3901
    %v3905 = vtanh.pop %v3902
    %v3906 = vtanh.pop %v3903
    %v3907 = vtanh.pop %v3904
    %v3908 = vmul.f32 %v3893, %v3905
    %v3909 = vmul.f32 %v3894, %v3906
    %v3910 = vmul.f32 %v3895, %v3907
    %v3911 = vpack.c.bf16 %v3908, %v3908
    %v3912 = vpack.c.bf16 %v3909, %v3909
    %v3913 = vpack.c.bf16 %v3910, %v3910
    %v3915 = vsel %vm2221, %v3913, 0
    %3917 = vmatprep.subr.bf16.mxu0 %v1790
    %3918 = vmatpush1.bf16.msra.mxu0 %v1789
    %3919 = vmatprep.subr.bf16.mxu0 %v1802
    %3920 = vmatpush1.bf16.msra.mxu0 %v1801
    %3921 = vmatprep.subr.bf16.mxu0 %v1814
    %3922 = vmatpush1.bf16.msra.mxu0 %v1813
    %3923 = vmatprep.subr.bf16.mxu0 %v1826
    %3924 = vmatpush1.bf16.msra.mxu0 %v1825
    %3925 = vmatprep.subr.bf16.mxu0 %v1838
    %3926 = vmatpush1.bf16.msra.mxu0 %v1837
    %3927 = vmatprep.subr.bf16.mxu0 %v1850
    %3928 = vmatpush1.bf16.msra.mxu0 %v1849
    %3929 = vmatprep.subr.bf16.mxu0 %v1862
    %3930 = vmatpush1.bf16.msra.mxu0 %v1861
    %3931 = vmatprep.subr.bf16.mxu0 %v1874
    %3932 = vmatpush1.bf16.msra.mxu0 %v1873
    %3933 = vmatprep.subr.bf16.mxu0 %v1886
    %3934 = vmatpush1.bf16.msra.mxu0 %v1885
    %3935 = vmatprep.subr.bf16.mxu0 %v1898
    %3936 = vmatpush1.bf16.msra.mxu0 %v1897
    %3937 = vmatprep.subr.bf16.mxu0 %v1910
    %3938 = vmatpush1.bf16.msra.mxu0 %v1909
    %3939 = vmatprep.subr.bf16.mxu0 %v1922
    %3940 = vmatpush1.bf16.msra.mxu0 %v1921
    %3941 = vmatprep.subr.bf16.mxu0 %v1934
    %3942 = vmatpush1.bf16.msra.mxu0 %v1933
    %3943 = vmatprep.subr.bf16.mxu0 %v1946
    %3944 = vmatpush1.bf16.msra.mxu0 %v1945
    %3945 = vmatprep.subr.bf16.mxu0 %v1958
    %3946 = vmatpush1.bf16.msra.mxu0 %v1957
    %3947 = vmatprep.subr.bf16.mxu0 %v1970
    %3948 = vmatpush1.bf16.msra.mxu0 %v1969
    %3949 = vmatprep.mubr.bf16.mxu0 %v3912
    %3950 = vmatmul.mubr.bf16.gmra.mrb[0].mxu0 %v3911
    %v3951 = vpop.f32.mrb[0].mxu0
    %v3952 = vadd.f32 0.0, %v3951
    %v3953 = vpop.f32.mrb[0].mxu0
    %v3954 = vadd.f32 0.0, %v3953
    %v3955 = vpop.f32.mrb[0].mxu0
    %v3956 = vpop.f32.mrb[0].mxu0
    %3957 = vdwg.mxu0
    %3958 = vmatprep.subr.bf16.mxu0 %v1982
    %3959 = vmatpush1.bf16.msra.mxu0 %v1981
    %3960 = vmatprep.subr.bf16.mxu0 %v1994
    %3961 = vmatpush1.bf16.msra.mxu0 %v1993
    %3962 = vmatprep.subr.bf16.mxu0 0
    %3963 = vmatpush1.bf16.msra.mxu0 0
    %3964 = vmatprep.subr.bf16.mxu0 0
    %3965 = vmatpush1.bf16.msra.mxu0 0
    %3966 = vmatprep.subr.bf16.mxu0 0
    %3967 = vmatpush1.bf16.msra.mxu0 0
    %3968 = vmatprep.subr.bf16.mxu0 0
    %3969 = vmatpush1.bf16.msra.mxu0 0
    %3970 = vmatprep.subr.bf16.mxu0 0
    %3971 = vmatpush1.bf16.msra.mxu0 0
    %3972 = vmatprep.subr.bf16.mxu0 0
    %3973 = vmatpush1.bf16.msra.mxu0 0
    %3974 = vmatprep.subr.bf16.mxu0 0
    %3975 = vmatpush1.bf16.msra.mxu0 0
    %3976 = vmatprep.subr.bf16.mxu0 0
    %3977 = vmatpush1.bf16.msra.mxu0 0
    %3978 = vmatprep.subr.bf16.mxu0 0
    %3979 = vmatpush1.bf16.msra.mxu0 0
    %3980 = vmatprep.subr.bf16.mxu0 0
    %3981 = vmatpush1.bf16.msra.mxu0 0
    %3982 = vmatprep.subr.bf16.mxu0 0
    %3983 = vmatpush1.bf16.msra.mxu0 0
    %3984 = vmatprep.subr.bf16.mxu0 0
    %3985 = vmatpush1.bf16.msra.mxu0 0
    %3986 = vmatprep.subr.bf16.mxu0 0
    %3987 = vmatpush1.bf16.msra.mxu0 0
    %3988 = vmatprep.subr.bf16.mxu0 0
    %3989 = vmatpush1.bf16.msra.mxu0 0
    %3990 = vmatprep.mubr.bf16.mxu0 0
    %3991 = vmatmul.mubr.bf16.gmra.mrb[0].mxu0 %v3915
    %v3992 = vpop.f32.mrb[0].mxu0
    %v3993 = vadd.f32 %v3952, %v3992
    %v3994 = vpop.f32.mrb[0].mxu0
    %v3995 = vadd.f32 %v3954, %v3994
    %v3996 = vpop.f32.mrb[0].mxu0
    %v3997 = vpop.f32.mrb[0].mxu0
    %3998 = vdwg.mxu0
    %3999 = vmatprep.subr.bf16.mxu0 %v1792
    %4000 = vmatpush1.bf16.msra.mxu0 %v1791
    %4001 = vmatprep.subr.bf16.mxu0 %v1804
    %4002 = vmatpush1.bf16.msra.mxu0 %v1803
    %4003 = vmatprep.subr.bf16.mxu0 %v1816
    %4004 = vmatpush1.bf16.msra.mxu0 %v1815
    %4005 = vmatprep.subr.bf16.mxu0 %v1828
    %4006 = vmatpush1.bf16.msra.mxu0 %v1827
    %4007 = vmatprep.subr.bf16.mxu0 %v1840
    %4008 = vmatpush1.bf16.msra.mxu0 %v1839
    %4009 = vmatprep.subr.bf16.mxu0 %v1852
    %4010 = vmatpush1.bf16.msra.mxu0 %v1851
    %4011 = vmatprep.subr.bf16.mxu0 %v1864
    %4012 = vmatpush1.bf16.msra.mxu0 %v1863
    %4013 = vmatprep.subr.bf16.mxu0 %v1876
    %4014 = vmatpush1.bf16.msra.mxu0 %v1875
    %4015 = vmatprep.subr.bf16.mxu0 %v1888
    %4016 = vmatpush1.bf16.msra.mxu0 %v1887
    %4017 = vmatprep.subr.bf16.mxu0 %v1900
    %4018 = vmatpush1.bf16.msra.mxu0 %v1899
    %4019 = vmatprep.subr.bf16.mxu0 %v1912
    %4020 = vmatpush1.bf16.msra.mxu0 %v1911
    %4021 = vmatprep.subr.bf16.mxu0 %v1924
    %4022 = vmatpush1.bf16.msra.mxu0 %v1923
    %4023 = vmatprep.subr.bf16.mxu0 %v1936
    %4024 = vmatpush1.bf16.msra.mxu0 %v1935
    %4025 = vmatprep.subr.bf16.mxu0 %v1948
    %4026 = vmatpush1.bf16.msra.mxu0 %v1947
    %4027 = vmatprep.subr.bf16.mxu0 %v1960
    %4028 = vmatpush1.bf16.msra.mxu0 %v1959
    %4029 = vmatprep.subr.bf16.mxu0 %v1972
    %4030 = vmatpush1.bf16.msra.mxu0 %v1971
    %4031 = vmatprep.mubr.bf16.mxu0 %v3912
    %4032 = vmatmul.mubr.bf16.gmra.mrb[0].mxu0 %v3911
    %v4033 = vpop.f32.mrb[0].mxu0
    %v4034 = vadd.f32 0.0, %v4033
    %v4035 = vpop.f32.mrb[0].mxu0
    %v4036 = vadd.f32 0.0, %v4035
    %v4037 = vpop.f32.mrb[0].mxu0
    %v4038 = vpop.f32.mrb[0].mxu0
    %4039 = vdwg.mxu0
    %4040 = vmatprep.subr.bf16.mxu0 %v1984
    %4041 = vmatpush1.bf16.msra.mxu0 %v1983
    %4042 = vmatprep.subr.bf16.mxu0 %v1996
    %4043 = vmatpush1.bf16.msra.mxu0 %v1995
    %4044 = vmatprep.subr.bf16.mxu0 0
    %4045 = vmatpush1.bf16.msra.mxu0 0
    %4046 = vmatprep.subr.bf16.mxu0 0
    %4047 = vmatpush1.bf16.msra.mxu0 0
    %4048 = vmatprep.subr.bf16.mxu0 0
    %4049 = vmatpush1.bf16.msra.mxu0 0
    %4050 = vmatprep.subr.bf16.mxu0 0
    %4051 = vmatpush1.bf16.msra.mxu0 0
    %4052 = vmatprep.subr.bf16.mxu0 0
    %4053 = vmatpush1.bf16.msra.mxu0 0
    %4054 = vmatprep.subr.bf16.mxu0 0
    %4055 = vmatpush1.bf16.msra.mxu0 0
    %4056 = vmatprep.subr.bf16.mxu0 0
    %4057 = vmatpush1.bf16.msra.mxu0 0
    %4058 = vmatprep.subr.bf16.mxu0 0
    %4059 = vmatpush1.bf16.msra.mxu0 0
    %4060 = vmatprep.subr.bf16.mxu0 0
    %4061 = vmatpush1.bf16.msra.mxu0 0
    %4062 = vmatprep.subr.bf16.mxu0 0
    %4063 = vmatpush1.bf16.msra.mxu0 0
    %4064 = vmatprep.subr.bf16.mxu0 0
    %4065 = vmatpush1.bf16.msra.mxu0 0
    %4066 = vmatprep.subr.bf16.mxu0 0
    %4067 = vmatpush1.bf16.msra.mxu0 0
    %4068 = vmatprep.subr.bf16.mxu0 0
    %4069 = vmatpush1.bf16.msra.mxu0 0
    %4070 = vmatprep.subr.bf16.mxu0 0
    %4071 = vmatpush1.bf16.msra.mxu0 0
    %4072 = vmatprep.mubr.bf16.mxu0 0
    %4073 = vmatmul.mubr.bf16.gmra.mrb[0].mxu0 %v3915
    %v4074 = vpop.f32.mrb[0].mxu0
    %v4075 = vadd.f32 %v4034, %v4074
    %v4076 = vpop.f32.mrb[0].mxu0
    %v4077 = vadd.f32 %v4036, %v4076
    %v4078 = vpop.f32.mrb[0].mxu0
    %v4079 = vpop.f32.mrb[0].mxu0
    %4080 = vdwg.mxu0
    %4081 = vmatprep.subr.bf16.mxu0 %v1794
    %4082 = vmatpush1.bf16.msra.mxu0 %v1793
    %4083 = vmatprep.subr.bf16.mxu0 %v1806
    %4084 = vmatpush1.bf16.msra.mxu0 %v1805
    %4085 = vmatprep.subr.bf16.mxu0 %v1818
    %4086 = vmatpush1.bf16.msra.mxu0 %v1817
    %4087 = vmatprep.subr.bf16.mxu0 %v1830
    %4088 = vmatpush1.bf16.msra.mxu0 %v1829
    %4089 = vmatprep.subr.bf16.mxu0 %v1842
    %4090 = vmatpush1.bf16.msra.mxu0 %v1841
    %4091 = vmatprep.subr.bf16.mxu0 %v1854
    %4092 = vmatpush1.bf16.msra.mxu0 %v1853
    %4093 = vmatprep.subr.bf16.mxu0 %v1866
    %4094 = vmatpush1.bf16.msra.mxu0 %v1865
    %4095 = vmatprep.subr.bf16.mxu0 %v1878
    %4096 = vmatpush1.bf16.msra.mxu0 %v1877
    %4097 = vmatprep.subr.bf16.mxu0 %v1890
    %4098 = vmatpush1.bf16.msra.mxu0 %v1889
    %4099 = vmatprep.subr.bf16.mxu0 %v1902
    %4100 = vmatpush1.bf16.msra.mxu0 %v1901
    %4101 = vmatprep.subr.bf16.mxu0 %v1914
    %4102 = vmatpush1.bf16.msra.mxu0 %v1913
    %4103 = vmatprep.subr.bf16.mxu0 %v1926
    %4104 = vmatpush1.bf16.msra.mxu0 %v1925
    %4105 = vmatprep.subr.bf16.mxu0 %v1938
    %4106 = vmatpush1.bf16.msra.mxu0 %v1937
    %4107 = vmatprep.subr.bf16.mxu0 %v1950
    %4108 = vmatpush1.bf16.msra.mxu0 %v1949
    %4109 = vmatprep.subr.bf16.mxu0 %v1962
    %4110 = vmatpush1.bf16.msra.mxu0 %v1961
    %4111 = vmatprep.subr.bf16.mxu0 %v1974
    %4112 = vmatpush1.bf16.msra.mxu0 %v1973
    %4113 = vmatprep.mubr.bf16.mxu0 %v3912
    %4114 = vmatmul.mubr.bf16.gmra.mrb[0].mxu0 %v3911
    %v4115 = vpop.f32.mrb[0].mxu0
    %v4116 = vadd.f32 0.0, %v4115
    %v4117 = vpop.f32.mrb[0].mxu0
    %v4118 = vadd.f32 0.0, %v4117
    %v4119 = vpop.f32.mrb[0].mxu0
    %v4120 = vpop.f32.mrb[0].mxu0
    %4121 = vdwg.mxu0
    %4122 = vmatprep.subr.bf16.mxu0 %v1986
    %4123 = vmatpush1.bf16.msra.mxu0 %v1985
    %4124 = vmatprep.subr.bf16.mxu0 %v1998
    %4125 = vmatpush1.bf16.msra.mxu0 %v1997
    %4126 = vmatprep.subr.bf16.mxu0 0
    %4127 = vmatpush1.bf16.msra.mxu0 0
    %4128 = vmatprep.subr.bf16.mxu0 0
    %4129 = vmatpush1.bf16.msra.mxu0 0
    %4130 = vmatprep.subr.bf16.mxu0 0
    %4131 = vmatpush1.bf16.msra.mxu0 0
    %4132 = vmatprep.subr.bf16.mxu0 0
    %4133 = vmatpush1.bf16.msra.mxu0 0
    %4134 = vmatprep.subr.bf16.mxu0 0
    %4135 = vmatpush1.bf16.msra.mxu0 0
    %4136 = vmatprep.subr.bf16.mxu0 0
    %4137 = vmatpush1.bf16.msra.mxu0 0
    %4138 = vmatprep.subr.bf16.mxu0 0
    %4139 = vmatpush1.bf16.msra.mxu0 0
    %4140 = vmatprep.subr.bf16.mxu0 0
    %4141 = vmatpush1.bf16.msra.mxu0 0
    %4142 = vmatprep.subr.bf16.mxu0 0
    %4143 = vmatpush1.bf16.msra.mxu0 0
    %4144 = vmatprep.subr.bf16.mxu0 0
    %4145 = vmatpush1.bf16.msra.mxu0 0
    %4146 = vmatprep.subr.bf16.mxu0 0
    %4147 = vmatpush1.bf16.msra.mxu0 0
    %4148 = vmatprep.subr.bf16.mxu0 0
    %4149 = vmatpush1.bf16.msra.mxu0 0
    %4150 = vmatprep.subr.bf16.mxu0 0
    %4151 = vmatpush1.bf16.msra.mxu0 0
    %4152 = vmatprep.subr.bf16.mxu0 0
    %4153 = vmatpush1.bf16.msra.mxu0 0
    %4154 = vmatprep.mubr.bf16.mxu0 0
    %4155 = vmatmul.mubr.bf16.gmra.mrb[0].mxu0 %v3915
    %v4156 = vpop.f32.mrb[0].mxu0
    %v4157 = vadd.f32 %v4116, %v4156
    %v4158 = vpop.f32.mrb[0].mxu0
    %v4159 = vadd.f32 %v4118, %v4158
    %v4160 = vpop.f32.mrb[0].mxu0
    %v4161 = vpop.f32.mrb[0].mxu0
    %4162 = vdwg.mxu0
    %4163 = vmatprep.subr.bf16.mxu0 %v1796
    %4164 = vmatpush1.bf16.msra.mxu0 %v1795
    %4165 = vmatprep.subr.bf16.mxu0 %v1808
    %4166 = vmatpush1.bf16.msra.mxu0 %v1807
    %4167 = vmatprep.subr.bf16.mxu0 %v1820
    %4168 = vmatpush1.bf16.msra.mxu0 %v1819
    %4169 = vmatprep.subr.bf16.mxu0 %v1832
    %4170 = vmatpush1.bf16.msra.mxu0 %v1831
    %4171 = vmatprep.subr.bf16.mxu0 %v1844
    %4172 = vmatpush1.bf16.msra.mxu0 %v1843
    %4173 = vmatprep.subr.bf16.mxu0 %v1856
    %4174 = vmatpush1.bf16.msra.mxu0 %v1855
    %4175 = vmatprep.subr.bf16.mxu0 %v1868
    %4176 = vmatpush1.bf16.msra.mxu0 %v1867
    %4177 = vmatprep.subr.bf16.mxu0 %v1880
    %4178 = vmatpush1.bf16.msra.mxu0 %v1879
    %4179 = vmatprep.subr.bf16.mxu0 %v1892
    %4180 = vmatpush1.bf16.msra.mxu0 %v1891
    %4181 = vmatprep.subr.bf16.mxu0 %v1904
    %4182 = vmatpush1.bf16.msra.mxu0 %v1903
    %4183 = vmatprep.subr.bf16.mxu0 %v1916
    %4184 = vmatpush1.bf16.msra.mxu0 %v1915
    %4185 = vmatprep.subr.bf16.mxu0 %v1928
    %4186 = vmatpush1.bf16.msra.mxu0 %v1927
    %4187 = vmatprep.subr.bf16.mxu0 %v1940
    %4188 = vmatpush1.bf16.msra.mxu0 %v1939
    %4189 = vmatprep.subr.bf16.mxu0 %v1952
    %4190 = vmatpush1.bf16.msra.mxu0 %v1951
    %4191 = vmatprep.subr.bf16.mxu0 %v1964
    %4192 = vmatpush1.bf16.msra.mxu0 %v1963
    %4193 = vmatprep.subr.bf16.mxu0 %v1976
    %4194 = vmatpush1.bf16.msra.mxu0 %v1975
    %4195 = vmatprep.mubr.bf16.mxu0 %v3912
    %4196 = vmatmul.mubr.bf16.gmra.mrb[0].mxu0 %v3911
    %v4197 = vpop.f32.mrb[0].mxu0
    %v4198 = vadd.f32 0.0, %v4197
    %v4199 = vpop.f32.mrb[0].mxu0
    %v4200 = vadd.f32 0.0, %v4199
    %v4201 = vpop.f32.mrb[0].mxu0
    %v4202 = vpop.f32.mrb[0].mxu0
    %4203 = vdwg.mxu0
    %4204 = vmatprep.subr.bf16.mxu0 %v1988
    %4205 = vmatpush1.bf16.msra.mxu0 %v1987
    %4206 = vmatprep.subr.bf16.mxu0 %v2000
    %4207 = vmatpush1.bf16.msra.mxu0 %v1999
    %4208 = vmatprep.subr.bf16.mxu0 0
    %4209 = vmatpush1.bf16.msra.mxu0 0
    %4210 = vmatprep.subr.bf16.mxu0 0
    %4211 = vmatpush1.bf16.msra.mxu0 0
    %4212 = vmatprep.subr.bf16.mxu0 0
    %4213 = vmatpush1.bf16.msra.mxu0 0
    %4214 = vmatprep.subr.bf16.mxu0 0
    %4215 = vmatpush1.bf16.msra.mxu0 0
    %4216 = vmatprep.subr.bf16.mxu0 0
    %4217 = vmatpush1.bf16.msra.mxu0 0
    %4218 = vmatprep.subr.bf16.mxu0 0
    %4219 = vmatpush1.bf16.msra.mxu0 0
    %4220 = vmatprep.subr.bf16.mxu0 0
    %4221 = vmatpush1.bf16.msra.mxu0 0
    %4222 = vmatprep.subr.bf16.mxu0 0
    %4223 = vmatpush1.bf16.msra.mxu0 0
    %4224 = vmatprep.subr.bf16.mxu0 0
    %4225 = vmatpush1.bf16.msra.mxu0 0
    %4226 = vmatprep.subr.bf16.mxu0 0
    %4227 = vmatpush1.bf16.msra.mxu0 0
    %4228 = vmatprep.subr.bf16.mxu0 0
    %4229 = vmatpush1.bf16.msra.mxu0 0
    %4230 = vmatprep.subr.bf16.mxu0 0
    %4231 = vmatpush1.bf16.msra.mxu0 0
    %4232 = vmatprep.subr.bf16.mxu0 0
    %4233 = vmatpush1.bf16.msra.mxu0 0
    %4234 = vmatprep.subr.bf16.mxu0 0
    %4235 = vmatpush1.bf16.msra.mxu0 0
    %4236 = vmatprep.mubr.bf16.mxu0 0
    %4237 = vmatmul.mubr.bf16.gmra.mrb[0].mxu0 %v3915
    %v4238 = vpop.f32.mrb[0].mxu0
    %v4239 = vadd.f32 %v4198, %v4238
    %v4240 = vpop.f32.mrb[0].mxu0
    %v4241 = vadd.f32 %v4200, %v4240
    %v4242 = vpop.f32.mrb[0].mxu0
    %v4243 = vpop.f32.mrb[0].mxu0
    %4244 = vdwg.mxu0
    %4245 = vmatprep.subr.bf16.mxu0 %v1798
    %4246 = vmatpush1.bf16.msra.mxu0 %v1797
    %4247 = vmatprep.subr.bf16.mxu0 %v1810
    %4248 = vmatpush1.bf16.msra.mxu0 %v1809
    %4249 = vmatprep.subr.bf16.mxu0 %v1822
    %4250 = vmatpush1.bf16.msra.mxu0 %v1821
    %4251 = vmatprep.subr.bf16.mxu0 %v1834
    %4252 = vmatpush1.bf16.msra.mxu0 %v1833
    %4253 = vmatprep.subr.bf16.mxu0 %v1846
    %4254 = vmatpush1.bf16.msra.mxu0 %v1845
    %4255 = vmatprep.subr.bf16.mxu0 %v1858
    %4256 = vmatpush1.bf16.msra.mxu0 %v1857
    %4257 = vmatprep.subr.bf16.mxu0 %v1870
    %4258 = vmatpush1.bf16.msra.mxu0 %v1869
    %4259 = vmatprep.subr.bf16.mxu0 %v1882
    %4260 = vmatpush1.bf16.msra.mxu0 %v1881
    %4261 = vmatprep.subr.bf16.mxu0 %v1894
    %4262 = vmatpush1.bf16.msra.mxu0 %v1893
    %4263 = vmatprep.subr.bf16.mxu0 %v1906
    %4264 = vmatpush1.bf16.msra.mxu0 %v1905
    %4265 = vmatprep.subr.bf16.mxu0 %v1918
    %4266 = vmatpush1.bf16.msra.mxu0 %v1917
    %4267 = vmatprep.subr.bf16.mxu0 %v1930
    %4268 = vmatpush1.bf16.msra.mxu0 %v1929
    %4269 = vmatprep.subr.bf16.mxu0 %v1942
    %4270 = vmatpush1.bf16.msra.mxu0 %v1941
    %4271 = vmatprep.subr.bf16.mxu0 %v1954
    %4272 = vmatpush1.bf16.msra.mxu0 %v1953
    %4273 = vmatprep.subr.bf16.mxu0 %v1966
    %4274 = vmatpush1.bf16.msra.mxu0 %v1965
    %4275 = vmatprep.subr.bf16.mxu0 %v1978
    %4276 = vmatpush1.bf16.msra.mxu0 %v1977
    %4277 = vmatprep.mubr.bf16.mxu0 %v3912
    %4278 = vmatmul.mubr.bf16.gmra.mrb[0].mxu0 %v3911
    %v4279 = vpop.f32.mrb[0].mxu0
    %v4280 = vadd.f32 0.0, %v4279
    %v4281 = vpop.f32.mrb[0].mxu0
    %v4282 = vadd.f32 0.0, %v4281
    %v4283 = vpop.f32.mrb[0].mxu0
    %v4284 = vpop.f32.mrb[0].mxu0
    %4285 = vdwg.mxu0
    %4286 = vmatprep.subr.bf16.mxu0 %v1990
    %4287 = vmatpush1.bf16.msra.mxu0 %v1989
    %4288 = vmatprep.subr.bf16.mxu0 %v2002
    %4289 = vmatpush1.bf16.msra.mxu0 %v2001
    %4290 = vmatprep.subr.bf16.mxu0 0
    %4291 = vmatpush1.bf16.msra.mxu0 0
    %4292 = vmatprep.subr.bf16.mxu0 0
    %4293 = vmatpush1.bf16.msra.mxu0 0
    %4294 = vmatprep.subr.bf16.mxu0 0
    %4295 = vmatpush1.bf16.msra.mxu0 0
    %4296 = vmatprep.subr.bf16.mxu0 0
    %4297 = vmatpush1.bf16.msra.mxu0 0
    %4298 = vmatprep.subr.bf16.mxu0 0
    %4299 = vmatpush1.bf16.msra.mxu0 0
    %4300 = vmatprep.subr.bf16.mxu0 0
    %4301 = vmatpush1.bf16.msra.mxu0 0
    %4302 = vmatprep.subr.bf16.mxu0 0
    %4303 = vmatpush1.bf16.msra.mxu0 0
    %4304 = vmatprep.subr.bf16.mxu0 0
    %4305 = vmatpush1.bf16.msra.mxu0 0
    %4306 = vmatprep.subr.bf16.mxu0 0
    %4307 = vmatpush1.bf16.msra.mxu0 0
    %4308 = vmatprep.subr.bf16.mxu0 0
    %4309 = vmatpush1.bf16.msra.mxu0 0
    %4310 = vmatprep.subr.bf16.mxu0 0
    %4311 = vmatpush1.bf16.msra.mxu0 0
    %4312 = vmatprep.subr.bf16.mxu0 0
    %4313 = vmatpush1.bf16.msra.mxu0 0
    %4314 = vmatprep.subr.bf16.mxu0 0
    %4315 = vmatpush1.bf16.msra.mxu0 0
    %4316 = vmatprep.subr.bf16.mxu0 0
    %4317 = vmatpush1.bf16.msra.mxu0 0
    %4318 = vmatprep.mubr.bf16.mxu0 0
    %4319 = vmatmul.mubr.bf16.gmra.mrb[0].mxu0 %v3915
    %v4320 = vpop.f32.mrb[0].mxu0
    %v4321 = vadd.f32 %v4280, %v4320
    %v4322 = vpop.f32.mrb[0].mxu0
    %v4323 = vadd.f32 %v4282, %v4322
    %v4324 = vpop.f32.mrb[0].mxu0
    %v4325 = vpop.f32.mrb[0].mxu0
    %4326 = vdwg.mxu0
    %4327 = vmatprep.subr.bf16.mxu0 %v1800
    %4328 = vmatpush1.bf16.msra.mxu0 %v1799
    %4329 = vmatprep.subr.bf16.mxu0 %v1812
    %4330 = vmatpush1.bf16.msra.mxu0 %v1811
    %4331 = vmatprep.subr.bf16.mxu0 %v1824
    %4332 = vmatpush1.bf16.msra.mxu0 %v1823
    %4333 = vmatprep.subr.bf16.mxu0 %v1836
    %4334 = vmatpush1.bf16.msra.mxu0 %v1835
    %4335 = vmatprep.subr.bf16.mxu0 %v1848
    %4336 = vmatpush1.bf16.msra.mxu0 %v1847
    %4337 = vmatprep.subr.bf16.mxu0 %v1860
    %4338 = vmatpush1.bf16.msra.mxu0 %v1859
    %4339 = vmatprep.subr.bf16.mxu0 %v1872
    %4340 = vmatpush1.bf16.msra.mxu0 %v1871
    %4341 = vmatprep.subr.bf16.mxu0 %v1884
    %4342 = vmatpush1.bf16.msra.mxu0 %v1883
    %4343 = vmatprep.subr.bf16.mxu0 %v1896
    %4344 = vmatpush1.bf16.msra.mxu0 %v1895
    %4345 = vmatprep.subr.bf16.mxu0 %v1908
    %4346 = vmatpush1.bf16.msra.mxu0 %v1907
    %4347 = vmatprep.subr.bf16.mxu0 %v1920
    %4348 = vmatpush1.bf16.msra.mxu0 %v1919
    %4349 = vmatprep.subr.bf16.mxu0 %v1932
    %4350 = vmatpush1.bf16.msra.mxu0 %v1931
    %4351 = vmatprep.subr.bf16.mxu0 %v1944
    %4352 = vmatpush1.bf16.msra.mxu0 %v1943
    %4353 = vmatprep.subr.bf16.mxu0 %v1956
    %4354 = vmatpush1.bf16.msra.mxu0 %v1955
    %4355 = vmatprep.subr.bf16.mxu0 %v1968
    %4356 = vmatpush1.bf16.msra.mxu0 %v1967
    %4357 = vmatprep.subr.bf16.mxu0 %v1980
    %4358 = vmatpush1.bf16.msra.mxu0 %v1979
    %4359 = vmatprep.mubr.bf16.mxu0 %v3912
    %4360 = vmatmul.mubr.bf16.gmra.mrb[0].mxu0 %v3911
    %v4361 = vpop.f32.mrb[0].mxu0
    %v4362 = vadd.f32 0.0, %v4361
    %v4363 = vpop.f32.mrb[0].mxu0
    %v4364 = vadd.f32 0.0, %v4363
    %v4365 = vpop.f32.mrb[0].mxu0
    %v4366 = vpop.f32.mrb[0].mxu0
    %4367 = vdwg.mxu0
    %4368 = vmatprep.subr.bf16.mxu0 %v1992
    %4369 = vmatpush1.bf16.msra.mxu0 %v1991
    %4370 = vmatprep.subr.bf16.mxu0 %v2004
    %4371 = vmatpush1.bf16.msra.mxu0 %v2003
    %4372 = vmatprep.subr.bf16.mxu0 0
    %4373 = vmatpush1.bf16.msra.mxu0 0
    %4374 = vmatprep.subr.bf16.mxu0 0
    %4375 = vmatpush1.bf16.msra.mxu0 0
    %4376 = vmatprep.subr.bf16.mxu0 0
    %4377 = vmatpush1.bf16.msra.mxu0 0
    %4378 = vmatprep.subr.bf16.mxu0 0
    %4379 = vmatpush1.bf16.msra.mxu0 0
    %4380 = vmatprep.subr.bf16.mxu0 0
    %4381 = vmatpush1.bf16.msra.mxu0 0
    %4382 = vmatprep.subr.bf16.mxu0 0
    %4383 = vmatpush1.bf16.msra.mxu0 0
    %4384 = vmatprep.subr.bf16.mxu0 0
    %4385 = vmatpush1.bf16.msra.mxu0 0
    %4386 = vmatprep.subr.bf16.mxu0 0
    %4387 = vmatpush1.bf16.msra.mxu0 0
    %4388 = vmatprep.subr.bf16.mxu0 0
    %4389 = vmatpush1.bf16.msra.mxu0 0
    %4390 = vmatprep.subr.bf16.mxu0 0
    %4391 = vmatpush1.bf16.msra.mxu0 0
    %4392 = vmatprep.subr.bf16.mxu0 0
    %4393 = vmatpush1.bf16.msra.mxu0 0
    %4394 = vmatprep.subr.bf16.mxu0 0
    %4395 = vmatpush1.bf16.msra.mxu0 0
    %4396 = vmatprep.subr.bf16.mxu0 0
    %4397 = vmatpush1.bf16.msra.mxu0 0
    %4398 = vmatprep.subr.bf16.mxu0 0
    %4399 = vmatpush1.bf16.msra.mxu0 0
    %4400 = vmatprep.mubr.bf16.mxu0 0
    %4401 = vmatmul.mubr.bf16.gmra.mrb[0].mxu0 %v3915
    %v4402 = vpop.f32.mrb[0].mxu0
    %v4403 = vadd.f32 %v4362, %v4402
    %v4404 = vpop.f32.mrb[0].mxu0
    %v4405 = vadd.f32 %v4364, %v4404
    %v4406 = vpop.f32.mrb[0].mxu0
    %v4407 = vpop.f32.mrb[0].mxu0
    %4408 = vdwg.mxu0
    %v4409 = vadd.f32 %v308, %v3993
    %v4410 = vadd.f32 %v310, %v3995
    %v4411 = vadd.f32 %v419, %v4075
    %v4412 = vadd.f32 %v421, %v4077
    %v4413 = vadd.f32 %v530, %v4157
    %v4414 = vadd.f32 %v532, %v4159
    %v4415 = vadd.f32 %v641, %v4239
    %v4416 = vadd.f32 %v643, %v4241
    %v4417 = vadd.f32 %v752, %v4321
    %v4418 = vadd.f32 %v754, %v4323
    %v4419 = vadd.f32 %v863, %v4403
    %v4420 = vadd.f32 %v865, %v4405
    %v4421 = vmul.f32 %v4409, 0.5
    %v4422 = vmul.f32 %v4410, 0.5
    %v4423 = vmul.f32 %v4411, 0.5
    %v4424 = vtanh.pop %v4421
    %v4425 = vtanh.pop %v4422
    %v4426 = vtanh.pop %v4423
    %v4427 = vmul.f32 %v4424, 0.5
    %v4428 = vmul.f32 %v4425, 0.5
    %v4429 = vmul.f32 %v4426, 0.5
    %v4430 = vadd.f32 %v4427, 0.5
    %v4431 = vadd.f32 %v4428, 0.5
    %v4432 = vadd.f32 %v4429, 0.5
    %v4433 = vmul.f32 %v4412, 0.5
    %v4434 = vmul.f32 %v4413, 0.5
    %v4435 = vmul.f32 %v4414, 0.5
    %v4436 = vtanh.pop %v4433
    %v4437 = vtanh.pop %v4434
    %v4438 = vtanh.pop %v4435
    %v4439 = vmul.f32 %v4436, 0.5
    %v4440 = vmul.f32 %v4437, 0.5
    %v4441 = vmul.f32 %v4438, 0.5
    %v4442 = vadd.f32 %v4439, 0.5
    %v4443 = vadd.f32 %v4440, 0.5
    %v4444 = vadd.f32 %v4441, 0.5
    %v4445 = vtanh.pop %v4415
    %v4446 = vtanh.pop %v4416
    %v4447 = vtanh.pop %v4417
    %v4448 = vmul.f32 %v4418, 0.5
    %v4449 = vmul.f32 %v4419, 0.5
    %v4450 = vmul.f32 %v4420, 0.5
    %v4451 = vtanh.pop %v4448
    %v4452 = vtanh.pop %v4449
    %v4453 = vtanh.pop %v4450
    %v4454 = vmul.f32 %v4451, 0.5
    %v4455 = vmul.f32 %v4452, 0.5
    %v4456 = vmul.f32 %v4453, 0.5
    %v4457 = vadd.f32 %v4454, 0.5
    %v4458 = vadd.f32 %v4455, 0.5
    %v4459 = vadd.f32 %v4456, 0.5
    %v4460 = vmul.f32 %v4442, %v3902
    %v4461 = vmul.f32 %v4443, %v3903
    %v4462 = vmul.f32 %v4444, %v3904
    %v4463 = vmul.f32 %v4430, %v4445
    %v4464 = vmul.f32 %v4431, %v4446
    %v4465 = vmul.f32 %v4432, %v4447
    %v4466 = vadd.f32 %v4460, %v4463
    %v4467 = vadd.f32 %v4461, %v4464
    %v4468 = vadd.f32 %v4462, %v4465
    %v4469 = vtanh.pop %v4466
    %v4470 = vtanh.pop %v4467
    %v4471 = vtanh.pop %v4468
    %v4472 = vmul.f32 %v4457, %v4469
    %v4473 = vmul.f32 %v4458, %v4470
    %v4474 = vmul.f32 %v4459, %v4471
    %v4475 = vpack.c.bf16 %v4472, %v4472
    %v4476 = vpack.c.bf16 %v4473, %v4473
    %v4477 = vpack.c.bf16 %v4474, %v4474
    %v4479 = vsel %vm2221, %v4477, 0
    %4481 = vmatprep.subr.bf16.mxu0 %v1790
    %4482 = vmatpush1.bf16.msra.mxu0 %v1789
    %4483 = vmatprep.subr.bf16.mxu0 %v1802
    %4484 = vmatpush1.bf16.msra.mxu0 %v1801
    %4485 = vmatprep.subr.bf16.mxu0 %v1814
    %4486 = vmatpush1.bf16.msra.mxu0 %v1813
    %4487 = vmatprep.subr.bf16.mxu0 %v1826
    %4488 = vmatpush1.bf16.msra.mxu0 %v1825
    %4489 = vmatprep.subr.bf16.mxu0 %v1838
    %4490 = vmatpush1.bf16.msra.mxu0 %v1837
    %4491 = vmatprep.subr.bf16.mxu0 %v1850
    %4492 = vmatpush1.bf16.msra.mxu0 %v1849
    %4493 = vmatprep.subr.bf16.mxu0 %v1862
    %4494 = vmatpush1.bf16.msra.mxu0 %v1861
    %4495 = vmatprep.subr.bf16.mxu0 %v1874
    %4496 = vmatpush1.bf16.msra.mxu0 %v1873
    %4497 = vmatprep.subr.bf16.mxu0 %v1886
    %4498 = vmatpush1.bf16.msra.mxu0 %v1885
    %4499 = vmatprep.subr.bf16.mxu0 %v1898
    %4500 = vmatpush1.bf16.msra.mxu0 %v1897
    %4501 = vmatprep.subr.bf16.mxu0 %v1910
    %4502 = vmatpush1.bf16.msra.mxu0 %v1909
    %4503 = vmatprep.subr.bf16.mxu0 %v1922
    %4504 = vmatpush1.bf16.msra.mxu0 %v1921
    %4505 = vmatprep.subr.bf16.mxu0 %v1934
    %4506 = vmatpush1.bf16.msra.mxu0 %v1933
    %4507 = vmatprep.subr.bf16.mxu0 %v1946
    %4508 = vmatpush1.bf16.msra.mxu0 %v1945
    %4509 = vmatprep.subr.bf16.mxu0 %v1958
    %4510 = vmatpush1.bf16.msra.mxu0 %v1957
    %4511 = vmatprep.subr.bf16.mxu0 %v1970
    %4512 = vmatpush1.bf16.msra.mxu0 %v1969
    %4513 = vmatprep.mubr.bf16.mxu0 %v4476
    %4514 = vmatmul.mubr.bf16.gmra.mrb[0].mxu0 %v4475
    %v4515 = vpop.f32.mrb[0].mxu0
    %v4516 = vadd.f32 0.0, %v4515
    %v4517 = vpop.f32.mrb[0].mxu0
    %v4518 = vadd.f32 0.0, %v4517
    %v4519 = vpop.f32.mrb[0].mxu0
    %v4520 = vpop.f32.mrb[0].mxu0
    %4521 = vdwg.mxu0
    %4522 = vmatprep.subr.bf16.mxu0 %v1982
    %4523 = vmatpush1.bf16.msra.mxu0 %v1981
    %4524 = vmatprep.subr.bf16.mxu0 %v1994
    %4525 = vmatpush1.bf16.msra.mxu0 %v1993
    %4526 = vmatprep.subr.bf16.mxu0 0
    %4527 = vmatpush1.bf16.msra.mxu0 0
    %4528 = vmatprep.subr.bf16.mxu0 0
    %4529 = vmatpush1.bf16.msra.mxu0 0
    %4530 = vmatprep.subr.bf16.mxu0 0
    %4531 = vmatpush1.bf16.msra.mxu0 0
    %4532 = vmatprep.subr.bf16.mxu0 0
    %4533 = vmatpush1.bf16.msra.mxu0 0
    %4534 = vmatprep.subr.bf16.mxu0 0
    %4535 = vmatpush1.bf16.msra.mxu0 0
    %4536 = vmatprep.subr.bf16.mxu0 0
    %4537 = vmatpush1.bf16.msra.mxu0 0
    %4538 = vmatprep.subr.bf16.mxu0 0
    %4539 = vmatpush1.bf16.msra.mxu0 0
    %4540 = vmatprep.subr.bf16.mxu0 0
    %4541 = vmatpush1.bf16.msra.mxu0 0
    %4542 = vmatprep.subr.bf16.mxu0 0
    %4543 = vmatpush1.bf16.msra.mxu0 0
    %4544 = vmatprep.subr.bf16.mxu0 0
    %4545 = vmatpush1.bf16.msra.mxu0 0
    %4546 = vmatprep.subr.bf16.mxu0 0
    %4547 = vmatpush1.bf16.msra.mxu0 0
    %4548 = vmatprep.subr.bf16.mxu0 0
    %4549 = vmatpush1.bf16.msra.mxu0 0
    %4550 = vmatprep.subr.bf16.mxu0 0
    %4551 = vmatpush1.bf16.msra.mxu0 0
    %4552 = vmatprep.subr.bf16.mxu0 0
    %4553 = vmatpush1.bf16.msra.mxu0 0
    %4554 = vmatprep.mubr.bf16.mxu0 0
    %4555 = vmatmul.mubr.bf16.gmra.mrb[0].mxu0 %v4479
    %v4556 = vpop.f32.mrb[0].mxu0
    %v4557 = vadd.f32 %v4516, %v4556
    %v4558 = vpop.f32.mrb[0].mxu0
    %v4559 = vadd.f32 %v4518, %v4558
    %v4560 = vpop.f32.mrb[0].mxu0
    %v4561 = vpop.f32.mrb[0].mxu0
    %4562 = vdwg.mxu0
    %4563 = vmatprep.subr.bf16.mxu0 %v1792
    %4564 = vmatpush1.bf16.msra.mxu0 %v1791
    %4565 = vmatprep.subr.bf16.mxu0 %v1804
    %4566 = vmatpush1.bf16.msra.mxu0 %v1803
    %4567 = vmatprep.subr.bf16.mxu0 %v1816
    %4568 = vmatpush1.bf16.msra.mxu0 %v1815
    %4569 = vmatprep.subr.bf16.mxu0 %v1828
    %4570 = vmatpush1.bf16.msra.mxu0 %v1827
    %4571 = vmatprep.subr.bf16.mxu0 %v1840
    %4572 = vmatpush1.bf16.msra.mxu0 %v1839
    %4573 = vmatprep.subr.bf16.mxu0 %v1852
    %4574 = vmatpush1.bf16.msra.mxu0 %v1851
    %4575 = vmatprep.subr.bf16.mxu0 %v1864
    %4576 = vmatpush1.bf16.msra.mxu0 %v1863
    %4577 = vmatprep.subr.bf16.mxu0 %v1876
    %4578 = vmatpush1.bf16.msra.mxu0 %v1875
    %4579 = vmatprep.subr.bf16.mxu0 %v1888
    %4580 = vmatpush1.bf16.msra.mxu0 %v1887
    %4581 = vmatprep.subr.bf16.mxu0 %v1900
    %4582 = vmatpush1.bf16.msra.mxu0 %v1899
    %4583 = vmatprep.subr.bf16.mxu0 %v1912
    %4584 = vmatpush1.bf16.msra.mxu0 %v1911
    %4585 = vmatprep.subr.bf16.mxu0 %v1924
    %4586 = vmatpush1.bf16.msra.mxu0 %v1923
    %4587 = vmatprep.subr.bf16.mxu0 %v1936
    %4588 = vmatpush1.bf16.msra.mxu0 %v1935
    %4589 = vmatprep.subr.bf16.mxu0 %v1948
    %4590 = vmatpush1.bf16.msra.mxu0 %v1947
    %4591 = vmatprep.subr.bf16.mxu0 %v1960
    %4592 = vmatpush1.bf16.msra.mxu0 %v1959
    %4593 = vmatprep.subr.bf16.mxu0 %v1972
    %4594 = vmatpush1.bf16.msra.mxu0 %v1971
    %4595 = vmatprep.mubr.bf16.mxu0 %v4476
    %4596 = vmatmul.mubr.bf16.gmra.mrb[0].mxu0 %v4475
    %v4597 = vpop.f32.mrb[0].mxu0
    %v4598 = vadd.f32 0.0, %v4597
    %v4599 = vpop.f32.mrb[0].mxu0
    %v4600 = vadd.f32 0.0, %v4599
    %v4601 = vpop.f32.mrb[0].mxu0
    %v4602 = vpop.f32.mrb[0].mxu0
    %4603 = vdwg.mxu0
    %4604 = vmatprep.subr.bf16.mxu0 %v1984
    %4605 = vmatpush1.bf16.msra.mxu0 %v1983
    %4606 = vmatprep.subr.bf16.mxu0 %v1996
    %4607 = vmatpush1.bf16.msra.mxu0 %v1995
    %4608 = vmatprep.subr.bf16.mxu0 0
    %4609 = vmatpush1.bf16.msra.mxu0 0
    %4610 = vmatprep.subr.bf16.mxu0 0
    %4611 = vmatpush1.bf16.msra.mxu0 0
    %4612 = vmatprep.subr.bf16.mxu0 0
    %4613 = vmatpush1.bf16.msra.mxu0 0
    %4614 = vmatprep.subr.bf16.mxu0 0
    %4615 = vmatpush1.bf16.msra.mxu0 0
    %4616 = vmatprep.subr.bf16.mxu0 0
    %4617 = vmatpush1.bf16.msra.mxu0 0
    %4618 = vmatprep.subr.bf16.mxu0 0
    %4619 = vmatpush1.bf16.msra.mxu0 0
    %4620 = vmatprep.subr.bf16.mxu0 0
    %4621 = vmatpush1.bf16.msra.mxu0 0
    %4622 = vmatprep.subr.bf16.mxu0 0
    %4623 = vmatpush1.bf16.msra.mxu0 0
    %4624 = vmatprep.subr.bf16.mxu0 0
    %4625 = vmatpush1.bf16.msra.mxu0 0
    %4626 = vmatprep.subr.bf16.mxu0 0
    %4627 = vmatpush1.bf16.msra.mxu0 0
    %4628 = vmatprep.subr.bf16.mxu0 0
    %4629 = vmatpush1.bf16.msra.mxu0 0
    %4630 = vmatprep.subr.bf16.mxu0 0
    %4631 = vmatpush1.bf16.msra.mxu0 0
    %4632 = vmatprep.subr.bf16.mxu0 0
    %4633 = vmatpush1.bf16.msra.mxu0 0
    %4634 = vmatprep.subr.bf16.mxu0 0
    %4635 = vmatpush1.bf16.msra.mxu0 0
    %4636 = vmatprep.mubr.bf16.mxu0 0
    %4637 = vmatmul.mubr.bf16.gmra.mrb[0].mxu0 %v4479
    %v4638 = vpop.f32.mrb[0].mxu0
    %v4639 = vadd.f32 %v4598, %v4638
    %v4640 = vpop.f32.mrb[0].mxu0
    %v4641 = vadd.f32 %v4600, %v4640
    %v4642 = vpop.f32.mrb[0].mxu0
    %v4643 = vpop.f32.mrb[0].mxu0
    %4644 = vdwg.mxu0
    %4645 = vmatprep.subr.bf16.mxu0 %v1794
    %4646 = vmatpush1.bf16.msra.mxu0 %v1793
    %4647 = vmatprep.subr.bf16.mxu0 %v1806
    %4648 = vmatpush1.bf16.msra.mxu0 %v1805
    %4649 = vmatprep.subr.bf16.mxu0 %v1818
    %4650 = vmatpush1.bf16.msra.mxu0 %v1817
    %4651 = vmatprep.subr.bf16.mxu0 %v1830
    %4652 = vmatpush1.bf16.msra.mxu0 %v1829
    %4653 = vmatprep.subr.bf16.mxu0 %v1842
    %4654 = vmatpush1.bf16.msra.mxu0 %v1841
    %4655 = vmatprep.subr.bf16.mxu0 %v1854
    %4656 = vmatpush1.bf16.msra.mxu0 %v1853
    %4657 = vmatprep.subr.bf16.mxu0 %v1866
    %4658 = vmatpush1.bf16.msra.mxu0 %v1865
    %4659 = vmatprep.subr.bf16.mxu0 %v1878
    %4660 = vmatpush1.bf16.msra.mxu0 %v1877
    %4661 = vmatprep.subr.bf16.mxu0 %v1890
    %4662 = vmatpush1.bf16.msra.mxu0 %v1889
    %4663 = vmatprep.subr.bf16.mxu0 %v1902
    %4664 = vmatpush1.bf16.msra.mxu0 %v1901
    %4665 = vmatprep.subr.bf16.mxu0 %v1914
    %4666 = vmatpush1.bf16.msra.mxu0 %v1913
    %4667 = vmatprep.subr.bf16.mxu0 %v1926
    %4668 = vmatpush1.bf16.msra.mxu0 %v1925
    %4669 = vmatprep.subr.bf16.mxu0 %v1938
    %4670 = vmatpush1.bf16.msra.mxu0 %v1937
    %4671 = vmatprep.subr.bf16.mxu0 %v1950
    %4672 = vmatpush1.bf16.msra.mxu0 %v1949
    %4673 = vmatprep.subr.bf16.mxu0 %v1962
    %4674 = vmatpush1.bf16.msra.mxu0 %v1961
    %4675 = vmatprep.subr.bf16.mxu0 %v1974
    %4676 = vmatpush1.bf16.msra.mxu0 %v1973
    %4677 = vmatprep.mubr.bf16.mxu0 %v4476
    %4678 = vmatmul.mubr.bf16.gmra.mrb[0].mxu0 %v4475
    %v4679 = vpop.f32.mrb[0].mxu0
    %v4680 = vadd.f32 0.0, %v4679
    %v4681 = vpop.f32.mrb[0].mxu0
    %v4682 = vadd.f32 0.0, %v4681
    %v4683 = vpop.f32.mrb[0].mxu0
    %v4684 = vpop.f32.mrb[0].mxu0
    %4685 = vdwg.mxu0
    %4686 = vmatprep.subr.bf16.mxu0 %v1986
    %4687 = vmatpush1.bf16.msra.mxu0 %v1985
    %4688 = vmatprep.subr.bf16.mxu0 %v1998
    %4689 = vmatpush1.bf16.msra.mxu0 %v1997
    %4690 = vmatprep.subr.bf16.mxu0 0
    %4691 = vmatpush1.bf16.msra.mxu0 0
    %4692 = vmatprep.subr.bf16.mxu0 0
    %4693 = vmatpush1.bf16.msra.mxu0 0
    %4694 = vmatprep.subr.bf16.mxu0 0
    %4695 = vmatpush1.bf16.msra.mxu0 0
    %4696 = vmatprep.subr.bf16.mxu0 0
    %4697 = vmatpush1.bf16.msra.mxu0 0
    %4698 = vmatprep.subr.bf16.mxu0 0
    %4699 = vmatpush1.bf16.msra.mxu0 0
    %4700 = vmatprep.subr.bf16.mxu0 0
    %4701 = vmatpush1.bf16.msra.mxu0 0
    %4702 = vmatprep.subr.bf16.mxu0 0
    %4703 = vmatpush1.bf16.msra.mxu0 0
    %4704 = vmatprep.subr.bf16.mxu0 0
    %4705 = vmatpush1.bf16.msra.mxu0 0
    %4706 = vmatprep.subr.bf16.mxu0 0
    %4707 = vmatpush1.bf16.msra.mxu0 0
    %4708 = vmatprep.subr.bf16.mxu0 0
    %4709 = vmatpush1.bf16.msra.mxu0 0
    %4710 = vmatprep.subr.bf16.mxu0 0
    %4711 = vmatpush1.bf16.msra.mxu0 0
    %4712 = vmatprep.subr.bf16.mxu0 0
    %4713 = vmatpush1.bf16.msra.mxu0 0
    %4714 = vmatprep.subr.bf16.mxu0 0
    %4715 = vmatpush1.bf16.msra.mxu0 0
    %4716 = vmatprep.subr.bf16.mxu0 0
    %4717 = vmatpush1.bf16.msra.mxu0 0
    %4718 = vmatprep.mubr.bf16.mxu0 0
    %4719 = vmatmul.mubr.bf16.gmra.mrb[0].mxu0 %v4479
    %v4720 = vpop.f32.mrb[0].mxu0
    %v4721 = vadd.f32 %v4680, %v4720
    %v4722 = vpop.f32.mrb[0].mxu0
    %v4723 = vadd.f32 %v4682, %v4722
    %v4724 = vpop.f32.mrb[0].mxu0
    %v4725 = vpop.f32.mrb[0].mxu0
    %4726 = vdwg.mxu0
    %4727 = vmatprep.subr.bf16.mxu0 %v1796
    %4728 = vmatpush1.bf16.msra.mxu0 %v1795
    %4729 = vmatprep.subr.bf16.mxu0 %v1808
    %4730 = vmatpush1.bf16.msra.mxu0 %v1807
    %4731 = vmatprep.subr.bf16.mxu0 %v1820
    %4732 = vmatpush1.bf16.msra.mxu0 %v1819
    %4733 = vmatprep.subr.bf16.mxu0 %v1832
    %4734 = vmatpush1.bf16.msra.mxu0 %v1831
    %4735 = vmatprep.subr.bf16.mxu0 %v1844
    %4736 = vmatpush1.bf16.msra.mxu0 %v1843
    %4737 = vmatprep.subr.bf16.mxu0 %v1856
    %4738 = vmatpush1.bf16.msra.mxu0 %v1855
    %4739 = vmatprep.subr.bf16.mxu0 %v1868
    %4740 = vmatpush1.bf16.msra.mxu0 %v1867
    %4741 = vmatprep.subr.bf16.mxu0 %v1880
    %4742 = vmatpush1.bf16.msra.mxu0 %v1879
    %4743 = vmatprep.subr.bf16.mxu0 %v1892
    %4744 = vmatpush1.bf16.msra.mxu0 %v1891
    %4745 = vmatprep.subr.bf16.mxu0 %v1904
    %4746 = vmatpush1.bf16.msra.mxu0 %v1903
    %4747 = vmatprep.subr.bf16.mxu0 %v1916
    %4748 = vmatpush1.bf16.msra.mxu0 %v1915
    %4749 = vmatprep.subr.bf16.mxu0 %v1928
    %4750 = vmatpush1.bf16.msra.mxu0 %v1927
    %4751 = vmatprep.subr.bf16.mxu0 %v1940
    %4752 = vmatpush1.bf16.msra.mxu0 %v1939
    %4753 = vmatprep.subr.bf16.mxu0 %v1952
    %4754 = vmatpush1.bf16.msra.mxu0 %v1951
    %4755 = vmatprep.subr.bf16.mxu0 %v1964
    %4756 = vmatpush1.bf16.msra.mxu0 %v1963
    %4757 = vmatprep.subr.bf16.mxu0 %v1976
    %4758 = vmatpush1.bf16.msra.mxu0 %v1975
    %4759 = vmatprep.mubr.bf16.mxu0 %v4476
    %4760 = vmatmul.mubr.bf16.gmra.mrb[0].mxu0 %v4475
    %v4761 = vpop.f32.mrb[0].mxu0
    %v4762 = vadd.f32 0.0, %v4761
    %v4763 = vpop.f32.mrb[0].mxu0
    %v4764 = vadd.f32 0.0, %v4763
    %v4765 = vpop.f32.mrb[0].mxu0
    %v4766 = vpop.f32.mrb[0].mxu0
    %4767 = vdwg.mxu0
    %4768 = vmatprep.subr.bf16.mxu0 %v1988
    %4769 = vmatpush1.bf16.msra.mxu0 %v1987
    %4770 = vmatprep.subr.bf16.mxu0 %v2000
    %4771 = vmatpush1.bf16.msra.mxu0 %v1999
    %4772 = vmatprep.subr.bf16.mxu0 0
    %4773 = vmatpush1.bf16.msra.mxu0 0
    %4774 = vmatprep.subr.bf16.mxu0 0
    %4775 = vmatpush1.bf16.msra.mxu0 0
    %4776 = vmatprep.subr.bf16.mxu0 0
    %4777 = vmatpush1.bf16.msra.mxu0 0
    %4778 = vmatprep.subr.bf16.mxu0 0
    %4779 = vmatpush1.bf16.msra.mxu0 0
    %4780 = vmatprep.subr.bf16.mxu0 0
    %4781 = vmatpush1.bf16.msra.mxu0 0
    %4782 = vmatprep.subr.bf16.mxu0 0
    %4783 = vmatpush1.bf16.msra.mxu0 0
    %4784 = vmatprep.subr.bf16.mxu0 0
    %4785 = vmatpush1.bf16.msra.mxu0 0
    %4786 = vmatprep.subr.bf16.mxu0 0
    %4787 = vmatpush1.bf16.msra.mxu0 0
    %4788 = vmatprep.subr.bf16.mxu0 0
    %4789 = vmatpush1.bf16.msra.mxu0 0
    %4790 = vmatprep.subr.bf16.mxu0 0
    %4791 = vmatpush1.bf16.msra.mxu0 0
    %4792 = vmatprep.subr.bf16.mxu0 0
    %4793 = vmatpush1.bf16.msra.mxu0 0
    %4794 = vmatprep.subr.bf16.mxu0 0
    %4795 = vmatpush1.bf16.msra.mxu0 0
    %4796 = vmatprep.subr.bf16.mxu0 0
    %4797 = vmatpush1.bf16.msra.mxu0 0
    %4798 = vmatprep.subr.bf16.mxu0 0
    %4799 = vmatpush1.bf16.msra.mxu0 0
    %4800 = vmatprep.mubr.bf16.mxu0 0
    %4801 = vmatmul.mubr.bf16.gmra.mrb[0].mxu0 %v4479
    %v4802 = vpop.f32.mrb[0].mxu0
    %v4803 = vadd.f32 %v4762, %v4802
    %v4804 = vpop.f32.mrb[0].mxu0
    %v4805 = vadd.f32 %v4764, %v4804
    %v4806 = vpop.f32.mrb[0].mxu0
    %v4807 = vpop.f32.mrb[0].mxu0
    %4808 = vdwg.mxu0
    %4809 = vmatprep.subr.bf16.mxu0 %v1798
    %4810 = vmatpush1.bf16.msra.mxu0 %v1797
    %4811 = vmatprep.subr.bf16.mxu0 %v1810
    %4812 = vmatpush1.bf16.msra.mxu0 %v1809
    %4813 = vmatprep.subr.bf16.mxu0 %v1822
    %4814 = vmatpush1.bf16.msra.mxu0 %v1821
    %4815 = vmatprep.subr.bf16.mxu0 %v1834
    %4816 = vmatpush1.bf16.msra.mxu0 %v1833
    %4817 = vmatprep.subr.bf16.mxu0 %v1846
    %4818 = vmatpush1.bf16.msra.mxu0 %v1845
    %4819 = vmatprep.subr.bf16.mxu0 %v1858
    %4820 = vmatpush1.bf16.msra.mxu0 %v1857
    %4821 = vmatprep.subr.bf16.mxu0 %v1870
    %4822 = vmatpush1.bf16.msra.mxu0 %v1869
    %4823 = vmatprep.subr.bf16.mxu0 %v1882
    %4824 = vmatpush1.bf16.msra.mxu0 %v1881
    %4825 = vmatprep.subr.bf16.mxu0 %v1894
    %4826 = vmatpush1.bf16.msra.mxu0 %v1893
    %4827 = vmatprep.subr.bf16.mxu0 %v1906
    %4828 = vmatpush1.bf16.msra.mxu0 %v1905
    %4829 = vmatprep.subr.bf16.mxu0 %v1918
    %4830 = vmatpush1.bf16.msra.mxu0 %v1917
    %4831 = vmatprep.subr.bf16.mxu0 %v1930
    %4832 = vmatpush1.bf16.msra.mxu0 %v1929
    %4833 = vmatprep.subr.bf16.mxu0 %v1942
    %4834 = vmatpush1.bf16.msra.mxu0 %v1941
    %4835 = vmatprep.subr.bf16.mxu0 %v1954
    %4836 = vmatpush1.bf16.msra.mxu0 %v1953
    %4837 = vmatprep.subr.bf16.mxu0 %v1966
    %4838 = vmatpush1.bf16.msra.mxu0 %v1965
    %4839 = vmatprep.subr.bf16.mxu0 %v1978
    %4840 = vmatpush1.bf16.msra.mxu0 %v1977
    %4841 = vmatprep.mubr.bf16.mxu0 %v4476
    %4842 = vmatmul.mubr.bf16.gmra.mrb[0].mxu0 %v4475
    %v4843 = vpop.f32.mrb[0].mxu0
    %v4844 = vadd.f32 0.0, %v4843
    %v4845 = vpop.f32.mrb[0].mxu0
    %v4846 = vadd.f32 0.0, %v4845
    %v4847 = vpop.f32.mrb[0].mxu0
    %v4848 = vpop.f32.mrb[0].mxu0
    %4849 = vdwg.mxu0
    %4850 = vmatprep.subr.bf16.mxu0 %v1990
    %4851 = vmatpush1.bf16.msra.mxu0 %v1989
    %4852 = vmatprep.subr.bf16.mxu0 %v2002
    %4853 = vmatpush1.bf16.msra.mxu0 %v2001
    %4854 = vmatprep.subr.bf16.mxu0 0
    %4855 = vmatpush1.bf16.msra.mxu0 0
    %4856 = vmatprep.subr.bf16.mxu0 0
    %4857 = vmatpush1.bf16.msra.mxu0 0
    %4858 = vmatprep.subr.bf16.mxu0 0
    %4859 = vmatpush1.bf16.msra.mxu0 0
    %4860 = vmatprep.subr.bf16.mxu0 0
    %4861 = vmatpush1.bf16.msra.mxu0 0
    %4862 = vmatprep.subr.bf16.mxu0 0
    %4863 = vmatpush1.bf16.msra.mxu0 0
    %4864 = vmatprep.subr.bf16.mxu0 0
    %4865 = vmatpush1.bf16.msra.mxu0 0
    %4866 = vmatprep.subr.bf16.mxu0 0
    %4867 = vmatpush1.bf16.msra.mxu0 0
    %4868 = vmatprep.subr.bf16.mxu0 0
    %4869 = vmatpush1.bf16.msra.mxu0 0
    %4870 = vmatprep.subr.bf16.mxu0 0
    %4871 = vmatpush1.bf16.msra.mxu0 0
    %4872 = vmatprep.subr.bf16.mxu0 0
    %4873 = vmatpush1.bf16.msra.mxu0 0
    %4874 = vmatprep.subr.bf16.mxu0 0
    %4875 = vmatpush1.bf16.msra.mxu0 0
    %4876 = vmatprep.subr.bf16.mxu0 0
    %4877 = vmatpush1.bf16.msra.mxu0 0
    %4878 = vmatprep.subr.bf16.mxu0 0
    %4879 = vmatpush1.bf16.msra.mxu0 0
    %4880 = vmatprep.subr.bf16.mxu0 0
    %4881 = vmatpush1.bf16.msra.mxu0 0
    %4882 = vmatprep.mubr.bf16.mxu0 0
    %4883 = vmatmul.mubr.bf16.gmra.mrb[0].mxu0 %v4479
    %v4884 = vpop.f32.mrb[0].mxu0
    %v4885 = vadd.f32 %v4844, %v4884
    %v4886 = vpop.f32.mrb[0].mxu0
    %v4887 = vadd.f32 %v4846, %v4886
    %v4888 = vpop.f32.mrb[0].mxu0
    %v4889 = vpop.f32.mrb[0].mxu0
    %4890 = vdwg.mxu0
    %4891 = vmatprep.subr.bf16.mxu0 %v1800
    %4892 = vmatpush1.bf16.msra.mxu0 %v1799
    %4893 = vmatprep.subr.bf16.mxu0 %v1812
    %4894 = vmatpush1.bf16.msra.mxu0 %v1811
    %4895 = vmatprep.subr.bf16.mxu0 %v1824
    %4896 = vmatpush1.bf16.msra.mxu0 %v1823
    %4897 = vmatprep.subr.bf16.mxu0 %v1836
    %4898 = vmatpush1.bf16.msra.mxu0 %v1835
    %4899 = vmatprep.subr.bf16.mxu0 %v1848
    %4900 = vmatpush1.bf16.msra.mxu0 %v1847
    %4901 = vmatprep.subr.bf16.mxu0 %v1860
    %4902 = vmatpush1.bf16.msra.mxu0 %v1859
    %4903 = vmatprep.subr.bf16.mxu0 %v1872
    %4904 = vmatpush1.bf16.msra.mxu0 %v1871
    %4905 = vmatprep.subr.bf16.mxu0 %v1884
    %4906 = vmatpush1.bf16.msra.mxu0 %v1883
    %4907 = vmatprep.subr.bf16.mxu0 %v1896
    %4908 = vmatpush1.bf16.msra.mxu0 %v1895
    %4909 = vmatprep.subr.bf16.mxu0 %v1908
    %4910 = vmatpush1.bf16.msra.mxu0 %v1907
    %4911 = vmatprep.subr.bf16.mxu0 %v1920
    %4912 = vmatpush1.bf16.msra.mxu0 %v1919
    %4913 = vmatprep.subr.bf16.mxu0 %v1932
    %4914 = vmatpush1.bf16.msra.mxu0 %v1931
    %4915 = vmatprep.subr.bf16.mxu0 %v1944
    %4916 = vmatpush1.bf16.msra.mxu0 %v1943
    %4917 = vmatprep.subr.bf16.mxu0 %v1956
    %4918 = vmatpush1.bf16.msra.mxu0 %v1955
    %4919 = vmatprep.subr.bf16.mxu0 %v1968
    %4920 = vmatpush1.bf16.msra.mxu0 %v1967
    %4921 = vmatprep.subr.bf16.mxu0 %v1980
    %4922 = vmatpush1.bf16.msra.mxu0 %v1979
    %4923 = vmatprep.mubr.bf16.mxu0 %v4476
    %4924 = vmatmul.mubr.bf16.gmra.mrb[0].mxu0 %v4475
    %v4925 = vpop.f32.mrb[0].mxu0
    %v4926 = vadd.f32 0.0, %v4925
    %v4927 = vpop.f32.mrb[0].mxu0
    %v4928 = vadd.f32 0.0, %v4927
    %v4929 = vpop.f32.mrb[0].mxu0
    %v4930 = vpop.f32.mrb[0].mxu0
    %4931 = vdwg.mxu0
    %4932 = vmatprep.subr.bf16.mxu0 %v1992
    %4933 = vmatpush1.bf16.msra.mxu0 %v1991
    %4934 = vmatprep.subr.bf16.mxu0 %v2004
    %4935 = vmatpush1.bf16.msra.mxu0 %v2003
    %4936 = vmatprep.subr.bf16.mxu0 0
    %4937 = vmatpush1.bf16.msra.mxu0 0
    %4938 = vmatprep.subr.bf16.mxu0 0
    %4939 = vmatpush1.bf16.msra.mxu0 0
    %4940 = vmatprep.subr.bf16.mxu0 0
    %4941 = vmatpush1.bf16.msra.mxu0 0
    %4942 = vmatprep.subr.bf16.mxu0 0
    %4943 = vmatpush1.bf16.msra.mxu0 0
    %4944 = vmatprep.subr.bf16.mxu0 0
    %4945 = vmatpush1.bf16.msra.mxu0 0
    %4946 = vmatprep.subr.bf16.mxu0 0
    %4947 = vmatpush1.bf16.msra.mxu0 0
    %4948 = vmatprep.subr.bf16.mxu0 0
    %4949 = vmatpush1.bf16.msra.mxu0 0
    %4950 = vmatprep.subr.bf16.mxu0 0
    %4951 = vmatpush1.bf16.msra.mxu0 0
    %4952 = vmatprep.subr.bf16.mxu0 0
    %4953 = vmatpush1.bf16.msra.mxu0 0
    %4954 = vmatprep.subr.bf16.mxu0 0
    %4955 = vmatpush1.bf16.msra.mxu0 0
    %4956 = vmatprep.subr.bf16.mxu0 0
    %4957 = vmatpush1.bf16.msra.mxu0 0
    %4958 = vmatprep.subr.bf16.mxu0 0
    %4959 = vmatpush1.bf16.msra.mxu0 0
    %4960 = vmatprep.subr.bf16.mxu0 0
    %4961 = vmatpush1.bf16.msra.mxu0 0
    %4962 = vmatprep.subr.bf16.mxu0 0
    %4963 = vmatpush1.bf16.msra.mxu0 0
    %4964 = vmatprep.mubr.bf16.mxu0 0
    %4965 = vmatmul.mubr.bf16.gmra.mrb[0].mxu0 %v4479
    %v4966 = vpop.f32.mrb[0].mxu0
    %v4967 = vadd.f32 %v4926, %v4966
    %v4968 = vpop.f32.mrb[0].mxu0
    %v4969 = vadd.f32 %v4928, %v4968
    %v4970 = vpop.f32.mrb[0].mxu0
    %v4971 = vpop.f32.mrb[0].mxu0
    %4972 = vdwg.mxu0
    %v4973 = vadd.f32 %v314, %v4557
    %v4974 = vadd.f32 %v316, %v4559
    %v4975 = vadd.f32 %v425, %v4639
    %v4976 = vadd.f32 %v427, %v4641
    %v4977 = vadd.f32 %v536, %v4721
    %v4978 = vadd.f32 %v538, %v4723
    %v4979 = vadd.f32 %v647, %v4803
    %v4980 = vadd.f32 %v649, %v4805
    %v4981 = vadd.f32 %v758, %v4885
    %v4982 = vadd.f32 %v760, %v4887
    %v4983 = vadd.f32 %v869, %v4967
    %v4984 = vadd.f32 %v871, %v4969
    %v4985 = vmul.f32 %v4973, 0.5
    %v4986 = vmul.f32 %v4974, 0.5
    %v4987 = vmul.f32 %v4975, 0.5
    %v4988 = vtanh.pop %v4985
    %v4989 = vtanh.pop %v4986
    %v4990 = vtanh.pop %v4987
    %v4991 = vmul.f32 %v4988, 0.5
    %v4992 = vmul.f32 %v4989, 0.5
    %v4993 = vmul.f32 %v4990, 0.5
    %v4994 = vadd.f32 %v4991, 0.5
    %v4995 = vadd.f32 %v4992, 0.5
    %v4996 = vadd.f32 %v4993, 0.5
    %v4997 = vmul.f32 %v4976, 0.5
    %v4998 = vmul.f32 %v4977, 0.5
    %v4999 = vmul.f32 %v4978, 0.5
    %v5000 = vtanh.pop %v4997
    %v5001 = vtanh.pop %v4998
    %v5002 = vtanh.pop %v4999
    %v5003 = vmul.f32 %v5000, 0.5
    %v5004 = vmul.f32 %v5001, 0.5
    %v5005 = vmul.f32 %v5002, 0.5
    %v5006 = vadd.f32 %v5003, 0.5
    %v5007 = vadd.f32 %v5004, 0.5
    %v5008 = vadd.f32 %v5005, 0.5
    %v5009 = vtanh.pop %v4979
    %v5010 = vtanh.pop %v4980
    %v5011 = vtanh.pop %v4981
    %v5012 = vmul.f32 %v4982, 0.5
    %v5013 = vmul.f32 %v4983, 0.5
    %v5014 = vmul.f32 %v4984, 0.5
    %v5015 = vtanh.pop %v5012
    %v5016 = vtanh.pop %v5013
    %v5017 = vtanh.pop %v5014
    %v5018 = vmul.f32 %v5015, 0.5
    %v5019 = vmul.f32 %v5016, 0.5
    %v5020 = vmul.f32 %v5017, 0.5
    %v5021 = vadd.f32 %v5018, 0.5
    %v5022 = vadd.f32 %v5019, 0.5
    %v5023 = vadd.f32 %v5020, 0.5
    %v5024 = vmul.f32 %v5006, %v4466
    %v5025 = vmul.f32 %v5007, %v4467
    %v5026 = vmul.f32 %v5008, %v4468
    %v5027 = vmul.f32 %v4994, %v5009
    %v5028 = vmul.f32 %v4995, %v5010
    %v5029 = vmul.f32 %v4996, %v5011
    %v5030 = vadd.f32 %v5024, %v5027
    %v5031 = vadd.f32 %v5025, %v5028
    %v5032 = vadd.f32 %v5026, %v5029
    %v5033 = vtanh.pop %v5030
    %v5034 = vtanh.pop %v5031
    %v5035 = vtanh.pop %v5032
    %v5036 = vmul.f32 %v5021, %v5033
    %v5037 = vmul.f32 %v5022, %v5034
    %v5038 = vmul.f32 %v5023, %v5035
    %v5039 = vpack.c.bf16 %v5036, %v5036
    %v5040 = vpack.c.bf16 %v5037, %v5037
    %v5041 = vpack.c.bf16 %v5038, %v5038
    %v5043 = vsel %vm2221, %v5041, 0
    %5045 = vmatprep.subr.bf16.mxu0 %v1790
    %5046 = vmatpush1.bf16.msra.mxu0 %v1789
    %5047 = vmatprep.subr.bf16.mxu0 %v1802
    %5048 = vmatpush1.bf16.msra.mxu0 %v1801
    %5049 = vmatprep.subr.bf16.mxu0 %v1814
    %5050 = vmatpush1.bf16.msra.mxu0 %v1813
    %5051 = vmatprep.subr.bf16.mxu0 %v1826
    %5052 = vmatpush1.bf16.msra.mxu0 %v1825
    %5053 = vmatprep.subr.bf16.mxu0 %v1838
    %5054 = vmatpush1.bf16.msra.mxu0 %v1837
    %5055 = vmatprep.subr.bf16.mxu0 %v1850
    %5056 = vmatpush1.bf16.msra.mxu0 %v1849
    %5057 = vmatprep.subr.bf16.mxu0 %v1862
    %5058 = vmatpush1.bf16.msra.mxu0 %v1861
    %5059 = vmatprep.subr.bf16.mxu0 %v1874
    %5060 = vmatpush1.bf16.msra.mxu0 %v1873
    %5061 = vmatprep.subr.bf16.mxu0 %v1886
    %5062 = vmatpush1.bf16.msra.mxu0 %v1885
    %5063 = vmatprep.subr.bf16.mxu0 %v1898
    %5064 = vmatpush1.bf16.msra.mxu0 %v1897
    %5065 = vmatprep.subr.bf16.mxu0 %v1910
    %5066 = vmatpush1.bf16.msra.mxu0 %v1909
    %5067 = vmatprep.subr.bf16.mxu0 %v1922
    %5068 = vmatpush1.bf16.msra.mxu0 %v1921
    %5069 = vmatprep.subr.bf16.mxu0 %v1934
    %5070 = vmatpush1.bf16.msra.mxu0 %v1933
    %5071 = vmatprep.subr.bf16.mxu0 %v1946
    %5072 = vmatpush1.bf16.msra.mxu0 %v1945
    %5073 = vmatprep.subr.bf16.mxu0 %v1958
    %5074 = vmatpush1.bf16.msra.mxu0 %v1957
    %5075 = vmatprep.subr.bf16.mxu0 %v1970
    %5076 = vmatpush1.bf16.msra.mxu0 %v1969
    %5077 = vmatprep.mubr.bf16.mxu0 %v5040
    %5078 = vmatmul.mubr.bf16.gmra.mrb[0].mxu0 %v5039
    %v5079 = vpop.f32.mrb[0].mxu0
    %v5080 = vadd.f32 0.0, %v5079
    %v5081 = vpop.f32.mrb[0].mxu0
    %v5082 = vadd.f32 0.0, %v5081
    %v5083 = vpop.f32.mrb[0].mxu0
    %v5084 = vpop.f32.mrb[0].mxu0
    %5085 = vdwg.mxu0
    %5086 = vmatprep.subr.bf16.mxu0 %v1982
    %5087 = vmatpush1.bf16.msra.mxu0 %v1981
    %5088 = vmatprep.subr.bf16.mxu0 %v1994
    %5089 = vmatpush1.bf16.msra.mxu0 %v1993
    %5090 = vmatprep.subr.bf16.mxu0 0
    %5091 = vmatpush1.bf16.msra.mxu0 0
    %5092 = vmatprep.subr.bf16.mxu0 0
    %5093 = vmatpush1.bf16.msra.mxu0 0
    %5094 = vmatprep.subr.bf16.mxu0 0
    %5095 = vmatpush1.bf16.msra.mxu0 0
    %5096 = vmatprep.subr.bf16.mxu0 0
    %5097 = vmatpush1.bf16.msra.mxu0 0
    %5098 = vmatprep.subr.bf16.mxu0 0
    %5099 = vmatpush1.bf16.msra.mxu0 0
    %5100 = vmatprep.subr.bf16.mxu0 0
    %5101 = vmatpush1.bf16.msra.mxu0 0
    %5102 = vmatprep.subr.bf16.mxu0 0
    %5103 = vmatpush1.bf16.msra.mxu0 0
    %5104 = vmatprep.subr.bf16.mxu0 0
    %5105 = vmatpush1.bf16.msra.mxu0 0
    %5106 = vmatprep.subr.bf16.mxu0 0
    %5107 = vmatpush1.bf16.msra.mxu0 0
    %5108 = vmatprep.subr.bf16.mxu0 0
    %5109 = vmatpush1.bf16.msra.mxu0 0
    %5110 = vmatprep.subr.bf16.mxu0 0
    %5111 = vmatpush1.bf16.msra.mxu0 0
    %5112 = vmatprep.subr.bf16.mxu0 0
    %5113 = vmatpush1.bf16.msra.mxu0 0
    %5114 = vmatprep.subr.bf16.mxu0 0
    %5115 = vmatpush1.bf16.msra.mxu0 0
    %5116 = vmatprep.subr.bf16.mxu0 0
    %5117 = vmatpush1.bf16.msra.mxu0 0
    %5118 = vmatprep.mubr.bf16.mxu0 0
    %5119 = vmatmul.mubr.bf16.gmra.mrb[0].mxu0 %v5043
    %v5120 = vpop.f32.mrb[0].mxu0
    %v5121 = vadd.f32 %v5080, %v5120
    %v5122 = vpop.f32.mrb[0].mxu0
    %v5123 = vadd.f32 %v5082, %v5122
    %v5124 = vpop.f32.mrb[0].mxu0
    %v5125 = vpop.f32.mrb[0].mxu0
    %5126 = vdwg.mxu0
    %5127 = vmatprep.subr.bf16.mxu0 %v1792
    %5128 = vmatpush1.bf16.msra.mxu0 %v1791
    %5129 = vmatprep.subr.bf16.mxu0 %v1804
    %5130 = vmatpush1.bf16.msra.mxu0 %v1803
    %5131 = vmatprep.subr.bf16.mxu0 %v1816
    %5132 = vmatpush1.bf16.msra.mxu0 %v1815
    %5133 = vmatprep.subr.bf16.mxu0 %v1828
    %5134 = vmatpush1.bf16.msra.mxu0 %v1827
    %5135 = vmatprep.subr.bf16.mxu0 %v1840
    %5136 = vmatpush1.bf16.msra.mxu0 %v1839
    %5137 = vmatprep.subr.bf16.mxu0 %v1852
    %5138 = vmatpush1.bf16.msra.mxu0 %v1851
    %5139 = vmatprep.subr.bf16.mxu0 %v1864
    %5140 = vmatpush1.bf16.msra.mxu0 %v1863
    %5141 = vmatprep.subr.bf16.mxu0 %v1876
    %5142 = vmatpush1.bf16.msra.mxu0 %v1875
    %5143 = vmatprep.subr.bf16.mxu0 %v1888
    %5144 = vmatpush1.bf16.msra.mxu0 %v1887
    %5145 = vmatprep.subr.bf16.mxu0 %v1900
    %5146 = vmatpush1.bf16.msra.mxu0 %v1899
    %5147 = vmatprep.subr.bf16.mxu0 %v1912
    %5148 = vmatpush1.bf16.msra.mxu0 %v1911
    %5149 = vmatprep.subr.bf16.mxu0 %v1924
    %5150 = vmatpush1.bf16.msra.mxu0 %v1923
    %5151 = vmatprep.subr.bf16.mxu0 %v1936
    %5152 = vmatpush1.bf16.msra.mxu0 %v1935
    %5153 = vmatprep.subr.bf16.mxu0 %v1948
    %5154 = vmatpush1.bf16.msra.mxu0 %v1947
    %5155 = vmatprep.subr.bf16.mxu0 %v1960
    %5156 = vmatpush1.bf16.msra.mxu0 %v1959
    %5157 = vmatprep.subr.bf16.mxu0 %v1972
    %5158 = vmatpush1.bf16.msra.mxu0 %v1971
    %5159 = vmatprep.mubr.bf16.mxu0 %v5040
    %5160 = vmatmul.mubr.bf16.gmra.mrb[0].mxu0 %v5039
    %v5161 = vpop.f32.mrb[0].mxu0
    %v5162 = vadd.f32 0.0, %v5161
    %v5163 = vpop.f32.mrb[0].mxu0
    %v5164 = vadd.f32 0.0, %v5163
    %v5165 = vpop.f32.mrb[0].mxu0
    %v5166 = vpop.f32.mrb[0].mxu0
    %5167 = vdwg.mxu0
    %5168 = vmatprep.subr.bf16.mxu0 %v1984
    %5169 = vmatpush1.bf16.msra.mxu0 %v1983
    %5170 = vmatprep.subr.bf16.mxu0 %v1996
    %5171 = vmatpush1.bf16.msra.mxu0 %v1995
    %5172 = vmatprep.subr.bf16.mxu0 0
    %5173 = vmatpush1.bf16.msra.mxu0 0
    %5174 = vmatprep.subr.bf16.mxu0 0
    %5175 = vmatpush1.bf16.msra.mxu0 0
    %5176 = vmatprep.subr.bf16.mxu0 0
    %5177 = vmatpush1.bf16.msra.mxu0 0
    %5178 = vmatprep.subr.bf16.mxu0 0
    %5179 = vmatpush1.bf16.msra.mxu0 0
    %5180 = vmatprep.subr.bf16.mxu0 0
    %5181 = vmatpush1.bf16.msra.mxu0 0
    %5182 = vmatprep.subr.bf16.mxu0 0
    %5183 = vmatpush1.bf16.msra.mxu0 0
    %5184 = vmatprep.subr.bf16.mxu0 0
    %5185 = vmatpush1.bf16.msra.mxu0 0
    %5186 = vmatprep.subr.bf16.mxu0 0
    %5187 = vmatpush1.bf16.msra.mxu0 0
    %5188 = vmatprep.subr.bf16.mxu0 0
    %5189 = vmatpush1.bf16.msra.mxu0 0
    %5190 = vmatprep.subr.bf16.mxu0 0
    %5191 = vmatpush1.bf16.msra.mxu0 0
    %5192 = vmatprep.subr.bf16.mxu0 0
    %5193 = vmatpush1.bf16.msra.mxu0 0
    %5194 = vmatprep.subr.bf16.mxu0 0
    %5195 = vmatpush1.bf16.msra.mxu0 0
    %5196 = vmatprep.subr.bf16.mxu0 0
    %5197 = vmatpush1.bf16.msra.mxu0 0
    %5198 = vmatprep.subr.bf16.mxu0 0
    %5199 = vmatpush1.bf16.msra.mxu0 0
    %5200 = vmatprep.mubr.bf16.mxu0 0
    %5201 = vmatmul.mubr.bf16.gmra.mrb[0].mxu0 %v5043
    %v5202 = vpop.f32.mrb[0].mxu0
    %v5203 = vadd.f32 %v5162, %v5202
    %v5204 = vpop.f32.mrb[0].mxu0
    %v5205 = vadd.f32 %v5164, %v5204
    %v5206 = vpop.f32.mrb[0].mxu0
    %v5207 = vpop.f32.mrb[0].mxu0
    %5208 = vdwg.mxu0
    %5209 = vmatprep.subr.bf16.mxu0 %v1794
    %5210 = vmatpush1.bf16.msra.mxu0 %v1793
    %5211 = vmatprep.subr.bf16.mxu0 %v1806
    %5212 = vmatpush1.bf16.msra.mxu0 %v1805
    %5213 = vmatprep.subr.bf16.mxu0 %v1818
    %5214 = vmatpush1.bf16.msra.mxu0 %v1817
    %5215 = vmatprep.subr.bf16.mxu0 %v1830
    %5216 = vmatpush1.bf16.msra.mxu0 %v1829
    %5217 = vmatprep.subr.bf16.mxu0 %v1842
    %5218 = vmatpush1.bf16.msra.mxu0 %v1841
    %5219 = vmatprep.subr.bf16.mxu0 %v1854
    %5220 = vmatpush1.bf16.msra.mxu0 %v1853
    %5221 = vmatprep.subr.bf16.mxu0 %v1866
    %5222 = vmatpush1.bf16.msra.mxu0 %v1865
    %5223 = vmatprep.subr.bf16.mxu0 %v1878
    %5224 = vmatpush1.bf16.msra.mxu0 %v1877
    %5225 = vmatprep.subr.bf16.mxu0 %v1890
    %5226 = vmatpush1.bf16.msra.mxu0 %v1889
    %5227 = vmatprep.subr.bf16.mxu0 %v1902
    %5228 = vmatpush1.bf16.msra.mxu0 %v1901
    %5229 = vmatprep.subr.bf16.mxu0 %v1914
    %5230 = vmatpush1.bf16.msra.mxu0 %v1913
    %5231 = vmatprep.subr.bf16.mxu0 %v1926
    %5232 = vmatpush1.bf16.msra.mxu0 %v1925
    %5233 = vmatprep.subr.bf16.mxu0 %v1938
    %5234 = vmatpush1.bf16.msra.mxu0 %v1937
    %5235 = vmatprep.subr.bf16.mxu0 %v1950
    %5236 = vmatpush1.bf16.msra.mxu0 %v1949
    %5237 = vmatprep.subr.bf16.mxu0 %v1962
    %5238 = vmatpush1.bf16.msra.mxu0 %v1961
    %5239 = vmatprep.subr.bf16.mxu0 %v1974
    %5240 = vmatpush1.bf16.msra.mxu0 %v1973
    %5241 = vmatprep.mubr.bf16.mxu0 %v5040
    %5242 = vmatmul.mubr.bf16.gmra.mrb[0].mxu0 %v5039
    %v5243 = vpop.f32.mrb[0].mxu0
    %v5244 = vadd.f32 0.0, %v5243
    %v5245 = vpop.f32.mrb[0].mxu0
    %v5246 = vadd.f32 0.0, %v5245
    %v5247 = vpop.f32.mrb[0].mxu0
    %v5248 = vpop.f32.mrb[0].mxu0
    %5249 = vdwg.mxu0
    %5250 = vmatprep.subr.bf16.mxu0 %v1986
    %5251 = vmatpush1.bf16.msra.mxu0 %v1985
    %5252 = vmatprep.subr.bf16.mxu0 %v1998
    %5253 = vmatpush1.bf16.msra.mxu0 %v1997
    %5254 = vmatprep.subr.bf16.mxu0 0
    %5255 = vmatpush1.bf16.msra.mxu0 0
    %5256 = vmatprep.subr.bf16.mxu0 0
    %5257 = vmatpush1.bf16.msra.mxu0 0
    %5258 = vmatprep.subr.bf16.mxu0 0
    %5259 = vmatpush1.bf16.msra.mxu0 0
    %5260 = vmatprep.subr.bf16.mxu0 0
    %5261 = vmatpush1.bf16.msra.mxu0 0
    %5262 = vmatprep.subr.bf16.mxu0 0
    %5263 = vmatpush1.bf16.msra.mxu0 0
    %5264 = vmatprep.subr.bf16.mxu0 0
    %5265 = vmatpush1.bf16.msra.mxu0 0
    %5266 = vmatprep.subr.bf16.mxu0 0
    %5267 = vmatpush1.bf16.msra.mxu0 0
    %5268 = vmatprep.subr.bf16.mxu0 0
    %5269 = vmatpush1.bf16.msra.mxu0 0
    %5270 = vmatprep.subr.bf16.mxu0 0
    %5271 = vmatpush1.bf16.msra.mxu0 0
    %5272 = vmatprep.subr.bf16.mxu0 0
    %5273 = vmatpush1.bf16.msra.mxu0 0
    %5274 = vmatprep.subr.bf16.mxu0 0
    %5275 = vmatpush1.bf16.msra.mxu0 0
    %5276 = vmatprep.subr.bf16.mxu0 0
    %5277 = vmatpush1.bf16.msra.mxu0 0
    %5278 = vmatprep.subr.bf16.mxu0 0
    %5279 = vmatpush1.bf16.msra.mxu0 0
    %5280 = vmatprep.subr.bf16.mxu0 0
    %5281 = vmatpush1.bf16.msra.mxu0 0
    %5282 = vmatprep.mubr.bf16.mxu0 0
    %5283 = vmatmul.mubr.bf16.gmra.mrb[0].mxu0 %v5043
    %v5284 = vpop.f32.mrb[0].mxu0
    %v5285 = vadd.f32 %v5244, %v5284
    %v5286 = vpop.f32.mrb[0].mxu0
    %v5287 = vadd.f32 %v5246, %v5286
    %v5288 = vpop.f32.mrb[0].mxu0
    %v5289 = vpop.f32.mrb[0].mxu0
    %5290 = vdwg.mxu0
    %5291 = vmatprep.subr.bf16.mxu0 %v1796
    %5292 = vmatpush1.bf16.msra.mxu0 %v1795
    %5293 = vmatprep.subr.bf16.mxu0 %v1808
    %5294 = vmatpush1.bf16.msra.mxu0 %v1807
    %5295 = vmatprep.subr.bf16.mxu0 %v1820
    %5296 = vmatpush1.bf16.msra.mxu0 %v1819
    %5297 = vmatprep.subr.bf16.mxu0 %v1832
    %5298 = vmatpush1.bf16.msra.mxu0 %v1831
    %5299 = vmatprep.subr.bf16.mxu0 %v1844
    %5300 = vmatpush1.bf16.msra.mxu0 %v1843
    %5301 = vmatprep.subr.bf16.mxu0 %v1856
    %5302 = vmatpush1.bf16.msra.mxu0 %v1855
    %5303 = vmatprep.subr.bf16.mxu0 %v1868
    %5304 = vmatpush1.bf16.msra.mxu0 %v1867
    %5305 = vmatprep.subr.bf16.mxu0 %v1880
    %5306 = vmatpush1.bf16.msra.mxu0 %v1879
    %5307 = vmatprep.subr.bf16.mxu0 %v1892
    %5308 = vmatpush1.bf16.msra.mxu0 %v1891
    %5309 = vmatprep.subr.bf16.mxu0 %v1904
    %5310 = vmatpush1.bf16.msra.mxu0 %v1903
    %5311 = vmatprep.subr.bf16.mxu0 %v1916
    %5312 = vmatpush1.bf16.msra.mxu0 %v1915
    %5313 = vmatprep.subr.bf16.mxu0 %v1928
    %5314 = vmatpush1.bf16.msra.mxu0 %v1927
    %5315 = vmatprep.subr.bf16.mxu0 %v1940
    %5316 = vmatpush1.bf16.msra.mxu0 %v1939
    %5317 = vmatprep.subr.bf16.mxu0 %v1952
    %5318 = vmatpush1.bf16.msra.mxu0 %v1951
    %5319 = vmatprep.subr.bf16.mxu0 %v1964
    %5320 = vmatpush1.bf16.msra.mxu0 %v1963
    %5321 = vmatprep.subr.bf16.mxu0 %v1976
    %5322 = vmatpush1.bf16.msra.mxu0 %v1975
    %5323 = vmatprep.mubr.bf16.mxu0 %v5040
    %5324 = vmatmul.mubr.bf16.gmra.mrb[0].mxu0 %v5039
    %v5325 = vpop.f32.mrb[0].mxu0
    %v5326 = vadd.f32 0.0, %v5325
    %v5327 = vpop.f32.mrb[0].mxu0
    %v5328 = vadd.f32 0.0, %v5327
    %v5329 = vpop.f32.mrb[0].mxu0
    %v5330 = vpop.f32.mrb[0].mxu0
    %5331 = vdwg.mxu0
    %5332 = vmatprep.subr.bf16.mxu0 %v1988
    %5333 = vmatpush1.bf16.msra.mxu0 %v1987
    %5334 = vmatprep.subr.bf16.mxu0 %v2000
    %5335 = vmatpush1.bf16.msra.mxu0 %v1999
    %5336 = vmatprep.subr.bf16.mxu0 0
    %5337 = vmatpush1.bf16.msra.mxu0 0
    %5338 = vmatprep.subr.bf16.mxu0 0
    %5339 = vmatpush1.bf16.msra.mxu0 0
    %5340 = vmatprep.subr.bf16.mxu0 0
    %5341 = vmatpush1.bf16.msra.mxu0 0
    %5342 = vmatprep.subr.bf16.mxu0 0
    %5343 = vmatpush1.bf16.msra.mxu0 0
    %5344 = vmatprep.subr.bf16.mxu0 0
    %5345 = vmatpush1.bf16.msra.mxu0 0
    %5346 = vmatprep.subr.bf16.mxu0 0
    %5347 = vmatpush1.bf16.msra.mxu0 0
    %5348 = vmatprep.subr.bf16.mxu0 0
    %5349 = vmatpush1.bf16.msra.mxu0 0
    %5350 = vmatprep.subr.bf16.mxu0 0
    %5351 = vmatpush1.bf16.msra.mxu0 0
    %5352 = vmatprep.subr.bf16.mxu0 0
    %5353 = vmatpush1.bf16.msra.mxu0 0
    %5354 = vmatprep.subr.bf16.mxu0 0
    %5355 = vmatpush1.bf16.msra.mxu0 0
    %5356 = vmatprep.subr.bf16.mxu0 0
    %5357 = vmatpush1.bf16.msra.mxu0 0
    %5358 = vmatprep.subr.bf16.mxu0 0
    %5359 = vmatpush1.bf16.msra.mxu0 0
    %5360 = vmatprep.subr.bf16.mxu0 0
    %5361 = vmatpush1.bf16.msra.mxu0 0
    %5362 = vmatprep.subr.bf16.mxu0 0
    %5363 = vmatpush1.bf16.msra.mxu0 0
    %5364 = vmatprep.mubr.bf16.mxu0 0
    %5365 = vmatmul.mubr.bf16.gmra.mrb[0].mxu0 %v5043
    %v5366 = vpop.f32.mrb[0].mxu0
    %v5367 = vadd.f32 %v5326, %v5366
    %v5368 = vpop.f32.mrb[0].mxu0
    %v5369 = vadd.f32 %v5328, %v5368
    %v5370 = vpop.f32.mrb[0].mxu0
    %v5371 = vpop.f32.mrb[0].mxu0
    %5372 = vdwg.mxu0
    %5373 = vmatprep.subr.bf16.mxu0 %v1798
    %5374 = vmatpush1.bf16.msra.mxu0 %v1797
    %5375 = vmatprep.subr.bf16.mxu0 %v1810
    %5376 = vmatpush1.bf16.msra.mxu0 %v1809
    %5377 = vmatprep.subr.bf16.mxu0 %v1822
    %5378 = vmatpush1.bf16.msra.mxu0 %v1821
    %5379 = vmatprep.subr.bf16.mxu0 %v1834
    %5380 = vmatpush1.bf16.msra.mxu0 %v1833
    %5381 = vmatprep.subr.bf16.mxu0 %v1846
    %5382 = vmatpush1.bf16.msra.mxu0 %v1845
    %5383 = vmatprep.subr.bf16.mxu0 %v1858
    %5384 = vmatpush1.bf16.msra.mxu0 %v1857
    %5385 = vmatprep.subr.bf16.mxu0 %v1870
    %5386 = vmatpush1.bf16.msra.mxu0 %v1869
    %5387 = vmatprep.subr.bf16.mxu0 %v1882
    %5388 = vmatpush1.bf16.msra.mxu0 %v1881
    %5389 = vmatprep.subr.bf16.mxu0 %v1894
    %5390 = vmatpush1.bf16.msra.mxu0 %v1893
    %5391 = vmatprep.subr.bf16.mxu0 %v1906
    %5392 = vmatpush1.bf16.msra.mxu0 %v1905
    %5393 = vmatprep.subr.bf16.mxu0 %v1918
    %5394 = vmatpush1.bf16.msra.mxu0 %v1917
    %5395 = vmatprep.subr.bf16.mxu0 %v1930
    %5396 = vmatpush1.bf16.msra.mxu0 %v1929
    %5397 = vmatprep.subr.bf16.mxu0 %v1942
    %5398 = vmatpush1.bf16.msra.mxu0 %v1941
    %5399 = vmatprep.subr.bf16.mxu0 %v1954
    %5400 = vmatpush1.bf16.msra.mxu0 %v1953
    %5401 = vmatprep.subr.bf16.mxu0 %v1966
    %5402 = vmatpush1.bf16.msra.mxu0 %v1965
    %5403 = vmatprep.subr.bf16.mxu0 %v1978
    %5404 = vmatpush1.bf16.msra.mxu0 %v1977
    %5405 = vmatprep.mubr.bf16.mxu0 %v5040
    %5406 = vmatmul.mubr.bf16.gmra.mrb[0].mxu0 %v5039
    %v5407 = vpop.f32.mrb[0].mxu0
    %v5408 = vadd.f32 0.0, %v5407
    %v5409 = vpop.f32.mrb[0].mxu0
    %v5410 = vadd.f32 0.0, %v5409
    %v5411 = vpop.f32.mrb[0].mxu0
    %v5412 = vpop.f32.mrb[0].mxu0
    %5413 = vdwg.mxu0
    %5414 = vmatprep.subr.bf16.mxu0 %v1990
    %5415 = vmatpush1.bf16.msra.mxu0 %v1989
    %5416 = vmatprep.subr.bf16.mxu0 %v2002
    %5417 = vmatpush1.bf16.msra.mxu0 %v2001
    %5418 = vmatprep.subr.bf16.mxu0 0
    %5419 = vmatpush1.bf16.msra.mxu0 0
    %5420 = vmatprep.subr.bf16.mxu0 0
    %5421 = vmatpush1.bf16.msra.mxu0 0
    %5422 = vmatprep.subr.bf16.mxu0 0
    %5423 = vmatpush1.bf16.msra.mxu0 0
    %5424 = vmatprep.subr.bf16.mxu0 0
    %5425 = vmatpush1.bf16.msra.mxu0 0
    %5426 = vmatprep.subr.bf16.mxu0 0
    %5427 = vmatpush1.bf16.msra.mxu0 0
    %5428 = vmatprep.subr.bf16.mxu0 0
    %5429 = vmatpush1.bf16.msra.mxu0 0
    %5430 = vmatprep.subr.bf16.mxu0 0
    %5431 = vmatpush1.bf16.msra.mxu0 0
    %5432 = vmatprep.subr.bf16.mxu0 0
    %5433 = vmatpush1.bf16.msra.mxu0 0
    %5434 = vmatprep.subr.bf16.mxu0 0
    %5435 = vmatpush1.bf16.msra.mxu0 0
    %5436 = vmatprep.subr.bf16.mxu0 0
    %5437 = vmatpush1.bf16.msra.mxu0 0
    %5438 = vmatprep.subr.bf16.mxu0 0
    %5439 = vmatpush1.bf16.msra.mxu0 0
    %5440 = vmatprep.subr.bf16.mxu0 0
    %5441 = vmatpush1.bf16.msra.mxu0 0
    %5442 = vmatprep.subr.bf16.mxu0 0
    %5443 = vmatpush1.bf16.msra.mxu0 0
    %5444 = vmatprep.subr.bf16.mxu0 0
    %5445 = vmatpush1.bf16.msra.mxu0 0
    %5446 = vmatprep.mubr.bf16.mxu0 0
    %5447 = vmatmul.mubr.bf16.gmra.mrb[0].mxu0 %v5043
    %v5448 = vpop.f32.mrb[0].mxu0
    %v5449 = vadd.f32 %v5408, %v5448
    %v5450 = vpop.f32.mrb[0].mxu0
    %v5451 = vadd.f32 %v5410, %v5450
    %v5452 = vpop.f32.mrb[0].mxu0
    %v5453 = vpop.f32.mrb[0].mxu0
    %5454 = vdwg.mxu0
    %5455 = vmatprep.subr.bf16.mxu0 %v1800
    %5456 = vmatpush1.bf16.msra.mxu0 %v1799
    %5457 = vmatprep.subr.bf16.mxu0 %v1812
    %5458 = vmatpush1.bf16.msra.mxu0 %v1811
    %5459 = vmatprep.subr.bf16.mxu0 %v1824
    %5460 = vmatpush1.bf16.msra.mxu0 %v1823
    %5461 = vmatprep.subr.bf16.mxu0 %v1836
    %5462 = vmatpush1.bf16.msra.mxu0 %v1835
    %5463 = vmatprep.subr.bf16.mxu0 %v1848
    %5464 = vmatpush1.bf16.msra.mxu0 %v1847
    %5465 = vmatprep.subr.bf16.mxu0 %v1860
    %5466 = vmatpush1.bf16.msra.mxu0 %v1859
    %5467 = vmatprep.subr.bf16.mxu0 %v1872
    %5468 = vmatpush1.bf16.msra.mxu0 %v1871
    %5469 = vmatprep.subr.bf16.mxu0 %v1884
    %5470 = vmatpush1.bf16.msra.mxu0 %v1883
    %5471 = vmatprep.subr.bf16.mxu0 %v1896
    %5472 = vmatpush1.bf16.msra.mxu0 %v1895
    %5473 = vmatprep.subr.bf16.mxu0 %v1908
    %5474 = vmatpush1.bf16.msra.mxu0 %v1907
    %5475 = vmatprep.subr.bf16.mxu0 %v1920
    %5476 = vmatpush1.bf16.msra.mxu0 %v1919
    %5477 = vmatprep.subr.bf16.mxu0 %v1932
    %5478 = vmatpush1.bf16.msra.mxu0 %v1931
    %5479 = vmatprep.subr.bf16.mxu0 %v1944
    %5480 = vmatpush1.bf16.msra.mxu0 %v1943
    %5481 = vmatprep.subr.bf16.mxu0 %v1956
    %5482 = vmatpush1.bf16.msra.mxu0 %v1955
    %5483 = vmatprep.subr.bf16.mxu0 %v1968
    %5484 = vmatpush1.bf16.msra.mxu0 %v1967
    %5485 = vmatprep.subr.bf16.mxu0 %v1980
    %5486 = vmatpush1.bf16.msra.mxu0 %v1979
    %5487 = vmatprep.mubr.bf16.mxu0 %v5040
    %5488 = vmatmul.mubr.bf16.gmra.mrb[0].mxu0 %v5039
    %v5489 = vpop.f32.mrb[0].mxu0
    %v5490 = vadd.f32 0.0, %v5489
    %v5491 = vpop.f32.mrb[0].mxu0
    %v5492 = vadd.f32 0.0, %v5491
    %v5493 = vpop.f32.mrb[0].mxu0
    %v5494 = vpop.f32.mrb[0].mxu0
    %5495 = vdwg.mxu0
    %5496 = vmatprep.subr.bf16.mxu0 %v1992
    %5497 = vmatpush1.bf16.msra.mxu0 %v1991
    %5498 = vmatprep.subr.bf16.mxu0 %v2004
    %5499 = vmatpush1.bf16.msra.mxu0 %v2003
    %5500 = vmatprep.subr.bf16.mxu0 0
    %5501 = vmatpush1.bf16.msra.mxu0 0
    %5502 = vmatprep.subr.bf16.mxu0 0
    %5503 = vmatpush1.bf16.msra.mxu0 0
    %5504 = vmatprep.subr.bf16.mxu0 0
    %5505 = vmatpush1.bf16.msra.mxu0 0
    %5506 = vmatprep.subr.bf16.mxu0 0
    %5507 = vmatpush1.bf16.msra.mxu0 0
    %5508 = vmatprep.subr.bf16.mxu0 0
    %5509 = vmatpush1.bf16.msra.mxu0 0
    %5510 = vmatprep.subr.bf16.mxu0 0
    %5511 = vmatpush1.bf16.msra.mxu0 0
    %5512 = vmatprep.subr.bf16.mxu0 0
    %5513 = vmatpush1.bf16.msra.mxu0 0
    %5514 = vmatprep.subr.bf16.mxu0 0
    %5515 = vmatpush1.bf16.msra.mxu0 0
    %5516 = vmatprep.subr.bf16.mxu0 0
    %5517 = vmatpush1.bf16.msra.mxu0 0
    %5518 = vmatprep.subr.bf16.mxu0 0
    %5519 = vmatpush1.bf16.msra.mxu0 0
    %5520 = vmatprep.subr.bf16.mxu0 0
    %5521 = vmatpush1.bf16.msra.mxu0 0
    %5522 = vmatprep.subr.bf16.mxu0 0
    %5523 = vmatpush1.bf16.msra.mxu0 0
    %5524 = vmatprep.subr.bf16.mxu0 0
    %5525 = vmatpush1.bf16.msra.mxu0 0
    %5526 = vmatprep.subr.bf16.mxu0 0
    %5527 = vmatpush1.bf16.msra.mxu0 0
    %5528 = vmatprep.mubr.bf16.mxu0 0
    %5529 = vmatmul.mubr.bf16.gmra.mrb[0].mxu0 %v5043
    %v5530 = vpop.f32.mrb[0].mxu0
    %v5531 = vadd.f32 %v5490, %v5530
    %v5532 = vpop.f32.mrb[0].mxu0
    %v5533 = vadd.f32 %v5492, %v5532
    %v5534 = vpop.f32.mrb[0].mxu0
    %v5535 = vpop.f32.mrb[0].mxu0
    %5536 = vdwg.mxu0
    %v5537 = vadd.f32 %v318, %v5121
    %v5538 = vadd.f32 %v320, %v5123
    %v5539 = vadd.f32 %v429, %v5203
    %v5540 = vadd.f32 %v431, %v5205
    %v5541 = vadd.f32 %v540, %v5285
    %v5542 = vadd.f32 %v542, %v5287
    %v5543 = vadd.f32 %v651, %v5367
    %v5544 = vadd.f32 %v653, %v5369
    %v5545 = vadd.f32 %v762, %v5449
    %v5546 = vadd.f32 %v764, %v5451
    %v5547 = vadd.f32 %v873, %v5531
    %v5548 = vadd.f32 %v875, %v5533
    %v5549 = vmul.f32 %v5537, 0.5
    %v5550 = vmul.f32 %v5538, 0.5
    %v5551 = vmul.f32 %v5539, 0.5
    %v5552 = vtanh.pop %v5549
    %v5553 = vtanh.pop %v5550
    %v5554 = vtanh.pop %v5551
    %v5555 = vmul.f32 %v5552, 0.5
    %v5556 = vmul.f32 %v5553, 0.5
    %v5557 = vmul.f32 %v5554, 0.5
    %v5558 = vadd.f32 %v5555, 0.5
    %v5559 = vadd.f32 %v5556, 0.5
    %v5560 = vadd.f32 %v5557, 0.5
    %v5561 = vmul.f32 %v5540, 0.5
    %v5562 = vmul.f32 %v5541, 0.5
    %v5563 = vmul.f32 %v5542, 0.5
    %v5564 = vtanh.pop %v5561
    %v5565 = vtanh.pop %v5562
    %v5566 = vtanh.pop %v5563
    %v5567 = vmul.f32 %v5564, 0.5
    %v5568 = vmul.f32 %v5565, 0.5
    %v5569 = vmul.f32 %v5566, 0.5
    %v5570 = vadd.f32 %v5567, 0.5
    %v5571 = vadd.f32 %v5568, 0.5
    %v5572 = vadd.f32 %v5569, 0.5
    %v5573 = vtanh.pop %v5543
    %v5574 = vtanh.pop %v5544
    %v5575 = vtanh.pop %v5545
    %v5576 = vmul.f32 %v5546, 0.5
    %v5577 = vmul.f32 %v5547, 0.5
    %v5578 = vmul.f32 %v5548, 0.5
    %v5579 = vtanh.pop %v5576
    %v5580 = vtanh.pop %v5577
    %v5581 = vtanh.pop %v5578
    %v5582 = vmul.f32 %v5579, 0.5
    %v5583 = vmul.f32 %v5580, 0.5
    %v5584 = vmul.f32 %v5581, 0.5
    %v5585 = vadd.f32 %v5582, 0.5
    %v5586 = vadd.f32 %v5583, 0.5
    %v5587 = vadd.f32 %v5584, 0.5
    %v5588 = vmul.f32 %v5570, %v5030
    %v5589 = vmul.f32 %v5571, %v5031
    %v5590 = vmul.f32 %v5572, %v5032
    %v5591 = vmul.f32 %v5558, %v5573
    %v5592 = vmul.f32 %v5559, %v5574
    %v5593 = vmul.f32 %v5560, %v5575
    %v5594 = vadd.f32 %v5588, %v5591
    %v5595 = vadd.f32 %v5589, %v5592
    %v5596 = vadd.f32 %v5590, %v5593
    %v5597 = vtanh.pop %v5594
    %v5598 = vtanh.pop %v5595
    %v5599 = vtanh.pop %v5596
    %v5600 = vmul.f32 %v5585, %v5597
    %v5601 = vmul.f32 %v5586, %v5598
    %v5602 = vmul.f32 %v5587, %v5599
    %v5603 = vpack.c.bf16 %v5600, %v5600
    %v5604 = vpack.c.bf16 %v5601, %v5601
    %v5605 = vpack.c.bf16 %v5602, %v5602
    %v5607 = vsel %vm2221, %v5605, 0
    %5609 = vmatprep.subr.bf16.mxu0 %v1790
    %5610 = vmatpush1.bf16.msra.mxu0 %v1789
    %5611 = vmatprep.subr.bf16.mxu0 %v1802
    %5612 = vmatpush1.bf16.msra.mxu0 %v1801
    %5613 = vmatprep.subr.bf16.mxu0 %v1814
    %5614 = vmatpush1.bf16.msra.mxu0 %v1813
    %5615 = vmatprep.subr.bf16.mxu0 %v1826
    %5616 = vmatpush1.bf16.msra.mxu0 %v1825
    %5617 = vmatprep.subr.bf16.mxu0 %v1838
    %5618 = vmatpush1.bf16.msra.mxu0 %v1837
    %5619 = vmatprep.subr.bf16.mxu0 %v1850
    %5620 = vmatpush1.bf16.msra.mxu0 %v1849
    %5621 = vmatprep.subr.bf16.mxu0 %v1862
    %5622 = vmatpush1.bf16.msra.mxu0 %v1861
    %5623 = vmatprep.subr.bf16.mxu0 %v1874
    %5624 = vmatpush1.bf16.msra.mxu0 %v1873
    %5625 = vmatprep.subr.bf16.mxu0 %v1886
    %5626 = vmatpush1.bf16.msra.mxu0 %v1885
    %5627 = vmatprep.subr.bf16.mxu0 %v1898
    %5628 = vmatpush1.bf16.msra.mxu0 %v1897
    %5629 = vmatprep.subr.bf16.mxu0 %v1910
    %5630 = vmatpush1.bf16.msra.mxu0 %v1909
    %5631 = vmatprep.subr.bf16.mxu0 %v1922
    %5632 = vmatpush1.bf16.msra.mxu0 %v1921
    %5633 = vmatprep.subr.bf16.mxu0 %v1934
    %5634 = vmatpush1.bf16.msra.mxu0 %v1933
    %5635 = vmatprep.subr.bf16.mxu0 %v1946
    %5636 = vmatpush1.bf16.msra.mxu0 %v1945
    %5637 = vmatprep.subr.bf16.mxu0 %v1958
    %5638 = vmatpush1.bf16.msra.mxu0 %v1957
    %5639 = vmatprep.subr.bf16.mxu0 %v1970
    %5640 = vmatpush1.bf16.msra.mxu0 %v1969
    %5641 = vmatprep.mubr.bf16.mxu0 %v5604
    %5642 = vmatmul.mubr.bf16.gmra.mrb[0].mxu0 %v5603
    %v5643 = vpop.f32.mrb[0].mxu0
    %v5644 = vadd.f32 0.0, %v5643
    %v5645 = vpop.f32.mrb[0].mxu0
    %v5646 = vadd.f32 0.0, %v5645
    %v5647 = vpop.f32.mrb[0].mxu0
    %v5648 = vpop.f32.mrb[0].mxu0
    %5649 = vdwg.mxu0
    %5650 = vmatprep.subr.bf16.mxu0 %v1982
    %5651 = vmatpush1.bf16.msra.mxu0 %v1981
    %5652 = vmatprep.subr.bf16.mxu0 %v1994
    %5653 = vmatpush1.bf16.msra.mxu0 %v1993
    %5654 = vmatprep.subr.bf16.mxu0 0
    %5655 = vmatpush1.bf16.msra.mxu0 0
    %5656 = vmatprep.subr.bf16.mxu0 0
    %5657 = vmatpush1.bf16.msra.mxu0 0
    %5658 = vmatprep.subr.bf16.mxu0 0
    %5659 = vmatpush1.bf16.msra.mxu0 0
    %5660 = vmatprep.subr.bf16.mxu0 0
    %5661 = vmatpush1.bf16.msra.mxu0 0
    %5662 = vmatprep.subr.bf16.mxu0 0
    %5663 = vmatpush1.bf16.msra.mxu0 0
    %5664 = vmatprep.subr.bf16.mxu0 0
    %5665 = vmatpush1.bf16.msra.mxu0 0
    %5666 = vmatprep.subr.bf16.mxu0 0
    %5667 = vmatpush1.bf16.msra.mxu0 0
    %5668 = vmatprep.subr.bf16.mxu0 0
    %5669 = vmatpush1.bf16.msra.mxu0 0
    %5670 = vmatprep.subr.bf16.mxu0 0
    %5671 = vmatpush1.bf16.msra.mxu0 0
    %5672 = vmatprep.subr.bf16.mxu0 0
    %5673 = vmatpush1.bf16.msra.mxu0 0
    %5674 = vmatprep.subr.bf16.mxu0 0
    %5675 = vmatpush1.bf16.msra.mxu0 0
    %5676 = vmatprep.subr.bf16.mxu0 0
    %5677 = vmatpush1.bf16.msra.mxu0 0
    %5678 = vmatprep.subr.bf16.mxu0 0
    %5679 = vmatpush1.bf16.msra.mxu0 0
    %5680 = vmatprep.subr.bf16.mxu0 0
    %5681 = vmatpush1.bf16.msra.mxu0 0
    %5682 = vmatprep.mubr.bf16.mxu0 0
    %5683 = vmatmul.mubr.bf16.gmra.mrb[0].mxu0 %v5607
    %v5684 = vpop.f32.mrb[0].mxu0
    %v5685 = vadd.f32 %v5644, %v5684
    %v5686 = vpop.f32.mrb[0].mxu0
    %v5687 = vadd.f32 %v5646, %v5686
    %v5688 = vpop.f32.mrb[0].mxu0
    %v5689 = vpop.f32.mrb[0].mxu0
    %5690 = vdwg.mxu0
    %5691 = vmatprep.subr.bf16.mxu0 %v1792
    %5692 = vmatpush1.bf16.msra.mxu0 %v1791
    %5693 = vmatprep.subr.bf16.mxu0 %v1804
    %5694 = vmatpush1.bf16.msra.mxu0 %v1803
    %5695 = vmatprep.subr.bf16.mxu0 %v1816
    %5696 = vmatpush1.bf16.msra.mxu0 %v1815
    %5697 = vmatprep.subr.bf16.mxu0 %v1828
    %5698 = vmatpush1.bf16.msra.mxu0 %v1827
    %5699 = vmatprep.subr.bf16.mxu0 %v1840
    %5700 = vmatpush1.bf16.msra.mxu0 %v1839
    %5701 = vmatprep.subr.bf16.mxu0 %v1852
    %5702 = vmatpush1.bf16.msra.mxu0 %v1851
    %5703 = vmatprep.subr.bf16.mxu0 %v1864
    %5704 = vmatpush1.bf16.msra.mxu0 %v1863
    %5705 = vmatprep.subr.bf16.mxu0 %v1876
    %5706 = vmatpush1.bf16.msra.mxu0 %v1875
    %5707 = vmatprep.subr.bf16.mxu0 %v1888
    %5708 = vmatpush1.bf16.msra.mxu0 %v1887
    %5709 = vmatprep.subr.bf16.mxu0 %v1900
    %5710 = vmatpush1.bf16.msra.mxu0 %v1899
    %5711 = vmatprep.subr.bf16.mxu0 %v1912
    %5712 = vmatpush1.bf16.msra.mxu0 %v1911
    %5713 = vmatprep.subr.bf16.mxu0 %v1924
    %5714 = vmatpush1.bf16.msra.mxu0 %v1923
    %5715 = vmatprep.subr.bf16.mxu0 %v1936
    %5716 = vmatpush1.bf16.msra.mxu0 %v1935
    %5717 = vmatprep.subr.bf16.mxu0 %v1948
    %5718 = vmatpush1.bf16.msra.mxu0 %v1947
    %5719 = vmatprep.subr.bf16.mxu0 %v1960
    %5720 = vmatpush1.bf16.msra.mxu0 %v1959
    %5721 = vmatprep.subr.bf16.mxu0 %v1972
    %5722 = vmatpush1.bf16.msra.mxu0 %v1971
    %5723 = vmatprep.mubr.bf16.mxu0 %v5604
    %5724 = vmatmul.mubr.bf16.gmra.mrb[0].mxu0 %v5603
    %v5725 = vpop.f32.mrb[0].mxu0
    %v5726 = vadd.f32 0.0, %v5725
    %v5727 = vpop.f32.mrb[0].mxu0
    %v5728 = vadd.f32 0.0, %v5727
    %v5729 = vpop.f32.mrb[0].mxu0
    %v5730 = vpop.f32.mrb[0].mxu0
    %5731 = vdwg.mxu0
    %5732 = vmatprep.subr.bf16.mxu0 %v1984
    %5733 = vmatpush1.bf16.msra.mxu0 %v1983
    %5734 = vmatprep.subr.bf16.mxu0 %v1996
    %5735 = vmatpush1.bf16.msra.mxu0 %v1995
    %5736 = vmatprep.subr.bf16.mxu0 0
    %5737 = vmatpush1.bf16.msra.mxu0 0
    %5738 = vmatprep.subr.bf16.mxu0 0
    %5739 = vmatpush1.bf16.msra.mxu0 0
    %5740 = vmatprep.subr.bf16.mxu0 0
    %5741 = vmatpush1.bf16.msra.mxu0 0
    %5742 = vmatprep.subr.bf16.mxu0 0
    %5743 = vmatpush1.bf16.msra.mxu0 0
    %5744 = vmatprep.subr.bf16.mxu0 0
    %5745 = vmatpush1.bf16.msra.mxu0 0
    %5746 = vmatprep.subr.bf16.mxu0 0
    %5747 = vmatpush1.bf16.msra.mxu0 0
    %5748 = vmatprep.subr.bf16.mxu0 0
    %5749 = vmatpush1.bf16.msra.mxu0 0
    %5750 = vmatprep.subr.bf16.mxu0 0
    %5751 = vmatpush1.bf16.msra.mxu0 0
    %5752 = vmatprep.subr.bf16.mxu0 0
    %5753 = vmatpush1.bf16.msra.mxu0 0
    %5754 = vmatprep.subr.bf16.mxu0 0
    %5755 = vmatpush1.bf16.msra.mxu0 0
    %5756 = vmatprep.subr.bf16.mxu0 0
    %5757 = vmatpush1.bf16.msra.mxu0 0
    %5758 = vmatprep.subr.bf16.mxu0 0
    %5759 = vmatpush1.bf16.msra.mxu0 0
    %5760 = vmatprep.subr.bf16.mxu0 0
    %5761 = vmatpush1.bf16.msra.mxu0 0
    %5762 = vmatprep.subr.bf16.mxu0 0
    %5763 = vmatpush1.bf16.msra.mxu0 0
    %5764 = vmatprep.mubr.bf16.mxu0 0
    %5765 = vmatmul.mubr.bf16.gmra.mrb[0].mxu0 %v5607
    %v5766 = vpop.f32.mrb[0].mxu0
    %v5767 = vadd.f32 %v5726, %v5766
    %v5768 = vpop.f32.mrb[0].mxu0
    %v5769 = vadd.f32 %v5728, %v5768
    %v5770 = vpop.f32.mrb[0].mxu0
    %v5771 = vpop.f32.mrb[0].mxu0
    %5772 = vdwg.mxu0
    %5773 = vmatprep.subr.bf16.mxu0 %v1794
    %5774 = vmatpush1.bf16.msra.mxu0 %v1793
    %5775 = vmatprep.subr.bf16.mxu0 %v1806
    %5776 = vmatpush1.bf16.msra.mxu0 %v1805
    %5777 = vmatprep.subr.bf16.mxu0 %v1818
    %5778 = vmatpush1.bf16.msra.mxu0 %v1817
    %5779 = vmatprep.subr.bf16.mxu0 %v1830
    %5780 = vmatpush1.bf16.msra.mxu0 %v1829
    %5781 = vmatprep.subr.bf16.mxu0 %v1842
    %5782 = vmatpush1.bf16.msra.mxu0 %v1841
    %5783 = vmatprep.subr.bf16.mxu0 %v1854
    %5784 = vmatpush1.bf16.msra.mxu0 %v1853
    %5785 = vmatprep.subr.bf16.mxu0 %v1866
    %5786 = vmatpush1.bf16.msra.mxu0 %v1865
    %5787 = vmatprep.subr.bf16.mxu0 %v1878
    %5788 = vmatpush1.bf16.msra.mxu0 %v1877
    %5789 = vmatprep.subr.bf16.mxu0 %v1890
    %5790 = vmatpush1.bf16.msra.mxu0 %v1889
    %5791 = vmatprep.subr.bf16.mxu0 %v1902
    %5792 = vmatpush1.bf16.msra.mxu0 %v1901
    %5793 = vmatprep.subr.bf16.mxu0 %v1914
    %5794 = vmatpush1.bf16.msra.mxu0 %v1913
    %5795 = vmatprep.subr.bf16.mxu0 %v1926
    %5796 = vmatpush1.bf16.msra.mxu0 %v1925
    %5797 = vmatprep.subr.bf16.mxu0 %v1938
    %5798 = vmatpush1.bf16.msra.mxu0 %v1937
    %5799 = vmatprep.subr.bf16.mxu0 %v1950
    %5800 = vmatpush1.bf16.msra.mxu0 %v1949
    %5801 = vmatprep.subr.bf16.mxu0 %v1962
    %5802 = vmatpush1.bf16.msra.mxu0 %v1961
    %5803 = vmatprep.subr.bf16.mxu0 %v1974
    %5804 = vmatpush1.bf16.msra.mxu0 %v1973
    %5805 = vmatprep.mubr.bf16.mxu0 %v5604
    %5806 = vmatmul.mubr.bf16.gmra.mrb[0].mxu0 %v5603
    %v5807 = vpop.f32.mrb[0].mxu0
    %v5808 = vadd.f32 0.0, %v5807
    %v5809 = vpop.f32.mrb[0].mxu0
    %v5810 = vadd.f32 0.0, %v5809
    %v5811 = vpop.f32.mrb[0].mxu0
    %v5812 = vpop.f32.mrb[0].mxu0
    %5813 = vdwg.mxu0
    %5814 = vmatprep.subr.bf16.mxu0 %v1986
    %5815 = vmatpush1.bf16.msra.mxu0 %v1985
    %5816 = vmatprep.subr.bf16.mxu0 %v1998
    %5817 = vmatpush1.bf16.msra.mxu0 %v1997
    %5818 = vmatprep.subr.bf16.mxu0 0
    %5819 = vmatpush1.bf16.msra.mxu0 0
    %5820 = vmatprep.subr.bf16.mxu0 0
    %5821 = vmatpush1.bf16.msra.mxu0 0
    %5822 = vmatprep.subr.bf16.mxu0 0
    %5823 = vmatpush1.bf16.msra.mxu0 0
    %5824 = vmatprep.subr.bf16.mxu0 0
    %5825 = vmatpush1.bf16.msra.mxu0 0
    %5826 = vmatprep.subr.bf16.mxu0 0
    %5827 = vmatpush1.bf16.msra.mxu0 0
    %5828 = vmatprep.subr.bf16.mxu0 0
    %5829 = vmatpush1.bf16.msra.mxu0 0
    %5830 = vmatprep.subr.bf16.mxu0 0
    %5831 = vmatpush1.bf16.msra.mxu0 0
    %5832 = vmatprep.subr.bf16.mxu0 0
    %5833 = vmatpush1.bf16.msra.mxu0 0
    %5834 = vmatprep.subr.bf16.mxu0 0
    %5835 = vmatpush1.bf16.msra.mxu0 0
    %5836 = vmatprep.subr.bf16.mxu0 0
    %5837 = vmatpush1.bf16.msra.mxu0 0
    %5838 = vmatprep.subr.bf16.mxu0 0
    %5839 = vmatpush1.bf16.msra.mxu0 0
    %5840 = vmatprep.subr.bf16.mxu0 0
    %5841 = vmatpush1.bf16.msra.mxu0 0
    %5842 = vmatprep.subr.bf16.mxu0 0
    %5843 = vmatpush1.bf16.msra.mxu0 0
    %5844 = vmatprep.subr.bf16.mxu0 0
    %5845 = vmatpush1.bf16.msra.mxu0 0
    %5846 = vmatprep.mubr.bf16.mxu0 0
    %5847 = vmatmul.mubr.bf16.gmra.mrb[0].mxu0 %v5607
    %v5848 = vpop.f32.mrb[0].mxu0
    %v5849 = vadd.f32 %v5808, %v5848
    %v5850 = vpop.f32.mrb[0].mxu0
    %v5851 = vadd.f32 %v5810, %v5850
    %v5852 = vpop.f32.mrb[0].mxu0
    %v5853 = vpop.f32.mrb[0].mxu0
    %5854 = vdwg.mxu0
    %5855 = vmatprep.subr.bf16.mxu0 %v1796
    %5856 = vmatpush1.bf16.msra.mxu0 %v1795
    %5857 = vmatprep.subr.bf16.mxu0 %v1808
    %5858 = vmatpush1.bf16.msra.mxu0 %v1807
    %5859 = vmatprep.subr.bf16.mxu0 %v1820
    %5860 = vmatpush1.bf16.msra.mxu0 %v1819
    %5861 = vmatprep.subr.bf16.mxu0 %v1832
    %5862 = vmatpush1.bf16.msra.mxu0 %v1831
    %5863 = vmatprep.subr.bf16.mxu0 %v1844
    %5864 = vmatpush1.bf16.msra.mxu0 %v1843
    %5865 = vmatprep.subr.bf16.mxu0 %v1856
    %5866 = vmatpush1.bf16.msra.mxu0 %v1855
    %5867 = vmatprep.subr.bf16.mxu0 %v1868
    %5868 = vmatpush1.bf16.msra.mxu0 %v1867
    %5869 = vmatprep.subr.bf16.mxu0 %v1880
    %5870 = vmatpush1.bf16.msra.mxu0 %v1879
    %5871 = vmatprep.subr.bf16.mxu0 %v1892
    %5872 = vmatpush1.bf16.msra.mxu0 %v1891
    %5873 = vmatprep.subr.bf16.mxu0 %v1904
    %5874 = vmatpush1.bf16.msra.mxu0 %v1903
    %5875 = vmatprep.subr.bf16.mxu0 %v1916
    %5876 = vmatpush1.bf16.msra.mxu0 %v1915
    %5877 = vmatprep.subr.bf16.mxu0 %v1928
    %5878 = vmatpush1.bf16.msra.mxu0 %v1927
    %5879 = vmatprep.subr.bf16.mxu0 %v1940
    %5880 = vmatpush1.bf16.msra.mxu0 %v1939
    %5881 = vmatprep.subr.bf16.mxu0 %v1952
    %5882 = vmatpush1.bf16.msra.mxu0 %v1951
    %5883 = vmatprep.subr.bf16.mxu0 %v1964
    %5884 = vmatpush1.bf16.msra.mxu0 %v1963
    %5885 = vmatprep.subr.bf16.mxu0 %v1976
    %5886 = vmatpush1.bf16.msra.mxu0 %v1975
    %5887 = vmatprep.mubr.bf16.mxu0 %v5604
    %5888 = vmatmul.mubr.bf16.gmra.mrb[0].mxu0 %v5603
    %v5889 = vpop.f32.mrb[0].mxu0
    %v5890 = vadd.f32 0.0, %v5889
    %v5891 = vpop.f32.mrb[0].mxu0
    %v5892 = vadd.f32 0.0, %v5891
    %v5893 = vpop.f32.mrb[0].mxu0
    %v5894 = vpop.f32.mrb[0].mxu0
    %5895 = vdwg.mxu0
    %5896 = vmatprep.subr.bf16.mxu0 %v1988
    %5897 = vmatpush1.bf16.msra.mxu0 %v1987
    %5898 = vmatprep.subr.bf16.mxu0 %v2000
    %5899 = vmatpush1.bf16.msra.mxu0 %v1999
    %5900 = vmatprep.subr.bf16.mxu0 0
    %5901 = vmatpush1.bf16.msra.mxu0 0
    %5902 = vmatprep.subr.bf16.mxu0 0
    %5903 = vmatpush1.bf16.msra.mxu0 0
    %5904 = vmatprep.subr.bf16.mxu0 0
    %5905 = vmatpush1.bf16.msra.mxu0 0
    %5906 = vmatprep.subr.bf16.mxu0 0
    %5907 = vmatpush1.bf16.msra.mxu0 0
    %5908 = vmatprep.subr.bf16.mxu0 0
    %5909 = vmatpush1.bf16.msra.mxu0 0
    %5910 = vmatprep.subr.bf16.mxu0 0
    %5911 = vmatpush1.bf16.msra.mxu0 0
    %5912 = vmatprep.subr.bf16.mxu0 0
    %5913 = vmatpush1.bf16.msra.mxu0 0
    %5914 = vmatprep.subr.bf16.mxu0 0
    %5915 = vmatpush1.bf16.msra.mxu0 0
    %5916 = vmatprep.subr.bf16.mxu0 0
    %5917 = vmatpush1.bf16.msra.mxu0 0
    %5918 = vmatprep.subr.bf16.mxu0 0
    %5919 = vmatpush1.bf16.msra.mxu0 0
    %5920 = vmatprep.subr.bf16.mxu0 0
    %5921 = vmatpush1.bf16.msra.mxu0 0
    %5922 = vmatprep.subr.bf16.mxu0 0
    %5923 = vmatpush1.bf16.msra.mxu0 0
    %5924 = vmatprep.subr.bf16.mxu0 0
    %5925 = vmatpush1.bf16.msra.mxu0 0
    %5926 = vmatprep.subr.bf16.mxu0 0
    %5927 = vmatpush1.bf16.msra.mxu0 0
    %5928 = vmatprep.mubr.bf16.mxu0 0
    %5929 = vmatmul.mubr.bf16.gmra.mrb[0].mxu0 %v5607
    %v5930 = vpop.f32.mrb[0].mxu0
    %v5931 = vadd.f32 %v5890, %v5930
    %v5932 = vpop.f32.mrb[0].mxu0
    %v5933 = vadd.f32 %v5892, %v5932
    %v5934 = vpop.f32.mrb[0].mxu0
    %v5935 = vpop.f32.mrb[0].mxu0
    %5936 = vdwg.mxu0
    %5937 = vmatprep.subr.bf16.mxu0 %v1798
    %5938 = vmatpush1.bf16.msra.mxu0 %v1797
    %5939 = vmatprep.subr.bf16.mxu0 %v1810
    %5940 = vmatpush1.bf16.msra.mxu0 %v1809
    %5941 = vmatprep.subr.bf16.mxu0 %v1822
    %5942 = vmatpush1.bf16.msra.mxu0 %v1821
    %5943 = vmatprep.subr.bf16.mxu0 %v1834
    %5944 = vmatpush1.bf16.msra.mxu0 %v1833
    %5945 = vmatprep.subr.bf16.mxu0 %v1846
    %5946 = vmatpush1.bf16.msra.mxu0 %v1845
    %5947 = vmatprep.subr.bf16.mxu0 %v1858
    %5948 = vmatpush1.bf16.msra.mxu0 %v1857
    %5949 = vmatprep.subr.bf16.mxu0 %v1870
    %5950 = vmatpush1.bf16.msra.mxu0 %v1869
    %5951 = vmatprep.subr.bf16.mxu0 %v1882
    %5952 = vmatpush1.bf16.msra.mxu0 %v1881
    %5953 = vmatprep.subr.bf16.mxu0 %v1894
    %5954 = vmatpush1.bf16.msra.mxu0 %v1893
    %5955 = vmatprep.subr.bf16.mxu0 %v1906
    %5956 = vmatpush1.bf16.msra.mxu0 %v1905
    %5957 = vmatprep.subr.bf16.mxu0 %v1918
    %5958 = vmatpush1.bf16.msra.mxu0 %v1917
    %5959 = vmatprep.subr.bf16.mxu0 %v1930
    %5960 = vmatpush1.bf16.msra.mxu0 %v1929
    %5961 = vmatprep.subr.bf16.mxu0 %v1942
    %5962 = vmatpush1.bf16.msra.mxu0 %v1941
    %5963 = vmatprep.subr.bf16.mxu0 %v1954
    %5964 = vmatpush1.bf16.msra.mxu0 %v1953
    %5965 = vmatprep.subr.bf16.mxu0 %v1966
    %5966 = vmatpush1.bf16.msra.mxu0 %v1965
    %5967 = vmatprep.subr.bf16.mxu0 %v1978
    %5968 = vmatpush1.bf16.msra.mxu0 %v1977
    %5969 = vmatprep.mubr.bf16.mxu0 %v5604
    %5970 = vmatmul.mubr.bf16.gmra.mrb[0].mxu0 %v5603
    %v5971 = vpop.f32.mrb[0].mxu0
    %v5972 = vadd.f32 0.0, %v5971
    %v5973 = vpop.f32.mrb[0].mxu0
    %v5974 = vadd.f32 0.0, %v5973
    %v5975 = vpop.f32.mrb[0].mxu0
    %v5976 = vpop.f32.mrb[0].mxu0
    %5977 = vdwg.mxu0
    %5978 = vmatprep.subr.bf16.mxu0 %v1990
    %5979 = vmatpush1.bf16.msra.mxu0 %v1989
    %5980 = vmatprep.subr.bf16.mxu0 %v2002
    %5981 = vmatpush1.bf16.msra.mxu0 %v2001
    %5982 = vmatprep.subr.bf16.mxu0 0
    %5983 = vmatpush1.bf16.msra.mxu0 0
    %5984 = vmatprep.subr.bf16.mxu0 0
    %5985 = vmatpush1.bf16.msra.mxu0 0
    %5986 = vmatprep.subr.bf16.mxu0 0
    %5987 = vmatpush1.bf16.msra.mxu0 0
    %5988 = vmatprep.subr.bf16.mxu0 0
    %5989 = vmatpush1.bf16.msra.mxu0 0
    %5990 = vmatprep.subr.bf16.mxu0 0
    %5991 = vmatpush1.bf16.msra.mxu0 0
    %5992 = vmatprep.subr.bf16.mxu0 0
    %5993 = vmatpush1.bf16.msra.mxu0 0
    %5994 = vmatprep.subr.bf16.mxu0 0
    %5995 = vmatpush1.bf16.msra.mxu0 0
    %5996 = vmatprep.subr.bf16.mxu0 0
    %5997 = vmatpush1.bf16.msra.mxu0 0
    %5998 = vmatprep.subr.bf16.mxu0 0
    %5999 = vmatpush1.bf16.msra.mxu0 0
    %6000 = vmatprep.subr.bf16.mxu0 0
    %6001 = vmatpush1.bf16.msra.mxu0 0
    %6002 = vmatprep.subr.bf16.mxu0 0
    %6003 = vmatpush1.bf16.msra.mxu0 0
    %6004 = vmatprep.subr.bf16.mxu0 0
    %6005 = vmatpush1.bf16.msra.mxu0 0
    %6006 = vmatprep.subr.bf16.mxu0 0
    %6007 = vmatpush1.bf16.msra.mxu0 0
    %6008 = vmatprep.subr.bf16.mxu0 0
    %6009 = vmatpush1.bf16.msra.mxu0 0
    %6010 = vmatprep.mubr.bf16.mxu0 0
    %6011 = vmatmul.mubr.bf16.gmra.mrb[0].mxu0 %v5607
    %v6012 = vpop.f32.mrb[0].mxu0
    %v6013 = vadd.f32 %v5972, %v6012
    %v6014 = vpop.f32.mrb[0].mxu0
    %v6015 = vadd.f32 %v5974, %v6014
    %v6016 = vpop.f32.mrb[0].mxu0
    %v6017 = vpop.f32.mrb[0].mxu0
    %6018 = vdwg.mxu0
    %6019 = vmatprep.subr.bf16.mxu0 %v1800
    %6020 = vmatpush1.bf16.msra.mxu0 %v1799
    %6021 = vmatprep.subr.bf16.mxu0 %v1812
    %6022 = vmatpush1.bf16.msra.mxu0 %v1811
    %6023 = vmatprep.subr.bf16.mxu0 %v1824
    %6024 = vmatpush1.bf16.msra.mxu0 %v1823
    %6025 = vmatprep.subr.bf16.mxu0 %v1836
    %6026 = vmatpush1.bf16.msra.mxu0 %v1835
    %6027 = vmatprep.subr.bf16.mxu0 %v1848
    %6028 = vmatpush1.bf16.msra.mxu0 %v1847
    %6029 = vmatprep.subr.bf16.mxu0 %v1860
    %6030 = vmatpush1.bf16.msra.mxu0 %v1859
    %6031 = vmatprep.subr.bf16.mxu0 %v1872
    %6032 = vmatpush1.bf16.msra.mxu0 %v1871
    %6033 = vmatprep.subr.bf16.mxu0 %v1884
    %6034 = vmatpush1.bf16.msra.mxu0 %v1883
    %6035 = vmatprep.subr.bf16.mxu0 %v1896
    %6036 = vmatpush1.bf16.msra.mxu0 %v1895
    %6037 = vmatprep.subr.bf16.mxu0 %v1908
    %6038 = vmatpush1.bf16.msra.mxu0 %v1907
    %6039 = vmatprep.subr.bf16.mxu0 %v1920
    %6040 = vmatpush1.bf16.msra.mxu0 %v1919
    %6041 = vmatprep.subr.bf16.mxu0 %v1932
    %6042 = vmatpush1.bf16.msra.mxu0 %v1931
    %6043 = vmatprep.subr.bf16.mxu0 %v1944
    %6044 = vmatpush1.bf16.msra.mxu0 %v1943
    %6045 = vmatprep.subr.bf16.mxu0 %v1956
    %6046 = vmatpush1.bf16.msra.mxu0 %v1955
    %6047 = vmatprep.subr.bf16.mxu0 %v1968
    %6048 = vmatpush1.bf16.msra.mxu0 %v1967
    %6049 = vmatprep.subr.bf16.mxu0 %v1980
    %6050 = vmatpush1.bf16.msra.mxu0 %v1979
    %6051 = vmatprep.mubr.bf16.mxu0 %v5604
    %6052 = vmatmul.mubr.bf16.gmra.mrb[0].mxu0 %v5603
    %v6053 = vpop.f32.mrb[0].mxu0
    %v6054 = vadd.f32 0.0, %v6053
    %v6055 = vpop.f32.mrb[0].mxu0
    %v6056 = vadd.f32 0.0, %v6055
    %v6057 = vpop.f32.mrb[0].mxu0
    %v6058 = vpop.f32.mrb[0].mxu0
    %6059 = vdwg.mxu0
    %6060 = vmatprep.subr.bf16.mxu0 %v1992
    %6061 = vmatpush1.bf16.msra.mxu0 %v1991
    %6062 = vmatprep.subr.bf16.mxu0 %v2004
    %6063 = vmatpush1.bf16.msra.mxu0 %v2003
    %6064 = vmatprep.subr.bf16.mxu0 0
    %6065 = vmatpush1.bf16.msra.mxu0 0
    %6066 = vmatprep.subr.bf16.mxu0 0
    %6067 = vmatpush1.bf16.msra.mxu0 0
    %6068 = vmatprep.subr.bf16.mxu0 0
    %6069 = vmatpush1.bf16.msra.mxu0 0
    %6070 = vmatprep.subr.bf16.mxu0 0
    %6071 = vmatpush1.bf16.msra.mxu0 0
    %6072 = vmatprep.subr.bf16.mxu0 0
    %6073 = vmatpush1.bf16.msra.mxu0 0
    %6074 = vmatprep.subr.bf16.mxu0 0
    %6075 = vmatpush1.bf16.msra.mxu0 0
    %6076 = vmatprep.subr.bf16.mxu0 0
    %6077 = vmatpush1.bf16.msra.mxu0 0
    %6078 = vmatprep.subr.bf16.mxu0 0
    %6079 = vmatpush1.bf16.msra.mxu0 0
    %6080 = vmatprep.subr.bf16.mxu0 0
    %6081 = vmatpush1.bf16.msra.mxu0 0
    %6082 = vmatprep.subr.bf16.mxu0 0
    %6083 = vmatpush1.bf16.msra.mxu0 0
    %6084 = vmatprep.subr.bf16.mxu0 0
    %6085 = vmatpush1.bf16.msra.mxu0 0
    %6086 = vmatprep.subr.bf16.mxu0 0
    %6087 = vmatpush1.bf16.msra.mxu0 0
    %6088 = vmatprep.subr.bf16.mxu0 0
    %6089 = vmatpush1.bf16.msra.mxu0 0
    %6090 = vmatprep.subr.bf16.mxu0 0
    %6091 = vmatpush1.bf16.msra.mxu0 0
    %6092 = vmatprep.mubr.bf16.mxu0 0
    %6093 = vmatmul.mubr.bf16.gmra.mrb[0].mxu0 %v5607
    %v6094 = vpop.f32.mrb[0].mxu0
    %v6095 = vadd.f32 %v6054, %v6094
    %v6096 = vpop.f32.mrb[0].mxu0
    %v6097 = vadd.f32 %v6056, %v6096
    %v6098 = vpop.f32.mrb[0].mxu0
    %v6099 = vpop.f32.mrb[0].mxu0
    %6100 = vdwg.mxu0
    %v6101 = vadd.f32 %v324, %v5685
    %v6102 = vadd.f32 %v326, %v5687
    %v6103 = vadd.f32 %v435, %v5767
    %v6104 = vadd.f32 %v437, %v5769
    %v6105 = vadd.f32 %v546, %v5849
    %v6106 = vadd.f32 %v548, %v5851
    %v6107 = vadd.f32 %v657, %v5931
    %v6108 = vadd.f32 %v659, %v5933
    %v6109 = vadd.f32 %v768, %v6013
    %v6110 = vadd.f32 %v770, %v6015
    %v6111 = vadd.f32 %v879, %v6095
    %v6112 = vadd.f32 %v881, %v6097
    %v6113 = vmul.f32 %v6101, 0.5
    %v6114 = vmul.f32 %v6102, 0.5
    %v6115 = vmul.f32 %v6103, 0.5
    %v6116 = vtanh.pop %v6113
    %v6117 = vtanh.pop %v6114
    %v6118 = vtanh.pop %v6115
    %v6119 = vmul.f32 %v6116, 0.5
    %v6120 = vmul.f32 %v6117, 0.5
    %v6121 = vmul.f32 %v6118, 0.5
    %v6122 = vadd.f32 %v6119, 0.5
    %v6123 = vadd.f32 %v6120, 0.5
    %v6124 = vadd.f32 %v6121, 0.5
    %v6125 = vmul.f32 %v6104, 0.5
    %v6126 = vmul.f32 %v6105, 0.5
    %v6127 = vmul.f32 %v6106, 0.5
    %v6128 = vtanh.pop %v6125
    %v6129 = vtanh.pop %v6126
    %v6130 = vtanh.pop %v6127
    %v6131 = vmul.f32 %v6128, 0.5
    %v6132 = vmul.f32 %v6129, 0.5
    %v6133 = vmul.f32 %v6130, 0.5
    %v6134 = vadd.f32 %v6131, 0.5
    %v6135 = vadd.f32 %v6132, 0.5
    %v6136 = vadd.f32 %v6133, 0.5
    %v6137 = vtanh.pop %v6107
    %v6138 = vtanh.pop %v6108
    %v6139 = vtanh.pop %v6109
    %v6140 = vmul.f32 %v6110, 0.5
    %v6141 = vmul.f32 %v6111, 0.5
    %v6142 = vmul.f32 %v6112, 0.5
    %v6143 = vtanh.pop %v6140
    %v6144 = vtanh.pop %v6141
    %v6145 = vtanh.pop %v6142
    %v6146 = vmul.f32 %v6143, 0.5
    %v6147 = vmul.f32 %v6144, 0.5
    %v6148 = vmul.f32 %v6145, 0.5
    %v6149 = vadd.f32 %v6146, 0.5
    %v6150 = vadd.f32 %v6147, 0.5
    %v6151 = vadd.f32 %v6148, 0.5
    %v6152 = vmul.f32 %v6134, %v5594
    %v6153 = vmul.f32 %v6135, %v5595
    %v6154 = vmul.f32 %v6136, %v5596
    %v6155 = vmul.f32 %v6122, %v6137
    %v6156 = vmul.f32 %v6123, %v6138
    %v6157 = vmul.f32 %v6124, %v6139
    %v6158 = vadd.f32 %v6152, %v6155
    %v6159 = vadd.f32 %v6153, %v6156
    %v6160 = vadd.f32 %v6154, %v6157
    %v6161 = vtanh.pop %v6158
    %v6162 = vtanh.pop %v6159
    %v6163 = vtanh.pop %v6160
    %v6164 = vmul.f32 %v6149, %v6161
    %v6165 = vmul.f32 %v6150, %v6162
    %v6166 = vmul.f32 %v6151, %v6163
    %v6167 = vpack.c.bf16 %v6164, %v6164
    %v6168 = vpack.c.bf16 %v6165, %v6165
    %v6169 = vpack.c.bf16 %v6166, %v6166
    %v6171 = vsel %vm2221, %v6169, 0
    %6173 = vmatprep.subr.bf16.mxu0 %v1790
    %6174 = vmatpush1.bf16.msra.mxu0 %v1789
    %6175 = vmatprep.subr.bf16.mxu0 %v1802
    %6176 = vmatpush1.bf16.msra.mxu0 %v1801
    %6177 = vmatprep.subr.bf16.mxu0 %v1814
    %6178 = vmatpush1.bf16.msra.mxu0 %v1813
    %6179 = vmatprep.subr.bf16.mxu0 %v1826
    %6180 = vmatpush1.bf16.msra.mxu0 %v1825
    %6181 = vmatprep.subr.bf16.mxu0 %v1838
    %6182 = vmatpush1.bf16.msra.mxu0 %v1837
    %6183 = vmatprep.subr.bf16.mxu0 %v1850
    %6184 = vmatpush1.bf16.msra.mxu0 %v1849
    %6185 = vmatprep.subr.bf16.mxu0 %v1862
    %6186 = vmatpush1.bf16.msra.mxu0 %v1861
    %6187 = vmatprep.subr.bf16.mxu0 %v1874
    %6188 = vmatpush1.bf16.msra.mxu0 %v1873
    %6189 = vmatprep.subr.bf16.mxu0 %v1886
    %6190 = vmatpush1.bf16.msra.mxu0 %v1885
    %6191 = vmatprep.subr.bf16.mxu0 %v1898
    %6192 = vmatpush1.bf16.msra.mxu0 %v1897
    %6193 = vmatprep.subr.bf16.mxu0 %v1910
    %6194 = vmatpush1.bf16.msra.mxu0 %v1909
    %6195 = vmatprep.subr.bf16.mxu0 %v1922
    %6196 = vmatpush1.bf16.msra.mxu0 %v1921
    %6197 = vmatprep.subr.bf16.mxu0 %v1934
    %6198 = vmatpush1.bf16.msra.mxu0 %v1933
    %6199 = vmatprep.subr.bf16.mxu0 %v1946
    %6200 = vmatpush1.bf16.msra.mxu0 %v1945
    %6201 = vmatprep.subr.bf16.mxu0 %v1958
    %6202 = vmatpush1.bf16.msra.mxu0 %v1957
    %6203 = vmatprep.subr.bf16.mxu0 %v1970
    %6204 = vmatpush1.bf16.msra.mxu0 %v1969
    %6205 = vmatprep.mubr.bf16.mxu0 %v6168
    %6206 = vmatmul.mubr.bf16.gmra.mrb[0].mxu0 %v6167
    %v6207 = vpop.f32.mrb[0].mxu0
    %v6208 = vadd.f32 0.0, %v6207
    %v6209 = vpop.f32.mrb[0].mxu0
    %v6210 = vadd.f32 0.0, %v6209
    %v6211 = vpop.f32.mrb[0].mxu0
    %v6212 = vpop.f32.mrb[0].mxu0
    %6213 = vdwg.mxu0
    %6214 = vmatprep.subr.bf16.mxu0 %v1982
    %6215 = vmatpush1.bf16.msra.mxu0 %v1981
    %6216 = vmatprep.subr.bf16.mxu0 %v1994
    %6217 = vmatpush1.bf16.msra.mxu0 %v1993
    %6218 = vmatprep.subr.bf16.mxu0 0
    %6219 = vmatpush1.bf16.msra.mxu0 0
    %6220 = vmatprep.subr.bf16.mxu0 0
    %6221 = vmatpush1.bf16.msra.mxu0 0
    %6222 = vmatprep.subr.bf16.mxu0 0
    %6223 = vmatpush1.bf16.msra.mxu0 0
    %6224 = vmatprep.subr.bf16.mxu0 0
    %6225 = vmatpush1.bf16.msra.mxu0 0
    %6226 = vmatprep.subr.bf16.mxu0 0
    %6227 = vmatpush1.bf16.msra.mxu0 0
    %6228 = vmatprep.subr.bf16.mxu0 0
    %6229 = vmatpush1.bf16.msra.mxu0 0
    %6230 = vmatprep.subr.bf16.mxu0 0
    %6231 = vmatpush1.bf16.msra.mxu0 0
    %6232 = vmatprep.subr.bf16.mxu0 0
    %6233 = vmatpush1.bf16.msra.mxu0 0
    %6234 = vmatprep.subr.bf16.mxu0 0
    %6235 = vmatpush1.bf16.msra.mxu0 0
    %6236 = vmatprep.subr.bf16.mxu0 0
    %6237 = vmatpush1.bf16.msra.mxu0 0
    %6238 = vmatprep.subr.bf16.mxu0 0
    %6239 = vmatpush1.bf16.msra.mxu0 0
    %6240 = vmatprep.subr.bf16.mxu0 0
    %6241 = vmatpush1.bf16.msra.mxu0 0
    %6242 = vmatprep.subr.bf16.mxu0 0
    %6243 = vmatpush1.bf16.msra.mxu0 0
    %6244 = vmatprep.subr.bf16.mxu0 0
    %6245 = vmatpush1.bf16.msra.mxu0 0
    %6246 = vmatprep.mubr.bf16.mxu0 0
    %6247 = vmatmul.mubr.bf16.gmra.mrb[0].mxu0 %v6171
    %v6248 = vpop.f32.mrb[0].mxu0
    %v6249 = vadd.f32 %v6208, %v6248
    %v6250 = vpop.f32.mrb[0].mxu0
    %v6251 = vadd.f32 %v6210, %v6250
    %v6252 = vpop.f32.mrb[0].mxu0
    %v6253 = vpop.f32.mrb[0].mxu0
    %6254 = vdwg.mxu0
    %6255 = vmatprep.subr.bf16.mxu0 %v1792
    %6256 = vmatpush1.bf16.msra.mxu0 %v1791
    %6257 = vmatprep.subr.bf16.mxu0 %v1804
    %6258 = vmatpush1.bf16.msra.mxu0 %v1803
    %6259 = vmatprep.subr.bf16.mxu0 %v1816
    %6260 = vmatpush1.bf16.msra.mxu0 %v1815
    %6261 = vmatprep.subr.bf16.mxu0 %v1828
    %6262 = vmatpush1.bf16.msra.mxu0 %v1827
    %6263 = vmatprep.subr.bf16.mxu0 %v1840
    %6264 = vmatpush1.bf16.msra.mxu0 %v1839
    %6265 = vmatprep.subr.bf16.mxu0 %v1852
    %6266 = vmatpush1.bf16.msra.mxu0 %v1851
    %6267 = vmatprep.subr.bf16.mxu0 %v1864
    %6268 = vmatpush1.bf16.msra.mxu0 %v1863
    %6269 = vmatprep.subr.bf16.mxu0 %v1876
    %6270 = vmatpush1.bf16.msra.mxu0 %v1875
    %6271 = vmatprep.subr.bf16.mxu0 %v1888
    %6272 = vmatpush1.bf16.msra.mxu0 %v1887
    %6273 = vmatprep.subr.bf16.mxu0 %v1900
    %6274 = vmatpush1.bf16.msra.mxu0 %v1899
    %6275 = vmatprep.subr.bf16.mxu0 %v1912
    %6276 = vmatpush1.bf16.msra.mxu0 %v1911
    %6277 = vmatprep.subr.bf16.mxu0 %v1924
    %6278 = vmatpush1.bf16.msra.mxu0 %v1923
    %6279 = vmatprep.subr.bf16.mxu0 %v1936
    %6280 = vmatpush1.bf16.msra.mxu0 %v1935
    %6281 = vmatprep.subr.bf16.mxu0 %v1948
    %6282 = vmatpush1.bf16.msra.mxu0 %v1947
    %6283 = vmatprep.subr.bf16.mxu0 %v1960
    %6284 = vmatpush1.bf16.msra.mxu0 %v1959
    %6285 = vmatprep.subr.bf16.mxu0 %v1972
    %6286 = vmatpush1.bf16.msra.mxu0 %v1971
    %6287 = vmatprep.mubr.bf16.mxu0 %v6168
    %6288 = vmatmul.mubr.bf16.gmra.mrb[0].mxu0 %v6167
    %v6289 = vpop.f32.mrb[0].mxu0
    %v6290 = vadd.f32 0.0, %v6289
    %v6291 = vpop.f32.mrb[0].mxu0
    %v6292 = vadd.f32 0.0, %v6291
    %v6293 = vpop.f32.mrb[0].mxu0
    %v6294 = vpop.f32.mrb[0].mxu0
    %6295 = vdwg.mxu0
    %6296 = vmatprep.subr.bf16.mxu0 %v1984
    %6297 = vmatpush1.bf16.msra.mxu0 %v1983
    %6298 = vmatprep.subr.bf16.mxu0 %v1996
    %6299 = vmatpush1.bf16.msra.mxu0 %v1995
    %6300 = vmatprep.subr.bf16.mxu0 0
    %6301 = vmatpush1.bf16.msra.mxu0 0
    %6302 = vmatprep.subr.bf16.mxu0 0
    %6303 = vmatpush1.bf16.msra.mxu0 0
    %6304 = vmatprep.subr.bf16.mxu0 0
    %6305 = vmatpush1.bf16.msra.mxu0 0
    %6306 = vmatprep.subr.bf16.mxu0 0
    %6307 = vmatpush1.bf16.msra.mxu0 0
    %6308 = vmatprep.subr.bf16.mxu0 0
    %6309 = vmatpush1.bf16.msra.mxu0 0
    %6310 = vmatprep.subr.bf16.mxu0 0
    %6311 = vmatpush1.bf16.msra.mxu0 0
    %6312 = vmatprep.subr.bf16.mxu0 0
    %6313 = vmatpush1.bf16.msra.mxu0 0
    %6314 = vmatprep.subr.bf16.mxu0 0
    %6315 = vmatpush1.bf16.msra.mxu0 0
    %6316 = vmatprep.subr.bf16.mxu0 0
    %6317 = vmatpush1.bf16.msra.mxu0 0
    %6318 = vmatprep.subr.bf16.mxu0 0
    %6319 = vmatpush1.bf16.msra.mxu0 0
    %6320 = vmatprep.subr.bf16.mxu0 0
    %6321 = vmatpush1.bf16.msra.mxu0 0
    %6322 = vmatprep.subr.bf16.mxu0 0
    %6323 = vmatpush1.bf16.msra.mxu0 0
    %6324 = vmatprep.subr.bf16.mxu0 0
    %6325 = vmatpush1.bf16.msra.mxu0 0
    %6326 = vmatprep.subr.bf16.mxu0 0
    %6327 = vmatpush1.bf16.msra.mxu0 0
    %6328 = vmatprep.mubr.bf16.mxu0 0
    %6329 = vmatmul.mubr.bf16.gmra.mrb[0].mxu0 %v6171
    %v6330 = vpop.f32.mrb[0].mxu0
    %v6331 = vadd.f32 %v6290, %v6330
    %v6332 = vpop.f32.mrb[0].mxu0
    %v6333 = vadd.f32 %v6292, %v6332
    %v6334 = vpop.f32.mrb[0].mxu0
    %v6335 = vpop.f32.mrb[0].mxu0
    %6336 = vdwg.mxu0
    %6337 = vmatprep.subr.bf16.mxu0 %v1794
    %6338 = vmatpush1.bf16.msra.mxu0 %v1793
    %6339 = vmatprep.subr.bf16.mxu0 %v1806
    %6340 = vmatpush1.bf16.msra.mxu0 %v1805
    %6341 = vmatprep.subr.bf16.mxu0 %v1818
    %6342 = vmatpush1.bf16.msra.mxu0 %v1817
    %6343 = vmatprep.subr.bf16.mxu0 %v1830
    %6344 = vmatpush1.bf16.msra.mxu0 %v1829
    %6345 = vmatprep.subr.bf16.mxu0 %v1842
    %6346 = vmatpush1.bf16.msra.mxu0 %v1841
    %6347 = vmatprep.subr.bf16.mxu0 %v1854
    %6348 = vmatpush1.bf16.msra.mxu0 %v1853
    %6349 = vmatprep.subr.bf16.mxu0 %v1866
    %6350 = vmatpush1.bf16.msra.mxu0 %v1865
    %6351 = vmatprep.subr.bf16.mxu0 %v1878
    %6352 = vmatpush1.bf16.msra.mxu0 %v1877
    %6353 = vmatprep.subr.bf16.mxu0 %v1890
    %6354 = vmatpush1.bf16.msra.mxu0 %v1889
    %6355 = vmatprep.subr.bf16.mxu0 %v1902
    %6356 = vmatpush1.bf16.msra.mxu0 %v1901
    %6357 = vmatprep.subr.bf16.mxu0 %v1914
    %6358 = vmatpush1.bf16.msra.mxu0 %v1913
    %6359 = vmatprep.subr.bf16.mxu0 %v1926
    %6360 = vmatpush1.bf16.msra.mxu0 %v1925
    %6361 = vmatprep.subr.bf16.mxu0 %v1938
    %6362 = vmatpush1.bf16.msra.mxu0 %v1937
    %6363 = vmatprep.subr.bf16.mxu0 %v1950
    %6364 = vmatpush1.bf16.msra.mxu0 %v1949
    %6365 = vmatprep.subr.bf16.mxu0 %v1962
    %6366 = vmatpush1.bf16.msra.mxu0 %v1961
    %6367 = vmatprep.subr.bf16.mxu0 %v1974
    %6368 = vmatpush1.bf16.msra.mxu0 %v1973
    %6369 = vmatprep.mubr.bf16.mxu0 %v6168
    %6370 = vmatmul.mubr.bf16.gmra.mrb[0].mxu0 %v6167
    %v6371 = vpop.f32.mrb[0].mxu0
    %v6372 = vadd.f32 0.0, %v6371
    %v6373 = vpop.f32.mrb[0].mxu0
    %v6374 = vadd.f32 0.0, %v6373
    %v6375 = vpop.f32.mrb[0].mxu0
    %v6376 = vpop.f32.mrb[0].mxu0
    %6377 = vdwg.mxu0
    %6378 = vmatprep.subr.bf16.mxu0 %v1986
    %6379 = vmatpush1.bf16.msra.mxu0 %v1985
    %6380 = vmatprep.subr.bf16.mxu0 %v1998
    %6381 = vmatpush1.bf16.msra.mxu0 %v1997
    %6382 = vmatprep.subr.bf16.mxu0 0
    %6383 = vmatpush1.bf16.msra.mxu0 0
    %6384 = vmatprep.subr.bf16.mxu0 0
    %6385 = vmatpush1.bf16.msra.mxu0 0
    %6386 = vmatprep.subr.bf16.mxu0 0
    %6387 = vmatpush1.bf16.msra.mxu0 0
    %6388 = vmatprep.subr.bf16.mxu0 0
    %6389 = vmatpush1.bf16.msra.mxu0 0
    %6390 = vmatprep.subr.bf16.mxu0 0
    %6391 = vmatpush1.bf16.msra.mxu0 0
    %6392 = vmatprep.subr.bf16.mxu0 0
    %6393 = vmatpush1.bf16.msra.mxu0 0
    %6394 = vmatprep.subr.bf16.mxu0 0
    %6395 = vmatpush1.bf16.msra.mxu0 0
    %6396 = vmatprep.subr.bf16.mxu0 0
    %6397 = vmatpush1.bf16.msra.mxu0 0
    %6398 = vmatprep.subr.bf16.mxu0 0
    %6399 = vmatpush1.bf16.msra.mxu0 0
    %6400 = vmatprep.subr.bf16.mxu0 0
    %6401 = vmatpush1.bf16.msra.mxu0 0
    %6402 = vmatprep.subr.bf16.mxu0 0
    %6403 = vmatpush1.bf16.msra.mxu0 0
    %6404 = vmatprep.subr.bf16.mxu0 0
    %6405 = vmatpush1.bf16.msra.mxu0 0
    %6406 = vmatprep.subr.bf16.mxu0 0
    %6407 = vmatpush1.bf16.msra.mxu0 0
    %6408 = vmatprep.subr.bf16.mxu0 0
    %6409 = vmatpush1.bf16.msra.mxu0 0
    %6410 = vmatprep.mubr.bf16.mxu0 0
    %6411 = vmatmul.mubr.bf16.gmra.mrb[0].mxu0 %v6171
    %v6412 = vpop.f32.mrb[0].mxu0
    %v6413 = vadd.f32 %v6372, %v6412
    %v6414 = vpop.f32.mrb[0].mxu0
    %v6415 = vadd.f32 %v6374, %v6414
    %v6416 = vpop.f32.mrb[0].mxu0
    %v6417 = vpop.f32.mrb[0].mxu0
    %6418 = vdwg.mxu0
    %6419 = vmatprep.subr.bf16.mxu0 %v1796
    %6420 = vmatpush1.bf16.msra.mxu0 %v1795
    %6421 = vmatprep.subr.bf16.mxu0 %v1808
    %6422 = vmatpush1.bf16.msra.mxu0 %v1807
    %6423 = vmatprep.subr.bf16.mxu0 %v1820
    %6424 = vmatpush1.bf16.msra.mxu0 %v1819
    %6425 = vmatprep.subr.bf16.mxu0 %v1832
    %6426 = vmatpush1.bf16.msra.mxu0 %v1831
    %6427 = vmatprep.subr.bf16.mxu0 %v1844
    %6428 = vmatpush1.bf16.msra.mxu0 %v1843
    %6429 = vmatprep.subr.bf16.mxu0 %v1856
    %6430 = vmatpush1.bf16.msra.mxu0 %v1855
    %6431 = vmatprep.subr.bf16.mxu0 %v1868
    %6432 = vmatpush1.bf16.msra.mxu0 %v1867
    %6433 = vmatprep.subr.bf16.mxu0 %v1880
    %6434 = vmatpush1.bf16.msra.mxu0 %v1879
    %6435 = vmatprep.subr.bf16.mxu0 %v1892
    %6436 = vmatpush1.bf16.msra.mxu0 %v1891
    %6437 = vmatprep.subr.bf16.mxu0 %v1904
    %6438 = vmatpush1.bf16.msra.mxu0 %v1903
    %6439 = vmatprep.subr.bf16.mxu0 %v1916
    %6440 = vmatpush1.bf16.msra.mxu0 %v1915
    %6441 = vmatprep.subr.bf16.mxu0 %v1928
    %6442 = vmatpush1.bf16.msra.mxu0 %v1927
    %6443 = vmatprep.subr.bf16.mxu0 %v1940
    %6444 = vmatpush1.bf16.msra.mxu0 %v1939
    %6445 = vmatprep.subr.bf16.mxu0 %v1952
    %6446 = vmatpush1.bf16.msra.mxu0 %v1951
    %6447 = vmatprep.subr.bf16.mxu0 %v1964
    %6448 = vmatpush1.bf16.msra.mxu0 %v1963
    %6449 = vmatprep.subr.bf16.mxu0 %v1976
    %6450 = vmatpush1.bf16.msra.mxu0 %v1975
    %6451 = vmatprep.mubr.bf16.mxu0 %v6168
    %6452 = vmatmul.mubr.bf16.gmra.mrb[0].mxu0 %v6167
    %v6453 = vpop.f32.mrb[0].mxu0
    %v6454 = vadd.f32 0.0, %v6453
    %v6455 = vpop.f32.mrb[0].mxu0
    %v6456 = vadd.f32 0.0, %v6455
    %v6457 = vpop.f32.mrb[0].mxu0
    %v6458 = vpop.f32.mrb[0].mxu0
    %6459 = vdwg.mxu0
    %6460 = vmatprep.subr.bf16.mxu0 %v1988
    %6461 = vmatpush1.bf16.msra.mxu0 %v1987
    %6462 = vmatprep.subr.bf16.mxu0 %v2000
    %6463 = vmatpush1.bf16.msra.mxu0 %v1999
    %6464 = vmatprep.subr.bf16.mxu0 0
    %6465 = vmatpush1.bf16.msra.mxu0 0
    %6466 = vmatprep.subr.bf16.mxu0 0
    %6467 = vmatpush1.bf16.msra.mxu0 0
    %6468 = vmatprep.subr.bf16.mxu0 0
    %6469 = vmatpush1.bf16.msra.mxu0 0
    %6470 = vmatprep.subr.bf16.mxu0 0
    %6471 = vmatpush1.bf16.msra.mxu0 0
    %6472 = vmatprep.subr.bf16.mxu0 0
    %6473 = vmatpush1.bf16.msra.mxu0 0
    %6474 = vmatprep.subr.bf16.mxu0 0
    %6475 = vmatpush1.bf16.msra.mxu0 0
    %6476 = vmatprep.subr.bf16.mxu0 0
    %6477 = vmatpush1.bf16.msra.mxu0 0
    %6478 = vmatprep.subr.bf16.mxu0 0
    %6479 = vmatpush1.bf16.msra.mxu0 0
    %6480 = vmatprep.subr.bf16.mxu0 0
    %6481 = vmatpush1.bf16.msra.mxu0 0
    %6482 = vmatprep.subr.bf16.mxu0 0
    %6483 = vmatpush1.bf16.msra.mxu0 0
    %6484 = vmatprep.subr.bf16.mxu0 0
    %6485 = vmatpush1.bf16.msra.mxu0 0
    %6486 = vmatprep.subr.bf16.mxu0 0
    %6487 = vmatpush1.bf16.msra.mxu0 0
    %6488 = vmatprep.subr.bf16.mxu0 0
    %6489 = vmatpush1.bf16.msra.mxu0 0
    %6490 = vmatprep.subr.bf16.mxu0 0
    %6491 = vmatpush1.bf16.msra.mxu0 0
    %6492 = vmatprep.mubr.bf16.mxu0 0
    %6493 = vmatmul.mubr.bf16.gmra.mrb[0].mxu0 %v6171
    %v6494 = vpop.f32.mrb[0].mxu0
    %v6495 = vadd.f32 %v6454, %v6494
    %v6496 = vpop.f32.mrb[0].mxu0
    %v6497 = vadd.f32 %v6456, %v6496
    %v6498 = vpop.f32.mrb[0].mxu0
    %v6499 = vpop.f32.mrb[0].mxu0
    %6500 = vdwg.mxu0
    %6501 = vmatprep.subr.bf16.mxu0 %v1798
    %6502 = vmatpush1.bf16.msra.mxu0 %v1797
    %6503 = vmatprep.subr.bf16.mxu0 %v1810
    %6504 = vmatpush1.bf16.msra.mxu0 %v1809
    %6505 = vmatprep.subr.bf16.mxu0 %v1822
    %6506 = vmatpush1.bf16.msra.mxu0 %v1821
    %6507 = vmatprep.subr.bf16.mxu0 %v1834
    %6508 = vmatpush1.bf16.msra.mxu0 %v1833
    %6509 = vmatprep.subr.bf16.mxu0 %v1846
    %6510 = vmatpush1.bf16.msra.mxu0 %v1845
    %6511 = vmatprep.subr.bf16.mxu0 %v1858
    %6512 = vmatpush1.bf16.msra.mxu0 %v1857
    %6513 = vmatprep.subr.bf16.mxu0 %v1870
    %6514 = vmatpush1.bf16.msra.mxu0 %v1869
    %6515 = vmatprep.subr.bf16.mxu0 %v1882
    %6516 = vmatpush1.bf16.msra.mxu0 %v1881
    %6517 = vmatprep.subr.bf16.mxu0 %v1894
    %6518 = vmatpush1.bf16.msra.mxu0 %v1893
    %6519 = vmatprep.subr.bf16.mxu0 %v1906
    %6520 = vmatpush1.bf16.msra.mxu0 %v1905
    %6521 = vmatprep.subr.bf16.mxu0 %v1918
    %6522 = vmatpush1.bf16.msra.mxu0 %v1917
    %6523 = vmatprep.subr.bf16.mxu0 %v1930
    %6524 = vmatpush1.bf16.msra.mxu0 %v1929
    %6525 = vmatprep.subr.bf16.mxu0 %v1942
    %6526 = vmatpush1.bf16.msra.mxu0 %v1941
    %6527 = vmatprep.subr.bf16.mxu0 %v1954
    %6528 = vmatpush1.bf16.msra.mxu0 %v1953
    %6529 = vmatprep.subr.bf16.mxu0 %v1966
    %6530 = vmatpush1.bf16.msra.mxu0 %v1965
    %6531 = vmatprep.subr.bf16.mxu0 %v1978
    %6532 = vmatpush1.bf16.msra.mxu0 %v1977
    %6533 = vmatprep.mubr.bf16.mxu0 %v6168
    %6534 = vmatmul.mubr.bf16.gmra.mrb[0].mxu0 %v6167
    %v6535 = vpop.f32.mrb[0].mxu0
    %v6536 = vadd.f32 0.0, %v6535
    %v6537 = vpop.f32.mrb[0].mxu0
    %v6538 = vadd.f32 0.0, %v6537
    %v6539 = vpop.f32.mrb[0].mxu0
    %v6540 = vpop.f32.mrb[0].mxu0
    %6541 = vdwg.mxu0
    %6542 = vmatprep.subr.bf16.mxu0 %v1990
    %6543 = vmatpush1.bf16.msra.mxu0 %v1989
    %6544 = vmatprep.subr.bf16.mxu0 %v2002
    %6545 = vmatpush1.bf16.msra.mxu0 %v2001
    %6546 = vmatprep.subr.bf16.mxu0 0
    %6547 = vmatpush1.bf16.msra.mxu0 0
    %6548 = vmatprep.subr.bf16.mxu0 0
    %6549 = vmatpush1.bf16.msra.mxu0 0
    %6550 = vmatprep.subr.bf16.mxu0 0
    %6551 = vmatpush1.bf16.msra.mxu0 0
    %6552 = vmatprep.subr.bf16.mxu0 0
    %6553 = vmatpush1.bf16.msra.mxu0 0
    %6554 = vmatprep.subr.bf16.mxu0 0
    %6555 = vmatpush1.bf16.msra.mxu0 0
    %6556 = vmatprep.subr.bf16.mxu0 0
    %6557 = vmatpush1.bf16.msra.mxu0 0
    %6558 = vmatprep.subr.bf16.mxu0 0
    %6559 = vmatpush1.bf16.msra.mxu0 0
    %6560 = vmatprep.subr.bf16.mxu0 0
    %6561 = vmatpush1.bf16.msra.mxu0 0
    %6562 = vmatprep.subr.bf16.mxu0 0
    %6563 = vmatpush1.bf16.msra.mxu0 0
    %6564 = vmatprep.subr.bf16.mxu0 0
    %6565 = vmatpush1.bf16.msra.mxu0 0
    %6566 = vmatprep.subr.bf16.mxu0 0
    %6567 = vmatpush1.bf16.msra.mxu0 0
    %6568 = vmatprep.subr.bf16.mxu0 0
    %6569 = vmatpush1.bf16.msra.mxu0 0
    %6570 = vmatprep.subr.bf16.mxu0 0
    %6571 = vmatpush1.bf16.msra.mxu0 0
    %6572 = vmatprep.subr.bf16.mxu0 0
    %6573 = vmatpush1.bf16.msra.mxu0 0
    %6574 = vmatprep.mubr.bf16.mxu0 0
    %6575 = vmatmul.mubr.bf16.gmra.mrb[0].mxu0 %v6171
    %v6576 = vpop.f32.mrb[0].mxu0
    %v6577 = vadd.f32 %v6536, %v6576
    %v6578 = vpop.f32.mrb[0].mxu0
    %v6579 = vadd.f32 %v6538, %v6578
    %v6580 = vpop.f32.mrb[0].mxu0
    %v6581 = vpop.f32.mrb[0].mxu0
    %6582 = vdwg.mxu0
    %6583 = vmatprep.subr.bf16.mxu0 %v1800
    %6584 = vmatpush1.bf16.msra.mxu0 %v1799
    %6585 = vmatprep.subr.bf16.mxu0 %v1812
    %6586 = vmatpush1.bf16.msra.mxu0 %v1811
    %6587 = vmatprep.subr.bf16.mxu0 %v1824
    %6588 = vmatpush1.bf16.msra.mxu0 %v1823
    %6589 = vmatprep.subr.bf16.mxu0 %v1836
    %6590 = vmatpush1.bf16.msra.mxu0 %v1835
    %6591 = vmatprep.subr.bf16.mxu0 %v1848
    %6592 = vmatpush1.bf16.msra.mxu0 %v1847
    %6593 = vmatprep.subr.bf16.mxu0 %v1860
    %6594 = vmatpush1.bf16.msra.mxu0 %v1859
    %6595 = vmatprep.subr.bf16.mxu0 %v1872
    %6596 = vmatpush1.bf16.msra.mxu0 %v1871
    %6597 = vmatprep.subr.bf16.mxu0 %v1884
    %6598 = vmatpush1.bf16.msra.mxu0 %v1883
    %6599 = vmatprep.subr.bf16.mxu0 %v1896
    %6600 = vmatpush1.bf16.msra.mxu0 %v1895
    %6601 = vmatprep.subr.bf16.mxu0 %v1908
    %6602 = vmatpush1.bf16.msra.mxu0 %v1907
    %6603 = vmatprep.subr.bf16.mxu0 %v1920
    %6604 = vmatpush1.bf16.msra.mxu0 %v1919
    %6605 = vmatprep.subr.bf16.mxu0 %v1932
    %6606 = vmatpush1.bf16.msra.mxu0 %v1931
    %6607 = vmatprep.subr.bf16.mxu0 %v1944
    %6608 = vmatpush1.bf16.msra.mxu0 %v1943
    %6609 = vmatprep.subr.bf16.mxu0 %v1956
    %6610 = vmatpush1.bf16.msra.mxu0 %v1955
    %6611 = vmatprep.subr.bf16.mxu0 %v1968
    %6612 = vmatpush1.bf16.msra.mxu0 %v1967
    %6613 = vmatprep.subr.bf16.mxu0 %v1980
    %6614 = vmatpush1.bf16.msra.mxu0 %v1979
    %6615 = vmatprep.mubr.bf16.mxu0 %v6168
    %6616 = vmatmul.mubr.bf16.gmra.mrb[0].mxu0 %v6167
    %v6617 = vpop.f32.mrb[0].mxu0
    %v6618 = vadd.f32 0.0, %v6617
    %v6619 = vpop.f32.mrb[0].mxu0
    %v6620 = vadd.f32 0.0, %v6619
    %v6621 = vpop.f32.mrb[0].mxu0
    %v6622 = vpop.f32.mrb[0].mxu0
    %6623 = vdwg.mxu0
    %6624 = vmatprep.subr.bf16.mxu0 %v1992
    %6625 = vmatpush1.bf16.msra.mxu0 %v1991
    %6626 = vmatprep.subr.bf16.mxu0 %v2004
    %6627 = vmatpush1.bf16.msra.mxu0 %v2003
    %6628 = vmatprep.subr.bf16.mxu0 0
    %6629 = vmatpush1.bf16.msra.mxu0 0
    %6630 = vmatprep.subr.bf16.mxu0 0
    %6631 = vmatpush1.bf16.msra.mxu0 0
    %6632 = vmatprep.subr.bf16.mxu0 0
    %6633 = vmatpush1.bf16.msra.mxu0 0
    %6634 = vmatprep.subr.bf16.mxu0 0
    %6635 = vmatpush1.bf16.msra.mxu0 0
    %6636 = vmatprep.subr.bf16.mxu0 0
    %6637 = vmatpush1.bf16.msra.mxu0 0
    %6638 = vmatprep.subr.bf16.mxu0 0
    %6639 = vmatpush1.bf16.msra.mxu0 0
    %6640 = vmatprep.subr.bf16.mxu0 0
    %6641 = vmatpush1.bf16.msra.mxu0 0
    %6642 = vmatprep.subr.bf16.mxu0 0
    %6643 = vmatpush1.bf16.msra.mxu0 0
    %6644 = vmatprep.subr.bf16.mxu0 0
    %6645 = vmatpush1.bf16.msra.mxu0 0
    %6646 = vmatprep.subr.bf16.mxu0 0
    %6647 = vmatpush1.bf16.msra.mxu0 0
    %6648 = vmatprep.subr.bf16.mxu0 0
    %6649 = vmatpush1.bf16.msra.mxu0 0
    %6650 = vmatprep.subr.bf16.mxu0 0
    %6651 = vmatpush1.bf16.msra.mxu0 0
    %6652 = vmatprep.subr.bf16.mxu0 0
    %6653 = vmatpush1.bf16.msra.mxu0 0
    %6654 = vmatprep.subr.bf16.mxu0 0
    %6655 = vmatpush1.bf16.msra.mxu0 0
    %6656 = vmatprep.mubr.bf16.mxu0 0
    %6657 = vmatmul.mubr.bf16.gmra.mrb[0].mxu0 %v6171
    %v6658 = vpop.f32.mrb[0].mxu0
    %v6659 = vadd.f32 %v6618, %v6658
    %v6660 = vpop.f32.mrb[0].mxu0
    %v6661 = vadd.f32 %v6620, %v6660
    %v6662 = vpop.f32.mrb[0].mxu0
    %v6663 = vpop.f32.mrb[0].mxu0
    %6664 = vdwg.mxu0
    %v6665 = vadd.f32 %v328, %v6249
    %v6666 = vadd.f32 %v330, %v6251
    %v6667 = vadd.f32 %v439, %v6331
    %v6668 = vadd.f32 %v441, %v6333
    %v6669 = vadd.f32 %v550, %v6413
    %v6670 = vadd.f32 %v552, %v6415
    %v6671 = vadd.f32 %v661, %v6495
    %v6672 = vadd.f32 %v663, %v6497
    %v6673 = vadd.f32 %v772, %v6577
    %v6674 = vadd.f32 %v774, %v6579
    %v6675 = vadd.f32 %v883, %v6659
    %v6676 = vadd.f32 %v885, %v6661
    %v6677 = vmul.f32 %v6665, 0.5
    %v6678 = vmul.f32 %v6666, 0.5
    %v6679 = vmul.f32 %v6667, 0.5
    %v6680 = vtanh.pop %v6677
    %v6681 = vtanh.pop %v6678
    %v6682 = vtanh.pop %v6679
    %v6683 = vmul.f32 %v6680, 0.5
    %v6684 = vmul.f32 %v6681, 0.5
    %v6685 = vmul.f32 %v6682, 0.5
    %v6686 = vadd.f32 %v6683, 0.5
    %v6687 = vadd.f32 %v6684, 0.5
    %v6688 = vadd.f32 %v6685, 0.5
    %v6689 = vmul.f32 %v6668, 0.5
    %v6690 = vmul.f32 %v6669, 0.5
    %v6691 = vmul.f32 %v6670, 0.5
    %v6692 = vtanh.pop %v6689
    %v6693 = vtanh.pop %v6690
    %v6694 = vtanh.pop %v6691
    %v6695 = vmul.f32 %v6692, 0.5
    %v6696 = vmul.f32 %v6693, 0.5
    %v6697 = vmul.f32 %v6694, 0.5
    %v6698 = vadd.f32 %v6695, 0.5
    %v6699 = vadd.f32 %v6696, 0.5
    %v6700 = vadd.f32 %v6697, 0.5
    %v6701 = vtanh.pop %v6671
    %v6702 = vtanh.pop %v6672
    %v6703 = vtanh.pop %v6673
    %v6704 = vmul.f32 %v6674, 0.5
    %v6705 = vmul.f32 %v6675, 0.5
    %v6706 = vmul.f32 %v6676, 0.5
    %v6707 = vtanh.pop %v6704
    %v6708 = vtanh.pop %v6705
    %v6709 = vtanh.pop %v6706
    %v6710 = vmul.f32 %v6707, 0.5
    %v6711 = vmul.f32 %v6708, 0.5
    %v6712 = vmul.f32 %v6709, 0.5
    %v6713 = vadd.f32 %v6710, 0.5
    %v6714 = vadd.f32 %v6711, 0.5
    %v6715 = vadd.f32 %v6712, 0.5
    %v6716 = vmul.f32 %v6698, %v6158
    %v6717 = vmul.f32 %v6699, %v6159
    %v6718 = vmul.f32 %v6700, %v6160
    %v6719 = vmul.f32 %v6686, %v6701
    %v6720 = vmul.f32 %v6687, %v6702
    %v6721 = vmul.f32 %v6688, %v6703
    %v6722 = vadd.f32 %v6716, %v6719
    %v6723 = vadd.f32 %v6717, %v6720
    %v6724 = vadd.f32 %v6718, %v6721
    %v6725 = vtanh.pop %v6722
    %v6726 = vtanh.pop %v6723
    %v6727 = vtanh.pop %v6724
    %v6728 = vmul.f32 %v6713, %v6725
    %v6729 = vmul.f32 %v6714, %v6726
    %v6730 = vmul.f32 %v6715, %v6727
    %v6731 = vpack.c.bf16 %v6728, %v6728
    %v6732 = vpack.c.bf16 %v6729, %v6729
    %v6733 = vpack.c.bf16 %v6730, %v6730
    %v6735 = vsel %vm2221, %v6733, 0
    %6737 = vmatprep.subr.bf16.mxu0 %v1790
    %6738 = vmatpush1.bf16.msra.mxu0 %v1789
    %6739 = vmatprep.subr.bf16.mxu0 %v1802
    %6740 = vmatpush1.bf16.msra.mxu0 %v1801
    %6741 = vmatprep.subr.bf16.mxu0 %v1814
    %6742 = vmatpush1.bf16.msra.mxu0 %v1813
    %6743 = vmatprep.subr.bf16.mxu0 %v1826
    %6744 = vmatpush1.bf16.msra.mxu0 %v1825
    %6745 = vmatprep.subr.bf16.mxu0 %v1838
    %6746 = vmatpush1.bf16.msra.mxu0 %v1837
    %6747 = vmatprep.subr.bf16.mxu0 %v1850
    %6748 = vmatpush1.bf16.msra.mxu0 %v1849
    %6749 = vmatprep.subr.bf16.mxu0 %v1862
    %6750 = vmatpush1.bf16.msra.mxu0 %v1861
    %6751 = vmatprep.subr.bf16.mxu0 %v1874
    %6752 = vmatpush1.bf16.msra.mxu0 %v1873
    %6753 = vmatprep.subr.bf16.mxu0 %v1886
    %6754 = vmatpush1.bf16.msra.mxu0 %v1885
    %6755 = vmatprep.subr.bf16.mxu0 %v1898
    %6756 = vmatpush1.bf16.msra.mxu0 %v1897
    %6757 = vmatprep.subr.bf16.mxu0 %v1910
    %6758 = vmatpush1.bf16.msra.mxu0 %v1909
    %6759 = vmatprep.subr.bf16.mxu0 %v1922
    %6760 = vmatpush1.bf16.msra.mxu0 %v1921
    %6761 = vmatprep.subr.bf16.mxu0 %v1934
    %6762 = vmatpush1.bf16.msra.mxu0 %v1933
    %6763 = vmatprep.subr.bf16.mxu0 %v1946
    %6764 = vmatpush1.bf16.msra.mxu0 %v1945
    %6765 = vmatprep.subr.bf16.mxu0 %v1958
    %6766 = vmatpush1.bf16.msra.mxu0 %v1957
    %6767 = vmatprep.subr.bf16.mxu0 %v1970
    %6768 = vmatpush1.bf16.msra.mxu0 %v1969
    %6769 = vmatprep.mubr.bf16.mxu0 %v6732
    %6770 = vmatmul.mubr.bf16.gmra.mrb[0].mxu0 %v6731
    %v6771 = vpop.f32.mrb[0].mxu0
    %v6772 = vadd.f32 0.0, %v6771
    %v6773 = vpop.f32.mrb[0].mxu0
    %v6774 = vadd.f32 0.0, %v6773
    %v6775 = vpop.f32.mrb[0].mxu0
    %v6776 = vpop.f32.mrb[0].mxu0
    %6777 = vdwg.mxu0
    %6778 = vmatprep.subr.bf16.mxu0 %v1982
    %6779 = vmatpush1.bf16.msra.mxu0 %v1981
    %6780 = vmatprep.subr.bf16.mxu0 %v1994
    %6781 = vmatpush1.bf16.msra.mxu0 %v1993
    %6782 = vmatprep.subr.bf16.mxu0 0
    %6783 = vmatpush1.bf16.msra.mxu0 0
    %6784 = vmatprep.subr.bf16.mxu0 0
    %6785 = vmatpush1.bf16.msra.mxu0 0
    %6786 = vmatprep.subr.bf16.mxu0 0
    %6787 = vmatpush1.bf16.msra.mxu0 0
    %6788 = vmatprep.subr.bf16.mxu0 0
    %6789 = vmatpush1.bf16.msra.mxu0 0
    %6790 = vmatprep.subr.bf16.mxu0 0
    %6791 = vmatpush1.bf16.msra.mxu0 0
    %6792 = vmatprep.subr.bf16.mxu0 0
    %6793 = vmatpush1.bf16.msra.mxu0 0
    %6794 = vmatprep.subr.bf16.mxu0 0
    %6795 = vmatpush1.bf16.msra.mxu0 0
    %6796 = vmatprep.subr.bf16.mxu0 0
    %6797 = vmatpush1.bf16.msra.mxu0 0
    %6798 = vmatprep.subr.bf16.mxu0 0
    %6799 = vmatpush1.bf16.msra.mxu0 0
    %6800 = vmatprep.subr.bf16.mxu0 0
    %6801 = vmatpush1.bf16.msra.mxu0 0
    %6802 = vmatprep.subr.bf16.mxu0 0
    %6803 = vmatpush1.bf16.msra.mxu0 0
    %6804 = vmatprep.subr.bf16.mxu0 0
    %6805 = vmatpush1.bf16.msra.mxu0 0
    %6806 = vmatprep.subr.bf16.mxu0 0
    %6807 = vmatpush1.bf16.msra.mxu0 0
    %6808 = vmatprep.subr.bf16.mxu0 0
    %6809 = vmatpush1.bf16.msra.mxu0 0
    %6810 = vmatprep.mubr.bf16.mxu0 0
    %6811 = vmatmul.mubr.bf16.gmra.mrb[0].mxu0 %v6735
    %v6812 = vpop.f32.mrb[0].mxu0
    %v6813 = vadd.f32 %v6772, %v6812
    %v6814 = vpop.f32.mrb[0].mxu0
    %v6815 = vadd.f32 %v6774, %v6814
    %v6816 = vpop.f32.mrb[0].mxu0
    %v6817 = vpop.f32.mrb[0].mxu0
    %6818 = vdwg.mxu0
    %6819 = vmatprep.subr.bf16.mxu0 %v1792
    %6820 = vmatpush1.bf16.msra.mxu0 %v1791
    %6821 = vmatprep.subr.bf16.mxu0 %v1804
    %6822 = vmatpush1.bf16.msra.mxu0 %v1803
    %6823 = vmatprep.subr.bf16.mxu0 %v1816
    %6824 = vmatpush1.bf16.msra.mxu0 %v1815
    %6825 = vmatprep.subr.bf16.mxu0 %v1828
    %6826 = vmatpush1.bf16.msra.mxu0 %v1827
    %6827 = vmatprep.subr.bf16.mxu0 %v1840
    %6828 = vmatpush1.bf16.msra.mxu0 %v1839
    %6829 = vmatprep.subr.bf16.mxu0 %v1852
    %6830 = vmatpush1.bf16.msra.mxu0 %v1851
    %6831 = vmatprep.subr.bf16.mxu0 %v1864
    %6832 = vmatpush1.bf16.msra.mxu0 %v1863
    %6833 = vmatprep.subr.bf16.mxu0 %v1876
    %6834 = vmatpush1.bf16.msra.mxu0 %v1875
    %6835 = vmatprep.subr.bf16.mxu0 %v1888
    %6836 = vmatpush1.bf16.msra.mxu0 %v1887
    %6837 = vmatprep.subr.bf16.mxu0 %v1900
    %6838 = vmatpush1.bf16.msra.mxu0 %v1899
    %6839 = vmatprep.subr.bf16.mxu0 %v1912
    %6840 = vmatpush1.bf16.msra.mxu0 %v1911
    %6841 = vmatprep.subr.bf16.mxu0 %v1924
    %6842 = vmatpush1.bf16.msra.mxu0 %v1923
    %6843 = vmatprep.subr.bf16.mxu0 %v1936
    %6844 = vmatpush1.bf16.msra.mxu0 %v1935
    %6845 = vmatprep.subr.bf16.mxu0 %v1948
    %6846 = vmatpush1.bf16.msra.mxu0 %v1947
    %6847 = vmatprep.subr.bf16.mxu0 %v1960
    %6848 = vmatpush1.bf16.msra.mxu0 %v1959
    %6849 = vmatprep.subr.bf16.mxu0 %v1972
    %6850 = vmatpush1.bf16.msra.mxu0 %v1971
    %6851 = vmatprep.mubr.bf16.mxu0 %v6732
    %6852 = vmatmul.mubr.bf16.gmra.mrb[0].mxu0 %v6731
    %v6853 = vpop.f32.mrb[0].mxu0
    %v6854 = vadd.f32 0.0, %v6853
    %v6855 = vpop.f32.mrb[0].mxu0
    %v6856 = vadd.f32 0.0, %v6855
    %v6857 = vpop.f32.mrb[0].mxu0
    %v6858 = vpop.f32.mrb[0].mxu0
    %6859 = vdwg.mxu0
    %6860 = vmatprep.subr.bf16.mxu0 %v1984
    %6861 = vmatpush1.bf16.msra.mxu0 %v1983
    %6862 = vmatprep.subr.bf16.mxu0 %v1996
    %6863 = vmatpush1.bf16.msra.mxu0 %v1995
    %6864 = vmatprep.subr.bf16.mxu0 0
    %6865 = vmatpush1.bf16.msra.mxu0 0
    %6866 = vmatprep.subr.bf16.mxu0 0
    %6867 = vmatpush1.bf16.msra.mxu0 0
    %6868 = vmatprep.subr.bf16.mxu0 0
    %6869 = vmatpush1.bf16.msra.mxu0 0
    %6870 = vmatprep.subr.bf16.mxu0 0
    %6871 = vmatpush1.bf16.msra.mxu0 0
    %6872 = vmatprep.subr.bf16.mxu0 0
    %6873 = vmatpush1.bf16.msra.mxu0 0
    %6874 = vmatprep.subr.bf16.mxu0 0
    %6875 = vmatpush1.bf16.msra.mxu0 0
    %6876 = vmatprep.subr.bf16.mxu0 0
    %6877 = vmatpush1.bf16.msra.mxu0 0
    %6878 = vmatprep.subr.bf16.mxu0 0
    %6879 = vmatpush1.bf16.msra.mxu0 0
    %6880 = vmatprep.subr.bf16.mxu0 0
    %6881 = vmatpush1.bf16.msra.mxu0 0
    %6882 = vmatprep.subr.bf16.mxu0 0
    %6883 = vmatpush1.bf16.msra.mxu0 0
    %6884 = vmatprep.subr.bf16.mxu0 0
    %6885 = vmatpush1.bf16.msra.mxu0 0
    %6886 = vmatprep.subr.bf16.mxu0 0
    %6887 = vmatpush1.bf16.msra.mxu0 0
    %6888 = vmatprep.subr.bf16.mxu0 0
    %6889 = vmatpush1.bf16.msra.mxu0 0
    %6890 = vmatprep.subr.bf16.mxu0 0
    %6891 = vmatpush1.bf16.msra.mxu0 0
    %6892 = vmatprep.mubr.bf16.mxu0 0
    %6893 = vmatmul.mubr.bf16.gmra.mrb[0].mxu0 %v6735
    %v6894 = vpop.f32.mrb[0].mxu0
    %v6895 = vadd.f32 %v6854, %v6894
    %v6896 = vpop.f32.mrb[0].mxu0
    %v6897 = vadd.f32 %v6856, %v6896
    %v6898 = vpop.f32.mrb[0].mxu0
    %v6899 = vpop.f32.mrb[0].mxu0
    %6900 = vdwg.mxu0
    %6901 = vmatprep.subr.bf16.mxu0 %v1794
    %6902 = vmatpush1.bf16.msra.mxu0 %v1793
    %6903 = vmatprep.subr.bf16.mxu0 %v1806
    %6904 = vmatpush1.bf16.msra.mxu0 %v1805
    %6905 = vmatprep.subr.bf16.mxu0 %v1818
    %6906 = vmatpush1.bf16.msra.mxu0 %v1817
    %6907 = vmatprep.subr.bf16.mxu0 %v1830
    %6908 = vmatpush1.bf16.msra.mxu0 %v1829
    %6909 = vmatprep.subr.bf16.mxu0 %v1842
    %6910 = vmatpush1.bf16.msra.mxu0 %v1841
    %6911 = vmatprep.subr.bf16.mxu0 %v1854
    %6912 = vmatpush1.bf16.msra.mxu0 %v1853
    %6913 = vmatprep.subr.bf16.mxu0 %v1866
    %6914 = vmatpush1.bf16.msra.mxu0 %v1865
    %6915 = vmatprep.subr.bf16.mxu0 %v1878
    %6916 = vmatpush1.bf16.msra.mxu0 %v1877
    %6917 = vmatprep.subr.bf16.mxu0 %v1890
    %6918 = vmatpush1.bf16.msra.mxu0 %v1889
    %6919 = vmatprep.subr.bf16.mxu0 %v1902
    %6920 = vmatpush1.bf16.msra.mxu0 %v1901
    %6921 = vmatprep.subr.bf16.mxu0 %v1914
    %6922 = vmatpush1.bf16.msra.mxu0 %v1913
    %6923 = vmatprep.subr.bf16.mxu0 %v1926
    %6924 = vmatpush1.bf16.msra.mxu0 %v1925
    %6925 = vmatprep.subr.bf16.mxu0 %v1938
    %6926 = vmatpush1.bf16.msra.mxu0 %v1937
    %6927 = vmatprep.subr.bf16.mxu0 %v1950
    %6928 = vmatpush1.bf16.msra.mxu0 %v1949
    %6929 = vmatprep.subr.bf16.mxu0 %v1962
    %6930 = vmatpush1.bf16.msra.mxu0 %v1961
    %6931 = vmatprep.subr.bf16.mxu0 %v1974
    %6932 = vmatpush1.bf16.msra.mxu0 %v1973
    %6933 = vmatprep.mubr.bf16.mxu0 %v6732
    %6934 = vmatmul.mubr.bf16.gmra.mrb[0].mxu0 %v6731
    %v6935 = vpop.f32.mrb[0].mxu0
    %v6936 = vadd.f32 0.0, %v6935
    %v6937 = vpop.f32.mrb[0].mxu0
    %v6938 = vadd.f32 0.0, %v6937
    %v6939 = vpop.f32.mrb[0].mxu0
    %v6940 = vpop.f32.mrb[0].mxu0
    %6941 = vdwg.mxu0
    %6942 = vmatprep.subr.bf16.mxu0 %v1986
    %6943 = vmatpush1.bf16.msra.mxu0 %v1985
    %6944 = vmatprep.subr.bf16.mxu0 %v1998
    %6945 = vmatpush1.bf16.msra.mxu0 %v1997
    %6946 = vmatprep.subr.bf16.mxu0 0
    %6947 = vmatpush1.bf16.msra.mxu0 0
    %6948 = vmatprep.subr.bf16.mxu0 0
    %6949 = vmatpush1.bf16.msra.mxu0 0
    %6950 = vmatprep.subr.bf16.mxu0 0
    %6951 = vmatpush1.bf16.msra.mxu0 0
    %6952 = vmatprep.subr.bf16.mxu0 0
    %6953 = vmatpush1.bf16.msra.mxu0 0
    %6954 = vmatprep.subr.bf16.mxu0 0
    %6955 = vmatpush1.bf16.msra.mxu0 0
    %6956 = vmatprep.subr.bf16.mxu0 0
    %6957 = vmatpush1.bf16.msra.mxu0 0
    %6958 = vmatprep.subr.bf16.mxu0 0
    %6959 = vmatpush1.bf16.msra.mxu0 0
    %6960 = vmatprep.subr.bf16.mxu0 0
    %6961 = vmatpush1.bf16.msra.mxu0 0
    %6962 = vmatprep.subr.bf16.mxu0 0
    %6963 = vmatpush1.bf16.msra.mxu0 0
    %6964 = vmatprep.subr.bf16.mxu0 0
    %6965 = vmatpush1.bf16.msra.mxu0 0
    %6966 = vmatprep.subr.bf16.mxu0 0
    %6967 = vmatpush1.bf16.msra.mxu0 0
    %6968 = vmatprep.subr.bf16.mxu0 0
    %6969 = vmatpush1.bf16.msra.mxu0 0
    %6970 = vmatprep.subr.bf16.mxu0 0
    %6971 = vmatpush1.bf16.msra.mxu0 0
    %6972 = vmatprep.subr.bf16.mxu0 0
    %6973 = vmatpush1.bf16.msra.mxu0 0
    %6974 = vmatprep.mubr.bf16.mxu0 0
    %6975 = vmatmul.mubr.bf16.gmra.mrb[0].mxu0 %v6735
    %v6976 = vpop.f32.mrb[0].mxu0
    %v6977 = vadd.f32 %v6936, %v6976
    %v6978 = vpop.f32.mrb[0].mxu0
    %v6979 = vadd.f32 %v6938, %v6978
    %v6980 = vpop.f32.mrb[0].mxu0
    %v6981 = vpop.f32.mrb[0].mxu0
    %6982 = vdwg.mxu0
    %6983 = vmatprep.subr.bf16.mxu0 %v1796
    %6984 = vmatpush1.bf16.msra.mxu0 %v1795
    %6985 = vmatprep.subr.bf16.mxu0 %v1808
    %6986 = vmatpush1.bf16.msra.mxu0 %v1807
    %6987 = vmatprep.subr.bf16.mxu0 %v1820
    %6988 = vmatpush1.bf16.msra.mxu0 %v1819
    %6989 = vmatprep.subr.bf16.mxu0 %v1832
    %6990 = vmatpush1.bf16.msra.mxu0 %v1831
    %6991 = vmatprep.subr.bf16.mxu0 %v1844
    %6992 = vmatpush1.bf16.msra.mxu0 %v1843
    %6993 = vmatprep.subr.bf16.mxu0 %v1856
    %6994 = vmatpush1.bf16.msra.mxu0 %v1855
    %6995 = vmatprep.subr.bf16.mxu0 %v1868
    %6996 = vmatpush1.bf16.msra.mxu0 %v1867
    %6997 = vmatprep.subr.bf16.mxu0 %v1880
    %6998 = vmatpush1.bf16.msra.mxu0 %v1879
    %6999 = vmatprep.subr.bf16.mxu0 %v1892
    %7000 = vmatpush1.bf16.msra.mxu0 %v1891
    %7001 = vmatprep.subr.bf16.mxu0 %v1904
    %7002 = vmatpush1.bf16.msra.mxu0 %v1903
    %7003 = vmatprep.subr.bf16.mxu0 %v1916
    %7004 = vmatpush1.bf16.msra.mxu0 %v1915
    %7005 = vmatprep.subr.bf16.mxu0 %v1928
    %7006 = vmatpush1.bf16.msra.mxu0 %v1927
    %7007 = vmatprep.subr.bf16.mxu0 %v1940
    %7008 = vmatpush1.bf16.msra.mxu0 %v1939
    %7009 = vmatprep.subr.bf16.mxu0 %v1952
    %7010 = vmatpush1.bf16.msra.mxu0 %v1951
    %7011 = vmatprep.subr.bf16.mxu0 %v1964
    %7012 = vmatpush1.bf16.msra.mxu0 %v1963
    %7013 = vmatprep.subr.bf16.mxu0 %v1976
    %7014 = vmatpush1.bf16.msra.mxu0 %v1975
    %7015 = vmatprep.mubr.bf16.mxu0 %v6732
    %7016 = vmatmul.mubr.bf16.gmra.mrb[0].mxu0 %v6731
    %v7017 = vpop.f32.mrb[0].mxu0
    %v7018 = vadd.f32 0.0, %v7017
    %v7019 = vpop.f32.mrb[0].mxu0
    %v7020 = vadd.f32 0.0, %v7019
    %v7021 = vpop.f32.mrb[0].mxu0
    %v7022 = vpop.f32.mrb[0].mxu0
    %7023 = vdwg.mxu0
    %7024 = vmatprep.subr.bf16.mxu0 %v1988
    %7025 = vmatpush1.bf16.msra.mxu0 %v1987
    %7026 = vmatprep.subr.bf16.mxu0 %v2000
    %7027 = vmatpush1.bf16.msra.mxu0 %v1999
    %7028 = vmatprep.subr.bf16.mxu0 0
    %7029 = vmatpush1.bf16.msra.mxu0 0
    %7030 = vmatprep.subr.bf16.mxu0 0
    %7031 = vmatpush1.bf16.msra.mxu0 0
    %7032 = vmatprep.subr.bf16.mxu0 0
    %7033 = vmatpush1.bf16.msra.mxu0 0
    %7034 = vmatprep.subr.bf16.mxu0 0
    %7035 = vmatpush1.bf16.msra.mxu0 0
    %7036 = vmatprep.subr.bf16.mxu0 0
    %7037 = vmatpush1.bf16.msra.mxu0 0
    %7038 = vmatprep.subr.bf16.mxu0 0
    %7039 = vmatpush1.bf16.msra.mxu0 0
    %7040 = vmatprep.subr.bf16.mxu0 0
    %7041 = vmatpush1.bf16.msra.mxu0 0
    %7042 = vmatprep.subr.bf16.mxu0 0
    %7043 = vmatpush1.bf16.msra.mxu0 0
    %7044 = vmatprep.subr.bf16.mxu0 0
    %7045 = vmatpush1.bf16.msra.mxu0 0
    %7046 = vmatprep.subr.bf16.mxu0 0
    %7047 = vmatpush1.bf16.msra.mxu0 0
    %7048 = vmatprep.subr.bf16.mxu0 0
    %7049 = vmatpush1.bf16.msra.mxu0 0
    %7050 = vmatprep.subr.bf16.mxu0 0
    %7051 = vmatpush1.bf16.msra.mxu0 0
    %7052 = vmatprep.subr.bf16.mxu0 0
    %7053 = vmatpush1.bf16.msra.mxu0 0
    %7054 = vmatprep.subr.bf16.mxu0 0
    %7055 = vmatpush1.bf16.msra.mxu0 0
    %7056 = vmatprep.mubr.bf16.mxu0 0
    %7057 = vmatmul.mubr.bf16.gmra.mrb[0].mxu0 %v6735
    %v7058 = vpop.f32.mrb[0].mxu0
    %v7059 = vadd.f32 %v7018, %v7058
    %v7060 = vpop.f32.mrb[0].mxu0
    %v7061 = vadd.f32 %v7020, %v7060
    %v7062 = vpop.f32.mrb[0].mxu0
    %v7063 = vpop.f32.mrb[0].mxu0
    %7064 = vdwg.mxu0
    %7065 = vmatprep.subr.bf16.mxu0 %v1798
    %7066 = vmatpush1.bf16.msra.mxu0 %v1797
    %7067 = vmatprep.subr.bf16.mxu0 %v1810
    %7068 = vmatpush1.bf16.msra.mxu0 %v1809
    %7069 = vmatprep.subr.bf16.mxu0 %v1822
    %7070 = vmatpush1.bf16.msra.mxu0 %v1821
    %7071 = vmatprep.subr.bf16.mxu0 %v1834
    %7072 = vmatpush1.bf16.msra.mxu0 %v1833
    %7073 = vmatprep.subr.bf16.mxu0 %v1846
    %7074 = vmatpush1.bf16.msra.mxu0 %v1845
    %7075 = vmatprep.subr.bf16.mxu0 %v1858
    %7076 = vmatpush1.bf16.msra.mxu0 %v1857
    %7077 = vmatprep.subr.bf16.mxu0 %v1870
    %7078 = vmatpush1.bf16.msra.mxu0 %v1869
    %7079 = vmatprep.subr.bf16.mxu0 %v1882
    %7080 = vmatpush1.bf16.msra.mxu0 %v1881
    %7081 = vmatprep.subr.bf16.mxu0 %v1894
    %7082 = vmatpush1.bf16.msra.mxu0 %v1893
    %7083 = vmatprep.subr.bf16.mxu0 %v1906
    %7084 = vmatpush1.bf16.msra.mxu0 %v1905
    %7085 = vmatprep.subr.bf16.mxu0 %v1918
    %7086 = vmatpush1.bf16.msra.mxu0 %v1917
    %7087 = vmatprep.subr.bf16.mxu0 %v1930
    %7088 = vmatpush1.bf16.msra.mxu0 %v1929
    %7089 = vmatprep.subr.bf16.mxu0 %v1942
    %7090 = vmatpush1.bf16.msra.mxu0 %v1941
    %7091 = vmatprep.subr.bf16.mxu0 %v1954
    %7092 = vmatpush1.bf16.msra.mxu0 %v1953
    %7093 = vmatprep.subr.bf16.mxu0 %v1966
    %7094 = vmatpush1.bf16.msra.mxu0 %v1965
    %7095 = vmatprep.subr.bf16.mxu0 %v1978
    %7096 = vmatpush1.bf16.msra.mxu0 %v1977
    %7097 = vmatprep.mubr.bf16.mxu0 %v6732
    %7098 = vmatmul.mubr.bf16.gmra.mrb[0].mxu0 %v6731
    %v7099 = vpop.f32.mrb[0].mxu0
    %v7100 = vadd.f32 0.0, %v7099
    %v7101 = vpop.f32.mrb[0].mxu0
    %v7102 = vadd.f32 0.0, %v7101
    %v7103 = vpop.f32.mrb[0].mxu0
    %v7104 = vpop.f32.mrb[0].mxu0
    %7105 = vdwg.mxu0
    %7106 = vmatprep.subr.bf16.mxu0 %v1990
    %7107 = vmatpush1.bf16.msra.mxu0 %v1989
    %7108 = vmatprep.subr.bf16.mxu0 %v2002
    %7109 = vmatpush1.bf16.msra.mxu0 %v2001
    %7110 = vmatprep.subr.bf16.mxu0 0
    %7111 = vmatpush1.bf16.msra.mxu0 0
    %7112 = vmatprep.subr.bf16.mxu0 0
    %7113 = vmatpush1.bf16.msra.mxu0 0
    %7114 = vmatprep.subr.bf16.mxu0 0
    %7115 = vmatpush1.bf16.msra.mxu0 0
    %7116 = vmatprep.subr.bf16.mxu0 0
    %7117 = vmatpush1.bf16.msra.mxu0 0
    %7118 = vmatprep.subr.bf16.mxu0 0
    %7119 = vmatpush1.bf16.msra.mxu0 0
    %7120 = vmatprep.subr.bf16.mxu0 0
    %7121 = vmatpush1.bf16.msra.mxu0 0
    %7122 = vmatprep.subr.bf16.mxu0 0
    %7123 = vmatpush1.bf16.msra.mxu0 0
    %7124 = vmatprep.subr.bf16.mxu0 0
    %7125 = vmatpush1.bf16.msra.mxu0 0
    %7126 = vmatprep.subr.bf16.mxu0 0
    %7127 = vmatpush1.bf16.msra.mxu0 0
    %7128 = vmatprep.subr.bf16.mxu0 0
    %7129 = vmatpush1.bf16.msra.mxu0 0
    %7130 = vmatprep.subr.bf16.mxu0 0
    %7131 = vmatpush1.bf16.msra.mxu0 0
    %7132 = vmatprep.subr.bf16.mxu0 0
    %7133 = vmatpush1.bf16.msra.mxu0 0
    %7134 = vmatprep.subr.bf16.mxu0 0
    %7135 = vmatpush1.bf16.msra.mxu0 0
    %7136 = vmatprep.subr.bf16.mxu0 0
    %7137 = vmatpush1.bf16.msra.mxu0 0
    %7138 = vmatprep.mubr.bf16.mxu0 0
    %7139 = vmatmul.mubr.bf16.gmra.mrb[0].mxu0 %v6735
    %v7140 = vpop.f32.mrb[0].mxu0
    %v7141 = vadd.f32 %v7100, %v7140
    %v7142 = vpop.f32.mrb[0].mxu0
    %v7143 = vadd.f32 %v7102, %v7142
    %v7144 = vpop.f32.mrb[0].mxu0
    %v7145 = vpop.f32.mrb[0].mxu0
    %7146 = vdwg.mxu0
    %7147 = vmatprep.subr.bf16.mxu0 %v1800
    %7148 = vmatpush1.bf16.msra.mxu0 %v1799
    %7149 = vmatprep.subr.bf16.mxu0 %v1812
    %7150 = vmatpush1.bf16.msra.mxu0 %v1811
    %7151 = vmatprep.subr.bf16.mxu0 %v1824
    %7152 = vmatpush1.bf16.msra.mxu0 %v1823
    %7153 = vmatprep.subr.bf16.mxu0 %v1836
    %7154 = vmatpush1.bf16.msra.mxu0 %v1835
    %7155 = vmatprep.subr.bf16.mxu0 %v1848
    %7156 = vmatpush1.bf16.msra.mxu0 %v1847
    %7157 = vmatprep.subr.bf16.mxu0 %v1860
    %7158 = vmatpush1.bf16.msra.mxu0 %v1859
    %7159 = vmatprep.subr.bf16.mxu0 %v1872
    %7160 = vmatpush1.bf16.msra.mxu0 %v1871
    %7161 = vmatprep.subr.bf16.mxu0 %v1884
    %7162 = vmatpush1.bf16.msra.mxu0 %v1883
    %7163 = vmatprep.subr.bf16.mxu0 %v1896
    %7164 = vmatpush1.bf16.msra.mxu0 %v1895
    %7165 = vmatprep.subr.bf16.mxu0 %v1908
    %7166 = vmatpush1.bf16.msra.mxu0 %v1907
    %7167 = vmatprep.subr.bf16.mxu0 %v1920
    %7168 = vmatpush1.bf16.msra.mxu0 %v1919
    %7169 = vmatprep.subr.bf16.mxu0 %v1932
    %7170 = vmatpush1.bf16.msra.mxu0 %v1931
    %7171 = vmatprep.subr.bf16.mxu0 %v1944
    %7172 = vmatpush1.bf16.msra.mxu0 %v1943
    %7173 = vmatprep.subr.bf16.mxu0 %v1956
    %7174 = vmatpush1.bf16.msra.mxu0 %v1955
    %7175 = vmatprep.subr.bf16.mxu0 %v1968
    %7176 = vmatpush1.bf16.msra.mxu0 %v1967
    %7177 = vmatprep.subr.bf16.mxu0 %v1980
    %7178 = vmatpush1.bf16.msra.mxu0 %v1979
    %7179 = vmatprep.mubr.bf16.mxu0 %v6732
    %7180 = vmatmul.mubr.bf16.gmra.mrb[0].mxu0 %v6731
    %v7181 = vpop.f32.mrb[0].mxu0
    %v7182 = vadd.f32 0.0, %v7181
    %v7183 = vpop.f32.mrb[0].mxu0
    %v7184 = vadd.f32 0.0, %v7183
    %v7185 = vpop.f32.mrb[0].mxu0
    %v7186 = vpop.f32.mrb[0].mxu0
    %7187 = vdwg.mxu0
    %7188 = vmatprep.subr.bf16.mxu0 %v1992
    %7189 = vmatpush1.bf16.msra.mxu0 %v1991
    %7190 = vmatprep.subr.bf16.mxu0 %v2004
    %7191 = vmatpush1.bf16.msra.mxu0 %v2003
    %7192 = vmatprep.subr.bf16.mxu0 0
    %7193 = vmatpush1.bf16.msra.mxu0 0
    %7194 = vmatprep.subr.bf16.mxu0 0
    %7195 = vmatpush1.bf16.msra.mxu0 0
    %7196 = vmatprep.subr.bf16.mxu0 0
    %7197 = vmatpush1.bf16.msra.mxu0 0
    %7198 = vmatprep.subr.bf16.mxu0 0
    %7199 = vmatpush1.bf16.msra.mxu0 0
    %7200 = vmatprep.subr.bf16.mxu0 0
    %7201 = vmatpush1.bf16.msra.mxu0 0
    %7202 = vmatprep.subr.bf16.mxu0 0
    %7203 = vmatpush1.bf16.msra.mxu0 0
    %7204 = vmatprep.subr.bf16.mxu0 0
    %7205 = vmatpush1.bf16.msra.mxu0 0
    %7206 = vmatprep.subr.bf16.mxu0 0
    %7207 = vmatpush1.bf16.msra.mxu0 0
    %7208 = vmatprep.subr.bf16.mxu0 0
    %7209 = vmatpush1.bf16.msra.mxu0 0
    %7210 = vmatprep.subr.bf16.mxu0 0
    %7211 = vmatpush1.bf16.msra.mxu0 0
    %7212 = vmatprep.subr.bf16.mxu0 0
    %7213 = vmatpush1.bf16.msra.mxu0 0
    %7214 = vmatprep.subr.bf16.mxu0 0
    %7215 = vmatpush1.bf16.msra.mxu0 0
    %7216 = vmatprep.subr.bf16.mxu0 0
    %7217 = vmatpush1.bf16.msra.mxu0 0
    %7218 = vmatprep.subr.bf16.mxu0 0
    %7219 = vmatpush1.bf16.msra.mxu0 0
    %7220 = vmatprep.mubr.bf16.mxu0 0
    %7221 = vmatmul.mubr.bf16.gmra.mrb[0].mxu0 %v6735
    %v7222 = vpop.f32.mrb[0].mxu0
    %v7223 = vadd.f32 %v7182, %v7222
    %v7224 = vpop.f32.mrb[0].mxu0
    %v7225 = vadd.f32 %v7184, %v7224
    %v7226 = vpop.f32.mrb[0].mxu0
    %v7227 = vpop.f32.mrb[0].mxu0
    %7228 = vdwg.mxu0
    %v7229 = vadd.f32 %v334, %v6813
    %v7230 = vadd.f32 %v336, %v6815
    %v7231 = vadd.f32 %v445, %v6895
    %v7232 = vadd.f32 %v447, %v6897
    %v7233 = vadd.f32 %v556, %v6977
    %v7234 = vadd.f32 %v558, %v6979
    %v7235 = vadd.f32 %v667, %v7059
    %v7236 = vadd.f32 %v669, %v7061
    %v7237 = vadd.f32 %v778, %v7141
    %v7238 = vadd.f32 %v780, %v7143
    %v7239 = vadd.f32 %v889, %v7223
    %v7240 = vadd.f32 %v891, %v7225
    %v7241 = vmul.f32 %v7229, 0.5
    %v7242 = vmul.f32 %v7230, 0.5
    %v7243 = vmul.f32 %v7231, 0.5
    %v7244 = vtanh.pop %v7241
    %v7245 = vtanh.pop %v7242
    %v7246 = vtanh.pop %v7243
    %v7247 = vmul.f32 %v7244, 0.5
    %v7248 = vmul.f32 %v7245, 0.5
    %v7249 = vmul.f32 %v7246, 0.5
    %v7250 = vadd.f32 %v7247, 0.5
    %v7251 = vadd.f32 %v7248, 0.5
    %v7252 = vadd.f32 %v7249, 0.5
    %v7253 = vmul.f32 %v7232, 0.5
    %v7254 = vmul.f32 %v7233, 0.5
    %v7255 = vmul.f32 %v7234, 0.5
    %v7256 = vtanh.pop %v7253
    %v7257 = vtanh.pop %v7254
    %v7258 = vtanh.pop %v7255
    %v7259 = vmul.f32 %v7256, 0.5
    %v7260 = vmul.f32 %v7257, 0.5
    %v7261 = vmul.f32 %v7258, 0.5
    %v7262 = vadd.f32 %v7259, 0.5
    %v7263 = vadd.f32 %v7260, 0.5
    %v7264 = vadd.f32 %v7261, 0.5
    %v7265 = vtanh.pop %v7235
    %v7266 = vtanh.pop %v7236
    %v7267 = vtanh.pop %v7237
    %v7268 = vmul.f32 %v7238, 0.5
    %v7269 = vmul.f32 %v7239, 0.5
    %v7270 = vmul.f32 %v7240, 0.5
    %v7271 = vtanh.pop %v7268
    %v7272 = vtanh.pop %v7269
    %v7273 = vtanh.pop %v7270
    %v7274 = vmul.f32 %v7271, 0.5
    %v7275 = vmul.f32 %v7272, 0.5
    %v7276 = vmul.f32 %v7273, 0.5
    %v7277 = vadd.f32 %v7274, 0.5
    %v7278 = vadd.f32 %v7275, 0.5
    %v7279 = vadd.f32 %v7276, 0.5
    %v7280 = vmul.f32 %v7262, %v6722
    %v7281 = vmul.f32 %v7263, %v6723
    %v7282 = vmul.f32 %v7264, %v6724
    %v7283 = vmul.f32 %v7250, %v7265
    %v7284 = vmul.f32 %v7251, %v7266
    %v7285 = vmul.f32 %v7252, %v7267
    %v7286 = vadd.f32 %v7280, %v7283
    %v7287 = vadd.f32 %v7281, %v7284
    %v7288 = vadd.f32 %v7282, %v7285
    %v7289 = vtanh.pop %v7286
    %v7290 = vtanh.pop %v7287
    %v7291 = vtanh.pop %v7288
    %v7292 = vmul.f32 %v7277, %v7289
    %v7293 = vmul.f32 %v7278, %v7290
    %v7294 = vmul.f32 %v7279, %v7291
    %v7295 = vpack.c.bf16 %v7292, %v7292
    %v7296 = vpack.c.bf16 %v7293, %v7293
    %v7297 = vpack.c.bf16 %v7294, %v7294
    %v7299 = vsel %vm2221, %v7297, 0
    %7301 = vmatprep.subr.bf16.mxu0 %v1790
    %7302 = vmatpush1.bf16.msra.mxu0 %v1789
    %7303 = vmatprep.subr.bf16.mxu0 %v1802
    %7304 = vmatpush1.bf16.msra.mxu0 %v1801
    %7305 = vmatprep.subr.bf16.mxu0 %v1814
    %7306 = vmatpush1.bf16.msra.mxu0 %v1813
    %7307 = vmatprep.subr.bf16.mxu0 %v1826
    %7308 = vmatpush1.bf16.msra.mxu0 %v1825
    %7309 = vmatprep.subr.bf16.mxu0 %v1838
    %7310 = vmatpush1.bf16.msra.mxu0 %v1837
    %7311 = vmatprep.subr.bf16.mxu0 %v1850
    %7312 = vmatpush1.bf16.msra.mxu0 %v1849
    %7313 = vmatprep.subr.bf16.mxu0 %v1862
    %7314 = vmatpush1.bf16.msra.mxu0 %v1861
    %7315 = vmatprep.subr.bf16.mxu0 %v1874
    %7316 = vmatpush1.bf16.msra.mxu0 %v1873
    %7317 = vmatprep.subr.bf16.mxu0 %v1886
    %7318 = vmatpush1.bf16.msra.mxu0 %v1885
    %7319 = vmatprep.subr.bf16.mxu0 %v1898
    %7320 = vmatpush1.bf16.msra.mxu0 %v1897
    %7321 = vmatprep.subr.bf16.mxu0 %v1910
    %7322 = vmatpush1.bf16.msra.mxu0 %v1909
    %7323 = vmatprep.subr.bf16.mxu0 %v1922
    %7324 = vmatpush1.bf16.msra.mxu0 %v1921
    %7325 = vmatprep.subr.bf16.mxu0 %v1934
    %7326 = vmatpush1.bf16.msra.mxu0 %v1933
    %7327 = vmatprep.subr.bf16.mxu0 %v1946
    %7328 = vmatpush1.bf16.msra.mxu0 %v1945
    %7329 = vmatprep.subr.bf16.mxu0 %v1958
    %7330 = vmatpush1.bf16.msra.mxu0 %v1957
    %7331 = vmatprep.subr.bf16.mxu0 %v1970
    %7332 = vmatpush1.bf16.msra.mxu0 %v1969
    %7333 = vmatprep.mubr.bf16.mxu0 %v7296
    %7334 = vmatmul.mubr.bf16.gmra.mrb[0].mxu0 %v7295
    %v7335 = vpop.f32.mrb[0].mxu0
    %v7336 = vadd.f32 0.0, %v7335
    %v7337 = vpop.f32.mrb[0].mxu0
    %v7338 = vadd.f32 0.0, %v7337
    %v7339 = vpop.f32.mrb[0].mxu0
    %v7340 = vpop.f32.mrb[0].mxu0
    %7341 = vdwg.mxu0
    %7342 = vmatprep.subr.bf16.mxu0 %v1982
    %7343 = vmatpush1.bf16.msra.mxu0 %v1981
    %7344 = vmatprep.subr.bf16.mxu0 %v1994
    %7345 = vmatpush1.bf16.msra.mxu0 %v1993
    %7346 = vmatprep.subr.bf16.mxu0 0
    %7347 = vmatpush1.bf16.msra.mxu0 0
    %7348 = vmatprep.subr.bf16.mxu0 0
    %7349 = vmatpush1.bf16.msra.mxu0 0
    %7350 = vmatprep.subr.bf16.mxu0 0
    %7351 = vmatpush1.bf16.msra.mxu0 0
    %7352 = vmatprep.subr.bf16.mxu0 0
    %7353 = vmatpush1.bf16.msra.mxu0 0
    %7354 = vmatprep.subr.bf16.mxu0 0
    %7355 = vmatpush1.bf16.msra.mxu0 0
    %7356 = vmatprep.subr.bf16.mxu0 0
    %7357 = vmatpush1.bf16.msra.mxu0 0
    %7358 = vmatprep.subr.bf16.mxu0 0
    %7359 = vmatpush1.bf16.msra.mxu0 0
    %7360 = vmatprep.subr.bf16.mxu0 0
    %7361 = vmatpush1.bf16.msra.mxu0 0
    %7362 = vmatprep.subr.bf16.mxu0 0
    %7363 = vmatpush1.bf16.msra.mxu0 0
    %7364 = vmatprep.subr.bf16.mxu0 0
    %7365 = vmatpush1.bf16.msra.mxu0 0
    %7366 = vmatprep.subr.bf16.mxu0 0
    %7367 = vmatpush1.bf16.msra.mxu0 0
    %7368 = vmatprep.subr.bf16.mxu0 0
    %7369 = vmatpush1.bf16.msra.mxu0 0
    %7370 = vmatprep.subr.bf16.mxu0 0
    %7371 = vmatpush1.bf16.msra.mxu0 0
    %7372 = vmatprep.subr.bf16.mxu0 0
    %7373 = vmatpush1.bf16.msra.mxu0 0
    %7374 = vmatprep.mubr.bf16.mxu0 0
    %7375 = vmatmul.mubr.bf16.gmra.mrb[0].mxu0 %v7299
    %v7376 = vpop.f32.mrb[0].mxu0
    %v7377 = vadd.f32 %v7336, %v7376
    %v7378 = vpop.f32.mrb[0].mxu0
    %v7379 = vadd.f32 %v7338, %v7378
    %v7380 = vpop.f32.mrb[0].mxu0
    %v7381 = vpop.f32.mrb[0].mxu0
    %7382 = vdwg.mxu0
    %7383 = vmatprep.subr.bf16.mxu0 %v1792
    %7384 = vmatpush1.bf16.msra.mxu0 %v1791
    %7385 = vmatprep.subr.bf16.mxu0 %v1804
    %7386 = vmatpush1.bf16.msra.mxu0 %v1803
    %7387 = vmatprep.subr.bf16.mxu0 %v1816
    %7388 = vmatpush1.bf16.msra.mxu0 %v1815
    %7389 = vmatprep.subr.bf16.mxu0 %v1828
    %7390 = vmatpush1.bf16.msra.mxu0 %v1827
    %7391 = vmatprep.subr.bf16.mxu0 %v1840
    %7392 = vmatpush1.bf16.msra.mxu0 %v1839
    %7393 = vmatprep.subr.bf16.mxu0 %v1852
    %7394 = vmatpush1.bf16.msra.mxu0 %v1851
    %7395 = vmatprep.subr.bf16.mxu0 %v1864
    %7396 = vmatpush1.bf16.msra.mxu0 %v1863
    %7397 = vmatprep.subr.bf16.mxu0 %v1876
    %7398 = vmatpush1.bf16.msra.mxu0 %v1875
    %7399 = vmatprep.subr.bf16.mxu0 %v1888
    %7400 = vmatpush1.bf16.msra.mxu0 %v1887
    %7401 = vmatprep.subr.bf16.mxu0 %v1900
    %7402 = vmatpush1.bf16.msra.mxu0 %v1899
    %7403 = vmatprep.subr.bf16.mxu0 %v1912
    %7404 = vmatpush1.bf16.msra.mxu0 %v1911
    %7405 = vmatprep.subr.bf16.mxu0 %v1924
    %7406 = vmatpush1.bf16.msra.mxu0 %v1923
    %7407 = vmatprep.subr.bf16.mxu0 %v1936
    %7408 = vmatpush1.bf16.msra.mxu0 %v1935
    %7409 = vmatprep.subr.bf16.mxu0 %v1948
    %7410 = vmatpush1.bf16.msra.mxu0 %v1947
    %7411 = vmatprep.subr.bf16.mxu0 %v1960
    %7412 = vmatpush1.bf16.msra.mxu0 %v1959
    %7413 = vmatprep.subr.bf16.mxu0 %v1972
    %7414 = vmatpush1.bf16.msra.mxu0 %v1971
    %7415 = vmatprep.mubr.bf16.mxu0 %v7296
    %7416 = vmatmul.mubr.bf16.gmra.mrb[0].mxu0 %v7295
    %v7417 = vpop.f32.mrb[0].mxu0
    %v7418 = vadd.f32 0.0, %v7417
    %v7419 = vpop.f32.mrb[0].mxu0
    %v7420 = vadd.f32 0.0, %v7419
    %v7421 = vpop.f32.mrb[0].mxu0
    %v7422 = vpop.f32.mrb[0].mxu0
    %7423 = vdwg.mxu0
    %7424 = vmatprep.subr.bf16.mxu0 %v1984
    %7425 = vmatpush1.bf16.msra.mxu0 %v1983
    %7426 = vmatprep.subr.bf16.mxu0 %v1996
    %7427 = vmatpush1.bf16.msra.mxu0 %v1995
    %7428 = vmatprep.subr.bf16.mxu0 0
    %7429 = vmatpush1.bf16.msra.mxu0 0
    %7430 = vmatprep.subr.bf16.mxu0 0
    %7431 = vmatpush1.bf16.msra.mxu0 0
    %7432 = vmatprep.subr.bf16.mxu0 0
    %7433 = vmatpush1.bf16.msra.mxu0 0
    %7434 = vmatprep.subr.bf16.mxu0 0
    %7435 = vmatpush1.bf16.msra.mxu0 0
    %7436 = vmatprep.subr.bf16.mxu0 0
    %7437 = vmatpush1.bf16.msra.mxu0 0
    %7438 = vmatprep.subr.bf16.mxu0 0
    %7439 = vmatpush1.bf16.msra.mxu0 0
    %7440 = vmatprep.subr.bf16.mxu0 0
    %7441 = vmatpush1.bf16.msra.mxu0 0
    %7442 = vmatprep.subr.bf16.mxu0 0
    %7443 = vmatpush1.bf16.msra.mxu0 0
    %7444 = vmatprep.subr.bf16.mxu0 0
    %7445 = vmatpush1.bf16.msra.mxu0 0
    %7446 = vmatprep.subr.bf16.mxu0 0
    %7447 = vmatpush1.bf16.msra.mxu0 0
    %7448 = vmatprep.subr.bf16.mxu0 0
    %7449 = vmatpush1.bf16.msra.mxu0 0
    %7450 = vmatprep.subr.bf16.mxu0 0
    %7451 = vmatpush1.bf16.msra.mxu0 0
    %7452 = vmatprep.subr.bf16.mxu0 0
    %7453 = vmatpush1.bf16.msra.mxu0 0
    %7454 = vmatprep.subr.bf16.mxu0 0
    %7455 = vmatpush1.bf16.msra.mxu0 0
    %7456 = vmatprep.mubr.bf16.mxu0 0
    %7457 = vmatmul.mubr.bf16.gmra.mrb[0].mxu0 %v7299
    %v7458 = vpop.f32.mrb[0].mxu0
    %v7459 = vadd.f32 %v7418, %v7458
    %v7460 = vpop.f32.mrb[0].mxu0
    %v7461 = vadd.f32 %v7420, %v7460
    %v7462 = vpop.f32.mrb[0].mxu0
    %v7463 = vpop.f32.mrb[0].mxu0
    %7464 = vdwg.mxu0
    %7465 = vmatprep.subr.bf16.mxu0 %v1794
    %7466 = vmatpush1.bf16.msra.mxu0 %v1793
    %7467 = vmatprep.subr.bf16.mxu0 %v1806
    %7468 = vmatpush1.bf16.msra.mxu0 %v1805
    %7469 = vmatprep.subr.bf16.mxu0 %v1818
    %7470 = vmatpush1.bf16.msra.mxu0 %v1817
    %7471 = vmatprep.subr.bf16.mxu0 %v1830
    %7472 = vmatpush1.bf16.msra.mxu0 %v1829
    %7473 = vmatprep.subr.bf16.mxu0 %v1842
    %7474 = vmatpush1.bf16.msra.mxu0 %v1841
    %7475 = vmatprep.subr.bf16.mxu0 %v1854
    %7476 = vmatpush1.bf16.msra.mxu0 %v1853
    %7477 = vmatprep.subr.bf16.mxu0 %v1866
    %7478 = vmatpush1.bf16.msra.mxu0 %v1865
    %7479 = vmatprep.subr.bf16.mxu0 %v1878
    %7480 = vmatpush1.bf16.msra.mxu0 %v1877
    %7481 = vmatprep.subr.bf16.mxu0 %v1890
    %7482 = vmatpush1.bf16.msra.mxu0 %v1889
    %7483 = vmatprep.subr.bf16.mxu0 %v1902
    %7484 = vmatpush1.bf16.msra.mxu0 %v1901
    %7485 = vmatprep.subr.bf16.mxu0 %v1914
    %7486 = vmatpush1.bf16.msra.mxu0 %v1913
    %7487 = vmatprep.subr.bf16.mxu0 %v1926
    %7488 = vmatpush1.bf16.msra.mxu0 %v1925
    %7489 = vmatprep.subr.bf16.mxu0 %v1938
    %7490 = vmatpush1.bf16.msra.mxu0 %v1937
    %7491 = vmatprep.subr.bf16.mxu0 %v1950
    %7492 = vmatpush1.bf16.msra.mxu0 %v1949
    %7493 = vmatprep.subr.bf16.mxu0 %v1962
    %7494 = vmatpush1.bf16.msra.mxu0 %v1961
    %7495 = vmatprep.subr.bf16.mxu0 %v1974
    %7496 = vmatpush1.bf16.msra.mxu0 %v1973
    %7497 = vmatprep.mubr.bf16.mxu0 %v7296
    %7498 = vmatmul.mubr.bf16.gmra.mrb[0].mxu0 %v7295
    %v7499 = vpop.f32.mrb[0].mxu0
    %v7500 = vadd.f32 0.0, %v7499
    %v7501 = vpop.f32.mrb[0].mxu0
    %v7502 = vadd.f32 0.0, %v7501
    %v7503 = vpop.f32.mrb[0].mxu0
    %v7504 = vpop.f32.mrb[0].mxu0
    %7505 = vdwg.mxu0
    %7506 = vmatprep.subr.bf16.mxu0 %v1986
    %7507 = vmatpush1.bf16.msra.mxu0 %v1985
    %7508 = vmatprep.subr.bf16.mxu0 %v1998
    %7509 = vmatpush1.bf16.msra.mxu0 %v1997
    %7510 = vmatprep.subr.bf16.mxu0 0
    %7511 = vmatpush1.bf16.msra.mxu0 0
    %7512 = vmatprep.subr.bf16.mxu0 0
    %7513 = vmatpush1.bf16.msra.mxu0 0
    %7514 = vmatprep.subr.bf16.mxu0 0
    %7515 = vmatpush1.bf16.msra.mxu0 0
    %7516 = vmatprep.subr.bf16.mxu0 0
    %7517 = vmatpush1.bf16.msra.mxu0 0
    %7518 = vmatprep.subr.bf16.mxu0 0
    %7519 = vmatpush1.bf16.msra.mxu0 0
    %7520 = vmatprep.subr.bf16.mxu0 0
    %7521 = vmatpush1.bf16.msra.mxu0 0
    %7522 = vmatprep.subr.bf16.mxu0 0
    %7523 = vmatpush1.bf16.msra.mxu0 0
    %7524 = vmatprep.subr.bf16.mxu0 0
    %7525 = vmatpush1.bf16.msra.mxu0 0
    %7526 = vmatprep.subr.bf16.mxu0 0
    %7527 = vmatpush1.bf16.msra.mxu0 0
    %7528 = vmatprep.subr.bf16.mxu0 0
    %7529 = vmatpush1.bf16.msra.mxu0 0
    %7530 = vmatprep.subr.bf16.mxu0 0
    %7531 = vmatpush1.bf16.msra.mxu0 0
    %7532 = vmatprep.subr.bf16.mxu0 0
    %7533 = vmatpush1.bf16.msra.mxu0 0
    %7534 = vmatprep.subr.bf16.mxu0 0
    %7535 = vmatpush1.bf16.msra.mxu0 0
    %7536 = vmatprep.subr.bf16.mxu0 0
    %7537 = vmatpush1.bf16.msra.mxu0 0
    %7538 = vmatprep.mubr.bf16.mxu0 0
    %7539 = vmatmul.mubr.bf16.gmra.mrb[0].mxu0 %v7299
    %v7540 = vpop.f32.mrb[0].mxu0
    %v7541 = vadd.f32 %v7500, %v7540
    %v7542 = vpop.f32.mrb[0].mxu0
    %v7543 = vadd.f32 %v7502, %v7542
    %v7544 = vpop.f32.mrb[0].mxu0
    %v7545 = vpop.f32.mrb[0].mxu0
    %7546 = vdwg.mxu0
    %7547 = vmatprep.subr.bf16.mxu0 %v1796
    %7548 = vmatpush1.bf16.msra.mxu0 %v1795
    %7549 = vmatprep.subr.bf16.mxu0 %v1808
    %7550 = vmatpush1.bf16.msra.mxu0 %v1807
    %7551 = vmatprep.subr.bf16.mxu0 %v1820
    %7552 = vmatpush1.bf16.msra.mxu0 %v1819
    %7553 = vmatprep.subr.bf16.mxu0 %v1832
    %7554 = vmatpush1.bf16.msra.mxu0 %v1831
    %7555 = vmatprep.subr.bf16.mxu0 %v1844
    %7556 = vmatpush1.bf16.msra.mxu0 %v1843
    %7557 = vmatprep.subr.bf16.mxu0 %v1856
    %7558 = vmatpush1.bf16.msra.mxu0 %v1855
    %7559 = vmatprep.subr.bf16.mxu0 %v1868
    %7560 = vmatpush1.bf16.msra.mxu0 %v1867
    %7561 = vmatprep.subr.bf16.mxu0 %v1880
    %7562 = vmatpush1.bf16.msra.mxu0 %v1879
    %7563 = vmatprep.subr.bf16.mxu0 %v1892
    %7564 = vmatpush1.bf16.msra.mxu0 %v1891
    %7565 = vmatprep.subr.bf16.mxu0 %v1904
    %7566 = vmatpush1.bf16.msra.mxu0 %v1903
    %7567 = vmatprep.subr.bf16.mxu0 %v1916
    %7568 = vmatpush1.bf16.msra.mxu0 %v1915
    %7569 = vmatprep.subr.bf16.mxu0 %v1928
    %7570 = vmatpush1.bf16.msra.mxu0 %v1927
    %7571 = vmatprep.subr.bf16.mxu0 %v1940
    %7572 = vmatpush1.bf16.msra.mxu0 %v1939
    %7573 = vmatprep.subr.bf16.mxu0 %v1952
    %7574 = vmatpush1.bf16.msra.mxu0 %v1951
    %7575 = vmatprep.subr.bf16.mxu0 %v1964
    %7576 = vmatpush1.bf16.msra.mxu0 %v1963
    %7577 = vmatprep.subr.bf16.mxu0 %v1976
    %7578 = vmatpush1.bf16.msra.mxu0 %v1975
    %7579 = vmatprep.mubr.bf16.mxu0 %v7296
    %7580 = vmatmul.mubr.bf16.gmra.mrb[0].mxu0 %v7295
    %v7581 = vpop.f32.mrb[0].mxu0
    %v7582 = vadd.f32 0.0, %v7581
    %v7583 = vpop.f32.mrb[0].mxu0
    %v7584 = vadd.f32 0.0, %v7583
    %v7585 = vpop.f32.mrb[0].mxu0
    %v7586 = vpop.f32.mrb[0].mxu0
    %7587 = vdwg.mxu0
    %7588 = vmatprep.subr.bf16.mxu0 %v1988
    %7589 = vmatpush1.bf16.msra.mxu0 %v1987
    %7590 = vmatprep.subr.bf16.mxu0 %v2000
    %7591 = vmatpush1.bf16.msra.mxu0 %v1999
    %7592 = vmatprep.subr.bf16.mxu0 0
    %7593 = vmatpush1.bf16.msra.mxu0 0
    %7594 = vmatprep.subr.bf16.mxu0 0
    %7595 = vmatpush1.bf16.msra.mxu0 0
    %7596 = vmatprep.subr.bf16.mxu0 0
    %7597 = vmatpush1.bf16.msra.mxu0 0
    %7598 = vmatprep.subr.bf16.mxu0 0
    %7599 = vmatpush1.bf16.msra.mxu0 0
    %7600 = vmatprep.subr.bf16.mxu0 0
    %7601 = vmatpush1.bf16.msra.mxu0 0
    %7602 = vmatprep.subr.bf16.mxu0 0
    %7603 = vmatpush1.bf16.msra.mxu0 0
    %7604 = vmatprep.subr.bf16.mxu0 0
    %7605 = vmatpush1.bf16.msra.mxu0 0
    %7606 = vmatprep.subr.bf16.mxu0 0
    %7607 = vmatpush1.bf16.msra.mxu0 0
    %7608 = vmatprep.subr.bf16.mxu0 0
    %7609 = vmatpush1.bf16.msra.mxu0 0
    %7610 = vmatprep.subr.bf16.mxu0 0
    %7611 = vmatpush1.bf16.msra.mxu0 0
    %7612 = vmatprep.subr.bf16.mxu0 0
    %7613 = vmatpush1.bf16.msra.mxu0 0
    %7614 = vmatprep.subr.bf16.mxu0 0
    %7615 = vmatpush1.bf16.msra.mxu0 0
    %7616 = vmatprep.subr.bf16.mxu0 0
    %7617 = vmatpush1.bf16.msra.mxu0 0
    %7618 = vmatprep.subr.bf16.mxu0 0
    %7619 = vmatpush1.bf16.msra.mxu0 0
    %7620 = vmatprep.mubr.bf16.mxu0 0
    %7621 = vmatmul.mubr.bf16.gmra.mrb[0].mxu0 %v7299
    %v7622 = vpop.f32.mrb[0].mxu0
    %v7623 = vadd.f32 %v7582, %v7622
    %v7624 = vpop.f32.mrb[0].mxu0
    %v7625 = vadd.f32 %v7584, %v7624
    %v7626 = vpop.f32.mrb[0].mxu0
    %v7627 = vpop.f32.mrb[0].mxu0
    %7628 = vdwg.mxu0
    %7629 = vmatprep.subr.bf16.mxu0 %v1798
    %7630 = vmatpush1.bf16.msra.mxu0 %v1797
    %7631 = vmatprep.subr.bf16.mxu0 %v1810
    %7632 = vmatpush1.bf16.msra.mxu0 %v1809
    %7633 = vmatprep.subr.bf16.mxu0 %v1822
    %7634 = vmatpush1.bf16.msra.mxu0 %v1821
    %7635 = vmatprep.subr.bf16.mxu0 %v1834
    %7636 = vmatpush1.bf16.msra.mxu0 %v1833
    %7637 = vmatprep.subr.bf16.mxu0 %v1846
    %7638 = vmatpush1.bf16.msra.mxu0 %v1845
    %7639 = vmatprep.subr.bf16.mxu0 %v1858
    %7640 = vmatpush1.bf16.msra.mxu0 %v1857
    %7641 = vmatprep.subr.bf16.mxu0 %v1870
    %7642 = vmatpush1.bf16.msra.mxu0 %v1869
    %7643 = vmatprep.subr.bf16.mxu0 %v1882
    %7644 = vmatpush1.bf16.msra.mxu0 %v1881
    %7645 = vmatprep.subr.bf16.mxu0 %v1894
    %7646 = vmatpush1.bf16.msra.mxu0 %v1893
    %7647 = vmatprep.subr.bf16.mxu0 %v1906
    %7648 = vmatpush1.bf16.msra.mxu0 %v1905
    %7649 = vmatprep.subr.bf16.mxu0 %v1918
    %7650 = vmatpush1.bf16.msra.mxu0 %v1917
    %7651 = vmatprep.subr.bf16.mxu0 %v1930
    %7652 = vmatpush1.bf16.msra.mxu0 %v1929
    %7653 = vmatprep.subr.bf16.mxu0 %v1942
    %7654 = vmatpush1.bf16.msra.mxu0 %v1941
    %7655 = vmatprep.subr.bf16.mxu0 %v1954
    %7656 = vmatpush1.bf16.msra.mxu0 %v1953
    %7657 = vmatprep.subr.bf16.mxu0 %v1966
    %7658 = vmatpush1.bf16.msra.mxu0 %v1965
    %7659 = vmatprep.subr.bf16.mxu0 %v1978
    %7660 = vmatpush1.bf16.msra.mxu0 %v1977
    %7661 = vmatprep.mubr.bf16.mxu0 %v7296
    %7662 = vmatmul.mubr.bf16.gmra.mrb[0].mxu0 %v7295
    %v7663 = vpop.f32.mrb[0].mxu0
    %v7664 = vadd.f32 0.0, %v7663
    %v7665 = vpop.f32.mrb[0].mxu0
    %v7666 = vadd.f32 0.0, %v7665
    %v7667 = vpop.f32.mrb[0].mxu0
    %v7668 = vpop.f32.mrb[0].mxu0
    %7669 = vdwg.mxu0
    %7670 = vmatprep.subr.bf16.mxu0 %v1990
    %7671 = vmatpush1.bf16.msra.mxu0 %v1989
    %7672 = vmatprep.subr.bf16.mxu0 %v2002
    %7673 = vmatpush1.bf16.msra.mxu0 %v2001
    %7674 = vmatprep.subr.bf16.mxu0 0
    %7675 = vmatpush1.bf16.msra.mxu0 0
    %7676 = vmatprep.subr.bf16.mxu0 0
    %7677 = vmatpush1.bf16.msra.mxu0 0
    %7678 = vmatprep.subr.bf16.mxu0 0
    %7679 = vmatpush1.bf16.msra.mxu0 0
    %7680 = vmatprep.subr.bf16.mxu0 0
    %7681 = vmatpush1.bf16.msra.mxu0 0
    %7682 = vmatprep.subr.bf16.mxu0 0
    %7683 = vmatpush1.bf16.msra.mxu0 0
    %7684 = vmatprep.subr.bf16.mxu0 0
    %7685 = vmatpush1.bf16.msra.mxu0 0
    %7686 = vmatprep.subr.bf16.mxu0 0
    %7687 = vmatpush1.bf16.msra.mxu0 0
    %7688 = vmatprep.subr.bf16.mxu0 0
    %7689 = vmatpush1.bf16.msra.mxu0 0
    %7690 = vmatprep.subr.bf16.mxu0 0
    %7691 = vmatpush1.bf16.msra.mxu0 0
    %7692 = vmatprep.subr.bf16.mxu0 0
    %7693 = vmatpush1.bf16.msra.mxu0 0
    %7694 = vmatprep.subr.bf16.mxu0 0
    %7695 = vmatpush1.bf16.msra.mxu0 0
    %7696 = vmatprep.subr.bf16.mxu0 0
    %7697 = vmatpush1.bf16.msra.mxu0 0
    %7698 = vmatprep.subr.bf16.mxu0 0
    %7699 = vmatpush1.bf16.msra.mxu0 0
    %7700 = vmatprep.subr.bf16.mxu0 0
    %7701 = vmatpush1.bf16.msra.mxu0 0
    %7702 = vmatprep.mubr.bf16.mxu0 0
    %7703 = vmatmul.mubr.bf16.gmra.mrb[0].mxu0 %v7299
    %v7704 = vpop.f32.mrb[0].mxu0
    %v7705 = vadd.f32 %v7664, %v7704
    %v7706 = vpop.f32.mrb[0].mxu0
    %v7707 = vadd.f32 %v7666, %v7706
    %v7708 = vpop.f32.mrb[0].mxu0
    %v7709 = vpop.f32.mrb[0].mxu0
    %7710 = vdwg.mxu0
    %7711 = vmatprep.subr.bf16.mxu0 %v1800
    %7712 = vmatpush1.bf16.msra.mxu0 %v1799
    %7713 = vmatprep.subr.bf16.mxu0 %v1812
    %7714 = vmatpush1.bf16.msra.mxu0 %v1811
    %7715 = vmatprep.subr.bf16.mxu0 %v1824
    %7716 = vmatpush1.bf16.msra.mxu0 %v1823
    %7717 = vmatprep.subr.bf16.mxu0 %v1836
    %7718 = vmatpush1.bf16.msra.mxu0 %v1835
    %7719 = vmatprep.subr.bf16.mxu0 %v1848
    %7720 = vmatpush1.bf16.msra.mxu0 %v1847
    %7721 = vmatprep.subr.bf16.mxu0 %v1860
    %7722 = vmatpush1.bf16.msra.mxu0 %v1859
    %7723 = vmatprep.subr.bf16.mxu0 %v1872
    %7724 = vmatpush1.bf16.msra.mxu0 %v1871
    %7725 = vmatprep.subr.bf16.mxu0 %v1884
    %7726 = vmatpush1.bf16.msra.mxu0 %v1883
    %7727 = vmatprep.subr.bf16.mxu0 %v1896
    %7728 = vmatpush1.bf16.msra.mxu0 %v1895
    %7729 = vmatprep.subr.bf16.mxu0 %v1908
    %7730 = vmatpush1.bf16.msra.mxu0 %v1907
    %7731 = vmatprep.subr.bf16.mxu0 %v1920
    %7732 = vmatpush1.bf16.msra.mxu0 %v1919
    %7733 = vmatprep.subr.bf16.mxu0 %v1932
    %7734 = vmatpush1.bf16.msra.mxu0 %v1931
    %7735 = vmatprep.subr.bf16.mxu0 %v1944
    %7736 = vmatpush1.bf16.msra.mxu0 %v1943
    %7737 = vmatprep.subr.bf16.mxu0 %v1956
    %7738 = vmatpush1.bf16.msra.mxu0 %v1955
    %7739 = vmatprep.subr.bf16.mxu0 %v1968
    %7740 = vmatpush1.bf16.msra.mxu0 %v1967
    %7741 = vmatprep.subr.bf16.mxu0 %v1980
    %7742 = vmatpush1.bf16.msra.mxu0 %v1979
    %7743 = vmatprep.mubr.bf16.mxu0 %v7296
    %7744 = vmatmul.mubr.bf16.gmra.mrb[0].mxu0 %v7295
    %v7745 = vpop.f32.mrb[0].mxu0
    %v7746 = vadd.f32 0.0, %v7745
    %v7747 = vpop.f32.mrb[0].mxu0
    %v7748 = vadd.f32 0.0, %v7747
    %v7749 = vpop.f32.mrb[0].mxu0
    %v7750 = vpop.f32.mrb[0].mxu0
    %7751 = vdwg.mxu0
    %7752 = vmatprep.subr.bf16.mxu0 %v1992
    %7753 = vmatpush1.bf16.msra.mxu0 %v1991
    %7754 = vmatprep.subr.bf16.mxu0 %v2004
    %7755 = vmatpush1.bf16.msra.mxu0 %v2003
    %7756 = vmatprep.subr.bf16.mxu0 0
    %7757 = vmatpush1.bf16.msra.mxu0 0
    %7758 = vmatprep.subr.bf16.mxu0 0
    %7759 = vmatpush1.bf16.msra.mxu0 0
    %7760 = vmatprep.subr.bf16.mxu0 0
    %7761 = vmatpush1.bf16.msra.mxu0 0
    %7762 = vmatprep.subr.bf16.mxu0 0
    %7763 = vmatpush1.bf16.msra.mxu0 0
    %7764 = vmatprep.subr.bf16.mxu0 0
    %7765 = vmatpush1.bf16.msra.mxu0 0
    %7766 = vmatprep.subr.bf16.mxu0 0
    %7767 = vmatpush1.bf16.msra.mxu0 0
    %7768 = vmatprep.subr.bf16.mxu0 0
    %7769 = vmatpush1.bf16.msra.mxu0 0
    %7770 = vmatprep.subr.bf16.mxu0 0
    %7771 = vmatpush1.bf16.msra.mxu0 0
    %7772 = vmatprep.subr.bf16.mxu0 0
    %7773 = vmatpush1.bf16.msra.mxu0 0
    %7774 = vmatprep.subr.bf16.mxu0 0
    %7775 = vmatpush1.bf16.msra.mxu0 0
    %7776 = vmatprep.subr.bf16.mxu0 0
    %7777 = vmatpush1.bf16.msra.mxu0 0
    %7778 = vmatprep.subr.bf16.mxu0 0
    %7779 = vmatpush1.bf16.msra.mxu0 0
    %7780 = vmatprep.subr.bf16.mxu0 0
    %7781 = vmatpush1.bf16.msra.mxu0 0
    %7782 = vmatprep.subr.bf16.mxu0 0
    %7783 = vmatpush1.bf16.msra.mxu0 0
    %7784 = vmatprep.mubr.bf16.mxu0 0
    %7785 = vmatmul.mubr.bf16.gmra.mrb[0].mxu0 %v7299
    %v7786 = vpop.f32.mrb[0].mxu0
    %v7787 = vadd.f32 %v7746, %v7786
    %v7788 = vpop.f32.mrb[0].mxu0
    %v7789 = vadd.f32 %v7748, %v7788
    %v7790 = vpop.f32.mrb[0].mxu0
    %v7791 = vpop.f32.mrb[0].mxu0
    %7792 = vdwg.mxu0
    %v7793 = vadd.f32 %v338, %v7377
    %v7794 = vadd.f32 %v340, %v7379
    %v7795 = vadd.f32 %v449, %v7459
    %v7796 = vadd.f32 %v451, %v7461
    %v7797 = vadd.f32 %v560, %v7541
    %v7798 = vadd.f32 %v562, %v7543
    %v7799 = vadd.f32 %v671, %v7623
    %v7800 = vadd.f32 %v673, %v7625
    %v7801 = vadd.f32 %v782, %v7705
    %v7802 = vadd.f32 %v784, %v7707
    %v7803 = vadd.f32 %v893, %v7787
    %v7804 = vadd.f32 %v895, %v7789
    %v7805 = vmul.f32 %v7793, 0.5
    %v7806 = vmul.f32 %v7794, 0.5
    %v7807 = vmul.f32 %v7795, 0.5
    %v7808 = vtanh.pop %v7805
    %v7809 = vtanh.pop %v7806
    %v7810 = vtanh.pop %v7807
    %v7811 = vmul.f32 %v7808, 0.5
    %v7812 = vmul.f32 %v7809, 0.5
    %v7813 = vmul.f32 %v7810, 0.5
    %v7814 = vadd.f32 %v7811, 0.5
    %v7815 = vadd.f32 %v7812, 0.5
    %v7816 = vadd.f32 %v7813, 0.5
    %v7817 = vmul.f32 %v7796, 0.5
    %v7818 = vmul.f32 %v7797, 0.5
    %v7819 = vmul.f32 %v7798, 0.5
    %v7820 = vtanh.pop %v7817
    %v7821 = vtanh.pop %v7818
    %v7822 = vtanh.pop %v7819
    %v7823 = vmul.f32 %v7820, 0.5
    %v7824 = vmul.f32 %v7821, 0.5
    %v7825 = vmul.f32 %v7822, 0.5
    %v7826 = vadd.f32 %v7823, 0.5
    %v7827 = vadd.f32 %v7824, 0.5
    %v7828 = vadd.f32 %v7825, 0.5
    %v7829 = vtanh.pop %v7799
    %v7830 = vtanh.pop %v7800
    %v7831 = vtanh.pop %v7801
    %v7832 = vmul.f32 %v7802, 0.5
    %v7833 = vmul.f32 %v7803, 0.5
    %v7834 = vmul.f32 %v7804, 0.5
    %v7835 = vtanh.pop %v7832
    %v7836 = vtanh.pop %v7833
    %v7837 = vtanh.pop %v7834
    %v7838 = vmul.f32 %v7835, 0.5
    %v7839 = vmul.f32 %v7836, 0.5
    %v7840 = vmul.f32 %v7837, 0.5
    %v7841 = vadd.f32 %v7838, 0.5
    %v7842 = vadd.f32 %v7839, 0.5
    %v7843 = vadd.f32 %v7840, 0.5
    %v7844 = vmul.f32 %v7826, %v7286
    %v7845 = vmul.f32 %v7827, %v7287
    %v7846 = vmul.f32 %v7828, %v7288
    %v7847 = vmul.f32 %v7814, %v7829
    %v7848 = vmul.f32 %v7815, %v7830
    %v7849 = vmul.f32 %v7816, %v7831
    %v7850 = vadd.f32 %v7844, %v7847
    %v7851 = vadd.f32 %v7845, %v7848
    %v7852 = vadd.f32 %v7846, %v7849
    %v7853 = vtanh.pop %v7850
    %v7854 = vtanh.pop %v7851
    %v7855 = vtanh.pop %v7852
    %v7856 = vmul.f32 %v7841, %v7853
    %v7857 = vmul.f32 %v7842, %v7854
    %v7858 = vmul.f32 %v7843, %v7855
    %v7859 = vpack.c.bf16 %v7856, %v7856
    %v7860 = vpack.c.bf16 %v7857, %v7857
    %v7861 = vpack.c.bf16 %v7858, %v7858
    %v7863 = vsel %vm2221, %v7861, 0
    %7865 = vmatprep.subr.bf16.mxu0 %v1790
    %7866 = vmatpush1.bf16.msra.mxu0 %v1789
    %7867 = vmatprep.subr.bf16.mxu0 %v1802
    %7868 = vmatpush1.bf16.msra.mxu0 %v1801
    %7869 = vmatprep.subr.bf16.mxu0 %v1814
    %7870 = vmatpush1.bf16.msra.mxu0 %v1813
    %7871 = vmatprep.subr.bf16.mxu0 %v1826
    %7872 = vmatpush1.bf16.msra.mxu0 %v1825
    %7873 = vmatprep.subr.bf16.mxu0 %v1838
    %7874 = vmatpush1.bf16.msra.mxu0 %v1837
    %7875 = vmatprep.subr.bf16.mxu0 %v1850
    %7876 = vmatpush1.bf16.msra.mxu0 %v1849
    %7877 = vmatprep.subr.bf16.mxu0 %v1862
    %7878 = vmatpush1.bf16.msra.mxu0 %v1861
    %7879 = vmatprep.subr.bf16.mxu0 %v1874
    %7880 = vmatpush1.bf16.msra.mxu0 %v1873
    %7881 = vmatprep.subr.bf16.mxu0 %v1886
    %7882 = vmatpush1.bf16.msra.mxu0 %v1885
    %7883 = vmatprep.subr.bf16.mxu0 %v1898
    %7884 = vmatpush1.bf16.msra.mxu0 %v1897
    %7885 = vmatprep.subr.bf16.mxu0 %v1910
    %7886 = vmatpush1.bf16.msra.mxu0 %v1909
    %7887 = vmatprep.subr.bf16.mxu0 %v1922
    %7888 = vmatpush1.bf16.msra.mxu0 %v1921
    %7889 = vmatprep.subr.bf16.mxu0 %v1934
    %7890 = vmatpush1.bf16.msra.mxu0 %v1933
    %7891 = vmatprep.subr.bf16.mxu0 %v1946
    %7892 = vmatpush1.bf16.msra.mxu0 %v1945
    %7893 = vmatprep.subr.bf16.mxu0 %v1958
    %7894 = vmatpush1.bf16.msra.mxu0 %v1957
    %7895 = vmatprep.subr.bf16.mxu0 %v1970
    %7896 = vmatpush1.bf16.msra.mxu0 %v1969
    %7897 = vmatprep.mubr.bf16.mxu0 %v7860
    %7898 = vmatmul.mubr.bf16.gmra.mrb[0].mxu0 %v7859
    %v7899 = vpop.f32.mrb[0].mxu0
    %v7900 = vadd.f32 0.0, %v7899
    %v7901 = vpop.f32.mrb[0].mxu0
    %v7902 = vadd.f32 0.0, %v7901
    %v7903 = vpop.f32.mrb[0].mxu0
    %v7904 = vpop.f32.mrb[0].mxu0
    %7905 = vdwg.mxu0
    %7906 = vmatprep.subr.bf16.mxu0 %v1982
    %7907 = vmatpush1.bf16.msra.mxu0 %v1981
    %7908 = vmatprep.subr.bf16.mxu0 %v1994
    %7909 = vmatpush1.bf16.msra.mxu0 %v1993
    %7910 = vmatprep.subr.bf16.mxu0 0
    %7911 = vmatpush1.bf16.msra.mxu0 0
    %7912 = vmatprep.subr.bf16.mxu0 0
    %7913 = vmatpush1.bf16.msra.mxu0 0
    %7914 = vmatprep.subr.bf16.mxu0 0
    %7915 = vmatpush1.bf16.msra.mxu0 0
    %7916 = vmatprep.subr.bf16.mxu0 0
    %7917 = vmatpush1.bf16.msra.mxu0 0
    %7918 = vmatprep.subr.bf16.mxu0 0
    %7919 = vmatpush1.bf16.msra.mxu0 0
    %7920 = vmatprep.subr.bf16.mxu0 0
    %7921 = vmatpush1.bf16.msra.mxu0 0
    %7922 = vmatprep.subr.bf16.mxu0 0
    %7923 = vmatpush1.bf16.msra.mxu0 0
    %7924 = vmatprep.subr.bf16.mxu0 0
    %7925 = vmatpush1.bf16.msra.mxu0 0
    %7926 = vmatprep.subr.bf16.mxu0 0
    %7927 = vmatpush1.bf16.msra.mxu0 0
    %7928 = vmatprep.subr.bf16.mxu0 0
    %7929 = vmatpush1.bf16.msra.mxu0 0
    %7930 = vmatprep.subr.bf16.mxu0 0
    %7931 = vmatpush1.bf16.msra.mxu0 0
    %7932 = vmatprep.subr.bf16.mxu0 0
    %7933 = vmatpush1.bf16.msra.mxu0 0
    %7934 = vmatprep.subr.bf16.mxu0 0
    %7935 = vmatpush1.bf16.msra.mxu0 0
    %7936 = vmatprep.subr.bf16.mxu0 0
    %7937 = vmatpush1.bf16.msra.mxu0 0
    %7938 = vmatprep.mubr.bf16.mxu0 0
    %7939 = vmatmul.mubr.bf16.gmra.mrb[0].mxu0 %v7863
    %v7940 = vpop.f32.mrb[0].mxu0
    %v7941 = vadd.f32 %v7900, %v7940
    %v7942 = vpop.f32.mrb[0].mxu0
    %v7943 = vadd.f32 %v7902, %v7942
    %v7944 = vpop.f32.mrb[0].mxu0
    %v7945 = vpop.f32.mrb[0].mxu0
    %7946 = vdwg.mxu0
    %7947 = vmatprep.subr.bf16.mxu0 %v1792
    %7948 = vmatpush1.bf16.msra.mxu0 %v1791
    %7949 = vmatprep.subr.bf16.mxu0 %v1804
    %7950 = vmatpush1.bf16.msra.mxu0 %v1803
    %7951 = vmatprep.subr.bf16.mxu0 %v1816
    %7952 = vmatpush1.bf16.msra.mxu0 %v1815
    %7953 = vmatprep.subr.bf16.mxu0 %v1828
    %7954 = vmatpush1.bf16.msra.mxu0 %v1827
    %7955 = vmatprep.subr.bf16.mxu0 %v1840
    %7956 = vmatpush1.bf16.msra.mxu0 %v1839
    %7957 = vmatprep.subr.bf16.mxu0 %v1852
    %7958 = vmatpush1.bf16.msra.mxu0 %v1851
    %7959 = vmatprep.subr.bf16.mxu0 %v1864
    %7960 = vmatpush1.bf16.msra.mxu0 %v1863
    %7961 = vmatprep.subr.bf16.mxu0 %v1876
    %7962 = vmatpush1.bf16.msra.mxu0 %v1875
    %7963 = vmatprep.subr.bf16.mxu0 %v1888
    %7964 = vmatpush1.bf16.msra.mxu0 %v1887
    %7965 = vmatprep.subr.bf16.mxu0 %v1900
    %7966 = vmatpush1.bf16.msra.mxu0 %v1899
    %7967 = vmatprep.subr.bf16.mxu0 %v1912
    %7968 = vmatpush1.bf16.msra.mxu0 %v1911
    %7969 = vmatprep.subr.bf16.mxu0 %v1924
    %7970 = vmatpush1.bf16.msra.mxu0 %v1923
    %7971 = vmatprep.subr.bf16.mxu0 %v1936
    %7972 = vmatpush1.bf16.msra.mxu0 %v1935
    %7973 = vmatprep.subr.bf16.mxu0 %v1948
    %7974 = vmatpush1.bf16.msra.mxu0 %v1947
    %7975 = vmatprep.subr.bf16.mxu0 %v1960
    %7976 = vmatpush1.bf16.msra.mxu0 %v1959
    %7977 = vmatprep.subr.bf16.mxu0 %v1972
    %7978 = vmatpush1.bf16.msra.mxu0 %v1971
    %7979 = vmatprep.mubr.bf16.mxu0 %v7860
    %7980 = vmatmul.mubr.bf16.gmra.mrb[0].mxu0 %v7859
    %v7981 = vpop.f32.mrb[0].mxu0
    %v7982 = vadd.f32 0.0, %v7981
    %v7983 = vpop.f32.mrb[0].mxu0
    %v7984 = vadd.f32 0.0, %v7983
    %v7985 = vpop.f32.mrb[0].mxu0
    %v7986 = vpop.f32.mrb[0].mxu0
    %7987 = vdwg.mxu0
    %7988 = vmatprep.subr.bf16.mxu0 %v1984
    %7989 = vmatpush1.bf16.msra.mxu0 %v1983
    %7990 = vmatprep.subr.bf16.mxu0 %v1996
    %7991 = vmatpush1.bf16.msra.mxu0 %v1995
    %7992 = vmatprep.subr.bf16.mxu0 0
    %7993 = vmatpush1.bf16.msra.mxu0 0
    %7994 = vmatprep.subr.bf16.mxu0 0
    %7995 = vmatpush1.bf16.msra.mxu0 0
    %7996 = vmatprep.subr.bf16.mxu0 0
    %7997 = vmatpush1.bf16.msra.mxu0 0
    %7998 = vmatprep.subr.bf16.mxu0 0
    %7999 = vmatpush1.bf16.msra.mxu0 0
    %8000 = vmatprep.subr.bf16.mxu0 0
    %8001 = vmatpush1.bf16.msra.mxu0 0
    %8002 = vmatprep.subr.bf16.mxu0 0
    %8003 = vmatpush1.bf16.msra.mxu0 0
    %8004 = vmatprep.subr.bf16.mxu0 0
    %8005 = vmatpush1.bf16.msra.mxu0 0
    %8006 = vmatprep.subr.bf16.mxu0 0
    %8007 = vmatpush1.bf16.msra.mxu0 0
    %8008 = vmatprep.subr.bf16.mxu0 0
    %8009 = vmatpush1.bf16.msra.mxu0 0
    %8010 = vmatprep.subr.bf16.mxu0 0
    %8011 = vmatpush1.bf16.msra.mxu0 0
    %8012 = vmatprep.subr.bf16.mxu0 0
    %8013 = vmatpush1.bf16.msra.mxu0 0
    %8014 = vmatprep.subr.bf16.mxu0 0
    %8015 = vmatpush1.bf16.msra.mxu0 0
    %8016 = vmatprep.subr.bf16.mxu0 0
    %8017 = vmatpush1.bf16.msra.mxu0 0
    %8018 = vmatprep.subr.bf16.mxu0 0
    %8019 = vmatpush1.bf16.msra.mxu0 0
    %8020 = vmatprep.mubr.bf16.mxu0 0
    %8021 = vmatmul.mubr.bf16.gmra.mrb[0].mxu0 %v7863
    %v8022 = vpop.f32.mrb[0].mxu0
    %v8023 = vadd.f32 %v7982, %v8022
    %v8024 = vpop.f32.mrb[0].mxu0
    %v8025 = vadd.f32 %v7984, %v8024
    %v8026 = vpop.f32.mrb[0].mxu0
    %v8027 = vpop.f32.mrb[0].mxu0
    %8028 = vdwg.mxu0
    %8029 = vmatprep.subr.bf16.mxu0 %v1794
    %8030 = vmatpush1.bf16.msra.mxu0 %v1793
    %8031 = vmatprep.subr.bf16.mxu0 %v1806
    %8032 = vmatpush1.bf16.msra.mxu0 %v1805
    %8033 = vmatprep.subr.bf16.mxu0 %v1818
    %8034 = vmatpush1.bf16.msra.mxu0 %v1817
    %8035 = vmatprep.subr.bf16.mxu0 %v1830
    %8036 = vmatpush1.bf16.msra.mxu0 %v1829
    %8037 = vmatprep.subr.bf16.mxu0 %v1842
    %8038 = vmatpush1.bf16.msra.mxu0 %v1841
    %8039 = vmatprep.subr.bf16.mxu0 %v1854
    %8040 = vmatpush1.bf16.msra.mxu0 %v1853
    %8041 = vmatprep.subr.bf16.mxu0 %v1866
    %8042 = vmatpush1.bf16.msra.mxu0 %v1865
    %8043 = vmatprep.subr.bf16.mxu0 %v1878
    %8044 = vmatpush1.bf16.msra.mxu0 %v1877
    %8045 = vmatprep.subr.bf16.mxu0 %v1890
    %8046 = vmatpush1.bf16.msra.mxu0 %v1889
    %8047 = vmatprep.subr.bf16.mxu0 %v1902
    %8048 = vmatpush1.bf16.msra.mxu0 %v1901
    %8049 = vmatprep.subr.bf16.mxu0 %v1914
    %8050 = vmatpush1.bf16.msra.mxu0 %v1913
    %8051 = vmatprep.subr.bf16.mxu0 %v1926
    %8052 = vmatpush1.bf16.msra.mxu0 %v1925
    %8053 = vmatprep.subr.bf16.mxu0 %v1938
    %8054 = vmatpush1.bf16.msra.mxu0 %v1937
    %8055 = vmatprep.subr.bf16.mxu0 %v1950
    %8056 = vmatpush1.bf16.msra.mxu0 %v1949
    %8057 = vmatprep.subr.bf16.mxu0 %v1962
    %8058 = vmatpush1.bf16.msra.mxu0 %v1961
    %8059 = vmatprep.subr.bf16.mxu0 %v1974
    %8060 = vmatpush1.bf16.msra.mxu0 %v1973
    %8061 = vmatprep.mubr.bf16.mxu0 %v7860
    %8062 = vmatmul.mubr.bf16.gmra.mrb[0].mxu0 %v7859
    %v8063 = vpop.f32.mrb[0].mxu0
    %v8064 = vadd.f32 0.0, %v8063
    %v8065 = vpop.f32.mrb[0].mxu0
    %v8066 = vadd.f32 0.0, %v8065
    %v8067 = vpop.f32.mrb[0].mxu0
    %v8068 = vpop.f32.mrb[0].mxu0
    %8069 = vdwg.mxu0
    %8070 = vmatprep.subr.bf16.mxu0 %v1986
    %8071 = vmatpush1.bf16.msra.mxu0 %v1985
    %8072 = vmatprep.subr.bf16.mxu0 %v1998
    %8073 = vmatpush1.bf16.msra.mxu0 %v1997
    %8074 = vmatprep.subr.bf16.mxu0 0
    %8075 = vmatpush1.bf16.msra.mxu0 0
    %8076 = vmatprep.subr.bf16.mxu0 0
    %8077 = vmatpush1.bf16.msra.mxu0 0
    %8078 = vmatprep.subr.bf16.mxu0 0
    %8079 = vmatpush1.bf16.msra.mxu0 0
    %8080 = vmatprep.subr.bf16.mxu0 0
    %8081 = vmatpush1.bf16.msra.mxu0 0
    %8082 = vmatprep.subr.bf16.mxu0 0
    %8083 = vmatpush1.bf16.msra.mxu0 0
    %8084 = vmatprep.subr.bf16.mxu0 0
    %8085 = vmatpush1.bf16.msra.mxu0 0
    %8086 = vmatprep.subr.bf16.mxu0 0
    %8087 = vmatpush1.bf16.msra.mxu0 0
    %8088 = vmatprep.subr.bf16.mxu0 0
    %8089 = vmatpush1.bf16.msra.mxu0 0
    %8090 = vmatprep.subr.bf16.mxu0 0
    %8091 = vmatpush1.bf16.msra.mxu0 0
    %8092 = vmatprep.subr.bf16.mxu0 0
    %8093 = vmatpush1.bf16.msra.mxu0 0
    %8094 = vmatprep.subr.bf16.mxu0 0
    %8095 = vmatpush1.bf16.msra.mxu0 0
    %8096 = vmatprep.subr.bf16.mxu0 0
    %8097 = vmatpush1.bf16.msra.mxu0 0
    %8098 = vmatprep.subr.bf16.mxu0 0
    %8099 = vmatpush1.bf16.msra.mxu0 0
    %8100 = vmatprep.subr.bf16.mxu0 0
    %8101 = vmatpush1.bf16.msra.mxu0 0
    %8102 = vmatprep.mubr.bf16.mxu0 0
    %8103 = vmatmul.mubr.bf16.gmra.mrb[0].mxu0 %v7863
    %v8104 = vpop.f32.mrb[0].mxu0
    %v8105 = vadd.f32 %v8064, %v8104
    %v8106 = vpop.f32.mrb[0].mxu0
    %v8107 = vadd.f32 %v8066, %v8106
    %v8108 = vpop.f32.mrb[0].mxu0
    %v8109 = vpop.f32.mrb[0].mxu0
    %8110 = vdwg.mxu0
    %8111 = vmatprep.subr.bf16.mxu0 %v1796
    %8112 = vmatpush1.bf16.msra.mxu0 %v1795
    %8113 = vmatprep.subr.bf16.mxu0 %v1808
    %8114 = vmatpush1.bf16.msra.mxu0 %v1807
    %8115 = vmatprep.subr.bf16.mxu0 %v1820
    %8116 = vmatpush1.bf16.msra.mxu0 %v1819
    %8117 = vmatprep.subr.bf16.mxu0 %v1832
    %8118 = vmatpush1.bf16.msra.mxu0 %v1831
    %8119 = vmatprep.subr.bf16.mxu0 %v1844
    %8120 = vmatpush1.bf16.msra.mxu0 %v1843
    %8121 = vmatprep.subr.bf16.mxu0 %v1856
    %8122 = vmatpush1.bf16.msra.mxu0 %v1855
    %8123 = vmatprep.subr.bf16.mxu0 %v1868
    %8124 = vmatpush1.bf16.msra.mxu0 %v1867
    %8125 = vmatprep.subr.bf16.mxu0 %v1880
    %8126 = vmatpush1.bf16.msra.mxu0 %v1879
    %8127 = vmatprep.subr.bf16.mxu0 %v1892
    %8128 = vmatpush1.bf16.msra.mxu0 %v1891
    %8129 = vmatprep.subr.bf16.mxu0 %v1904
    %8130 = vmatpush1.bf16.msra.mxu0 %v1903
    %8131 = vmatprep.subr.bf16.mxu0 %v1916
    %8132 = vmatpush1.bf16.msra.mxu0 %v1915
    %8133 = vmatprep.subr.bf16.mxu0 %v1928
    %8134 = vmatpush1.bf16.msra.mxu0 %v1927
    %8135 = vmatprep.subr.bf16.mxu0 %v1940
    %8136 = vmatpush1.bf16.msra.mxu0 %v1939
    %8137 = vmatprep.subr.bf16.mxu0 %v1952
    %8138 = vmatpush1.bf16.msra.mxu0 %v1951
    %8139 = vmatprep.subr.bf16.mxu0 %v1964
    %8140 = vmatpush1.bf16.msra.mxu0 %v1963
    %8141 = vmatprep.subr.bf16.mxu0 %v1976
    %8142 = vmatpush1.bf16.msra.mxu0 %v1975
    %8143 = vmatprep.mubr.bf16.mxu0 %v7860
    %8144 = vmatmul.mubr.bf16.gmra.mrb[0].mxu0 %v7859
    %v8145 = vpop.f32.mrb[0].mxu0
    %v8146 = vadd.f32 0.0, %v8145
    %v8147 = vpop.f32.mrb[0].mxu0
    %v8148 = vadd.f32 0.0, %v8147
    %v8149 = vpop.f32.mrb[0].mxu0
    %v8150 = vpop.f32.mrb[0].mxu0
    %8151 = vdwg.mxu0
    %8152 = vmatprep.subr.bf16.mxu0 %v1988
    %8153 = vmatpush1.bf16.msra.mxu0 %v1987
    %8154 = vmatprep.subr.bf16.mxu0 %v2000
    %8155 = vmatpush1.bf16.msra.mxu0 %v1999
    %8156 = vmatprep.subr.bf16.mxu0 0
    %8157 = vmatpush1.bf16.msra.mxu0 0
    %8158 = vmatprep.subr.bf16.mxu0 0
    %8159 = vmatpush1.bf16.msra.mxu0 0
    %8160 = vmatprep.subr.bf16.mxu0 0
    %8161 = vmatpush1.bf16.msra.mxu0 0
    %8162 = vmatprep.subr.bf16.mxu0 0
    %8163 = vmatpush1.bf16.msra.mxu0 0
    %8164 = vmatprep.subr.bf16.mxu0 0
    %8165 = vmatpush1.bf16.msra.mxu0 0
    %8166 = vmatprep.subr.bf16.mxu0 0
    %8167 = vmatpush1.bf16.msra.mxu0 0
    %8168 = vmatprep.subr.bf16.mxu0 0
    %8169 = vmatpush1.bf16.msra.mxu0 0
    %8170 = vmatprep.subr.bf16.mxu0 0
    %8171 = vmatpush1.bf16.msra.mxu0 0
    %8172 = vmatprep.subr.bf16.mxu0 0
    %8173 = vmatpush1.bf16.msra.mxu0 0
    %8174 = vmatprep.subr.bf16.mxu0 0
    %8175 = vmatpush1.bf16.msra.mxu0 0
    %8176 = vmatprep.subr.bf16.mxu0 0
    %8177 = vmatpush1.bf16.msra.mxu0 0
    %8178 = vmatprep.subr.bf16.mxu0 0
    %8179 = vmatpush1.bf16.msra.mxu0 0
    %8180 = vmatprep.subr.bf16.mxu0 0
    %8181 = vmatpush1.bf16.msra.mxu0 0
    %8182 = vmatprep.subr.bf16.mxu0 0
    %8183 = vmatpush1.bf16.msra.mxu0 0
    %8184 = vmatprep.mubr.bf16.mxu0 0
    %8185 = vmatmul.mubr.bf16.gmra.mrb[0].mxu0 %v7863
    %v8186 = vpop.f32.mrb[0].mxu0
    %v8187 = vadd.f32 %v8146, %v8186
    %v8188 = vpop.f32.mrb[0].mxu0
    %v8189 = vadd.f32 %v8148, %v8188
    %v8190 = vpop.f32.mrb[0].mxu0
    %v8191 = vpop.f32.mrb[0].mxu0
    %8192 = vdwg.mxu0
    %8193 = vmatprep.subr.bf16.mxu0 %v1798
    %8194 = vmatpush1.bf16.msra.mxu0 %v1797
    %8195 = vmatprep.subr.bf16.mxu0 %v1810
    %8196 = vmatpush1.bf16.msra.mxu0 %v1809
    %8197 = vmatprep.subr.bf16.mxu0 %v1822
    %8198 = vmatpush1.bf16.msra.mxu0 %v1821
    %8199 = vmatprep.subr.bf16.mxu0 %v1834
    %8200 = vmatpush1.bf16.msra.mxu0 %v1833
    %8201 = vmatprep.subr.bf16.mxu0 %v1846
    %8202 = vmatpush1.bf16.msra.mxu0 %v1845
    %8203 = vmatprep.subr.bf16.mxu0 %v1858
    %8204 = vmatpush1.bf16.msra.mxu0 %v1857
    %8205 = vmatprep.subr.bf16.mxu0 %v1870
    %8206 = vmatpush1.bf16.msra.mxu0 %v1869
    %8207 = vmatprep.subr.bf16.mxu0 %v1882
    %8208 = vmatpush1.bf16.msra.mxu0 %v1881
    %8209 = vmatprep.subr.bf16.mxu0 %v1894
    %8210 = vmatpush1.bf16.msra.mxu0 %v1893
    %8211 = vmatprep.subr.bf16.mxu0 %v1906
    %8212 = vmatpush1.bf16.msra.mxu0 %v1905
    %8213 = vmatprep.subr.bf16.mxu0 %v1918
    %8214 = vmatpush1.bf16.msra.mxu0 %v1917
    %8215 = vmatprep.subr.bf16.mxu0 %v1930
    %8216 = vmatpush1.bf16.msra.mxu0 %v1929
    %8217 = vmatprep.subr.bf16.mxu0 %v1942
    %8218 = vmatpush1.bf16.msra.mxu0 %v1941
    %8219 = vmatprep.subr.bf16.mxu0 %v1954
    %8220 = vmatpush1.bf16.msra.mxu0 %v1953
    %8221 = vmatprep.subr.bf16.mxu0 %v1966
    %8222 = vmatpush1.bf16.msra.mxu0 %v1965
    %8223 = vmatprep.subr.bf16.mxu0 %v1978
    %8224 = vmatpush1.bf16.msra.mxu0 %v1977
    %8225 = vmatprep.mubr.bf16.mxu0 %v7860
    %8226 = vmatmul.mubr.bf16.gmra.mrb[0].mxu0 %v7859
    %v8227 = vpop.f32.mrb[0].mxu0
    %v8228 = vadd.f32 0.0, %v8227
    %v8229 = vpop.f32.mrb[0].mxu0
    %v8230 = vadd.f32 0.0, %v8229
    %v8231 = vpop.f32.mrb[0].mxu0
    %v8232 = vpop.f32.mrb[0].mxu0
    %8233 = vdwg.mxu0
    %8234 = vmatprep.subr.bf16.mxu0 %v1990
    %8235 = vmatpush1.bf16.msra.mxu0 %v1989
    %8236 = vmatprep.subr.bf16.mxu0 %v2002
    %8237 = vmatpush1.bf16.msra.mxu0 %v2001
    %8238 = vmatprep.subr.bf16.mxu0 0
    %8239 = vmatpush1.bf16.msra.mxu0 0
    %8240 = vmatprep.subr.bf16.mxu0 0
    %8241 = vmatpush1.bf16.msra.mxu0 0
    %8242 = vmatprep.subr.bf16.mxu0 0
    %8243 = vmatpush1.bf16.msra.mxu0 0
    %8244 = vmatprep.subr.bf16.mxu0 0
    %8245 = vmatpush1.bf16.msra.mxu0 0
    %8246 = vmatprep.subr.bf16.mxu0 0
    %8247 = vmatpush1.bf16.msra.mxu0 0
    %8248 = vmatprep.subr.bf16.mxu0 0
    %8249 = vmatpush1.bf16.msra.mxu0 0
    %8250 = vmatprep.subr.bf16.mxu0 0
    %8251 = vmatpush1.bf16.msra.mxu0 0
    %8252 = vmatprep.subr.bf16.mxu0 0
    %8253 = vmatpush1.bf16.msra.mxu0 0
    %8254 = vmatprep.subr.bf16.mxu0 0
    %8255 = vmatpush1.bf16.msra.mxu0 0
    %8256 = vmatprep.subr.bf16.mxu0 0
    %8257 = vmatpush1.bf16.msra.mxu0 0
    %8258 = vmatprep.subr.bf16.mxu0 0
    %8259 = vmatpush1.bf16.msra.mxu0 0
    %8260 = vmatprep.subr.bf16.mxu0 0
    %8261 = vmatpush1.bf16.msra.mxu0 0
    %8262 = vmatprep.subr.bf16.mxu0 0
    %8263 = vmatpush1.bf16.msra.mxu0 0
    %8264 = vmatprep.subr.bf16.mxu0 0
    %8265 = vmatpush1.bf16.msra.mxu0 0
    %8266 = vmatprep.mubr.bf16.mxu0 0
    %8267 = vmatmul.mubr.bf16.gmra.mrb[0].mxu0 %v7863
    %v8268 = vpop.f32.mrb[0].mxu0
    %v8269 = vadd.f32 %v8228, %v8268
    %v8270 = vpop.f32.mrb[0].mxu0
    %v8271 = vadd.f32 %v8230, %v8270
    %v8272 = vpop.f32.mrb[0].mxu0
    %v8273 = vpop.f32.mrb[0].mxu0
    %8274 = vdwg.mxu0
    %8275 = vmatprep.subr.bf16.mxu0 %v1800
    %8276 = vmatpush1.bf16.msra.mxu0 %v1799
    %8277 = vmatprep.subr.bf16.mxu0 %v1812
    %8278 = vmatpush1.bf16.msra.mxu0 %v1811
    %8279 = vmatprep.subr.bf16.mxu0 %v1824
    %8280 = vmatpush1.bf16.msra.mxu0 %v1823
    %8281 = vmatprep.subr.bf16.mxu0 %v1836
    %8282 = vmatpush1.bf16.msra.mxu0 %v1835
    %8283 = vmatprep.subr.bf16.mxu0 %v1848
    %8284 = vmatpush1.bf16.msra.mxu0 %v1847
    %8285 = vmatprep.subr.bf16.mxu0 %v1860
    %8286 = vmatpush1.bf16.msra.mxu0 %v1859
    %8287 = vmatprep.subr.bf16.mxu0 %v1872
    %8288 = vmatpush1.bf16.msra.mxu0 %v1871
    %8289 = vmatprep.subr.bf16.mxu0 %v1884
    %8290 = vmatpush1.bf16.msra.mxu0 %v1883
    %8291 = vmatprep.subr.bf16.mxu0 %v1896
    %8292 = vmatpush1.bf16.msra.mxu0 %v1895
    %8293 = vmatprep.subr.bf16.mxu0 %v1908
    %8294 = vmatpush1.bf16.msra.mxu0 %v1907
    %8295 = vmatprep.subr.bf16.mxu0 %v1920
    %8296 = vmatpush1.bf16.msra.mxu0 %v1919
    %8297 = vmatprep.subr.bf16.mxu0 %v1932
    %8298 = vmatpush1.bf16.msra.mxu0 %v1931
    %8299 = vmatprep.subr.bf16.mxu0 %v1944
    %8300 = vmatpush1.bf16.msra.mxu0 %v1943
    %8301 = vmatprep.subr.bf16.mxu0 %v1956
    %8302 = vmatpush1.bf16.msra.mxu0 %v1955
    %8303 = vmatprep.subr.bf16.mxu0 %v1968
    %8304 = vmatpush1.bf16.msra.mxu0 %v1967
    %8305 = vmatprep.subr.bf16.mxu0 %v1980
    %8306 = vmatpush1.bf16.msra.mxu0 %v1979
    %8307 = vmatprep.mubr.bf16.mxu0 %v7860
    %8308 = vmatmul.mubr.bf16.gmra.mrb[0].mxu0 %v7859
    %v8309 = vpop.f32.mrb[0].mxu0
    %v8310 = vadd.f32 0.0, %v8309
    %v8311 = vpop.f32.mrb[0].mxu0
    %v8312 = vadd.f32 0.0, %v8311
    %v8313 = vpop.f32.mrb[0].mxu0
    %v8314 = vpop.f32.mrb[0].mxu0
    %8315 = vdwg.mxu0
    %8316 = vmatprep.subr.bf16.mxu0 %v1992
    %8317 = vmatpush1.bf16.msra.mxu0 %v1991
    %8318 = vmatprep.subr.bf16.mxu0 %v2004
    %8319 = vmatpush1.bf16.msra.mxu0 %v2003
    %8320 = vmatprep.subr.bf16.mxu0 0
    %8321 = vmatpush1.bf16.msra.mxu0 0
    %8322 = vmatprep.subr.bf16.mxu0 0
    %8323 = vmatpush1.bf16.msra.mxu0 0
    %8324 = vmatprep.subr.bf16.mxu0 0
    %8325 = vmatpush1.bf16.msra.mxu0 0
    %8326 = vmatprep.subr.bf16.mxu0 0
    %8327 = vmatpush1.bf16.msra.mxu0 0
    %8328 = vmatprep.subr.bf16.mxu0 0
    %8329 = vmatpush1.bf16.msra.mxu0 0
    %8330 = vmatprep.subr.bf16.mxu0 0
    %8331 = vmatpush1.bf16.msra.mxu0 0
    %8332 = vmatprep.subr.bf16.mxu0 0
    %8333 = vmatpush1.bf16.msra.mxu0 0
    %8334 = vmatprep.subr.bf16.mxu0 0
    %8335 = vmatpush1.bf16.msra.mxu0 0
    %8336 = vmatprep.subr.bf16.mxu0 0
    %8337 = vmatpush1.bf16.msra.mxu0 0
    %8338 = vmatprep.subr.bf16.mxu0 0
    %8339 = vmatpush1.bf16.msra.mxu0 0
    %8340 = vmatprep.subr.bf16.mxu0 0
    %8341 = vmatpush1.bf16.msra.mxu0 0
    %8342 = vmatprep.subr.bf16.mxu0 0
    %8343 = vmatpush1.bf16.msra.mxu0 0
    %8344 = vmatprep.subr.bf16.mxu0 0
    %8345 = vmatpush1.bf16.msra.mxu0 0
    %8346 = vmatprep.subr.bf16.mxu0 0
    %8347 = vmatpush1.bf16.msra.mxu0 0
    %8348 = vmatprep.mubr.bf16.mxu0 0
    %8349 = vmatmul.mubr.bf16.gmra.mrb[0].mxu0 %v7863
    %v8350 = vpop.f32.mrb[0].mxu0
    %v8351 = vadd.f32 %v8310, %v8350
    %v8352 = vpop.f32.mrb[0].mxu0
    %v8353 = vadd.f32 %v8312, %v8352
    %v8354 = vpop.f32.mrb[0].mxu0
    %v8355 = vpop.f32.mrb[0].mxu0
    %8356 = vdwg.mxu0
    %v8357 = vadd.f32 %v344, %v7941
    %v8358 = vadd.f32 %v346, %v7943
    %v8359 = vadd.f32 %v455, %v8023
    %v8360 = vadd.f32 %v457, %v8025
    %v8361 = vadd.f32 %v566, %v8105
    %v8362 = vadd.f32 %v568, %v8107
    %v8363 = vadd.f32 %v677, %v8187
    %v8364 = vadd.f32 %v679, %v8189
    %v8365 = vadd.f32 %v788, %v8269
    %v8366 = vadd.f32 %v790, %v8271
    %v8367 = vadd.f32 %v899, %v8351
    %v8368 = vadd.f32 %v901, %v8353
    %v8369 = vmul.f32 %v8357, 0.5
    %v8370 = vmul.f32 %v8358, 0.5
    %v8371 = vmul.f32 %v8359, 0.5
    %v8372 = vtanh.pop %v8369
    %v8373 = vtanh.pop %v8370
    %v8374 = vtanh.pop %v8371
    %v8375 = vmul.f32 %v8372, 0.5
    %v8376 = vmul.f32 %v8373, 0.5
    %v8377 = vmul.f32 %v8374, 0.5
    %v8378 = vadd.f32 %v8375, 0.5
    %v8379 = vadd.f32 %v8376, 0.5
    %v8380 = vadd.f32 %v8377, 0.5
    %v8381 = vmul.f32 %v8360, 0.5
    %v8382 = vmul.f32 %v8361, 0.5
    %v8383 = vmul.f32 %v8362, 0.5
    %v8384 = vtanh.pop %v8381
    %v8385 = vtanh.pop %v8382
    %v8386 = vtanh.pop %v8383
    %v8387 = vmul.f32 %v8384, 0.5
    %v8388 = vmul.f32 %v8385, 0.5
    %v8389 = vmul.f32 %v8386, 0.5
    %v8390 = vadd.f32 %v8387, 0.5
    %v8391 = vadd.f32 %v8388, 0.5
    %v8392 = vadd.f32 %v8389, 0.5
    %v8393 = vtanh.pop %v8363
    %v8394 = vtanh.pop %v8364
    %v8395 = vtanh.pop %v8365
    %v8396 = vmul.f32 %v8366, 0.5
    %v8397 = vmul.f32 %v8367, 0.5
    %v8398 = vmul.f32 %v8368, 0.5
    %v8399 = vtanh.pop %v8396
    %v8400 = vtanh.pop %v8397
    %v8401 = vtanh.pop %v8398
    %v8402 = vmul.f32 %v8399, 0.5
    %v8403 = vmul.f32 %v8400, 0.5
    %v8404 = vmul.f32 %v8401, 0.5
    %v8405 = vadd.f32 %v8402, 0.5
    %v8406 = vadd.f32 %v8403, 0.5
    %v8407 = vadd.f32 %v8404, 0.5
    %v8408 = vmul.f32 %v8390, %v7850
    %v8409 = vmul.f32 %v8391, %v7851
    %v8410 = vmul.f32 %v8392, %v7852
    %v8411 = vmul.f32 %v8378, %v8393
    %v8412 = vmul.f32 %v8379, %v8394
    %v8413 = vmul.f32 %v8380, %v8395
    %v8414 = vadd.f32 %v8408, %v8411
    %v8415 = vadd.f32 %v8409, %v8412
    %v8416 = vadd.f32 %v8410, %v8413
    %v8417 = vtanh.pop %v8414
    %v8418 = vtanh.pop %v8415
    %v8419 = vtanh.pop %v8416
    %v8420 = vmul.f32 %v8405, %v8417
    %v8421 = vmul.f32 %v8406, %v8418
    %v8422 = vmul.f32 %v8407, %v8419
    %v8423 = vpack.c.bf16 %v8420, %v8420
    %v8424 = vpack.c.bf16 %v8421, %v8421
    %v8425 = vpack.c.bf16 %v8422, %v8422
    %v8427 = vsel %vm2221, %v8425, 0
    %8429 = vmatprep.subr.bf16.mxu0 %v1790
    %8430 = vmatpush1.bf16.msra.mxu0 %v1789
    %8431 = vmatprep.subr.bf16.mxu0 %v1802
    %8432 = vmatpush1.bf16.msra.mxu0 %v1801
    %8433 = vmatprep.subr.bf16.mxu0 %v1814
    %8434 = vmatpush1.bf16.msra.mxu0 %v1813
    %8435 = vmatprep.subr.bf16.mxu0 %v1826
    %8436 = vmatpush1.bf16.msra.mxu0 %v1825
    %8437 = vmatprep.subr.bf16.mxu0 %v1838
    %8438 = vmatpush1.bf16.msra.mxu0 %v1837
    %8439 = vmatprep.subr.bf16.mxu0 %v1850
    %8440 = vmatpush1.bf16.msra.mxu0 %v1849
    %8441 = vmatprep.subr.bf16.mxu0 %v1862
    %8442 = vmatpush1.bf16.msra.mxu0 %v1861
    %8443 = vmatprep.subr.bf16.mxu0 %v1874
    %8444 = vmatpush1.bf16.msra.mxu0 %v1873
    %8445 = vmatprep.subr.bf16.mxu0 %v1886
    %8446 = vmatpush1.bf16.msra.mxu0 %v1885
    %8447 = vmatprep.subr.bf16.mxu0 %v1898
    %8448 = vmatpush1.bf16.msra.mxu0 %v1897
    %8449 = vmatprep.subr.bf16.mxu0 %v1910
    %8450 = vmatpush1.bf16.msra.mxu0 %v1909
    %8451 = vmatprep.subr.bf16.mxu0 %v1922
    %8452 = vmatpush1.bf16.msra.mxu0 %v1921
    %8453 = vmatprep.subr.bf16.mxu0 %v1934
    %8454 = vmatpush1.bf16.msra.mxu0 %v1933
    %8455 = vmatprep.subr.bf16.mxu0 %v1946
    %8456 = vmatpush1.bf16.msra.mxu0 %v1945
    %8457 = vmatprep.subr.bf16.mxu0 %v1958
    %8458 = vmatpush1.bf16.msra.mxu0 %v1957
    %8459 = vmatprep.subr.bf16.mxu0 %v1970
    %8460 = vmatpush1.bf16.msra.mxu0 %v1969
    %8461 = vmatprep.mubr.bf16.mxu0 %v8424
    %8462 = vmatmul.mubr.bf16.gmra.mrb[0].mxu0 %v8423
    %v8463 = vpop.f32.mrb[0].mxu0
    %v8464 = vadd.f32 0.0, %v8463
    %v8465 = vpop.f32.mrb[0].mxu0
    %v8466 = vadd.f32 0.0, %v8465
    %v8467 = vpop.f32.mrb[0].mxu0
    %v8468 = vpop.f32.mrb[0].mxu0
    %8469 = vdwg.mxu0
    %8470 = vmatprep.subr.bf16.mxu0 %v1982
    %8471 = vmatpush1.bf16.msra.mxu0 %v1981
    %8472 = vmatprep.subr.bf16.mxu0 %v1994
    %8473 = vmatpush1.bf16.msra.mxu0 %v1993
    %8474 = vmatprep.subr.bf16.mxu0 0
    %8475 = vmatpush1.bf16.msra.mxu0 0
    %8476 = vmatprep.subr.bf16.mxu0 0
    %8477 = vmatpush1.bf16.msra.mxu0 0
    %8478 = vmatprep.subr.bf16.mxu0 0
    %8479 = vmatpush1.bf16.msra.mxu0 0
    %8480 = vmatprep.subr.bf16.mxu0 0
    %8481 = vmatpush1.bf16.msra.mxu0 0
    %8482 = vmatprep.subr.bf16.mxu0 0
    %8483 = vmatpush1.bf16.msra.mxu0 0
    %8484 = vmatprep.subr.bf16.mxu0 0
    %8485 = vmatpush1.bf16.msra.mxu0 0
    %8486 = vmatprep.subr.bf16.mxu0 0
    %8487 = vmatpush1.bf16.msra.mxu0 0
    %8488 = vmatprep.subr.bf16.mxu0 0
    %8489 = vmatpush1.bf16.msra.mxu0 0
    %8490 = vmatprep.subr.bf16.mxu0 0
    %8491 = vmatpush1.bf16.msra.mxu0 0
    %8492 = vmatprep.subr.bf16.mxu0 0
    %8493 = vmatpush1.bf16.msra.mxu0 0
    %8494 = vmatprep.subr.bf16.mxu0 0
    %8495 = vmatpush1.bf16.msra.mxu0 0
    %8496 = vmatprep.subr.bf16.mxu0 0
    %8497 = vmatpush1.bf16.msra.mxu0 0
    %8498 = vmatprep.subr.bf16.mxu0 0
    %8499 = vmatpush1.bf16.msra.mxu0 0
    %8500 = vmatprep.subr.bf16.mxu0 0
    %8501 = vmatpush1.bf16.msra.mxu0 0
    %8502 = vmatprep.mubr.bf16.mxu0 0
    %8503 = vmatmul.mubr.bf16.gmra.mrb[0].mxu0 %v8427
    %v8504 = vpop.f32.mrb[0].mxu0
    %v8505 = vadd.f32 %v8464, %v8504
    %v8506 = vpop.f32.mrb[0].mxu0
    %v8507 = vadd.f32 %v8466, %v8506
    %v8508 = vpop.f32.mrb[0].mxu0
    %v8509 = vpop.f32.mrb[0].mxu0
    %8510 = vdwg.mxu0
    %8511 = vmatprep.subr.bf16.mxu0 %v1792
    %8512 = vmatpush1.bf16.msra.mxu0 %v1791
    %8513 = vmatprep.subr.bf16.mxu0 %v1804
    %8514 = vmatpush1.bf16.msra.mxu0 %v1803
    %8515 = vmatprep.subr.bf16.mxu0 %v1816
    %8516 = vmatpush1.bf16.msra.mxu0 %v1815
    %8517 = vmatprep.subr.bf16.mxu0 %v1828
    %8518 = vmatpush1.bf16.msra.mxu0 %v1827
    %8519 = vmatprep.subr.bf16.mxu0 %v1840
    %8520 = vmatpush1.bf16.msra.mxu0 %v1839
    %8521 = vmatprep.subr.bf16.mxu0 %v1852
    %8522 = vmatpush1.bf16.msra.mxu0 %v1851
    %8523 = vmatprep.subr.bf16.mxu0 %v1864
    %8524 = vmatpush1.bf16.msra.mxu0 %v1863
    %8525 = vmatprep.subr.bf16.mxu0 %v1876
    %8526 = vmatpush1.bf16.msra.mxu0 %v1875
    %8527 = vmatprep.subr.bf16.mxu0 %v1888
    %8528 = vmatpush1.bf16.msra.mxu0 %v1887
    %8529 = vmatprep.subr.bf16.mxu0 %v1900
    %8530 = vmatpush1.bf16.msra.mxu0 %v1899
    %8531 = vmatprep.subr.bf16.mxu0 %v1912
    %8532 = vmatpush1.bf16.msra.mxu0 %v1911
    %8533 = vmatprep.subr.bf16.mxu0 %v1924
    %8534 = vmatpush1.bf16.msra.mxu0 %v1923
    %8535 = vmatprep.subr.bf16.mxu0 %v1936
    %8536 = vmatpush1.bf16.msra.mxu0 %v1935
    %8537 = vmatprep.subr.bf16.mxu0 %v1948
    %8538 = vmatpush1.bf16.msra.mxu0 %v1947
    %8539 = vmatprep.subr.bf16.mxu0 %v1960
    %8540 = vmatpush1.bf16.msra.mxu0 %v1959
    %8541 = vmatprep.subr.bf16.mxu0 %v1972
    %8542 = vmatpush1.bf16.msra.mxu0 %v1971
    %8543 = vmatprep.mubr.bf16.mxu0 %v8424
    %8544 = vmatmul.mubr.bf16.gmra.mrb[0].mxu0 %v8423
    %v8545 = vpop.f32.mrb[0].mxu0
    %v8546 = vadd.f32 0.0, %v8545
    %v8547 = vpop.f32.mrb[0].mxu0
    %v8548 = vadd.f32 0.0, %v8547
    %v8549 = vpop.f32.mrb[0].mxu0
    %v8550 = vpop.f32.mrb[0].mxu0
    %8551 = vdwg.mxu0
    %8552 = vmatprep.subr.bf16.mxu0 %v1984
    %8553 = vmatpush1.bf16.msra.mxu0 %v1983
    %8554 = vmatprep.subr.bf16.mxu0 %v1996
    %8555 = vmatpush1.bf16.msra.mxu0 %v1995
    %8556 = vmatprep.subr.bf16.mxu0 0
    %8557 = vmatpush1.bf16.msra.mxu0 0
    %8558 = vmatprep.subr.bf16.mxu0 0
    %8559 = vmatpush1.bf16.msra.mxu0 0
    %8560 = vmatprep.subr.bf16.mxu0 0
    %8561 = vmatpush1.bf16.msra.mxu0 0
    %8562 = vmatprep.subr.bf16.mxu0 0
    %8563 = vmatpush1.bf16.msra.mxu0 0
    %8564 = vmatprep.subr.bf16.mxu0 0
    %8565 = vmatpush1.bf16.msra.mxu0 0
    %8566 = vmatprep.subr.bf16.mxu0 0
    %8567 = vmatpush1.bf16.msra.mxu0 0
    %8568 = vmatprep.subr.bf16.mxu0 0
    %8569 = vmatpush1.bf16.msra.mxu0 0
    %8570 = vmatprep.subr.bf16.mxu0 0
    %8571 = vmatpush1.bf16.msra.mxu0 0
    %8572 = vmatprep.subr.bf16.mxu0 0
    %8573 = vmatpush1.bf16.msra.mxu0 0
    %8574 = vmatprep.subr.bf16.mxu0 0
    %8575 = vmatpush1.bf16.msra.mxu0 0
    %8576 = vmatprep.subr.bf16.mxu0 0
    %8577 = vmatpush1.bf16.msra.mxu0 0
    %8578 = vmatprep.subr.bf16.mxu0 0
    %8579 = vmatpush1.bf16.msra.mxu0 0
    %8580 = vmatprep.subr.bf16.mxu0 0
    %8581 = vmatpush1.bf16.msra.mxu0 0
    %8582 = vmatprep.subr.bf16.mxu0 0
    %8583 = vmatpush1.bf16.msra.mxu0 0
    %8584 = vmatprep.mubr.bf16.mxu0 0
    %8585 = vmatmul.mubr.bf16.gmra.mrb[0].mxu0 %v8427
    %v8586 = vpop.f32.mrb[0].mxu0
    %v8587 = vadd.f32 %v8546, %v8586
    %v8588 = vpop.f32.mrb[0].mxu0
    %v8589 = vadd.f32 %v8548, %v8588
    %v8590 = vpop.f32.mrb[0].mxu0
    %v8591 = vpop.f32.mrb[0].mxu0
    %8592 = vdwg.mxu0
    %8593 = vmatprep.subr.bf16.mxu0 %v1794
    %8594 = vmatpush1.bf16.msra.mxu0 %v1793
    %8595 = vmatprep.subr.bf16.mxu0 %v1806
    %8596 = vmatpush1.bf16.msra.mxu0 %v1805
    %8597 = vmatprep.subr.bf16.mxu0 %v1818
    %8598 = vmatpush1.bf16.msra.mxu0 %v1817
    %8599 = vmatprep.subr.bf16.mxu0 %v1830
    %8600 = vmatpush1.bf16.msra.mxu0 %v1829
    %8601 = vmatprep.subr.bf16.mxu0 %v1842
    %8602 = vmatpush1.bf16.msra.mxu0 %v1841
    %8603 = vmatprep.subr.bf16.mxu0 %v1854
    %8604 = vmatpush1.bf16.msra.mxu0 %v1853
    %8605 = vmatprep.subr.bf16.mxu0 %v1866
    %8606 = vmatpush1.bf16.msra.mxu0 %v1865
    %8607 = vmatprep.subr.bf16.mxu0 %v1878
    %8608 = vmatpush1.bf16.msra.mxu0 %v1877
    %8609 = vmatprep.subr.bf16.mxu0 %v1890
    %8610 = vmatpush1.bf16.msra.mxu0 %v1889
    %8611 = vmatprep.subr.bf16.mxu0 %v1902
    %8612 = vmatpush1.bf16.msra.mxu0 %v1901
    %8613 = vmatprep.subr.bf16.mxu0 %v1914
    %8614 = vmatpush1.bf16.msra.mxu0 %v1913
    %8615 = vmatprep.subr.bf16.mxu0 %v1926
    %8616 = vmatpush1.bf16.msra.mxu0 %v1925
    %8617 = vmatprep.subr.bf16.mxu0 %v1938
    %8618 = vmatpush1.bf16.msra.mxu0 %v1937
    %8619 = vmatprep.subr.bf16.mxu0 %v1950
    %8620 = vmatpush1.bf16.msra.mxu0 %v1949
    %8621 = vmatprep.subr.bf16.mxu0 %v1962
    %8622 = vmatpush1.bf16.msra.mxu0 %v1961
    %8623 = vmatprep.subr.bf16.mxu0 %v1974
    %8624 = vmatpush1.bf16.msra.mxu0 %v1973
    %8625 = vmatprep.mubr.bf16.mxu0 %v8424
    %8626 = vmatmul.mubr.bf16.gmra.mrb[0].mxu0 %v8423
    %v8627 = vpop.f32.mrb[0].mxu0
    %v8628 = vadd.f32 0.0, %v8627
    %v8629 = vpop.f32.mrb[0].mxu0
    %v8630 = vadd.f32 0.0, %v8629
    %v8631 = vpop.f32.mrb[0].mxu0
    %v8632 = vpop.f32.mrb[0].mxu0
    %8633 = vdwg.mxu0
    %8634 = vmatprep.subr.bf16.mxu0 %v1986
    %8635 = vmatpush1.bf16.msra.mxu0 %v1985
    %8636 = vmatprep.subr.bf16.mxu0 %v1998
    %8637 = vmatpush1.bf16.msra.mxu0 %v1997
    %8638 = vmatprep.subr.bf16.mxu0 0
    %8639 = vmatpush1.bf16.msra.mxu0 0
    %8640 = vmatprep.subr.bf16.mxu0 0
    %8641 = vmatpush1.bf16.msra.mxu0 0
    %8642 = vmatprep.subr.bf16.mxu0 0
    %8643 = vmatpush1.bf16.msra.mxu0 0
    %8644 = vmatprep.subr.bf16.mxu0 0
    %8645 = vmatpush1.bf16.msra.mxu0 0
    %8646 = vmatprep.subr.bf16.mxu0 0
    %8647 = vmatpush1.bf16.msra.mxu0 0
    %8648 = vmatprep.subr.bf16.mxu0 0
    %8649 = vmatpush1.bf16.msra.mxu0 0
    %8650 = vmatprep.subr.bf16.mxu0 0
    %8651 = vmatpush1.bf16.msra.mxu0 0
    %8652 = vmatprep.subr.bf16.mxu0 0
    %8653 = vmatpush1.bf16.msra.mxu0 0
    %8654 = vmatprep.subr.bf16.mxu0 0
    %8655 = vmatpush1.bf16.msra.mxu0 0
    %8656 = vmatprep.subr.bf16.mxu0 0
    %8657 = vmatpush1.bf16.msra.mxu0 0
    %8658 = vmatprep.subr.bf16.mxu0 0
    %8659 = vmatpush1.bf16.msra.mxu0 0
    %8660 = vmatprep.subr.bf16.mxu0 0
    %8661 = vmatpush1.bf16.msra.mxu0 0
    %8662 = vmatprep.subr.bf16.mxu0 0
    %8663 = vmatpush1.bf16.msra.mxu0 0
    %8664 = vmatprep.subr.bf16.mxu0 0
    %8665 = vmatpush1.bf16.msra.mxu0 0
    %8666 = vmatprep.mubr.bf16.mxu0 0
    %8667 = vmatmul.mubr.bf16.gmra.mrb[0].mxu0 %v8427
    %v8668 = vpop.f32.mrb[0].mxu0
    %v8669 = vadd.f32 %v8628, %v8668
    %v8670 = vpop.f32.mrb[0].mxu0
    %v8671 = vadd.f32 %v8630, %v8670
    %v8672 = vpop.f32.mrb[0].mxu0
    %v8673 = vpop.f32.mrb[0].mxu0
    %8674 = vdwg.mxu0
    %8675 = vmatprep.subr.bf16.mxu0 %v1796
    %8676 = vmatpush1.bf16.msra.mxu0 %v1795
    %8677 = vmatprep.subr.bf16.mxu0 %v1808
    %8678 = vmatpush1.bf16.msra.mxu0 %v1807
    %8679 = vmatprep.subr.bf16.mxu0 %v1820
    %8680 = vmatpush1.bf16.msra.mxu0 %v1819
    %8681 = vmatprep.subr.bf16.mxu0 %v1832
    %8682 = vmatpush1.bf16.msra.mxu0 %v1831
    %8683 = vmatprep.subr.bf16.mxu0 %v1844
    %8684 = vmatpush1.bf16.msra.mxu0 %v1843
    %8685 = vmatprep.subr.bf16.mxu0 %v1856
    %8686 = vmatpush1.bf16.msra.mxu0 %v1855
    %8687 = vmatprep.subr.bf16.mxu0 %v1868
    %8688 = vmatpush1.bf16.msra.mxu0 %v1867
    %8689 = vmatprep.subr.bf16.mxu0 %v1880
    %8690 = vmatpush1.bf16.msra.mxu0 %v1879
    %8691 = vmatprep.subr.bf16.mxu0 %v1892
    %8692 = vmatpush1.bf16.msra.mxu0 %v1891
    %8693 = vmatprep.subr.bf16.mxu0 %v1904
    %8694 = vmatpush1.bf16.msra.mxu0 %v1903
    %8695 = vmatprep.subr.bf16.mxu0 %v1916
    %8696 = vmatpush1.bf16.msra.mxu0 %v1915
    %8697 = vmatprep.subr.bf16.mxu0 %v1928
    %8698 = vmatpush1.bf16.msra.mxu0 %v1927
    %8699 = vmatprep.subr.bf16.mxu0 %v1940
    %8700 = vmatpush1.bf16.msra.mxu0 %v1939
    %8701 = vmatprep.subr.bf16.mxu0 %v1952
    %8702 = vmatpush1.bf16.msra.mxu0 %v1951
    %8703 = vmatprep.subr.bf16.mxu0 %v1964
    %8704 = vmatpush1.bf16.msra.mxu0 %v1963
    %8705 = vmatprep.subr.bf16.mxu0 %v1976
    %8706 = vmatpush1.bf16.msra.mxu0 %v1975
    %8707 = vmatprep.mubr.bf16.mxu0 %v8424
    %8708 = vmatmul.mubr.bf16.gmra.mrb[0].mxu0 %v8423
    %v8709 = vpop.f32.mrb[0].mxu0
    %v8710 = vadd.f32 0.0, %v8709
    %v8711 = vpop.f32.mrb[0].mxu0
    %v8712 = vadd.f32 0.0, %v8711
    %v8713 = vpop.f32.mrb[0].mxu0
    %v8714 = vpop.f32.mrb[0].mxu0
    %8715 = vdwg.mxu0
    %8716 = vmatprep.subr.bf16.mxu0 %v1988
    %8717 = vmatpush1.bf16.msra.mxu0 %v1987
    %8718 = vmatprep.subr.bf16.mxu0 %v2000
    %8719 = vmatpush1.bf16.msra.mxu0 %v1999
    %8720 = vmatprep.subr.bf16.mxu0 0
    %8721 = vmatpush1.bf16.msra.mxu0 0
    %8722 = vmatprep.subr.bf16.mxu0 0
    %8723 = vmatpush1.bf16.msra.mxu0 0
    %8724 = vmatprep.subr.bf16.mxu0 0
    %8725 = vmatpush1.bf16.msra.mxu0 0
    %8726 = vmatprep.subr.bf16.mxu0 0
    %8727 = vmatpush1.bf16.msra.mxu0 0
    %8728 = vmatprep.subr.bf16.mxu0 0
    %8729 = vmatpush1.bf16.msra.mxu0 0
    %8730 = vmatprep.subr.bf16.mxu0 0
    %8731 = vmatpush1.bf16.msra.mxu0 0
    %8732 = vmatprep.subr.bf16.mxu0 0
    %8733 = vmatpush1.bf16.msra.mxu0 0
    %8734 = vmatprep.subr.bf16.mxu0 0
    %8735 = vmatpush1.bf16.msra.mxu0 0
    %8736 = vmatprep.subr.bf16.mxu0 0
    %8737 = vmatpush1.bf16.msra.mxu0 0
    %8738 = vmatprep.subr.bf16.mxu0 0
    %8739 = vmatpush1.bf16.msra.mxu0 0
    %8740 = vmatprep.subr.bf16.mxu0 0
    %8741 = vmatpush1.bf16.msra.mxu0 0
    %8742 = vmatprep.subr.bf16.mxu0 0
    %8743 = vmatpush1.bf16.msra.mxu0 0
    %8744 = vmatprep.subr.bf16.mxu0 0
    %8745 = vmatpush1.bf16.msra.mxu0 0
    %8746 = vmatprep.subr.bf16.mxu0 0
    %8747 = vmatpush1.bf16.msra.mxu0 0
    %8748 = vmatprep.mubr.bf16.mxu0 0
    %8749 = vmatmul.mubr.bf16.gmra.mrb[0].mxu0 %v8427
    %v8750 = vpop.f32.mrb[0].mxu0
    %v8751 = vadd.f32 %v8710, %v8750
    %v8752 = vpop.f32.mrb[0].mxu0
    %v8753 = vadd.f32 %v8712, %v8752
    %v8754 = vpop.f32.mrb[0].mxu0
    %v8755 = vpop.f32.mrb[0].mxu0
    %8756 = vdwg.mxu0
    %8757 = vmatprep.subr.bf16.mxu0 %v1798
    %8758 = vmatpush1.bf16.msra.mxu0 %v1797
    %8759 = vmatprep.subr.bf16.mxu0 %v1810
    %8760 = vmatpush1.bf16.msra.mxu0 %v1809
    %8761 = vmatprep.subr.bf16.mxu0 %v1822
    %8762 = vmatpush1.bf16.msra.mxu0 %v1821
    %8763 = vmatprep.subr.bf16.mxu0 %v1834
    %8764 = vmatpush1.bf16.msra.mxu0 %v1833
    %8765 = vmatprep.subr.bf16.mxu0 %v1846
    %8766 = vmatpush1.bf16.msra.mxu0 %v1845
    %8767 = vmatprep.subr.bf16.mxu0 %v1858
    %8768 = vmatpush1.bf16.msra.mxu0 %v1857
    %8769 = vmatprep.subr.bf16.mxu0 %v1870
    %8770 = vmatpush1.bf16.msra.mxu0 %v1869
    %8771 = vmatprep.subr.bf16.mxu0 %v1882
    %8772 = vmatpush1.bf16.msra.mxu0 %v1881
    %8773 = vmatprep.subr.bf16.mxu0 %v1894
    %8774 = vmatpush1.bf16.msra.mxu0 %v1893
    %8775 = vmatprep.subr.bf16.mxu0 %v1906
    %8776 = vmatpush1.bf16.msra.mxu0 %v1905
    %8777 = vmatprep.subr.bf16.mxu0 %v1918
    %8778 = vmatpush1.bf16.msra.mxu0 %v1917
    %8779 = vmatprep.subr.bf16.mxu0 %v1930
    %8780 = vmatpush1.bf16.msra.mxu0 %v1929
    %8781 = vmatprep.subr.bf16.mxu0 %v1942
    %8782 = vmatpush1.bf16.msra.mxu0 %v1941
    %8783 = vmatprep.subr.bf16.mxu0 %v1954
    %8784 = vmatpush1.bf16.msra.mxu0 %v1953
    %8785 = vmatprep.subr.bf16.mxu0 %v1966
    %8786 = vmatpush1.bf16.msra.mxu0 %v1965
    %8787 = vmatprep.subr.bf16.mxu0 %v1978
    %8788 = vmatpush1.bf16.msra.mxu0 %v1977
    %8789 = vmatprep.mubr.bf16.mxu0 %v8424
    %8790 = vmatmul.mubr.bf16.gmra.mrb[0].mxu0 %v8423
    %v8791 = vpop.f32.mrb[0].mxu0
    %v8792 = vadd.f32 0.0, %v8791
    %v8793 = vpop.f32.mrb[0].mxu0
    %v8794 = vadd.f32 0.0, %v8793
    %v8795 = vpop.f32.mrb[0].mxu0
    %v8796 = vpop.f32.mrb[0].mxu0
    %8797 = vdwg.mxu0
    %8798 = vmatprep.subr.bf16.mxu0 %v1990
    %8799 = vmatpush1.bf16.msra.mxu0 %v1989
    %8800 = vmatprep.subr.bf16.mxu0 %v2002
    %8801 = vmatpush1.bf16.msra.mxu0 %v2001
    %8802 = vmatprep.subr.bf16.mxu0 0
    %8803 = vmatpush1.bf16.msra.mxu0 0
    %8804 = vmatprep.subr.bf16.mxu0 0
    %8805 = vmatpush1.bf16.msra.mxu0 0
    %8806 = vmatprep.subr.bf16.mxu0 0
    %8807 = vmatpush1.bf16.msra.mxu0 0
    %8808 = vmatprep.subr.bf16.mxu0 0
    %8809 = vmatpush1.bf16.msra.mxu0 0
    %8810 = vmatprep.subr.bf16.mxu0 0
    %8811 = vmatpush1.bf16.msra.mxu0 0
    %8812 = vmatprep.subr.bf16.mxu0 0
    %8813 = vmatpush1.bf16.msra.mxu0 0
    %8814 = vmatprep.subr.bf16.mxu0 0
    %8815 = vmatpush1.bf16.msra.mxu0 0
    %8816 = vmatprep.subr.bf16.mxu0 0
    %8817 = vmatpush1.bf16.msra.mxu0 0
    %8818 = vmatprep.subr.bf16.mxu0 0
    %8819 = vmatpush1.bf16.msra.mxu0 0
    %8820 = vmatprep.subr.bf16.mxu0 0
    %8821 = vmatpush1.bf16.msra.mxu0 0
    %8822 = vmatprep.subr.bf16.mxu0 0
    %8823 = vmatpush1.bf16.msra.mxu0 0
    %8824 = vmatprep.subr.bf16.mxu0 0
    %8825 = vmatpush1.bf16.msra.mxu0 0
    %8826 = vmatprep.subr.bf16.mxu0 0
    %8827 = vmatpush1.bf16.msra.mxu0 0
    %8828 = vmatprep.subr.bf16.mxu0 0
    %8829 = vmatpush1.bf16.msra.mxu0 0
    %8830 = vmatprep.mubr.bf16.mxu0 0
    %8831 = vmatmul.mubr.bf16.gmra.mrb[0].mxu0 %v8427
    %v8832 = vpop.f32.mrb[0].mxu0
    %v8833 = vadd.f32 %v8792, %v8832
    %v8834 = vpop.f32.mrb[0].mxu0
    %v8835 = vadd.f32 %v8794, %v8834
    %v8836 = vpop.f32.mrb[0].mxu0
    %v8837 = vpop.f32.mrb[0].mxu0
    %8838 = vdwg.mxu0
    %8839 = vmatprep.subr.bf16.mxu0 %v1800
    %8840 = vmatpush1.bf16.msra.mxu0 %v1799
    %8841 = vmatprep.subr.bf16.mxu0 %v1812
    %8842 = vmatpush1.bf16.msra.mxu0 %v1811
    %8843 = vmatprep.subr.bf16.mxu0 %v1824
    %8844 = vmatpush1.bf16.msra.mxu0 %v1823
    %8845 = vmatprep.subr.bf16.mxu0 %v1836
    %8846 = vmatpush1.bf16.msra.mxu0 %v1835
    %8847 = vmatprep.subr.bf16.mxu0 %v1848
    %8848 = vmatpush1.bf16.msra.mxu0 %v1847
    %8849 = vmatprep.subr.bf16.mxu0 %v1860
    %8850 = vmatpush1.bf16.msra.mxu0 %v1859
    %8851 = vmatprep.subr.bf16.mxu0 %v1872
    %8852 = vmatpush1.bf16.msra.mxu0 %v1871
    %8853 = vmatprep.subr.bf16.mxu0 %v1884
    %8854 = vmatpush1.bf16.msra.mxu0 %v1883
    %8855 = vmatprep.subr.bf16.mxu0 %v1896
    %8856 = vmatpush1.bf16.msra.mxu0 %v1895
    %8857 = vmatprep.subr.bf16.mxu0 %v1908
    %8858 = vmatpush1.bf16.msra.mxu0 %v1907
    %8859 = vmatprep.subr.bf16.mxu0 %v1920
    %8860 = vmatpush1.bf16.msra.mxu0 %v1919
    %8861 = vmatprep.subr.bf16.mxu0 %v1932
    %8862 = vmatpush1.bf16.msra.mxu0 %v1931
    %8863 = vmatprep.subr.bf16.mxu0 %v1944
    %8864 = vmatpush1.bf16.msra.mxu0 %v1943
    %8865 = vmatprep.subr.bf16.mxu0 %v1956
    %8866 = vmatpush1.bf16.msra.mxu0 %v1955
    %8867 = vmatprep.subr.bf16.mxu0 %v1968
    %8868 = vmatpush1.bf16.msra.mxu0 %v1967
    %8869 = vmatprep.subr.bf16.mxu0 %v1980
    %8870 = vmatpush1.bf16.msra.mxu0 %v1979
    %8871 = vmatprep.mubr.bf16.mxu0 %v8424
    %8872 = vmatmul.mubr.bf16.gmra.mrb[0].mxu0 %v8423
    %v8873 = vpop.f32.mrb[0].mxu0
    %v8874 = vadd.f32 0.0, %v8873
    %v8875 = vpop.f32.mrb[0].mxu0
    %v8876 = vadd.f32 0.0, %v8875
    %v8877 = vpop.f32.mrb[0].mxu0
    %v8878 = vpop.f32.mrb[0].mxu0
    %8879 = vdwg.mxu0
    %8880 = vmatprep.subr.bf16.mxu0 %v1992
    %8881 = vmatpush1.bf16.msra.mxu0 %v1991
    %8882 = vmatprep.subr.bf16.mxu0 %v2004
    %8883 = vmatpush1.bf16.msra.mxu0 %v2003
    %8884 = vmatprep.subr.bf16.mxu0 0
    %8885 = vmatpush1.bf16.msra.mxu0 0
    %8886 = vmatprep.subr.bf16.mxu0 0
    %8887 = vmatpush1.bf16.msra.mxu0 0
    %8888 = vmatprep.subr.bf16.mxu0 0
    %8889 = vmatpush1.bf16.msra.mxu0 0
    %8890 = vmatprep.subr.bf16.mxu0 0
    %8891 = vmatpush1.bf16.msra.mxu0 0
    %8892 = vmatprep.subr.bf16.mxu0 0
    %8893 = vmatpush1.bf16.msra.mxu0 0
    %8894 = vmatprep.subr.bf16.mxu0 0
    %8895 = vmatpush1.bf16.msra.mxu0 0
    %8896 = vmatprep.subr.bf16.mxu0 0
    %8897 = vmatpush1.bf16.msra.mxu0 0
    %8898 = vmatprep.subr.bf16.mxu0 0
    %8899 = vmatpush1.bf16.msra.mxu0 0
    %8900 = vmatprep.subr.bf16.mxu0 0
    %8901 = vmatpush1.bf16.msra.mxu0 0
    %8902 = vmatprep.subr.bf16.mxu0 0
    %8903 = vmatpush1.bf16.msra.mxu0 0
    %8904 = vmatprep.subr.bf16.mxu0 0
    %8905 = vmatpush1.bf16.msra.mxu0 0
    %8906 = vmatprep.subr.bf16.mxu0 0
    %8907 = vmatpush1.bf16.msra.mxu0 0
    %8908 = vmatprep.subr.bf16.mxu0 0
    %8909 = vmatpush1.bf16.msra.mxu0 0
    %8910 = vmatprep.subr.bf16.mxu0 0
    %8911 = vmatpush1.bf16.msra.mxu0 0
    %8912 = vmatprep.mubr.bf16.mxu0 0
    %8913 = vmatmul.mubr.bf16.gmra.mrb[0].mxu0 %v8427
    %v8914 = vpop.f32.mrb[0].mxu0
    %v8915 = vadd.f32 %v8874, %v8914
    %v8916 = vpop.f32.mrb[0].mxu0
    %v8917 = vadd.f32 %v8876, %v8916
    %v8918 = vpop.f32.mrb[0].mxu0
    %v8919 = vpop.f32.mrb[0].mxu0
    %8920 = vdwg.mxu0
    %v8921 = vadd.f32 %v348, %v8505
    %v8922 = vadd.f32 %v350, %v8507
    %v8923 = vadd.f32 %v459, %v8587
    %v8924 = vadd.f32 %v461, %v8589
    %v8925 = vadd.f32 %v570, %v8669
    %v8926 = vadd.f32 %v572, %v8671
    %v8927 = vadd.f32 %v681, %v8751
    %v8928 = vadd.f32 %v683, %v8753
    %v8929 = vadd.f32 %v792, %v8833
    %v8930 = vadd.f32 %v794, %v8835
    %v8931 = vadd.f32 %v903, %v8915
    %v8932 = vadd.f32 %v905, %v8917
    %v8933 = vmul.f32 %v8921, 0.5
    %v8934 = vmul.f32 %v8922, 0.5
    %v8935 = vmul.f32 %v8923, 0.5
    %v8936 = vtanh.pop %v8933
    %v8937 = vtanh.pop %v8934
    %v8938 = vtanh.pop %v8935
    %v8939 = vmul.f32 %v8936, 0.5
    %v8940 = vmul.f32 %v8937, 0.5
    %v8941 = vmul.f32 %v8938, 0.5
    %v8942 = vadd.f32 %v8939, 0.5
    %v8943 = vadd.f32 %v8940, 0.5
    %v8944 = vadd.f32 %v8941, 0.5
    %v8945 = vmul.f32 %v8924, 0.5
    %v8946 = vmul.f32 %v8925, 0.5
    %v8947 = vmul.f32 %v8926, 0.5
    %v8948 = vtanh.pop %v8945
    %v8949 = vtanh.pop %v8946
    %v8950 = vtanh.pop %v8947
    %v8951 = vmul.f32 %v8948, 0.5
    %v8952 = vmul.f32 %v8949, 0.5
    %v8953 = vmul.f32 %v8950, 0.5
    %v8954 = vadd.f32 %v8951, 0.5
    %v8955 = vadd.f32 %v8952, 0.5
    %v8956 = vadd.f32 %v8953, 0.5
    %v8957 = vtanh.pop %v8927
    %v8958 = vtanh.pop %v8928
    %v8959 = vtanh.pop %v8929
    %v8960 = vmul.f32 %v8930, 0.5
    %v8961 = vmul.f32 %v8931, 0.5
    %v8962 = vmul.f32 %v8932, 0.5
    %v8963 = vtanh.pop %v8960
    %v8964 = vtanh.pop %v8961
    %v8965 = vtanh.pop %v8962
    %v8966 = vmul.f32 %v8963, 0.5
    %v8967 = vmul.f32 %v8964, 0.5
    %v8968 = vmul.f32 %v8965, 0.5
    %v8969 = vadd.f32 %v8966, 0.5
    %v8970 = vadd.f32 %v8967, 0.5
    %v8971 = vadd.f32 %v8968, 0.5
    %v8972 = vmul.f32 %v8954, %v8414
    %v8973 = vmul.f32 %v8955, %v8415
    %v8974 = vmul.f32 %v8956, %v8416
    %v8975 = vmul.f32 %v8942, %v8957
    %v8976 = vmul.f32 %v8943, %v8958
    %v8977 = vmul.f32 %v8944, %v8959
    %v8978 = vadd.f32 %v8972, %v8975
    %v8979 = vadd.f32 %v8973, %v8976
    %v8980 = vadd.f32 %v8974, %v8977
    %v8981 = vtanh.pop %v8978
    %v8982 = vtanh.pop %v8979
    %v8983 = vtanh.pop %v8980
    %v8984 = vmul.f32 %v8969, %v8981
    %v8985 = vmul.f32 %v8970, %v8982
    %v8986 = vmul.f32 %v8971, %v8983
    %v8987 = vpack.c.bf16 %v8984, %v8984
    %v8988 = vpack.c.bf16 %v8985, %v8985
    %v8989 = vpack.c.bf16 %v8986, %v8986
    %v8991 = vsel %vm2221, %v8989, 0
    %8993 = vmatprep.subr.bf16.mxu0 %v1790
    %8994 = vmatpush1.bf16.msra.mxu0 %v1789
    %8995 = vmatprep.subr.bf16.mxu0 %v1802
    %8996 = vmatpush1.bf16.msra.mxu0 %v1801
    %8997 = vmatprep.subr.bf16.mxu0 %v1814
    %8998 = vmatpush1.bf16.msra.mxu0 %v1813
    %8999 = vmatprep.subr.bf16.mxu0 %v1826
    %9000 = vmatpush1.bf16.msra.mxu0 %v1825
    %9001 = vmatprep.subr.bf16.mxu0 %v1838
    %9002 = vmatpush1.bf16.msra.mxu0 %v1837
    %9003 = vmatprep.subr.bf16.mxu0 %v1850
    %9004 = vmatpush1.bf16.msra.mxu0 %v1849
    %9005 = vmatprep.subr.bf16.mxu0 %v1862
    %9006 = vmatpush1.bf16.msra.mxu0 %v1861
    %9007 = vmatprep.subr.bf16.mxu0 %v1874
    %9008 = vmatpush1.bf16.msra.mxu0 %v1873
    %9009 = vmatprep.subr.bf16.mxu0 %v1886
    %9010 = vmatpush1.bf16.msra.mxu0 %v1885
    %9011 = vmatprep.subr.bf16.mxu0 %v1898
    %9012 = vmatpush1.bf16.msra.mxu0 %v1897
    %9013 = vmatprep.subr.bf16.mxu0 %v1910
    %9014 = vmatpush1.bf16.msra.mxu0 %v1909
    %9015 = vmatprep.subr.bf16.mxu0 %v1922
    %9016 = vmatpush1.bf16.msra.mxu0 %v1921
    %9017 = vmatprep.subr.bf16.mxu0 %v1934
    %9018 = vmatpush1.bf16.msra.mxu0 %v1933
    %9019 = vmatprep.subr.bf16.mxu0 %v1946
    %9020 = vmatpush1.bf16.msra.mxu0 %v1945
    %9021 = vmatprep.subr.bf16.mxu0 %v1958
    %9022 = vmatpush1.bf16.msra.mxu0 %v1957
    %9023 = vmatprep.subr.bf16.mxu0 %v1970
    %9024 = vmatpush1.bf16.msra.mxu0 %v1969
    %9025 = vmatprep.mubr.bf16.mxu0 %v8988
    %9026 = vmatmul.mubr.bf16.gmra.mrb[0].mxu0 %v8987
    %v9027 = vpop.f32.mrb[0].mxu0
    %v9028 = vadd.f32 0.0, %v9027
    %v9029 = vpop.f32.mrb[0].mxu0
    %v9030 = vadd.f32 0.0, %v9029
    %v9031 = vpop.f32.mrb[0].mxu0
    %v9032 = vpop.f32.mrb[0].mxu0
    %9033 = vdwg.mxu0
    %9034 = vmatprep.subr.bf16.mxu0 %v1982
    %9035 = vmatpush1.bf16.msra.mxu0 %v1981
    %9036 = vmatprep.subr.bf16.mxu0 %v1994
    %9037 = vmatpush1.bf16.msra.mxu0 %v1993
    %9038 = vmatprep.subr.bf16.mxu0 0
    %9039 = vmatpush1.bf16.msra.mxu0 0
    %9040 = vmatprep.subr.bf16.mxu0 0
    %9041 = vmatpush1.bf16.msra.mxu0 0
    %9042 = vmatprep.subr.bf16.mxu0 0
    %9043 = vmatpush1.bf16.msra.mxu0 0
    %9044 = vmatprep.subr.bf16.mxu0 0
    %9045 = vmatpush1.bf16.msra.mxu0 0
    %9046 = vmatprep.subr.bf16.mxu0 0
    %9047 = vmatpush1.bf16.msra.mxu0 0
    %9048 = vmatprep.subr.bf16.mxu0 0
    %9049 = vmatpush1.bf16.msra.mxu0 0
    %9050 = vmatprep.subr.bf16.mxu0 0
    %9051 = vmatpush1.bf16.msra.mxu0 0
    %9052 = vmatprep.subr.bf16.mxu0 0
    %9053 = vmatpush1.bf16.msra.mxu0 0
    %9054 = vmatprep.subr.bf16.mxu0 0
    %9055 = vmatpush1.bf16.msra.mxu0 0
    %9056 = vmatprep.subr.bf16.mxu0 0
    %9057 = vmatpush1.bf16.msra.mxu0 0
    %9058 = vmatprep.subr.bf16.mxu0 0
    %9059 = vmatpush1.bf16.msra.mxu0 0
    %9060 = vmatprep.subr.bf16.mxu0 0
    %9061 = vmatpush1.bf16.msra.mxu0 0
    %9062 = vmatprep.subr.bf16.mxu0 0
    %9063 = vmatpush1.bf16.msra.mxu0 0
    %9064 = vmatprep.subr.bf16.mxu0 0
    %9065 = vmatpush1.bf16.msra.mxu0 0
    %9066 = vmatprep.mubr.bf16.mxu0 0
    %9067 = vmatmul.mubr.bf16.gmra.mrb[0].mxu0 %v8991
    %v9068 = vpop.f32.mrb[0].mxu0
    %v9069 = vadd.f32 %v9028, %v9068
    %v9070 = vpop.f32.mrb[0].mxu0
    %v9071 = vadd.f32 %v9030, %v9070
    %v9072 = vpop.f32.mrb[0].mxu0
    %v9073 = vpop.f32.mrb[0].mxu0
    %9074 = vdwg.mxu0
    %9075 = vmatprep.subr.bf16.mxu0 %v1792
    %9076 = vmatpush1.bf16.msra.mxu0 %v1791
    %9077 = vmatprep.subr.bf16.mxu0 %v1804
    %9078 = vmatpush1.bf16.msra.mxu0 %v1803
    %9079 = vmatprep.subr.bf16.mxu0 %v1816
    %9080 = vmatpush1.bf16.msra.mxu0 %v1815
    %9081 = vmatprep.subr.bf16.mxu0 %v1828
    %9082 = vmatpush1.bf16.msra.mxu0 %v1827
    %9083 = vmatprep.subr.bf16.mxu0 %v1840
    %9084 = vmatpush1.bf16.msra.mxu0 %v1839
    %9085 = vmatprep.subr.bf16.mxu0 %v1852
    %9086 = vmatpush1.bf16.msra.mxu0 %v1851
    %9087 = vmatprep.subr.bf16.mxu0 %v1864
    %9088 = vmatpush1.bf16.msra.mxu0 %v1863
    %9089 = vmatprep.subr.bf16.mxu0 %v1876
    %9090 = vmatpush1.bf16.msra.mxu0 %v1875
    %9091 = vmatprep.subr.bf16.mxu0 %v1888
    %9092 = vmatpush1.bf16.msra.mxu0 %v1887
    %9093 = vmatprep.subr.bf16.mxu0 %v1900
    %9094 = vmatpush1.bf16.msra.mxu0 %v1899
    %9095 = vmatprep.subr.bf16.mxu0 %v1912
    %9096 = vmatpush1.bf16.msra.mxu0 %v1911
    %9097 = vmatprep.subr.bf16.mxu0 %v1924
    %9098 = vmatpush1.bf16.msra.mxu0 %v1923
    %9099 = vmatprep.subr.bf16.mxu0 %v1936
    %9100 = vmatpush1.bf16.msra.mxu0 %v1935
    %9101 = vmatprep.subr.bf16.mxu0 %v1948
    %9102 = vmatpush1.bf16.msra.mxu0 %v1947
    %9103 = vmatprep.subr.bf16.mxu0 %v1960
    %9104 = vmatpush1.bf16.msra.mxu0 %v1959
    %9105 = vmatprep.subr.bf16.mxu0 %v1972
    %9106 = vmatpush1.bf16.msra.mxu0 %v1971
    %9107 = vmatprep.mubr.bf16.mxu0 %v8988
    %9108 = vmatmul.mubr.bf16.gmra.mrb[0].mxu0 %v8987
    %v9109 = vpop.f32.mrb[0].mxu0
    %v9110 = vadd.f32 0.0, %v9109
    %v9111 = vpop.f32.mrb[0].mxu0
    %v9112 = vadd.f32 0.0, %v9111
    %v9113 = vpop.f32.mrb[0].mxu0
    %v9114 = vpop.f32.mrb[0].mxu0
    %9115 = vdwg.mxu0
    %9116 = vmatprep.subr.bf16.mxu0 %v1984
    %9117 = vmatpush1.bf16.msra.mxu0 %v1983
    %9118 = vmatprep.subr.bf16.mxu0 %v1996
    %9119 = vmatpush1.bf16.msra.mxu0 %v1995
    %9120 = vmatprep.subr.bf16.mxu0 0
    %9121 = vmatpush1.bf16.msra.mxu0 0
    %9122 = vmatprep.subr.bf16.mxu0 0
    %9123 = vmatpush1.bf16.msra.mxu0 0
    %9124 = vmatprep.subr.bf16.mxu0 0
    %9125 = vmatpush1.bf16.msra.mxu0 0
    %9126 = vmatprep.subr.bf16.mxu0 0
    %9127 = vmatpush1.bf16.msra.mxu0 0
    %9128 = vmatprep.subr.bf16.mxu0 0
    %9129 = vmatpush1.bf16.msra.mxu0 0
    %9130 = vmatprep.subr.bf16.mxu0 0
    %9131 = vmatpush1.bf16.msra.mxu0 0
    %9132 = vmatprep.subr.bf16.mxu0 0
    %9133 = vmatpush1.bf16.msra.mxu0 0
    %9134 = vmatprep.subr.bf16.mxu0 0
    %9135 = vmatpush1.bf16.msra.mxu0 0
    %9136 = vmatprep.subr.bf16.mxu0 0
    %9137 = vmatpush1.bf16.msra.mxu0 0
    %9138 = vmatprep.subr.bf16.mxu0 0
    %9139 = vmatpush1.bf16.msra.mxu0 0
    %9140 = vmatprep.subr.bf16.mxu0 0
    %9141 = vmatpush1.bf16.msra.mxu0 0
    %9142 = vmatprep.subr.bf16.mxu0 0
    %9143 = vmatpush1.bf16.msra.mxu0 0
    %9144 = vmatprep.subr.bf16.mxu0 0
    %9145 = vmatpush1.bf16.msra.mxu0 0
    %9146 = vmatprep.subr.bf16.mxu0 0
    %9147 = vmatpush1.bf16.msra.mxu0 0
    %9148 = vmatprep.mubr.bf16.mxu0 0
    %9149 = vmatmul.mubr.bf16.gmra.mrb[0].mxu0 %v8991
    %v9150 = vpop.f32.mrb[0].mxu0
    %v9151 = vadd.f32 %v9110, %v9150
    %v9152 = vpop.f32.mrb[0].mxu0
    %v9153 = vadd.f32 %v9112, %v9152
    %v9154 = vpop.f32.mrb[0].mxu0
    %v9155 = vpop.f32.mrb[0].mxu0
    %9156 = vdwg.mxu0
    %9157 = vmatprep.subr.bf16.mxu0 %v1794
    %9158 = vmatpush1.bf16.msra.mxu0 %v1793
    %9159 = vmatprep.subr.bf16.mxu0 %v1806
    %9160 = vmatpush1.bf16.msra.mxu0 %v1805
    %9161 = vmatprep.subr.bf16.mxu0 %v1818
    %9162 = vmatpush1.bf16.msra.mxu0 %v1817
    %9163 = vmatprep.subr.bf16.mxu0 %v1830
    %9164 = vmatpush1.bf16.msra.mxu0 %v1829
    %9165 = vmatprep.subr.bf16.mxu0 %v1842
    %9166 = vmatpush1.bf16.msra.mxu0 %v1841
    %9167 = vmatprep.subr.bf16.mxu0 %v1854
    %9168 = vmatpush1.bf16.msra.mxu0 %v1853
    %9169 = vmatprep.subr.bf16.mxu0 %v1866
    %9170 = vmatpush1.bf16.msra.mxu0 %v1865
    %9171 = vmatprep.subr.bf16.mxu0 %v1878
    %9172 = vmatpush1.bf16.msra.mxu0 %v1877
    %9173 = vmatprep.subr.bf16.mxu0 %v1890
    %9174 = vmatpush1.bf16.msra.mxu0 %v1889
    %9175 = vmatprep.subr.bf16.mxu0 %v1902
    %9176 = vmatpush1.bf16.msra.mxu0 %v1901
    %9177 = vmatprep.subr.bf16.mxu0 %v1914
    %9178 = vmatpush1.bf16.msra.mxu0 %v1913
    %9179 = vmatprep.subr.bf16.mxu0 %v1926
    %9180 = vmatpush1.bf16.msra.mxu0 %v1925
    %9181 = vmatprep.subr.bf16.mxu0 %v1938
    %9182 = vmatpush1.bf16.msra.mxu0 %v1937
    %9183 = vmatprep.subr.bf16.mxu0 %v1950
    %9184 = vmatpush1.bf16.msra.mxu0 %v1949
    %9185 = vmatprep.subr.bf16.mxu0 %v1962
    %9186 = vmatpush1.bf16.msra.mxu0 %v1961
    %9187 = vmatprep.subr.bf16.mxu0 %v1974
    %9188 = vmatpush1.bf16.msra.mxu0 %v1973
    %9189 = vmatprep.mubr.bf16.mxu0 %v8988
    %9190 = vmatmul.mubr.bf16.gmra.mrb[0].mxu0 %v8987
    %v9191 = vpop.f32.mrb[0].mxu0
    %v9192 = vadd.f32 0.0, %v9191
    %v9193 = vpop.f32.mrb[0].mxu0
    %v9194 = vadd.f32 0.0, %v9193
    %v9195 = vpop.f32.mrb[0].mxu0
    %v9196 = vpop.f32.mrb[0].mxu0
    %9197 = vdwg.mxu0
    %9198 = vmatprep.subr.bf16.mxu0 %v1986
    %9199 = vmatpush1.bf16.msra.mxu0 %v1985
    %9200 = vmatprep.subr.bf16.mxu0 %v1998
    %9201 = vmatpush1.bf16.msra.mxu0 %v1997
    %9202 = vmatprep.subr.bf16.mxu0 0
    %9203 = vmatpush1.bf16.msra.mxu0 0
    %9204 = vmatprep.subr.bf16.mxu0 0
    %9205 = vmatpush1.bf16.msra.mxu0 0
    %9206 = vmatprep.subr.bf16.mxu0 0
    %9207 = vmatpush1.bf16.msra.mxu0 0
    %9208 = vmatprep.subr.bf16.mxu0 0
    %9209 = vmatpush1.bf16.msra.mxu0 0
    %9210 = vmatprep.subr.bf16.mxu0 0
    %9211 = vmatpush1.bf16.msra.mxu0 0
    %9212 = vmatprep.subr.bf16.mxu0 0
    %9213 = vmatpush1.bf16.msra.mxu0 0
    %9214 = vmatprep.subr.bf16.mxu0 0
    %9215 = vmatpush1.bf16.msra.mxu0 0
    %9216 = vmatprep.subr.bf16.mxu0 0
    %9217 = vmatpush1.bf16.msra.mxu0 0
    %9218 = vmatprep.subr.bf16.mxu0 0
    %9219 = vmatpush1.bf16.msra.mxu0 0
    %9220 = vmatprep.subr.bf16.mxu0 0
    %9221 = vmatpush1.bf16.msra.mxu0 0
    %9222 = vmatprep.subr.bf16.mxu0 0
    %9223 = vmatpush1.bf16.msra.mxu0 0
    %9224 = vmatprep.subr.bf16.mxu0 0
    %9225 = vmatpush1.bf16.msra.mxu0 0
    %9226 = vmatprep.subr.bf16.mxu0 0
    %9227 = vmatpush1.bf16.msra.mxu0 0
    %9228 = vmatprep.subr.bf16.mxu0 0
    %9229 = vmatpush1.bf16.msra.mxu0 0
    %9230 = vmatprep.mubr.bf16.mxu0 0
    %9231 = vmatmul.mubr.bf16.gmra.mrb[0].mxu0 %v8991
    %v9232 = vpop.f32.mrb[0].mxu0
    %v9233 = vadd.f32 %v9192, %v9232
    %v9234 = vpop.f32.mrb[0].mxu0
    %v9235 = vadd.f32 %v9194, %v9234
    %v9236 = vpop.f32.mrb[0].mxu0
    %v9237 = vpop.f32.mrb[0].mxu0
    %9238 = vdwg.mxu0
    %9239 = vmatprep.subr.bf16.mxu0 %v1796
    %9240 = vmatpush1.bf16.msra.mxu0 %v1795
    %9241 = vmatprep.subr.bf16.mxu0 %v1808
    %9242 = vmatpush1.bf16.msra.mxu0 %v1807
    %9243 = vmatprep.subr.bf16.mxu0 %v1820
    %9244 = vmatpush1.bf16.msra.mxu0 %v1819
    %9245 = vmatprep.subr.bf16.mxu0 %v1832
    %9246 = vmatpush1.bf16.msra.mxu0 %v1831
    %9247 = vmatprep.subr.bf16.mxu0 %v1844
    %9248 = vmatpush1.bf16.msra.mxu0 %v1843
    %9249 = vmatprep.subr.bf16.mxu0 %v1856
    %9250 = vmatpush1.bf16.msra.mxu0 %v1855
    %9251 = vmatprep.subr.bf16.mxu0 %v1868
    %9252 = vmatpush1.bf16.msra.mxu0 %v1867
    %9253 = vmatprep.subr.bf16.mxu0 %v1880
    %9254 = vmatpush1.bf16.msra.mxu0 %v1879
    %9255 = vmatprep.subr.bf16.mxu0 %v1892
    %9256 = vmatpush1.bf16.msra.mxu0 %v1891
    %9257 = vmatprep.subr.bf16.mxu0 %v1904
    %9258 = vmatpush1.bf16.msra.mxu0 %v1903
    %9259 = vmatprep.subr.bf16.mxu0 %v1916
    %9260 = vmatpush1.bf16.msra.mxu0 %v1915
    %9261 = vmatprep.subr.bf16.mxu0 %v1928
    %9262 = vmatpush1.bf16.msra.mxu0 %v1927
    %9263 = vmatprep.subr.bf16.mxu0 %v1940
    %9264 = vmatpush1.bf16.msra.mxu0 %v1939
    %9265 = vmatprep.subr.bf16.mxu0 %v1952
    %9266 = vmatpush1.bf16.msra.mxu0 %v1951
    %9267 = vmatprep.subr.bf16.mxu0 %v1964
    %9268 = vmatpush1.bf16.msra.mxu0 %v1963
    %9269 = vmatprep.subr.bf16.mxu0 %v1976
    %9270 = vmatpush1.bf16.msra.mxu0 %v1975
    %9271 = vmatprep.mubr.bf16.mxu0 %v8988
    %9272 = vmatmul.mubr.bf16.gmra.mrb[0].mxu0 %v8987
    %v9273 = vpop.f32.mrb[0].mxu0
    %v9274 = vadd.f32 0.0, %v9273
    %v9275 = vpop.f32.mrb[0].mxu0
    %v9276 = vadd.f32 0.0, %v9275
    %v9277 = vpop.f32.mrb[0].mxu0
    %v9278 = vpop.f32.mrb[0].mxu0
    %9279 = vdwg.mxu0
    %9280 = vmatprep.subr.bf16.mxu0 %v1988
    %9281 = vmatpush1.bf16.msra.mxu0 %v1987
    %9282 = vmatprep.subr.bf16.mxu0 %v2000
    %9283 = vmatpush1.bf16.msra.mxu0 %v1999
    %9284 = vmatprep.subr.bf16.mxu0 0
    %9285 = vmatpush1.bf16.msra.mxu0 0
    %9286 = vmatprep.subr.bf16.mxu0 0
    %9287 = vmatpush1.bf16.msra.mxu0 0
    %9288 = vmatprep.subr.bf16.mxu0 0
    %9289 = vmatpush1.bf16.msra.mxu0 0
    %9290 = vmatprep.subr.bf16.mxu0 0
    %9291 = vmatpush1.bf16.msra.mxu0 0
    %9292 = vmatprep.subr.bf16.mxu0 0
    %9293 = vmatpush1.bf16.msra.mxu0 0
    %9294 = vmatprep.subr.bf16.mxu0 0
    %9295 = vmatpush1.bf16.msra.mxu0 0
    %9296 = vmatprep.subr.bf16.mxu0 0
    %9297 = vmatpush1.bf16.msra.mxu0 0
    %9298 = vmatprep.subr.bf16.mxu0 0
    %9299 = vmatpush1.bf16.msra.mxu0 0
    %9300 = vmatprep.subr.bf16.mxu0 0
    %9301 = vmatpush1.bf16.msra.mxu0 0
    %9302 = vmatprep.subr.bf16.mxu0 0
    %9303 = vmatpush1.bf16.msra.mxu0 0
    %9304 = vmatprep.subr.bf16.mxu0 0
    %9305 = vmatpush1.bf16.msra.mxu0 0
    %9306 = vmatprep.subr.bf16.mxu0 0
    %9307 = vmatpush1.bf16.msra.mxu0 0
    %9308 = vmatprep.subr.bf16.mxu0 0
    %9309 = vmatpush1.bf16.msra.mxu0 0
    %9310 = vmatprep.subr.bf16.mxu0 0
    %9311 = vmatpush1.bf16.msra.mxu0 0
    %9312 = vmatprep.mubr.bf16.mxu0 0
    %9313 = vmatmul.mubr.bf16.gmra.mrb[0].mxu0 %v8991
    %v9314 = vpop.f32.mrb[0].mxu0
    %v9315 = vadd.f32 %v9274, %v9314
    %v9316 = vpop.f32.mrb[0].mxu0
    %v9317 = vadd.f32 %v9276, %v9316
    %v9318 = vpop.f32.mrb[0].mxu0
    %v9319 = vpop.f32.mrb[0].mxu0
    %9320 = vdwg.mxu0
    %9321 = vmatprep.subr.bf16.mxu0 %v1798
    %9322 = vmatpush1.bf16.msra.mxu0 %v1797
    %9323 = vmatprep.subr.bf16.mxu0 %v1810
    %9324 = vmatpush1.bf16.msra.mxu0 %v1809
    %9325 = vmatprep.subr.bf16.mxu0 %v1822
    %9326 = vmatpush1.bf16.msra.mxu0 %v1821
    %9327 = vmatprep.subr.bf16.mxu0 %v1834
    %9328 = vmatpush1.bf16.msra.mxu0 %v1833
    %9329 = vmatprep.subr.bf16.mxu0 %v1846
    %9330 = vmatpush1.bf16.msra.mxu0 %v1845
    %9331 = vmatprep.subr.bf16.mxu0 %v1858
    %9332 = vmatpush1.bf16.msra.mxu0 %v1857
    %9333 = vmatprep.subr.bf16.mxu0 %v1870
    %9334 = vmatpush1.bf16.msra.mxu0 %v1869
    %9335 = vmatprep.subr.bf16.mxu0 %v1882
    %9336 = vmatpush1.bf16.msra.mxu0 %v1881
    %9337 = vmatprep.subr.bf16.mxu0 %v1894
    %9338 = vmatpush1.bf16.msra.mxu0 %v1893
    %9339 = vmatprep.subr.bf16.mxu0 %v1906
    %9340 = vmatpush1.bf16.msra.mxu0 %v1905
    %9341 = vmatprep.subr.bf16.mxu0 %v1918
    %9342 = vmatpush1.bf16.msra.mxu0 %v1917
    %9343 = vmatprep.subr.bf16.mxu0 %v1930
    %9344 = vmatpush1.bf16.msra.mxu0 %v1929
    %9345 = vmatprep.subr.bf16.mxu0 %v1942
    %9346 = vmatpush1.bf16.msra.mxu0 %v1941
    %9347 = vmatprep.subr.bf16.mxu0 %v1954
    %9348 = vmatpush1.bf16.msra.mxu0 %v1953
    %9349 = vmatprep.subr.bf16.mxu0 %v1966
    %9350 = vmatpush1.bf16.msra.mxu0 %v1965
    %9351 = vmatprep.subr.bf16.mxu0 %v1978
    %9352 = vmatpush1.bf16.msra.mxu0 %v1977
    %9353 = vmatprep.mubr.bf16.mxu0 %v8988
    %9354 = vmatmul.mubr.bf16.gmra.mrb[0].mxu0 %v8987
    %v9355 = vpop.f32.mrb[0].mxu0
    %v9356 = vadd.f32 0.0, %v9355
    %v9357 = vpop.f32.mrb[0].mxu0
    %v9358 = vadd.f32 0.0, %v9357
    %v9359 = vpop.f32.mrb[0].mxu0
    %v9360 = vpop.f32.mrb[0].mxu0
    %9361 = vdwg.mxu0
    %9362 = vmatprep.subr.bf16.mxu0 %v1990
    %9363 = vmatpush1.bf16.msra.mxu0 %v1989
    %9364 = vmatprep.subr.bf16.mxu0 %v2002
    %9365 = vmatpush1.bf16.msra.mxu0 %v2001
    %9366 = vmatprep.subr.bf16.mxu0 0
    %9367 = vmatpush1.bf16.msra.mxu0 0
    %9368 = vmatprep.subr.bf16.mxu0 0
    %9369 = vmatpush1.bf16.msra.mxu0 0
    %9370 = vmatprep.subr.bf16.mxu0 0
    %9371 = vmatpush1.bf16.msra.mxu0 0
    %9372 = vmatprep.subr.bf16.mxu0 0
    %9373 = vmatpush1.bf16.msra.mxu0 0
    %9374 = vmatprep.subr.bf16.mxu0 0
    %9375 = vmatpush1.bf16.msra.mxu0 0
    %9376 = vmatprep.subr.bf16.mxu0 0
    %9377 = vmatpush1.bf16.msra.mxu0 0
    %9378 = vmatprep.subr.bf16.mxu0 0
    %9379 = vmatpush1.bf16.msra.mxu0 0
    %9380 = vmatprep.subr.bf16.mxu0 0
    %9381 = vmatpush1.bf16.msra.mxu0 0
    %9382 = vmatprep.subr.bf16.mxu0 0
    %9383 = vmatpush1.bf16.msra.mxu0 0
    %9384 = vmatprep.subr.bf16.mxu0 0
    %9385 = vmatpush1.bf16.msra.mxu0 0
    %9386 = vmatprep.subr.bf16.mxu0 0
    %9387 = vmatpush1.bf16.msra.mxu0 0
    %9388 = vmatprep.subr.bf16.mxu0 0
    %9389 = vmatpush1.bf16.msra.mxu0 0
    %9390 = vmatprep.subr.bf16.mxu0 0
    %9391 = vmatpush1.bf16.msra.mxu0 0
    %9392 = vmatprep.subr.bf16.mxu0 0
    %9393 = vmatpush1.bf16.msra.mxu0 0
    %9394 = vmatprep.mubr.bf16.mxu0 0
    %9395 = vmatmul.mubr.bf16.gmra.mrb[0].mxu0 %v8991
    %v9396 = vpop.f32.mrb[0].mxu0
    %v9397 = vadd.f32 %v9356, %v9396
    %v9398 = vpop.f32.mrb[0].mxu0
    %v9399 = vadd.f32 %v9358, %v9398
    %v9400 = vpop.f32.mrb[0].mxu0
    %v9401 = vpop.f32.mrb[0].mxu0
    %9402 = vdwg.mxu0
    %9403 = vmatprep.subr.bf16.mxu0 %v1800
    %9404 = vmatpush1.bf16.msra.mxu0 %v1799
    %9405 = vmatprep.subr.bf16.mxu0 %v1812
    %9406 = vmatpush1.bf16.msra.mxu0 %v1811
    %9407 = vmatprep.subr.bf16.mxu0 %v1824
    %9408 = vmatpush1.bf16.msra.mxu0 %v1823
    %9409 = vmatprep.subr.bf16.mxu0 %v1836
    %9410 = vmatpush1.bf16.msra.mxu0 %v1835
    %9411 = vmatprep.subr.bf16.mxu0 %v1848
    %9412 = vmatpush1.bf16.msra.mxu0 %v1847
    %9413 = vmatprep.subr.bf16.mxu0 %v1860
    %9414 = vmatpush1.bf16.msra.mxu0 %v1859
    %9415 = vmatprep.subr.bf16.mxu0 %v1872
    %9416 = vmatpush1.bf16.msra.mxu0 %v1871
    %9417 = vmatprep.subr.bf16.mxu0 %v1884
    %9418 = vmatpush1.bf16.msra.mxu0 %v1883
    %9419 = vmatprep.subr.bf16.mxu0 %v1896
    %9420 = vmatpush1.bf16.msra.mxu0 %v1895
    %9421 = vmatprep.subr.bf16.mxu0 %v1908
    %9422 = vmatpush1.bf16.msra.mxu0 %v1907
    %9423 = vmatprep.subr.bf16.mxu0 %v1920
    %9424 = vmatpush1.bf16.msra.mxu0 %v1919
    %9425 = vmatprep.subr.bf16.mxu0 %v1932
    %9426 = vmatpush1.bf16.msra.mxu0 %v1931
    %9427 = vmatprep.subr.bf16.mxu0 %v1944
    %9428 = vmatpush1.bf16.msra.mxu0 %v1943
    %9429 = vmatprep.subr.bf16.mxu0 %v1956
    %9430 = vmatpush1.bf16.msra.mxu0 %v1955
    %9431 = vmatprep.subr.bf16.mxu0 %v1968
    %9432 = vmatpush1.bf16.msra.mxu0 %v1967
    %9433 = vmatprep.subr.bf16.mxu0 %v1980
    %9434 = vmatpush1.bf16.msra.mxu0 %v1979
    %9435 = vmatprep.mubr.bf16.mxu0 %v8988
    %9436 = vmatmul.mubr.bf16.gmra.mrb[0].mxu0 %v8987
    %v9437 = vpop.f32.mrb[0].mxu0
    %v9438 = vadd.f32 0.0, %v9437
    %v9439 = vpop.f32.mrb[0].mxu0
    %v9440 = vadd.f32 0.0, %v9439
    %v9441 = vpop.f32.mrb[0].mxu0
    %v9442 = vpop.f32.mrb[0].mxu0
    %9443 = vdwg.mxu0
    %9444 = vmatprep.subr.bf16.mxu0 %v1992
    %9445 = vmatpush1.bf16.msra.mxu0 %v1991
    %9446 = vmatprep.subr.bf16.mxu0 %v2004
    %9447 = vmatpush1.bf16.msra.mxu0 %v2003
    %9448 = vmatprep.subr.bf16.mxu0 0
    %9449 = vmatpush1.bf16.msra.mxu0 0
    %9450 = vmatprep.subr.bf16.mxu0 0
    %9451 = vmatpush1.bf16.msra.mxu0 0
    %9452 = vmatprep.subr.bf16.mxu0 0
    %9453 = vmatpush1.bf16.msra.mxu0 0
    %9454 = vmatprep.subr.bf16.mxu0 0
    %9455 = vmatpush1.bf16.msra.mxu0 0
    %9456 = vmatprep.subr.bf16.mxu0 0
    %9457 = vmatpush1.bf16.msra.mxu0 0
    %9458 = vmatprep.subr.bf16.mxu0 0
    %9459 = vmatpush1.bf16.msra.mxu0 0
    %9460 = vmatprep.subr.bf16.mxu0 0
    %9461 = vmatpush1.bf16.msra.mxu0 0
    %9462 = vmatprep.subr.bf16.mxu0 0
    %9463 = vmatpush1.bf16.msra.mxu0 0
    %9464 = vmatprep.subr.bf16.mxu0 0
    %9465 = vmatpush1.bf16.msra.mxu0 0
    %9466 = vmatprep.subr.bf16.mxu0 0
    %9467 = vmatpush1.bf16.msra.mxu0 0
    %9468 = vmatprep.subr.bf16.mxu0 0
    %9469 = vmatpush1.bf16.msra.mxu0 0
    %9470 = vmatprep.subr.bf16.mxu0 0
    %9471 = vmatpush1.bf16.msra.mxu0 0
    %9472 = vmatprep.subr.bf16.mxu0 0
    %9473 = vmatpush1.bf16.msra.mxu0 0
    %9474 = vmatprep.subr.bf16.mxu0 0
    %9475 = vmatpush1.bf16.msra.mxu0 0
    %9476 = vmatprep.mubr.bf16.mxu0 0
    %9477 = vmatmul.mubr.bf16.gmra.mrb[0].mxu0 %v8991
    %v9478 = vpop.f32.mrb[0].mxu0
    %v9479 = vadd.f32 %v9438, %v9478
    %v9480 = vpop.f32.mrb[0].mxu0
    %v9481 = vadd.f32 %v9440, %v9480
    %v9482 = vpop.f32.mrb[0].mxu0
    %v9483 = vpop.f32.mrb[0].mxu0
    %9484 = vdwg.mxu0
    %v9485 = vadd.f32 %v354, %v9069
    %v9486 = vadd.f32 %v356, %v9071
    %v9487 = vadd.f32 %v465, %v9151
    %v9488 = vadd.f32 %v467, %v9153
    %v9489 = vadd.f32 %v576, %v9233
    %v9490 = vadd.f32 %v578, %v9235
    %v9491 = vadd.f32 %v687, %v9315
    %v9492 = vadd.f32 %v689, %v9317
    %v9493 = vadd.f32 %v798, %v9397
    %v9494 = vadd.f32 %v800, %v9399
    %v9495 = vadd.f32 %v909, %v9479
    %v9496 = vadd.f32 %v911, %v9481
    %v9497 = vmul.f32 %v9485, 0.5
    %v9498 = vmul.f32 %v9486, 0.5
    %v9499 = vmul.f32 %v9487, 0.5
    %v9500 = vtanh.pop %v9497
    %v9501 = vtanh.pop %v9498
    %v9502 = vtanh.pop %v9499
    %v9503 = vmul.f32 %v9500, 0.5
    %v9504 = vmul.f32 %v9501, 0.5
    %v9505 = vmul.f32 %v9502, 0.5
    %v9506 = vadd.f32 %v9503, 0.5
    %v9507 = vadd.f32 %v9504, 0.5
    %v9508 = vadd.f32 %v9505, 0.5
    %v9509 = vmul.f32 %v9488, 0.5
    %v9510 = vmul.f32 %v9489, 0.5
    %v9511 = vmul.f32 %v9490, 0.5
    %v9512 = vtanh.pop %v9509
    %v9513 = vtanh.pop %v9510
    %v9514 = vtanh.pop %v9511
    %v9515 = vmul.f32 %v9512, 0.5
    %v9516 = vmul.f32 %v9513, 0.5
    %v9517 = vmul.f32 %v9514, 0.5
    %v9518 = vadd.f32 %v9515, 0.5
    %v9519 = vadd.f32 %v9516, 0.5
    %v9520 = vadd.f32 %v9517, 0.5
    %v9521 = vtanh.pop %v9491
    %v9522 = vtanh.pop %v9492
    %v9523 = vtanh.pop %v9493
    %v9524 = vmul.f32 %v9494, 0.5
    %v9525 = vmul.f32 %v9495, 0.5
    %v9526 = vmul.f32 %v9496, 0.5
    %v9527 = vtanh.pop %v9524
    %v9528 = vtanh.pop %v9525
    %v9529 = vtanh.pop %v9526
    %v9530 = vmul.f32 %v9527, 0.5
    %v9531 = vmul.f32 %v9528, 0.5
    %v9532 = vmul.f32 %v9529, 0.5
    %v9533 = vadd.f32 %v9530, 0.5
    %v9534 = vadd.f32 %v9531, 0.5
    %v9535 = vadd.f32 %v9532, 0.5
    %v9536 = vmul.f32 %v9518, %v8978
    %v9537 = vmul.f32 %v9519, %v8979
    %v9538 = vmul.f32 %v9520, %v8980
    %v9539 = vmul.f32 %v9506, %v9521
    %v9540 = vmul.f32 %v9507, %v9522
    %v9541 = vmul.f32 %v9508, %v9523
    %v9542 = vadd.f32 %v9536, %v9539
    %v9543 = vadd.f32 %v9537, %v9540
    %v9544 = vadd.f32 %v9538, %v9541
    %v9545 = vtanh.pop %v9542
    %v9546 = vtanh.pop %v9543
    %v9547 = vtanh.pop %v9544
    %v9548 = vmul.f32 %v9533, %v9545
    %v9549 = vmul.f32 %v9534, %v9546
    %v9550 = vmul.f32 %v9535, %v9547
    %v9551 = vpack.c.bf16 %v9548, %v9548
    %v9552 = vpack.c.bf16 %v9549, %v9549
    %v9553 = vpack.c.bf16 %v9550, %v9550
    %v9555 = vsel %vm2221, %v9553, 0
    %9557 = vmatprep.subr.bf16.mxu0 %v1790
    %9558 = vmatpush1.bf16.msra.mxu0 %v1789
    %9559 = vmatprep.subr.bf16.mxu0 %v1802
    %9560 = vmatpush1.bf16.msra.mxu0 %v1801
    %9561 = vmatprep.subr.bf16.mxu0 %v1814
    %9562 = vmatpush1.bf16.msra.mxu0 %v1813
    %9563 = vmatprep.subr.bf16.mxu0 %v1826
    %9564 = vmatpush1.bf16.msra.mxu0 %v1825
    %9565 = vmatprep.subr.bf16.mxu0 %v1838
    %9566 = vmatpush1.bf16.msra.mxu0 %v1837
    %9567 = vmatprep.subr.bf16.mxu0 %v1850
    %9568 = vmatpush1.bf16.msra.mxu0 %v1849
    %9569 = vmatprep.subr.bf16.mxu0 %v1862
    %9570 = vmatpush1.bf16.msra.mxu0 %v1861
    %9571 = vmatprep.subr.bf16.mxu0 %v1874
    %9572 = vmatpush1.bf16.msra.mxu0 %v1873
    %9573 = vmatprep.subr.bf16.mxu0 %v1886
    %9574 = vmatpush1.bf16.msra.mxu0 %v1885
    %9575 = vmatprep.subr.bf16.mxu0 %v1898
    %9576 = vmatpush1.bf16.msra.mxu0 %v1897
    %9577 = vmatprep.subr.bf16.mxu0 %v1910
    %9578 = vmatpush1.bf16.msra.mxu0 %v1909
    %9579 = vmatprep.subr.bf16.mxu0 %v1922
    %9580 = vmatpush1.bf16.msra.mxu0 %v1921
    %9581 = vmatprep.subr.bf16.mxu0 %v1934
    %9582 = vmatpush1.bf16.msra.mxu0 %v1933
    %9583 = vmatprep.subr.bf16.mxu0 %v1946
    %9584 = vmatpush1.bf16.msra.mxu0 %v1945
    %9585 = vmatprep.subr.bf16.mxu0 %v1958
    %9586 = vmatpush1.bf16.msra.mxu0 %v1957
    %9587 = vmatprep.subr.bf16.mxu0 %v1970
    %9588 = vmatpush1.bf16.msra.mxu0 %v1969
    %9589 = vmatprep.mubr.bf16.mxu0 %v9552
    %9590 = vmatmul.mubr.bf16.gmra.mrb[0].mxu0 %v9551
    %v9591 = vpop.f32.mrb[0].mxu0
    %v9592 = vadd.f32 0.0, %v9591
    %v9593 = vpop.f32.mrb[0].mxu0
    %v9594 = vadd.f32 0.0, %v9593
    %v9595 = vpop.f32.mrb[0].mxu0
    %v9596 = vpop.f32.mrb[0].mxu0
    %9597 = vdwg.mxu0
    %9598 = vmatprep.subr.bf16.mxu0 %v1982
    %9599 = vmatpush1.bf16.msra.mxu0 %v1981
    %9600 = vmatprep.subr.bf16.mxu0 %v1994
    %9601 = vmatpush1.bf16.msra.mxu0 %v1993
    %9602 = vmatprep.subr.bf16.mxu0 0
    %9603 = vmatpush1.bf16.msra.mxu0 0
    %9604 = vmatprep.subr.bf16.mxu0 0
    %9605 = vmatpush1.bf16.msra.mxu0 0
    %9606 = vmatprep.subr.bf16.mxu0 0
    %9607 = vmatpush1.bf16.msra.mxu0 0
    %9608 = vmatprep.subr.bf16.mxu0 0
    %9609 = vmatpush1.bf16.msra.mxu0 0
    %9610 = vmatprep.subr.bf16.mxu0 0
    %9611 = vmatpush1.bf16.msra.mxu0 0
    %9612 = vmatprep.subr.bf16.mxu0 0
    %9613 = vmatpush1.bf16.msra.mxu0 0
    %9614 = vmatprep.subr.bf16.mxu0 0
    %9615 = vmatpush1.bf16.msra.mxu0 0
    %9616 = vmatprep.subr.bf16.mxu0 0
    %9617 = vmatpush1.bf16.msra.mxu0 0
    %9618 = vmatprep.subr.bf16.mxu0 0
    %9619 = vmatpush1.bf16.msra.mxu0 0
    %9620 = vmatprep.subr.bf16.mxu0 0
    %9621 = vmatpush1.bf16.msra.mxu0 0
    %9622 = vmatprep.subr.bf16.mxu0 0
    %9623 = vmatpush1.bf16.msra.mxu0 0
    %9624 = vmatprep.subr.bf16.mxu0 0
    %9625 = vmatpush1.bf16.msra.mxu0 0
    %9626 = vmatprep.subr.bf16.mxu0 0
    %9627 = vmatpush1.bf16.msra.mxu0 0
    %9628 = vmatprep.subr.bf16.mxu0 0
    %9629 = vmatpush1.bf16.msra.mxu0 0
    %9630 = vmatprep.mubr.bf16.mxu0 0
    %9631 = vmatmul.mubr.bf16.gmra.mrb[0].mxu0 %v9555
    %v9632 = vpop.f32.mrb[0].mxu0
    %v9633 = vadd.f32 %v9592, %v9632
    %v9634 = vpop.f32.mrb[0].mxu0
    %v9635 = vadd.f32 %v9594, %v9634
    %v9636 = vpop.f32.mrb[0].mxu0
    %v9637 = vpop.f32.mrb[0].mxu0
    %9638 = vdwg.mxu0
    %9639 = vmatprep.subr.bf16.mxu0 %v1792
    %9640 = vmatpush1.bf16.msra.mxu0 %v1791
    %9641 = vmatprep.subr.bf16.mxu0 %v1804
    %9642 = vmatpush1.bf16.msra.mxu0 %v1803
    %9643 = vmatprep.subr.bf16.mxu0 %v1816
    %9644 = vmatpush1.bf16.msra.mxu0 %v1815
    %9645 = vmatprep.subr.bf16.mxu0 %v1828
    %9646 = vmatpush1.bf16.msra.mxu0 %v1827
    %9647 = vmatprep.subr.bf16.mxu0 %v1840
    %9648 = vmatpush1.bf16.msra.mxu0 %v1839
    %9649 = vmatprep.subr.bf16.mxu0 %v1852
    %9650 = vmatpush1.bf16.msra.mxu0 %v1851
    %9651 = vmatprep.subr.bf16.mxu0 %v1864
    %9652 = vmatpush1.bf16.msra.mxu0 %v1863
    %9653 = vmatprep.subr.bf16.mxu0 %v1876
    %9654 = vmatpush1.bf16.msra.mxu0 %v1875
    %9655 = vmatprep.subr.bf16.mxu0 %v1888
    %9656 = vmatpush1.bf16.msra.mxu0 %v1887
    %9657 = vmatprep.subr.bf16.mxu0 %v1900
    %9658 = vmatpush1.bf16.msra.mxu0 %v1899
    %9659 = vmatprep.subr.bf16.mxu0 %v1912
    %9660 = vmatpush1.bf16.msra.mxu0 %v1911
    %9661 = vmatprep.subr.bf16.mxu0 %v1924
    %9662 = vmatpush1.bf16.msra.mxu0 %v1923
    %9663 = vmatprep.subr.bf16.mxu0 %v1936
    %9664 = vmatpush1.bf16.msra.mxu0 %v1935
    %9665 = vmatprep.subr.bf16.mxu0 %v1948
    %9666 = vmatpush1.bf16.msra.mxu0 %v1947
    %9667 = vmatprep.subr.bf16.mxu0 %v1960
    %9668 = vmatpush1.bf16.msra.mxu0 %v1959
    %9669 = vmatprep.subr.bf16.mxu0 %v1972
    %9670 = vmatpush1.bf16.msra.mxu0 %v1971
    %9671 = vmatprep.mubr.bf16.mxu0 %v9552
    %9672 = vmatmul.mubr.bf16.gmra.mrb[0].mxu0 %v9551
    %v9673 = vpop.f32.mrb[0].mxu0
    %v9674 = vadd.f32 0.0, %v9673
    %v9675 = vpop.f32.mrb[0].mxu0
    %v9676 = vadd.f32 0.0, %v9675
    %v9677 = vpop.f32.mrb[0].mxu0
    %v9678 = vpop.f32.mrb[0].mxu0
    %9679 = vdwg.mxu0
    %9680 = vmatprep.subr.bf16.mxu0 %v1984
    %9681 = vmatpush1.bf16.msra.mxu0 %v1983
    %9682 = vmatprep.subr.bf16.mxu0 %v1996
    %9683 = vmatpush1.bf16.msra.mxu0 %v1995
    %9684 = vmatprep.subr.bf16.mxu0 0
    %9685 = vmatpush1.bf16.msra.mxu0 0
    %9686 = vmatprep.subr.bf16.mxu0 0
    %9687 = vmatpush1.bf16.msra.mxu0 0
    %9688 = vmatprep.subr.bf16.mxu0 0
    %9689 = vmatpush1.bf16.msra.mxu0 0
    %9690 = vmatprep.subr.bf16.mxu0 0
    %9691 = vmatpush1.bf16.msra.mxu0 0
    %9692 = vmatprep.subr.bf16.mxu0 0
    %9693 = vmatpush1.bf16.msra.mxu0 0
    %9694 = vmatprep.subr.bf16.mxu0 0
    %9695 = vmatpush1.bf16.msra.mxu0 0
    %9696 = vmatprep.subr.bf16.mxu0 0
    %9697 = vmatpush1.bf16.msra.mxu0 0
    %9698 = vmatprep.subr.bf16.mxu0 0
    %9699 = vmatpush1.bf16.msra.mxu0 0
    %9700 = vmatprep.subr.bf16.mxu0 0
    %9701 = vmatpush1.bf16.msra.mxu0 0
    %9702 = vmatprep.subr.bf16.mxu0 0
    %9703 = vmatpush1.bf16.msra.mxu0 0
    %9704 = vmatprep.subr.bf16.mxu0 0
    %9705 = vmatpush1.bf16.msra.mxu0 0
    %9706 = vmatprep.subr.bf16.mxu0 0
    %9707 = vmatpush1.bf16.msra.mxu0 0
    %9708 = vmatprep.subr.bf16.mxu0 0
    %9709 = vmatpush1.bf16.msra.mxu0 0
    %9710 = vmatprep.subr.bf16.mxu0 0
    %9711 = vmatpush1.bf16.msra.mxu0 0
    %9712 = vmatprep.mubr.bf16.mxu0 0
    %9713 = vmatmul.mubr.bf16.gmra.mrb[0].mxu0 %v9555
    %v9714 = vpop.f32.mrb[0].mxu0
    %v9715 = vadd.f32 %v9674, %v9714
    %v9716 = vpop.f32.mrb[0].mxu0
    %v9717 = vadd.f32 %v9676, %v9716
    %v9718 = vpop.f32.mrb[0].mxu0
    %v9719 = vpop.f32.mrb[0].mxu0
    %9720 = vdwg.mxu0
    %9721 = vmatprep.subr.bf16.mxu0 %v1794
    %9722 = vmatpush1.bf16.msra.mxu0 %v1793
    %9723 = vmatprep.subr.bf16.mxu0 %v1806
    %9724 = vmatpush1.bf16.msra.mxu0 %v1805
    %9725 = vmatprep.subr.bf16.mxu0 %v1818
    %9726 = vmatpush1.bf16.msra.mxu0 %v1817
    %9727 = vmatprep.subr.bf16.mxu0 %v1830
    %9728 = vmatpush1.bf16.msra.mxu0 %v1829
    %9729 = vmatprep.subr.bf16.mxu0 %v1842
    %9730 = vmatpush1.bf16.msra.mxu0 %v1841
    %9731 = vmatprep.subr.bf16.mxu0 %v1854
    %9732 = vmatpush1.bf16.msra.mxu0 %v1853
    %9733 = vmatprep.subr.bf16.mxu0 %v1866
    %9734 = vmatpush1.bf16.msra.mxu0 %v1865
    %9735 = vmatprep.subr.bf16.mxu0 %v1878
    %9736 = vmatpush1.bf16.msra.mxu0 %v1877
    %9737 = vmatprep.subr.bf16.mxu0 %v1890
    %9738 = vmatpush1.bf16.msra.mxu0 %v1889
    %9739 = vmatprep.subr.bf16.mxu0 %v1902
    %9740 = vmatpush1.bf16.msra.mxu0 %v1901
    %9741 = vmatprep.subr.bf16.mxu0 %v1914
    %9742 = vmatpush1.bf16.msra.mxu0 %v1913
    %9743 = vmatprep.subr.bf16.mxu0 %v1926
    %9744 = vmatpush1.bf16.msra.mxu0 %v1925
    %9745 = vmatprep.subr.bf16.mxu0 %v1938
    %9746 = vmatpush1.bf16.msra.mxu0 %v1937
    %9747 = vmatprep.subr.bf16.mxu0 %v1950
    %9748 = vmatpush1.bf16.msra.mxu0 %v1949
    %9749 = vmatprep.subr.bf16.mxu0 %v1962
    %9750 = vmatpush1.bf16.msra.mxu0 %v1961
    %9751 = vmatprep.subr.bf16.mxu0 %v1974
    %9752 = vmatpush1.bf16.msra.mxu0 %v1973
    %9753 = vmatprep.mubr.bf16.mxu0 %v9552
    %9754 = vmatmul.mubr.bf16.gmra.mrb[0].mxu0 %v9551
    %v9755 = vpop.f32.mrb[0].mxu0
    %v9756 = vadd.f32 0.0, %v9755
    %v9757 = vpop.f32.mrb[0].mxu0
    %v9758 = vadd.f32 0.0, %v9757
    %v9759 = vpop.f32.mrb[0].mxu0
    %v9760 = vpop.f32.mrb[0].mxu0
    %9761 = vdwg.mxu0
    %9762 = vmatprep.subr.bf16.mxu0 %v1986
    %9763 = vmatpush1.bf16.msra.mxu0 %v1985
    %9764 = vmatprep.subr.bf16.mxu0 %v1998
    %9765 = vmatpush1.bf16.msra.mxu0 %v1997
    %9766 = vmatprep.subr.bf16.mxu0 0
    %9767 = vmatpush1.bf16.msra.mxu0 0
    %9768 = vmatprep.subr.bf16.mxu0 0
    %9769 = vmatpush1.bf16.msra.mxu0 0
    %9770 = vmatprep.subr.bf16.mxu0 0
    %9771 = vmatpush1.bf16.msra.mxu0 0
    %9772 = vmatprep.subr.bf16.mxu0 0
    %9773 = vmatpush1.bf16.msra.mxu0 0
    %9774 = vmatprep.subr.bf16.mxu0 0
    %9775 = vmatpush1.bf16.msra.mxu0 0
    %9776 = vmatprep.subr.bf16.mxu0 0
    %9777 = vmatpush1.bf16.msra.mxu0 0
    %9778 = vmatprep.subr.bf16.mxu0 0
    %9779 = vmatpush1.bf16.msra.mxu0 0
    %9780 = vmatprep.subr.bf16.mxu0 0
    %9781 = vmatpush1.bf16.msra.mxu0 0
    %9782 = vmatprep.subr.bf16.mxu0 0
    %9783 = vmatpush1.bf16.msra.mxu0 0
    %9784 = vmatprep.subr.bf16.mxu0 0
    %9785 = vmatpush1.bf16.msra.mxu0 0
    %9786 = vmatprep.subr.bf16.mxu0 0
    %9787 = vmatpush1.bf16.msra.mxu0 0
    %9788 = vmatprep.subr.bf16.mxu0 0
    %9789 = vmatpush1.bf16.msra.mxu0 0
    %9790 = vmatprep.subr.bf16.mxu0 0
    %9791 = vmatpush1.bf16.msra.mxu0 0
    %9792 = vmatprep.subr.bf16.mxu0 0
    %9793 = vmatpush1.bf16.msra.mxu0 0
    %9794 = vmatprep.mubr.bf16.mxu0 0
    %9795 = vmatmul.mubr.bf16.gmra.mrb[0].mxu0 %v9555
    %v9796 = vpop.f32.mrb[0].mxu0
    %v9797 = vadd.f32 %v9756, %v9796
    %v9798 = vpop.f32.mrb[0].mxu0
    %v9799 = vadd.f32 %v9758, %v9798
    %v9800 = vpop.f32.mrb[0].mxu0
    %v9801 = vpop.f32.mrb[0].mxu0
    %9802 = vdwg.mxu0
    %9803 = vmatprep.subr.bf16.mxu0 %v1796
    %9804 = vmatpush1.bf16.msra.mxu0 %v1795
    %9805 = vmatprep.subr.bf16.mxu0 %v1808
    %9806 = vmatpush1.bf16.msra.mxu0 %v1807
    %9807 = vmatprep.subr.bf16.mxu0 %v1820
    %9808 = vmatpush1.bf16.msra.mxu0 %v1819
    %9809 = vmatprep.subr.bf16.mxu0 %v1832
    %9810 = vmatpush1.bf16.msra.mxu0 %v1831
    %9811 = vmatprep.subr.bf16.mxu0 %v1844
    %9812 = vmatpush1.bf16.msra.mxu0 %v1843
    %9813 = vmatprep.subr.bf16.mxu0 %v1856
    %9814 = vmatpush1.bf16.msra.mxu0 %v1855
    %9815 = vmatprep.subr.bf16.mxu0 %v1868
    %9816 = vmatpush1.bf16.msra.mxu0 %v1867
    %9817 = vmatprep.subr.bf16.mxu0 %v1880
    %9818 = vmatpush1.bf16.msra.mxu0 %v1879
    %9819 = vmatprep.subr.bf16.mxu0 %v1892
    %9820 = vmatpush1.bf16.msra.mxu0 %v1891
    %9821 = vmatprep.subr.bf16.mxu0 %v1904
    %9822 = vmatpush1.bf16.msra.mxu0 %v1903
    %9823 = vmatprep.subr.bf16.mxu0 %v1916
    %9824 = vmatpush1.bf16.msra.mxu0 %v1915
    %9825 = vmatprep.subr.bf16.mxu0 %v1928
    %9826 = vmatpush1.bf16.msra.mxu0 %v1927
    %9827 = vmatprep.subr.bf16.mxu0 %v1940
    %9828 = vmatpush1.bf16.msra.mxu0 %v1939
    %9829 = vmatprep.subr.bf16.mxu0 %v1952
    %9830 = vmatpush1.bf16.msra.mxu0 %v1951
    %9831 = vmatprep.subr.bf16.mxu0 %v1964
    %9832 = vmatpush1.bf16.msra.mxu0 %v1963
    %9833 = vmatprep.subr.bf16.mxu0 %v1976
    %9834 = vmatpush1.bf16.msra.mxu0 %v1975
    %9835 = vmatprep.mubr.bf16.mxu0 %v9552
    %9836 = vmatmul.mubr.bf16.gmra.mrb[0].mxu0 %v9551
    %v9837 = vpop.f32.mrb[0].mxu0
    %v9838 = vadd.f32 0.0, %v9837
    %v9839 = vpop.f32.mrb[0].mxu0
    %v9840 = vadd.f32 0.0, %v9839
    %v9841 = vpop.f32.mrb[0].mxu0
    %v9842 = vpop.f32.mrb[0].mxu0
    %9843 = vdwg.mxu0
    %9844 = vmatprep.subr.bf16.mxu0 %v1988
    %9845 = vmatpush1.bf16.msra.mxu0 %v1987
    %9846 = vmatprep.subr.bf16.mxu0 %v2000
    %9847 = vmatpush1.bf16.msra.mxu0 %v1999
    %9848 = vmatprep.subr.bf16.mxu0 0
    %9849 = vmatpush1.bf16.msra.mxu0 0
    %9850 = vmatprep.subr.bf16.mxu0 0
    %9851 = vmatpush1.bf16.msra.mxu0 0
    %9852 = vmatprep.subr.bf16.mxu0 0
    %9853 = vmatpush1.bf16.msra.mxu0 0
    %9854 = vmatprep.subr.bf16.mxu0 0
    %9855 = vmatpush1.bf16.msra.mxu0 0
    %9856 = vmatprep.subr.bf16.mxu0 0
    %9857 = vmatpush1.bf16.msra.mxu0 0
    %9858 = vmatprep.subr.bf16.mxu0 0
    %9859 = vmatpush1.bf16.msra.mxu0 0
    %9860 = vmatprep.subr.bf16.mxu0 0
    %9861 = vmatpush1.bf16.msra.mxu0 0
    %9862 = vmatprep.subr.bf16.mxu0 0
    %9863 = vmatpush1.bf16.msra.mxu0 0
    %9864 = vmatprep.subr.bf16.mxu0 0
    %9865 = vmatpush1.bf16.msra.mxu0 0
    %9866 = vmatprep.subr.bf16.mxu0 0
    %9867 = vmatpush1.bf16.msra.mxu0 0
    %9868 = vmatprep.subr.bf16.mxu0 0
    %9869 = vmatpush1.bf16.msra.mxu0 0
    %9870 = vmatprep.subr.bf16.mxu0 0
    %9871 = vmatpush1.bf16.msra.mxu0 0
    %9872 = vmatprep.subr.bf16.mxu0 0
    %9873 = vmatpush1.bf16.msra.mxu0 0
    %9874 = vmatprep.subr.bf16.mxu0 0
    %9875 = vmatpush1.bf16.msra.mxu0 0
    %9876 = vmatprep.mubr.bf16.mxu0 0
    %9877 = vmatmul.mubr.bf16.gmra.mrb[0].mxu0 %v9555
    %v9878 = vpop.f32.mrb[0].mxu0
    %v9879 = vadd.f32 %v9838, %v9878
    %v9880 = vpop.f32.mrb[0].mxu0
    %v9881 = vadd.f32 %v9840, %v9880
    %v9882 = vpop.f32.mrb[0].mxu0
    %v9883 = vpop.f32.mrb[0].mxu0
    %9884 = vdwg.mxu0
    %9885 = vmatprep.subr.bf16.mxu0 %v1798
    %9886 = vmatpush1.bf16.msra.mxu0 %v1797
    %9887 = vmatprep.subr.bf16.mxu0 %v1810
    %9888 = vmatpush1.bf16.msra.mxu0 %v1809
    %9889 = vmatprep.subr.bf16.mxu0 %v1822
    %9890 = vmatpush1.bf16.msra.mxu0 %v1821
    %9891 = vmatprep.subr.bf16.mxu0 %v1834
    %9892 = vmatpush1.bf16.msra.mxu0 %v1833
    %9893 = vmatprep.subr.bf16.mxu0 %v1846
    %9894 = vmatpush1.bf16.msra.mxu0 %v1845
    %9895 = vmatprep.subr.bf16.mxu0 %v1858
    %9896 = vmatpush1.bf16.msra.mxu0 %v1857
    %9897 = vmatprep.subr.bf16.mxu0 %v1870
    %9898 = vmatpush1.bf16.msra.mxu0 %v1869
    %9899 = vmatprep.subr.bf16.mxu0 %v1882
    %9900 = vmatpush1.bf16.msra.mxu0 %v1881
    %9901 = vmatprep.subr.bf16.mxu0 %v1894
    %9902 = vmatpush1.bf16.msra.mxu0 %v1893
    %9903 = vmatprep.subr.bf16.mxu0 %v1906
    %9904 = vmatpush1.bf16.msra.mxu0 %v1905
    %9905 = vmatprep.subr.bf16.mxu0 %v1918
    %9906 = vmatpush1.bf16.msra.mxu0 %v1917
    %9907 = vmatprep.subr.bf16.mxu0 %v1930
    %9908 = vmatpush1.bf16.msra.mxu0 %v1929
    %9909 = vmatprep.subr.bf16.mxu0 %v1942
    %9910 = vmatpush1.bf16.msra.mxu0 %v1941
    %9911 = vmatprep.subr.bf16.mxu0 %v1954
    %9912 = vmatpush1.bf16.msra.mxu0 %v1953
    %9913 = vmatprep.subr.bf16.mxu0 %v1966
    %9914 = vmatpush1.bf16.msra.mxu0 %v1965
    %9915 = vmatprep.subr.bf16.mxu0 %v1978
    %9916 = vmatpush1.bf16.msra.mxu0 %v1977
    %9917 = vmatprep.mubr.bf16.mxu0 %v9552
    %9918 = vmatmul.mubr.bf16.gmra.mrb[0].mxu0 %v9551
    %v9919 = vpop.f32.mrb[0].mxu0
    %v9920 = vadd.f32 0.0, %v9919
    %v9921 = vpop.f32.mrb[0].mxu0
    %v9922 = vadd.f32 0.0, %v9921
    %v9923 = vpop.f32.mrb[0].mxu0
    %v9924 = vpop.f32.mrb[0].mxu0
    %9925 = vdwg.mxu0
    %9926 = vmatprep.subr.bf16.mxu0 %v1990
    %9927 = vmatpush1.bf16.msra.mxu0 %v1989
    %9928 = vmatprep.subr.bf16.mxu0 %v2002
    %9929 = vmatpush1.bf16.msra.mxu0 %v2001
    %9930 = vmatprep.subr.bf16.mxu0 0
    %9931 = vmatpush1.bf16.msra.mxu0 0
    %9932 = vmatprep.subr.bf16.mxu0 0
    %9933 = vmatpush1.bf16.msra.mxu0 0
    %9934 = vmatprep.subr.bf16.mxu0 0
    %9935 = vmatpush1.bf16.msra.mxu0 0
    %9936 = vmatprep.subr.bf16.mxu0 0
    %9937 = vmatpush1.bf16.msra.mxu0 0
    %9938 = vmatprep.subr.bf16.mxu0 0
    %9939 = vmatpush1.bf16.msra.mxu0 0
    %9940 = vmatprep.subr.bf16.mxu0 0
    %9941 = vmatpush1.bf16.msra.mxu0 0
    %9942 = vmatprep.subr.bf16.mxu0 0
    %9943 = vmatpush1.bf16.msra.mxu0 0
    %9944 = vmatprep.subr.bf16.mxu0 0
    %9945 = vmatpush1.bf16.msra.mxu0 0
    %9946 = vmatprep.subr.bf16.mxu0 0
    %9947 = vmatpush1.bf16.msra.mxu0 0
    %9948 = vmatprep.subr.bf16.mxu0 0
    %9949 = vmatpush1.bf16.msra.mxu0 0
    %9950 = vmatprep.subr.bf16.mxu0 0
    %9951 = vmatpush1.bf16.msra.mxu0 0
    %9952 = vmatprep.subr.bf16.mxu0 0
    %9953 = vmatpush1.bf16.msra.mxu0 0
    %9954 = vmatprep.subr.bf16.mxu0 0
    %9955 = vmatpush1.bf16.msra.mxu0 0
    %9956 = vmatprep.subr.bf16.mxu0 0
    %9957 = vmatpush1.bf16.msra.mxu0 0
    %9958 = vmatprep.mubr.bf16.mxu0 0
    %9959 = vmatmul.mubr.bf16.gmra.mrb[0].mxu0 %v9555
    %v9960 = vpop.f32.mrb[0].mxu0
    %v9961 = vadd.f32 %v9920, %v9960
    %v9962 = vpop.f32.mrb[0].mxu0
    %v9963 = vadd.f32 %v9922, %v9962
    %v9964 = vpop.f32.mrb[0].mxu0
    %v9965 = vpop.f32.mrb[0].mxu0
    %9966 = vdwg.mxu0
    %9967 = vmatprep.subr.bf16.mxu0 %v1800
    %9968 = vmatpush1.bf16.msra.mxu0 %v1799
    %9969 = vmatprep.subr.bf16.mxu0 %v1812
    %9970 = vmatpush1.bf16.msra.mxu0 %v1811
    %9971 = vmatprep.subr.bf16.mxu0 %v1824
    %9972 = vmatpush1.bf16.msra.mxu0 %v1823
    %9973 = vmatprep.subr.bf16.mxu0 %v1836
    %9974 = vmatpush1.bf16.msra.mxu0 %v1835
    %9975 = vmatprep.subr.bf16.mxu0 %v1848
    %9976 = vmatpush1.bf16.msra.mxu0 %v1847
    %9977 = vmatprep.subr.bf16.mxu0 %v1860
    %9978 = vmatpush1.bf16.msra.mxu0 %v1859
    %9979 = vmatprep.subr.bf16.mxu0 %v1872
    %9980 = vmatpush1.bf16.msra.mxu0 %v1871
    %9981 = vmatprep.subr.bf16.mxu0 %v1884
    %9982 = vmatpush1.bf16.msra.mxu0 %v1883
    %9983 = vmatprep.subr.bf16.mxu0 %v1896
    %9984 = vmatpush1.bf16.msra.mxu0 %v1895
    %9985 = vmatprep.subr.bf16.mxu0 %v1908
    %9986 = vmatpush1.bf16.msra.mxu0 %v1907
    %9987 = vmatprep.subr.bf16.mxu0 %v1920
    %9988 = vmatpush1.bf16.msra.mxu0 %v1919
    %9989 = vmatprep.subr.bf16.mxu0 %v1932
    %9990 = vmatpush1.bf16.msra.mxu0 %v1931
    %9991 = vmatprep.subr.bf16.mxu0 %v1944
    %9992 = vmatpush1.bf16.msra.mxu0 %v1943
    %9993 = vmatprep.subr.bf16.mxu0 %v1956
    %9994 = vmatpush1.bf16.msra.mxu0 %v1955
    %9995 = vmatprep.subr.bf16.mxu0 %v1968
    %9996 = vmatpush1.bf16.msra.mxu0 %v1967
    %9997 = vmatprep.subr.bf16.mxu0 %v1980
    %9998 = vmatpush1.bf16.msra.mxu0 %v1979
    %9999 = vmatprep.mubr.bf16.mxu0 %v9552
    %10000 = vmatmul.mubr.bf16.gmra.mrb[0].mxu0 %v9551
    %v10001 = vpop.f32.mrb[0].mxu0
    %v10002 = vadd.f32 0.0, %v10001
    %v10003 = vpop.f32.mrb[0].mxu0
    %v10004 = vadd.f32 0.0, %v10003
    %v10005 = vpop.f32.mrb[0].mxu0
    %v10006 = vpop.f32.mrb[0].mxu0
    %10007 = vdwg.mxu0
    %10008 = vmatprep.subr.bf16.mxu0 %v1992
    %10009 = vmatpush1.bf16.msra.mxu0 %v1991
    %10010 = vmatprep.subr.bf16.mxu0 %v2004
    %10011 = vmatpush1.bf16.msra.mxu0 %v2003
    %10012 = vmatprep.subr.bf16.mxu0 0
    %10013 = vmatpush1.bf16.msra.mxu0 0
    %10014 = vmatprep.subr.bf16.mxu0 0
    %10015 = vmatpush1.bf16.msra.mxu0 0
    %10016 = vmatprep.subr.bf16.mxu0 0
    %10017 = vmatpush1.bf16.msra.mxu0 0
    %10018 = vmatprep.subr.bf16.mxu0 0
    %10019 = vmatpush1.bf16.msra.mxu0 0
    %10020 = vmatprep.subr.bf16.mxu0 0
    %10021 = vmatpush1.bf16.msra.mxu0 0
    %10022 = vmatprep.subr.bf16.mxu0 0
    %10023 = vmatpush1.bf16.msra.mxu0 0
    %10024 = vmatprep.subr.bf16.mxu0 0
    %10025 = vmatpush1.bf16.msra.mxu0 0
    %10026 = vmatprep.subr.bf16.mxu0 0
    %10027 = vmatpush1.bf16.msra.mxu0 0
    %10028 = vmatprep.subr.bf16.mxu0 0
    %10029 = vmatpush1.bf16.msra.mxu0 0
    %10030 = vmatprep.subr.bf16.mxu0 0
    %10031 = vmatpush1.bf16.msra.mxu0 0
    %10032 = vmatprep.subr.bf16.mxu0 0
    %10033 = vmatpush1.bf16.msra.mxu0 0
    %10034 = vmatprep.subr.bf16.mxu0 0
    %10035 = vmatpush1.bf16.msra.mxu0 0
    %10036 = vmatprep.subr.bf16.mxu0 0
    %10037 = vmatpush1.bf16.msra.mxu0 0
    %10038 = vmatprep.subr.bf16.mxu0 0
    %10039 = vmatpush1.bf16.msra.mxu0 0
    %10040 = vmatprep.mubr.bf16.mxu0 0
    %10041 = vmatmul.mubr.bf16.gmra.mrb[0].mxu0 %v9555
    %v10042 = vpop.f32.mrb[0].mxu0
    %v10043 = vadd.f32 %v10002, %v10042
    %v10044 = vpop.f32.mrb[0].mxu0
    %v10045 = vadd.f32 %v10004, %v10044
    %v10046 = vpop.f32.mrb[0].mxu0
    %v10047 = vpop.f32.mrb[0].mxu0
    %10048 = vdwg.mxu0
    %v10049 = vadd.f32 %v358, %v9633
    %v10050 = vadd.f32 %v360, %v9635
    %v10051 = vadd.f32 %v469, %v9715
    %v10052 = vadd.f32 %v471, %v9717
    %v10053 = vadd.f32 %v580, %v9797
    %v10054 = vadd.f32 %v582, %v9799
    %v10055 = vadd.f32 %v691, %v9879
    %v10056 = vadd.f32 %v693, %v9881
    %v10057 = vadd.f32 %v802, %v9961
    %v10058 = vadd.f32 %v804, %v9963
    %v10059 = vadd.f32 %v913, %v10043
    %v10060 = vadd.f32 %v915, %v10045
    %v10061 = vmul.f32 %v10049, 0.5
    %v10062 = vmul.f32 %v10050, 0.5
    %v10063 = vmul.f32 %v10051, 0.5
    %v10064 = vtanh.pop %v10061
    %v10065 = vtanh.pop %v10062
    %v10066 = vtanh.pop %v10063
    %v10067 = vmul.f32 %v10064, 0.5
    %v10068 = vmul.f32 %v10065, 0.5
    %v10069 = vmul.f32 %v10066, 0.5
    %v10070 = vadd.f32 %v10067, 0.5
    %v10071 = vadd.f32 %v10068, 0.5
    %v10072 = vadd.f32 %v10069, 0.5
    %v10073 = vmul.f32 %v10052, 0.5
    %v10074 = vmul.f32 %v10053, 0.5
    %v10075 = vmul.f32 %v10054, 0.5
    %v10076 = vtanh.pop %v10073
    %v10077 = vtanh.pop %v10074
    %v10078 = vtanh.pop %v10075
    %v10079 = vmul.f32 %v10076, 0.5
    %v10080 = vmul.f32 %v10077, 0.5
    %v10081 = vmul.f32 %v10078, 0.5
    %v10082 = vadd.f32 %v10079, 0.5
    %v10083 = vadd.f32 %v10080, 0.5
    %v10084 = vadd.f32 %v10081, 0.5
    %v10085 = vtanh.pop %v10055
    %v10086 = vtanh.pop %v10056
    %v10087 = vtanh.pop %v10057
    %v10088 = vmul.f32 %v10058, 0.5
    %v10089 = vmul.f32 %v10059, 0.5
    %v10090 = vmul.f32 %v10060, 0.5
    %v10091 = vtanh.pop %v10088
    %v10092 = vtanh.pop %v10089
    %v10093 = vtanh.pop %v10090
    %v10094 = vmul.f32 %v10091, 0.5
    %v10095 = vmul.f32 %v10092, 0.5
    %v10096 = vmul.f32 %v10093, 0.5
    %v10097 = vadd.f32 %v10094, 0.5
    %v10098 = vadd.f32 %v10095, 0.5
    %v10099 = vadd.f32 %v10096, 0.5
    %v10100 = vmul.f32 %v10082, %v9542
    %v10101 = vmul.f32 %v10083, %v9543
    %v10102 = vmul.f32 %v10084, %v9544
    %v10103 = vmul.f32 %v10070, %v10085
    %v10104 = vmul.f32 %v10071, %v10086
    %v10105 = vmul.f32 %v10072, %v10087
    %v10106 = vadd.f32 %v10100, %v10103
    %v10107 = vadd.f32 %v10101, %v10104
    %v10108 = vadd.f32 %v10102, %v10105
    %v10109 = vtanh.pop %v10106
    %v10110 = vtanh.pop %v10107
    %v10111 = vtanh.pop %v10108
    %v10112 = vmul.f32 %v10097, %v10109
    %v10113 = vmul.f32 %v10098, %v10110
    %v10114 = vmul.f32 %v10099, %v10111
    %v10115 = vpack.c.bf16 %v10112, %v10112
    %v10116 = vpack.c.bf16 %v10113, %v10113
    %v10117 = vpack.c.bf16 %v10114, %v10114
    %v10119 = vsel %vm2221, %v10117, 0
    %10121 = vmatprep.subr.bf16.mxu0 %v1790
    %10122 = vmatpush1.bf16.msra.mxu0 %v1789
    %10123 = vmatprep.subr.bf16.mxu0 %v1802
    %10124 = vmatpush1.bf16.msra.mxu0 %v1801
    %10125 = vmatprep.subr.bf16.mxu0 %v1814
    %10126 = vmatpush1.bf16.msra.mxu0 %v1813
    %10127 = vmatprep.subr.bf16.mxu0 %v1826
    %10128 = vmatpush1.bf16.msra.mxu0 %v1825
    %10129 = vmatprep.subr.bf16.mxu0 %v1838
    %10130 = vmatpush1.bf16.msra.mxu0 %v1837
    %10131 = vmatprep.subr.bf16.mxu0 %v1850
    %10132 = vmatpush1.bf16.msra.mxu0 %v1849
    %10133 = vmatprep.subr.bf16.mxu0 %v1862
    %10134 = vmatpush1.bf16.msra.mxu0 %v1861
    %10135 = vmatprep.subr.bf16.mxu0 %v1874
    %10136 = vmatpush1.bf16.msra.mxu0 %v1873
    %10137 = vmatprep.subr.bf16.mxu0 %v1886
    %10138 = vmatpush1.bf16.msra.mxu0 %v1885
    %10139 = vmatprep.subr.bf16.mxu0 %v1898
    %10140 = vmatpush1.bf16.msra.mxu0 %v1897
    %10141 = vmatprep.subr.bf16.mxu0 %v1910
    %10142 = vmatpush1.bf16.msra.mxu0 %v1909
    %10143 = vmatprep.subr.bf16.mxu0 %v1922
    %10144 = vmatpush1.bf16.msra.mxu0 %v1921
    %10145 = vmatprep.subr.bf16.mxu0 %v1934
    %10146 = vmatpush1.bf16.msra.mxu0 %v1933
    %10147 = vmatprep.subr.bf16.mxu0 %v1946
    %10148 = vmatpush1.bf16.msra.mxu0 %v1945
    %10149 = vmatprep.subr.bf16.mxu0 %v1958
    %10150 = vmatpush1.bf16.msra.mxu0 %v1957
    %10151 = vmatprep.subr.bf16.mxu0 %v1970
    %10152 = vmatpush1.bf16.msra.mxu0 %v1969
    %10153 = vmatprep.mubr.bf16.mxu0 %v10116
    %10154 = vmatmul.mubr.bf16.gmra.mrb[0].mxu0 %v10115
    %v10155 = vpop.f32.mrb[0].mxu0
    %v10156 = vadd.f32 0.0, %v10155
    %v10157 = vpop.f32.mrb[0].mxu0
    %v10158 = vadd.f32 0.0, %v10157
    %v10159 = vpop.f32.mrb[0].mxu0
    %v10160 = vpop.f32.mrb[0].mxu0
    %10161 = vdwg.mxu0
    %10162 = vmatprep.subr.bf16.mxu0 %v1982
    %10163 = vmatpush1.bf16.msra.mxu0 %v1981
    %10164 = vmatprep.subr.bf16.mxu0 %v1994
    %10165 = vmatpush1.bf16.msra.mxu0 %v1993
    %10166 = vmatprep.subr.bf16.mxu0 0
    %10167 = vmatpush1.bf16.msra.mxu0 0
    %10168 = vmatprep.subr.bf16.mxu0 0
    %10169 = vmatpush1.bf16.msra.mxu0 0
    %10170 = vmatprep.subr.bf16.mxu0 0
    %10171 = vmatpush1.bf16.msra.mxu0 0
    %10172 = vmatprep.subr.bf16.mxu0 0
    %10173 = vmatpush1.bf16.msra.mxu0 0
    %10174 = vmatprep.subr.bf16.mxu0 0
    %10175 = vmatpush1.bf16.msra.mxu0 0
    %10176 = vmatprep.subr.bf16.mxu0 0
    %10177 = vmatpush1.bf16.msra.mxu0 0
    %10178 = vmatprep.subr.bf16.mxu0 0
    %10179 = vmatpush1.bf16.msra.mxu0 0
    %10180 = vmatprep.subr.bf16.mxu0 0
    %10181 = vmatpush1.bf16.msra.mxu0 0
    %10182 = vmatprep.subr.bf16.mxu0 0
    %10183 = vmatpush1.bf16.msra.mxu0 0
    %10184 = vmatprep.subr.bf16.mxu0 0
    %10185 = vmatpush1.bf16.msra.mxu0 0
    %10186 = vmatprep.subr.bf16.mxu0 0
    %10187 = vmatpush1.bf16.msra.mxu0 0
    %10188 = vmatprep.subr.bf16.mxu0 0
    %10189 = vmatpush1.bf16.msra.mxu0 0
    %10190 = vmatprep.subr.bf16.mxu0 0
    %10191 = vmatpush1.bf16.msra.mxu0 0
    %10192 = vmatprep.subr.bf16.mxu0 0
    %10193 = vmatpush1.bf16.msra.mxu0 0
    %10194 = vmatprep.mubr.bf16.mxu0 0
    %10195 = vmatmul.mubr.bf16.gmra.mrb[0].mxu0 %v10119
    %v10196 = vpop.f32.mrb[0].mxu0
    %v10197 = vadd.f32 %v10156, %v10196
    %v10198 = vpop.f32.mrb[0].mxu0
    %v10199 = vadd.f32 %v10158, %v10198
    %v10200 = vpop.f32.mrb[0].mxu0
    %v10201 = vpop.f32.mrb[0].mxu0
    %10202 = vdwg.mxu0
    %10203 = vmatprep.subr.bf16.mxu0 %v1792
    %10204 = vmatpush1.bf16.msra.mxu0 %v1791
    %10205 = vmatprep.subr.bf16.mxu0 %v1804
    %10206 = vmatpush1.bf16.msra.mxu0 %v1803
    %10207 = vmatprep.subr.bf16.mxu0 %v1816
    %10208 = vmatpush1.bf16.msra.mxu0 %v1815
    %10209 = vmatprep.subr.bf16.mxu0 %v1828
    %10210 = vmatpush1.bf16.msra.mxu0 %v1827
    %10211 = vmatprep.subr.bf16.mxu0 %v1840
    %10212 = vmatpush1.bf16.msra.mxu0 %v1839
    %10213 = vmatprep.subr.bf16.mxu0 %v1852
    %10214 = vmatpush1.bf16.msra.mxu0 %v1851
    %10215 = vmatprep.subr.bf16.mxu0 %v1864
    %10216 = vmatpush1.bf16.msra.mxu0 %v1863
    %10217 = vmatprep.subr.bf16.mxu0 %v1876
    %10218 = vmatpush1.bf16.msra.mxu0 %v1875
    %10219 = vmatprep.subr.bf16.mxu0 %v1888
    %10220 = vmatpush1.bf16.msra.mxu0 %v1887
    %10221 = vmatprep.subr.bf16.mxu0 %v1900
    %10222 = vmatpush1.bf16.msra.mxu0 %v1899
    %10223 = vmatprep.subr.bf16.mxu0 %v1912
    %10224 = vmatpush1.bf16.msra.mxu0 %v1911
    %10225 = vmatprep.subr.bf16.mxu0 %v1924
    %10226 = vmatpush1.bf16.msra.mxu0 %v1923
    %10227 = vmatprep.subr.bf16.mxu0 %v1936
    %10228 = vmatpush1.bf16.msra.mxu0 %v1935
    %10229 = vmatprep.subr.bf16.mxu0 %v1948
    %10230 = vmatpush1.bf16.msra.mxu0 %v1947
    %10231 = vmatprep.subr.bf16.mxu0 %v1960
    %10232 = vmatpush1.bf16.msra.mxu0 %v1959
    %10233 = vmatprep.subr.bf16.mxu0 %v1972
    %10234 = vmatpush1.bf16.msra.mxu0 %v1971
    %10235 = vmatprep.mubr.bf16.mxu0 %v10116
    %10236 = vmatmul.mubr.bf16.gmra.mrb[0].mxu0 %v10115
    %v10237 = vpop.f32.mrb[0].mxu0
    %v10238 = vadd.f32 0.0, %v10237
    %v10239 = vpop.f32.mrb[0].mxu0
    %v10240 = vadd.f32 0.0, %v10239
    %v10241 = vpop.f32.mrb[0].mxu0
    %v10242 = vpop.f32.mrb[0].mxu0
    %10243 = vdwg.mxu0
    %10244 = vmatprep.subr.bf16.mxu0 %v1984
    %10245 = vmatpush1.bf16.msra.mxu0 %v1983
    %10246 = vmatprep.subr.bf16.mxu0 %v1996
    %10247 = vmatpush1.bf16.msra.mxu0 %v1995
    %10248 = vmatprep.subr.bf16.mxu0 0
    %10249 = vmatpush1.bf16.msra.mxu0 0
    %10250 = vmatprep.subr.bf16.mxu0 0
    %10251 = vmatpush1.bf16.msra.mxu0 0
    %10252 = vmatprep.subr.bf16.mxu0 0
    %10253 = vmatpush1.bf16.msra.mxu0 0
    %10254 = vmatprep.subr.bf16.mxu0 0
    %10255 = vmatpush1.bf16.msra.mxu0 0
    %10256 = vmatprep.subr.bf16.mxu0 0
    %10257 = vmatpush1.bf16.msra.mxu0 0
    %10258 = vmatprep.subr.bf16.mxu0 0
    %10259 = vmatpush1.bf16.msra.mxu0 0
    %10260 = vmatprep.subr.bf16.mxu0 0
    %10261 = vmatpush1.bf16.msra.mxu0 0
    %10262 = vmatprep.subr.bf16.mxu0 0
    %10263 = vmatpush1.bf16.msra.mxu0 0
    %10264 = vmatprep.subr.bf16.mxu0 0
    %10265 = vmatpush1.bf16.msra.mxu0 0
    %10266 = vmatprep.subr.bf16.mxu0 0
    %10267 = vmatpush1.bf16.msra.mxu0 0
    %10268 = vmatprep.subr.bf16.mxu0 0
    %10269 = vmatpush1.bf16.msra.mxu0 0
    %10270 = vmatprep.subr.bf16.mxu0 0
    %10271 = vmatpush1.bf16.msra.mxu0 0
    %10272 = vmatprep.subr.bf16.mxu0 0
    %10273 = vmatpush1.bf16.msra.mxu0 0
    %10274 = vmatprep.subr.bf16.mxu0 0
    %10275 = vmatpush1.bf16.msra.mxu0 0
    %10276 = vmatprep.mubr.bf16.mxu0 0
    %10277 = vmatmul.mubr.bf16.gmra.mrb[0].mxu0 %v10119
    %v10278 = vpop.f32.mrb[0].mxu0
    %v10279 = vadd.f32 %v10238, %v10278
    %v10280 = vpop.f32.mrb[0].mxu0
    %v10281 = vadd.f32 %v10240, %v10280
    %v10282 = vpop.f32.mrb[0].mxu0
    %v10283 = vpop.f32.mrb[0].mxu0
    %10284 = vdwg.mxu0
    %10285 = vmatprep.subr.bf16.mxu0 %v1794
    %10286 = vmatpush1.bf16.msra.mxu0 %v1793
    %10287 = vmatprep.subr.bf16.mxu0 %v1806
    %10288 = vmatpush1.bf16.msra.mxu0 %v1805
    %10289 = vmatprep.subr.bf16.mxu0 %v1818
    %10290 = vmatpush1.bf16.msra.mxu0 %v1817
    %10291 = vmatprep.subr.bf16.mxu0 %v1830
    %10292 = vmatpush1.bf16.msra.mxu0 %v1829
    %10293 = vmatprep.subr.bf16.mxu0 %v1842
    %10294 = vmatpush1.bf16.msra.mxu0 %v1841
    %10295 = vmatprep.subr.bf16.mxu0 %v1854
    %10296 = vmatpush1.bf16.msra.mxu0 %v1853
    %10297 = vmatprep.subr.bf16.mxu0 %v1866
    %10298 = vmatpush1.bf16.msra.mxu0 %v1865
    %10299 = vmatprep.subr.bf16.mxu0 %v1878
    %10300 = vmatpush1.bf16.msra.mxu0 %v1877
    %10301 = vmatprep.subr.bf16.mxu0 %v1890
    %10302 = vmatpush1.bf16.msra.mxu0 %v1889
    %10303 = vmatprep.subr.bf16.mxu0 %v1902
    %10304 = vmatpush1.bf16.msra.mxu0 %v1901
    %10305 = vmatprep.subr.bf16.mxu0 %v1914
    %10306 = vmatpush1.bf16.msra.mxu0 %v1913
    %10307 = vmatprep.subr.bf16.mxu0 %v1926
    %10308 = vmatpush1.bf16.msra.mxu0 %v1925
    %10309 = vmatprep.subr.bf16.mxu0 %v1938
    %10310 = vmatpush1.bf16.msra.mxu0 %v1937
    %10311 = vmatprep.subr.bf16.mxu0 %v1950
    %10312 = vmatpush1.bf16.msra.mxu0 %v1949
    %10313 = vmatprep.subr.bf16.mxu0 %v1962
    %10314 = vmatpush1.bf16.msra.mxu0 %v1961
    %10315 = vmatprep.subr.bf16.mxu0 %v1974
    %10316 = vmatpush1.bf16.msra.mxu0 %v1973
    %10317 = vmatprep.mubr.bf16.mxu0 %v10116
    %10318 = vmatmul.mubr.bf16.gmra.mrb[0].mxu0 %v10115
    %v10319 = vpop.f32.mrb[0].mxu0
    %v10320 = vadd.f32 0.0, %v10319
    %v10321 = vpop.f32.mrb[0].mxu0
    %v10322 = vadd.f32 0.0, %v10321
    %v10323 = vpop.f32.mrb[0].mxu0
    %v10324 = vpop.f32.mrb[0].mxu0
    %10325 = vdwg.mxu0
    %10326 = vmatprep.subr.bf16.mxu0 %v1986
    %10327 = vmatpush1.bf16.msra.mxu0 %v1985
    %10328 = vmatprep.subr.bf16.mxu0 %v1998
    %10329 = vmatpush1.bf16.msra.mxu0 %v1997
    %10330 = vmatprep.subr.bf16.mxu0 0
    %10331 = vmatpush1.bf16.msra.mxu0 0
    %10332 = vmatprep.subr.bf16.mxu0 0
    %10333 = vmatpush1.bf16.msra.mxu0 0
    %10334 = vmatprep.subr.bf16.mxu0 0
    %10335 = vmatpush1.bf16.msra.mxu0 0
    %10336 = vmatprep.subr.bf16.mxu0 0
    %10337 = vmatpush1.bf16.msra.mxu0 0
    %10338 = vmatprep.subr.bf16.mxu0 0
    %10339 = vmatpush1.bf16.msra.mxu0 0
    %10340 = vmatprep.subr.bf16.mxu0 0
    %10341 = vmatpush1.bf16.msra.mxu0 0
    %10342 = vmatprep.subr.bf16.mxu0 0
    %10343 = vmatpush1.bf16.msra.mxu0 0
    %10344 = vmatprep.subr.bf16.mxu0 0
    %10345 = vmatpush1.bf16.msra.mxu0 0
    %10346 = vmatprep.subr.bf16.mxu0 0
    %10347 = vmatpush1.bf16.msra.mxu0 0
    %10348 = vmatprep.subr.bf16.mxu0 0
    %10349 = vmatpush1.bf16.msra.mxu0 0
    %10350 = vmatprep.subr.bf16.mxu0 0
    %10351 = vmatpush1.bf16.msra.mxu0 0
    %10352 = vmatprep.subr.bf16.mxu0 0
    %10353 = vmatpush1.bf16.msra.mxu0 0
    %10354 = vmatprep.subr.bf16.mxu0 0
    %10355 = vmatpush1.bf16.msra.mxu0 0
    %10356 = vmatprep.subr.bf16.mxu0 0
    %10357 = vmatpush1.bf16.msra.mxu0 0
    %10358 = vmatprep.mubr.bf16.mxu0 0
    %10359 = vmatmul.mubr.bf16.gmra.mrb[0].mxu0 %v10119
    %v10360 = vpop.f32.mrb[0].mxu0
    %v10361 = vadd.f32 %v10320, %v10360
    %v10362 = vpop.f32.mrb[0].mxu0
    %v10363 = vadd.f32 %v10322, %v10362
    %v10364 = vpop.f32.mrb[0].mxu0
    %v10365 = vpop.f32.mrb[0].mxu0
    %10366 = vdwg.mxu0
    %10367 = vmatprep.subr.bf16.mxu0 %v1796
    %10368 = vmatpush1.bf16.msra.mxu0 %v1795
    %10369 = vmatprep.subr.bf16.mxu0 %v1808
    %10370 = vmatpush1.bf16.msra.mxu0 %v1807
    %10371 = vmatprep.subr.bf16.mxu0 %v1820
    %10372 = vmatpush1.bf16.msra.mxu0 %v1819
    %10373 = vmatprep.subr.bf16.mxu0 %v1832
    %10374 = vmatpush1.bf16.msra.mxu0 %v1831
    %10375 = vmatprep.subr.bf16.mxu0 %v1844
    %10376 = vmatpush1.bf16.msra.mxu0 %v1843
    %10377 = vmatprep.subr.bf16.mxu0 %v1856
    %10378 = vmatpush1.bf16.msra.mxu0 %v1855
    %10379 = vmatprep.subr.bf16.mxu0 %v1868
    %10380 = vmatpush1.bf16.msra.mxu0 %v1867
    %10381 = vmatprep.subr.bf16.mxu0 %v1880
    %10382 = vmatpush1.bf16.msra.mxu0 %v1879
    %10383 = vmatprep.subr.bf16.mxu0 %v1892
    %10384 = vmatpush1.bf16.msra.mxu0 %v1891
    %10385 = vmatprep.subr.bf16.mxu0 %v1904
    %10386 = vmatpush1.bf16.msra.mxu0 %v1903
    %10387 = vmatprep.subr.bf16.mxu0 %v1916
    %10388 = vmatpush1.bf16.msra.mxu0 %v1915
    %10389 = vmatprep.subr.bf16.mxu0 %v1928
    %10390 = vmatpush1.bf16.msra.mxu0 %v1927
    %10391 = vmatprep.subr.bf16.mxu0 %v1940
    %10392 = vmatpush1.bf16.msra.mxu0 %v1939
    %10393 = vmatprep.subr.bf16.mxu0 %v1952
    %10394 = vmatpush1.bf16.msra.mxu0 %v1951
    %10395 = vmatprep.subr.bf16.mxu0 %v1964
    %10396 = vmatpush1.bf16.msra.mxu0 %v1963
    %10397 = vmatprep.subr.bf16.mxu0 %v1976
    %10398 = vmatpush1.bf16.msra.mxu0 %v1975
    %10399 = vmatprep.mubr.bf16.mxu0 %v10116
    %10400 = vmatmul.mubr.bf16.gmra.mrb[0].mxu0 %v10115
    %v10401 = vpop.f32.mrb[0].mxu0
    %v10402 = vadd.f32 0.0, %v10401
    %v10403 = vpop.f32.mrb[0].mxu0
    %v10404 = vadd.f32 0.0, %v10403
    %v10405 = vpop.f32.mrb[0].mxu0
    %v10406 = vpop.f32.mrb[0].mxu0
    %10407 = vdwg.mxu0
    %10408 = vmatprep.subr.bf16.mxu0 %v1988
    %10409 = vmatpush1.bf16.msra.mxu0 %v1987
    %10410 = vmatprep.subr.bf16.mxu0 %v2000
    %10411 = vmatpush1.bf16.msra.mxu0 %v1999
    %10412 = vmatprep.subr.bf16.mxu0 0
    %10413 = vmatpush1.bf16.msra.mxu0 0
    %10414 = vmatprep.subr.bf16.mxu0 0
    %10415 = vmatpush1.bf16.msra.mxu0 0
    %10416 = vmatprep.subr.bf16.mxu0 0
    %10417 = vmatpush1.bf16.msra.mxu0 0
    %10418 = vmatprep.subr.bf16.mxu0 0
    %10419 = vmatpush1.bf16.msra.mxu0 0
    %10420 = vmatprep.subr.bf16.mxu0 0
    %10421 = vmatpush1.bf16.msra.mxu0 0
    %10422 = vmatprep.subr.bf16.mxu0 0
    %10423 = vmatpush1.bf16.msra.mxu0 0
    %10424 = vmatprep.subr.bf16.mxu0 0
    %10425 = vmatpush1.bf16.msra.mxu0 0
    %10426 = vmatprep.subr.bf16.mxu0 0
    %10427 = vmatpush1.bf16.msra.mxu0 0
    %10428 = vmatprep.subr.bf16.mxu0 0
    %10429 = vmatpush1.bf16.msra.mxu0 0
    %10430 = vmatprep.subr.bf16.mxu0 0
    %10431 = vmatpush1.bf16.msra.mxu0 0
    %10432 = vmatprep.subr.bf16.mxu0 0
    %10433 = vmatpush1.bf16.msra.mxu0 0
    %10434 = vmatprep.subr.bf16.mxu0 0
    %10435 = vmatpush1.bf16.msra.mxu0 0
    %10436 = vmatprep.subr.bf16.mxu0 0
    %10437 = vmatpush1.bf16.msra.mxu0 0
    %10438 = vmatprep.subr.bf16.mxu0 0
    %10439 = vmatpush1.bf16.msra.mxu0 0
    %10440 = vmatprep.mubr.bf16.mxu0 0
    %10441 = vmatmul.mubr.bf16.gmra.mrb[0].mxu0 %v10119
    %v10442 = vpop.f32.mrb[0].mxu0
    %v10443 = vadd.f32 %v10402, %v10442
    %v10444 = vpop.f32.mrb[0].mxu0
    %v10445 = vadd.f32 %v10404, %v10444
    %v10446 = vpop.f32.mrb[0].mxu0
    %v10447 = vpop.f32.mrb[0].mxu0
    %10448 = vdwg.mxu0
    %10449 = vmatprep.subr.bf16.mxu0 %v1798
    %10450 = vmatpush1.bf16.msra.mxu0 %v1797
    %10451 = vmatprep.subr.bf16.mxu0 %v1810
    %10452 = vmatpush1.bf16.msra.mxu0 %v1809
    %10453 = vmatprep.subr.bf16.mxu0 %v1822
    %10454 = vmatpush1.bf16.msra.mxu0 %v1821
    %10455 = vmatprep.subr.bf16.mxu0 %v1834
    %10456 = vmatpush1.bf16.msra.mxu0 %v1833
    %10457 = vmatprep.subr.bf16.mxu0 %v1846
    %10458 = vmatpush1.bf16.msra.mxu0 %v1845
    %10459 = vmatprep.subr.bf16.mxu0 %v1858
    %10460 = vmatpush1.bf16.msra.mxu0 %v1857
    %10461 = vmatprep.subr.bf16.mxu0 %v1870
    %10462 = vmatpush1.bf16.msra.mxu0 %v1869
    %10463 = vmatprep.subr.bf16.mxu0 %v1882
    %10464 = vmatpush1.bf16.msra.mxu0 %v1881
    %10465 = vmatprep.subr.bf16.mxu0 %v1894
    %10466 = vmatpush1.bf16.msra.mxu0 %v1893
    %10467 = vmatprep.subr.bf16.mxu0 %v1906
    %10468 = vmatpush1.bf16.msra.mxu0 %v1905
    %10469 = vmatprep.subr.bf16.mxu0 %v1918
    %10470 = vmatpush1.bf16.msra.mxu0 %v1917
    %10471 = vmatprep.subr.bf16.mxu0 %v1930
    %10472 = vmatpush1.bf16.msra.mxu0 %v1929
    %10473 = vmatprep.subr.bf16.mxu0 %v1942
    %10474 = vmatpush1.bf16.msra.mxu0 %v1941
    %10475 = vmatprep.subr.bf16.mxu0 %v1954
    %10476 = vmatpush1.bf16.msra.mxu0 %v1953
    %10477 = vmatprep.subr.bf16.mxu0 %v1966
    %10478 = vmatpush1.bf16.msra.mxu0 %v1965
    %10479 = vmatprep.subr.bf16.mxu0 %v1978
    %10480 = vmatpush1.bf16.msra.mxu0 %v1977
    %10481 = vmatprep.mubr.bf16.mxu0 %v10116
    %10482 = vmatmul.mubr.bf16.gmra.mrb[0].mxu0 %v10115
    %v10483 = vpop.f32.mrb[0].mxu0
    %v10484 = vadd.f32 0.0, %v10483
    %v10485 = vpop.f32.mrb[0].mxu0
    %v10486 = vadd.f32 0.0, %v10485
    %v10487 = vpop.f32.mrb[0].mxu0
    %v10488 = vpop.f32.mrb[0].mxu0
    %10489 = vdwg.mxu0
    %10490 = vmatprep.subr.bf16.mxu0 %v1990
    %10491 = vmatpush1.bf16.msra.mxu0 %v1989
    %10492 = vmatprep.subr.bf16.mxu0 %v2002
    %10493 = vmatpush1.bf16.msra.mxu0 %v2001
    %10494 = vmatprep.subr.bf16.mxu0 0
    %10495 = vmatpush1.bf16.msra.mxu0 0
    %10496 = vmatprep.subr.bf16.mxu0 0
    %10497 = vmatpush1.bf16.msra.mxu0 0
    %10498 = vmatprep.subr.bf16.mxu0 0
    %10499 = vmatpush1.bf16.msra.mxu0 0
    %10500 = vmatprep.subr.bf16.mxu0 0
    %10501 = vmatpush1.bf16.msra.mxu0 0
    %10502 = vmatprep.subr.bf16.mxu0 0
    %10503 = vmatpush1.bf16.msra.mxu0 0
    %10504 = vmatprep.subr.bf16.mxu0 0
    %10505 = vmatpush1.bf16.msra.mxu0 0
    %10506 = vmatprep.subr.bf16.mxu0 0
    %10507 = vmatpush1.bf16.msra.mxu0 0
    %10508 = vmatprep.subr.bf16.mxu0 0
    %10509 = vmatpush1.bf16.msra.mxu0 0
    %10510 = vmatprep.subr.bf16.mxu0 0
    %10511 = vmatpush1.bf16.msra.mxu0 0
    %10512 = vmatprep.subr.bf16.mxu0 0
    %10513 = vmatpush1.bf16.msra.mxu0 0
    %10514 = vmatprep.subr.bf16.mxu0 0
    %10515 = vmatpush1.bf16.msra.mxu0 0
    %10516 = vmatprep.subr.bf16.mxu0 0
    %10517 = vmatpush1.bf16.msra.mxu0 0
    %10518 = vmatprep.subr.bf16.mxu0 0
    %10519 = vmatpush1.bf16.msra.mxu0 0
    %10520 = vmatprep.subr.bf16.mxu0 0
    %10521 = vmatpush1.bf16.msra.mxu0 0
    %10522 = vmatprep.mubr.bf16.mxu0 0
    %10523 = vmatmul.mubr.bf16.gmra.mrb[0].mxu0 %v10119
    %v10524 = vpop.f32.mrb[0].mxu0
    %v10525 = vadd.f32 %v10484, %v10524
    %v10526 = vpop.f32.mrb[0].mxu0
    %v10527 = vadd.f32 %v10486, %v10526
    %v10528 = vpop.f32.mrb[0].mxu0
    %v10529 = vpop.f32.mrb[0].mxu0
    %10530 = vdwg.mxu0
    %10531 = vmatprep.subr.bf16.mxu0 %v1800
    %10532 = vmatpush1.bf16.msra.mxu0 %v1799
    %10533 = vmatprep.subr.bf16.mxu0 %v1812
    %10534 = vmatpush1.bf16.msra.mxu0 %v1811
    %10535 = vmatprep.subr.bf16.mxu0 %v1824
    %10536 = vmatpush1.bf16.msra.mxu0 %v1823
    %10537 = vmatprep.subr.bf16.mxu0 %v1836
    %10538 = vmatpush1.bf16.msra.mxu0 %v1835
    %10539 = vmatprep.subr.bf16.mxu0 %v1848
    %10540 = vmatpush1.bf16.msra.mxu0 %v1847
    %10541 = vmatprep.subr.bf16.mxu0 %v1860
    %10542 = vmatpush1.bf16.msra.mxu0 %v1859
    %10543 = vmatprep.subr.bf16.mxu0 %v1872
    %10544 = vmatpush1.bf16.msra.mxu0 %v1871
    %10545 = vmatprep.subr.bf16.mxu0 %v1884
    %10546 = vmatpush1.bf16.msra.mxu0 %v1883
    %10547 = vmatprep.subr.bf16.mxu0 %v1896
    %10548 = vmatpush1.bf16.msra.mxu0 %v1895
    %10549 = vmatprep.subr.bf16.mxu0 %v1908
    %10550 = vmatpush1.bf16.msra.mxu0 %v1907
    %10551 = vmatprep.subr.bf16.mxu0 %v1920
    %10552 = vmatpush1.bf16.msra.mxu0 %v1919
    %10553 = vmatprep.subr.bf16.mxu0 %v1932
    %10554 = vmatpush1.bf16.msra.mxu0 %v1931
    %10555 = vmatprep.subr.bf16.mxu0 %v1944
    %10556 = vmatpush1.bf16.msra.mxu0 %v1943
    %10557 = vmatprep.subr.bf16.mxu0 %v1956
    %10558 = vmatpush1.bf16.msra.mxu0 %v1955
    %10559 = vmatprep.subr.bf16.mxu0 %v1968
    %10560 = vmatpush1.bf16.msra.mxu0 %v1967
    %10561 = vmatprep.subr.bf16.mxu0 %v1980
    %10562 = vmatpush1.bf16.msra.mxu0 %v1979
    %10563 = vmatprep.mubr.bf16.mxu0 %v10116
    %10564 = vmatmul.mubr.bf16.gmra.mrb[0].mxu0 %v10115
    %v10565 = vpop.f32.mrb[0].mxu0
    %v10566 = vadd.f32 0.0, %v10565
    %v10567 = vpop.f32.mrb[0].mxu0
    %v10568 = vadd.f32 0.0, %v10567
    %v10569 = vpop.f32.mrb[0].mxu0
    %v10570 = vpop.f32.mrb[0].mxu0
    %10571 = vdwg.mxu0
    %10572 = vmatprep.subr.bf16.mxu0 %v1992
    %10573 = vmatpush1.bf16.msra.mxu0 %v1991
    %10574 = vmatprep.subr.bf16.mxu0 %v2004
    %10575 = vmatpush1.bf16.msra.mxu0 %v2003
    %10576 = vmatprep.subr.bf16.mxu0 0
    %10577 = vmatpush1.bf16.msra.mxu0 0
    %10578 = vmatprep.subr.bf16.mxu0 0
    %10579 = vmatpush1.bf16.msra.mxu0 0
    %10580 = vmatprep.subr.bf16.mxu0 0
    %10581 = vmatpush1.bf16.msra.mxu0 0
    %10582 = vmatprep.subr.bf16.mxu0 0
    %10583 = vmatpush1.bf16.msra.mxu0 0
    %10584 = vmatprep.subr.bf16.mxu0 0
    %10585 = vmatpush1.bf16.msra.mxu0 0
    %10586 = vmatprep.subr.bf16.mxu0 0
    %10587 = vmatpush1.bf16.msra.mxu0 0
    %10588 = vmatprep.subr.bf16.mxu0 0
    %10589 = vmatpush1.bf16.msra.mxu0 0
    %10590 = vmatprep.subr.bf16.mxu0 0
    %10591 = vmatpush1.bf16.msra.mxu0 0
    %10592 = vmatprep.subr.bf16.mxu0 0
    %10593 = vmatpush1.bf16.msra.mxu0 0
    %10594 = vmatprep.subr.bf16.mxu0 0
    %10595 = vmatpush1.bf16.msra.mxu0 0
    %10596 = vmatprep.subr.bf16.mxu0 0
    %10597 = vmatpush1.bf16.msra.mxu0 0
    %10598 = vmatprep.subr.bf16.mxu0 0
    %10599 = vmatpush1.bf16.msra.mxu0 0
    %10600 = vmatprep.subr.bf16.mxu0 0
    %10601 = vmatpush1.bf16.msra.mxu0 0
    %10602 = vmatprep.subr.bf16.mxu0 0
    %10603 = vmatpush1.bf16.msra.mxu0 0
    %10604 = vmatprep.mubr.bf16.mxu0 0
    %10605 = vmatmul.mubr.bf16.gmra.mrb[0].mxu0 %v10119
    %v10606 = vpop.f32.mrb[0].mxu0
    %v10607 = vadd.f32 %v10566, %v10606
    %v10608 = vpop.f32.mrb[0].mxu0
    %v10609 = vadd.f32 %v10568, %v10608
    %v10610 = vpop.f32.mrb[0].mxu0
    %v10611 = vpop.f32.mrb[0].mxu0
    %10612 = vdwg.mxu0
    %v10613 = vadd.f32 %v364, %v10197
    %v10614 = vadd.f32 %v366, %v10199
    %v10615 = vadd.f32 %v475, %v10279
    %v10616 = vadd.f32 %v477, %v10281
    %v10617 = vadd.f32 %v586, %v10361
    %v10618 = vadd.f32 %v588, %v10363
    %v10619 = vadd.f32 %v697, %v10443
    %v10620 = vadd.f32 %v699, %v10445
    %v10621 = vadd.f32 %v808, %v10525
    %v10622 = vadd.f32 %v810, %v10527
    %v10623 = vadd.f32 %v919, %v10607
    %v10624 = vadd.f32 %v921, %v10609
    %v10625 = vmul.f32 %v10613, 0.5
    %v10626 = vmul.f32 %v10614, 0.5
    %v10627 = vmul.f32 %v10615, 0.5
    %v10628 = vtanh.pop %v10625
    %v10629 = vtanh.pop %v10626
    %v10630 = vtanh.pop %v10627
    %v10631 = vmul.f32 %v10628, 0.5
    %v10632 = vmul.f32 %v10629, 0.5
    %v10633 = vmul.f32 %v10630, 0.5
    %v10634 = vadd.f32 %v10631, 0.5
    %v10635 = vadd.f32 %v10632, 0.5
    %v10636 = vadd.f32 %v10633, 0.5
    %v10637 = vmul.f32 %v10616, 0.5
    %v10638 = vmul.f32 %v10617, 0.5
    %v10639 = vmul.f32 %v10618, 0.5
    %v10640 = vtanh.pop %v10637
    %v10641 = vtanh.pop %v10638
    %v10642 = vtanh.pop %v10639
    %v10643 = vmul.f32 %v10640, 0.5
    %v10644 = vmul.f32 %v10641, 0.5
    %v10645 = vmul.f32 %v10642, 0.5
    %v10646 = vadd.f32 %v10643, 0.5
    %v10647 = vadd.f32 %v10644, 0.5
    %v10648 = vadd.f32 %v10645, 0.5
    %v10649 = vtanh.pop %v10619
    %v10650 = vtanh.pop %v10620
    %v10651 = vtanh.pop %v10621
    %v10652 = vmul.f32 %v10622, 0.5
    %v10653 = vmul.f32 %v10623, 0.5
    %v10654 = vmul.f32 %v10624, 0.5
    %v10655 = vtanh.pop %v10652
    %v10656 = vtanh.pop %v10653
    %v10657 = vtanh.pop %v10654
    %v10658 = vmul.f32 %v10655, 0.5
    %v10659 = vmul.f32 %v10656, 0.5
    %v10660 = vmul.f32 %v10657, 0.5
    %v10661 = vadd.f32 %v10658, 0.5
    %v10662 = vadd.f32 %v10659, 0.5
    %v10663 = vadd.f32 %v10660, 0.5
    %v10664 = vmul.f32 %v10646, %v10106
    %v10665 = vmul.f32 %v10647, %v10107
    %v10666 = vmul.f32 %v10648, %v10108
    %v10667 = vmul.f32 %v10634, %v10649
    %v10668 = vmul.f32 %v10635, %v10650
    %v10669 = vmul.f32 %v10636, %v10651
    %v10670 = vadd.f32 %v10664, %v10667
    %v10671 = vadd.f32 %v10665, %v10668
    %v10672 = vadd.f32 %v10666, %v10669
    %v10673 = vtanh.pop %v10670
    %v10674 = vtanh.pop %v10671
    %v10675 = vtanh.pop %v10672
    %v10676 = vmul.f32 %v10661, %v10673
    %v10677 = vmul.f32 %v10662, %v10674
    %v10678 = vmul.f32 %v10663, %v10675
    %v10679 = vpack.c.bf16 %v10676, %v10676
    %v10680 = vpack.c.bf16 %v10677, %v10677
    %v10681 = vpack.c.bf16 %v10678, %v10678
    %v10682 = vld [vmem:[%s4] sm:$0xf]
    %v10683 = vld [vmem:[%s4 + $0x4] sm:$0xf]
    %v10684 = vld [vmem:[%s4 + $0x8] sm:$0xf]
    %v10685 = vld [vmem:[%s4 + $0xc] sm:$0xf]
    %v10686 = vld [vmem:[%s4 + $0x10] sm:$0xf]
    %v10687 = vld [vmem:[%s4 + $0x14] sm:$0xf]
    %v10688 = vld [vmem:[%s4 + $0x18] sm:$0xf]
    %v10689 = vld [vmem:[%s4 + $0x1c] sm:$0xf]
    %v10690 = vld [vmem:[%s4 + $0x20] sm:$0xf]
    %v10691 = vld [vmem:[%s4 + $0x24] sm:$0xf]
    %v10692 = vld [vmem:[%s4 + $0x28] sm:$0xf]
    %v10693 = vld [vmem:[%s4 + $0x2c] sm:$0xf]
    %v10694 = vld [vmem:[%s4 + $0x30] sm:$0xf]
    %v10695 = vld [vmem:[%s4 + $0x34] sm:$0xf]
    %v10696 = vld [vmem:[%s4 + $0x38] sm:$0xf]
    %v10697 = vld [vmem:[%s4 + $0x3c] sm:$0xf]
    %v10698 = vld [vmem:[%s4 + $0x40] sm:$0xf]
    %v10699 = vld [vmem:[%s4 + $0x44] sm:$0xf]
    %v10700 = vld [vmem:[%s4 + $0x48] sm:$0xf]
    %v10701 = vld [vmem:[%s4 + $0x4c] sm:$0xf]
    %v10702 = vld [vmem:[%s4 + $0x50] sm:$0xf]
    %v10703 = vld [vmem:[%s4 + $0x54] sm:$0xf]
    %v10704 = vld [vmem:[%s4 + $0x58] sm:$0xf]
    %v10705 = vld [vmem:[%s4 + $0x5c] sm:$0xf]
    %v10706 = vld [vmem:[%s4 + $0x60] sm:$0xf]
    %v10707 = vld [vmem:[%s4 + $0x64] sm:$0xf]
    %v10708 = vld [vmem:[%s4 + $0x68] sm:$0xf]
    %v10709 = vld [vmem:[%s4 + $0x6c] sm:$0xf]
    %v10710 = vld [vmem:[%s4 + $0x70] sm:$0xf]
    %v10711 = vld [vmem:[%s4 + $0x74] sm:$0xf]
    %v10712 = vld [vmem:[%s4 + $0x78] sm:$0xf]
    %v10713 = vld [vmem:[%s4 + $0x7c] sm:$0xf]
    %v10714 = vld [vmem:[%s4 + $0x80] sm:$0xf]
    %v10715 = vld [vmem:[%s4 + $0x84] sm:$0xf]
    %v10716 = vld [vmem:[%s4 + $0x88] sm:$0xf]
    %v10717 = vld [vmem:[%s4 + $0x8c] sm:$0xf]
    %v10718 = vld [vmem:[%s5] sm:$0x1]
    %v10720 = vlaneseq
    %v10721 = vshrl.u32 %v10720, 7
    %v10722 = vsub.s32 0, %v10721
    %v10723 = vrot.slane %v10718, %v10722
    %v10761 = vunpack.c.l.b16 %v10682
    %v10762 = vunpack.c.l.b16 %v10683
    %v10763 = vunpack.c.l.b16 %v10684
    %v10764 = vunpack.c.l.b16 %v10685
    %v10765 = vunpack.c.l.b16 %v10686
    %v10766 = vunpack.c.l.b16 %v10687
    %v10767 = vunpack.c.l.b16 %v10688
    %v10768 = vunpack.c.l.b16 %v10689
    %v10769 = vunpack.c.l.b16 %v10690
    %v10770 = vunpack.c.l.b16 %v10691
    %v10771 = vunpack.c.l.b16 %v10692
    %v10772 = vunpack.c.l.b16 %v10693
    %v10773 = vunpack.c.l.b16 %v10694
    %v10774 = vunpack.c.l.b16 %v10695
    %v10775 = vunpack.c.l.b16 %v10696
    %v10776 = vunpack.c.l.b16 %v10697
    %v10777 = vunpack.c.l.b16 %v10698
    %v10778 = vunpack.c.l.b16 %v10699
    %v10779 = vunpack.c.l.b16 %v10700
    %v10780 = vunpack.c.l.b16 %v10701
    %v10781 = vunpack.c.l.b16 %v10702
    %v10782 = vunpack.c.l.b16 %v10703
    %v10783 = vunpack.c.l.b16 %v10704
    %v10784 = vunpack.c.l.b16 %v10705
    %v10785 = vunpack.c.l.b16 %v10706
    %v10786 = vunpack.c.l.b16 %v10707
    %v10787 = vunpack.c.l.b16 %v10708
    %v10788 = vunpack.c.l.b16 %v10709
    %v10789 = vunpack.c.l.b16 %v10710
    %v10790 = vunpack.c.l.b16 %v10711
    %v10791 = vunpack.c.l.b16 %v10712
    %v10792 = vunpack.c.l.b16 %v10713
    %v10793 = vunpack.c.l.b16 %v10714
    %v10794 = vunpack.c.l.b16 %v10715
    %v10795 = vunpack.c.l.b16 %v10716
    %v10796 = vunpack.c.l.b16 %v10717
    %v10797 = vpack.c.b16 %v10762, %v10761
    %v10798 = vpack.c.b16 %v10764, %v10763
    %v10799 = vpack.c.b16 %v10766, %v10765
    %v10800 = vpack.c.b16 %v10768, %v10767
    %v10801 = vpack.c.b16 %v10770, %v10769
    %v10802 = vpack.c.b16 %v10772, %v10771
    %v10803 = vpack.c.b16 %v10774, %v10773
    %v10804 = vpack.c.b16 %v10776, %v10775
    %v10805 = vpack.c.b16 %v10778, %v10777
    %v10806 = vpack.c.b16 %v10780, %v10779
    %v10807 = vpack.c.b16 %v10782, %v10781
    %v10808 = vpack.c.b16 %v10784, %v10783
    %v10809 = vpack.c.b16 %v10786, %v10785
    %v10810 = vpack.c.b16 %v10788, %v10787
    %v10811 = vpack.c.b16 %v10790, %v10789
    %v10812 = vpack.c.b16 %v10792, %v10791
    %v10813 = vpack.c.b16 %v10794, %v10793
    %v10814 = vpack.c.b16 %v10796, %v10795
    %v10834 = vsel %vm2221, %v10681, 0
    %10836 = vmatprep.subr.bf16.mxu0 0
    %10837 = vmatpush1.bf16.msra.mxu0 %v10797
    %10838 = vmatprep.subr.bf16.mxu0 0
    %10839 = vmatpush1.bf16.msra.mxu0 %v10798
    %10840 = vmatprep.subr.bf16.mxu0 0
    %10841 = vmatpush1.bf16.msra.mxu0 %v10799
    %10842 = vmatprep.subr.bf16.mxu0 0
    %10843 = vmatpush1.bf16.msra.mxu0 %v10800
    %10844 = vmatprep.subr.bf16.mxu0 0
    %10845 = vmatpush1.bf16.msra.mxu0 %v10801
    %10846 = vmatprep.subr.bf16.mxu0 0
    %10847 = vmatpush1.bf16.msra.mxu0 %v10802
    %10848 = vmatprep.subr.bf16.mxu0 0
    %10849 = vmatpush1.bf16.msra.mxu0 %v10803
    %10850 = vmatprep.subr.bf16.mxu0 0
    %10851 = vmatpush1.bf16.msra.mxu0 %v10804
    %10852 = vmatprep.subr.bf16.mxu0 0
    %10853 = vmatpush1.bf16.msra.mxu0 %v10805
    %10854 = vmatprep.subr.bf16.mxu0 0
    %10855 = vmatpush1.bf16.msra.mxu0 %v10806
    %10856 = vmatprep.subr.bf16.mxu0 0
    %10857 = vmatpush1.bf16.msra.mxu0 %v10807
    %10858 = vmatprep.subr.bf16.mxu0 0
    %10859 = vmatpush1.bf16.msra.mxu0 %v10808
    %10860 = vmatprep.subr.bf16.mxu0 0
    %10861 = vmatpush1.bf16.msra.mxu0 %v10809
    %10862 = vmatprep.subr.bf16.mxu0 0
    %10863 = vmatpush1.bf16.msra.mxu0 %v10810
    %10864 = vmatprep.subr.bf16.mxu0 0
    %10865 = vmatpush1.bf16.msra.mxu0 %v10811
    %10866 = vmatprep.subr.bf16.mxu0 0
    %10867 = vmatpush1.bf16.msra.mxu0 %v10812
    %10868 = vmatprep.mubr.bf16.mxu0 %v10680
    %10869 = vmatmul.mubr.bf16.gmra.mrb[0].mxu0 %v10679
    %v10870 = vpop.f32.mrb[0].mxu0
    %v10871 = vadd.f32 %v10723, %v10870
    %v10872 = vpop.f32.mrb[0].mxu0
    %v10873 = vpop.f32.mrb[0].mxu0
    %v10874 = vpop.f32.mrb[0].mxu0
    %10875 = vdwg.mxu0
    %10876 = vmatprep.subr.bf16.mxu0 0
    %10877 = vmatpush1.bf16.msra.mxu0 %v10813
    %10878 = vmatprep.subr.bf16.mxu0 0
    %10879 = vmatpush1.bf16.msra.mxu0 %v10814
    %10880 = vmatprep.subr.bf16.mxu0 0
    %10881 = vmatpush1.bf16.msra.mxu0 0
    %10882 = vmatprep.subr.bf16.mxu0 0
    %10883 = vmatpush1.bf16.msra.mxu0 0
    %10884 = vmatprep.subr.bf16.mxu0 0
    %10885 = vmatpush1.bf16.msra.mxu0 0
    %10886 = vmatprep.subr.bf16.mxu0 0
    %10887 = vmatpush1.bf16.msra.mxu0 0
    %10888 = vmatprep.subr.bf16.mxu0 0
    %10889 = vmatpush1.bf16.msra.mxu0 0
    %10890 = vmatprep.subr.bf16.mxu0 0
    %10891 = vmatpush1.bf16.msra.mxu0 0
    %10892 = vmatprep.subr.bf16.mxu0 0
    %10893 = vmatpush1.bf16.msra.mxu0 0
    %10894 = vmatprep.subr.bf16.mxu0 0
    %10895 = vmatpush1.bf16.msra.mxu0 0
    %10896 = vmatprep.subr.bf16.mxu0 0
    %10897 = vmatpush1.bf16.msra.mxu0 0
    %10898 = vmatprep.subr.bf16.mxu0 0
    %10899 = vmatpush1.bf16.msra.mxu0 0
    %10900 = vmatprep.subr.bf16.mxu0 0
    %10901 = vmatpush1.bf16.msra.mxu0 0
    %10902 = vmatprep.subr.bf16.mxu0 0
    %10903 = vmatpush1.bf16.msra.mxu0 0
    %10904 = vmatprep.subr.bf16.mxu0 0
    %10905 = vmatpush1.bf16.msra.mxu0 0
    %10906 = vmatprep.subr.bf16.mxu0 0
    %10907 = vmatpush1.bf16.msra.mxu0 0
    %10908 = vmatprep.mubr.bf16.mxu0 0
    %10909 = vmatmul.mubr.bf16.gmra.mrb[0].mxu0 %v10834
    %v10910 = vpop.f32.mrb[0].mxu0
    %v10911 = vadd.f32 %v10871, %v10910
    %v10912 = vpop.f32.mrb[0].mxu0
    %v10913 = vpop.f32.mrb[0].mxu0
    %v10914 = vpop.f32.mrb[0].mxu0
    %10915 = vdwg.mxu0
    %v10916 = vmax.f32 %v10911, 0.0
    %v10917 = vpack.c.bf16 %v10916, %v10916
    %v10918 = vld [vmem:[%s6] sm:$0xf]
    %v10919 = vld [vmem:[%s6 + $0x4] sm:$0xf]
    %v10920 = vld [vmem:[%s6 + $0x8] sm:$0xf]
    %v10921 = vld [vmem:[%s6 + $0xc] sm:$0xf]
    %v10922 = vld [vmem:[%s6 + $0x10] sm:$0xf]
    %v10923 = vld [vmem:[%s6 + $0x14] sm:$0xf]
    %v10924 = vld [vmem:[%s6 + $0x18] sm:$0xf]
    %v10925 = vld [vmem:[%s6 + $0x1c] sm:$0xf]
    %v10926 = vld [vmem:[%s6 + $0x20] sm:$0xf]
    %v10927 = vld [vmem:[%s6 + $0x24] sm:$0xf]
    %v10928 = vld [vmem:[%s6 + $0x28] sm:$0x3]
    %v10929 = vld [vmem:[%s7] sm:$0x1]
    %v10931 = vlaneseq
    %v10932 = vshrl.u32 %v10931, 7
    %v10933 = vsub.s32 0, %v10932
    %v10934 = vrot.slane %v10929, %v10933
    %v10947 = vunpack.c.l.b16 %v10918
    %v10948 = vunpack.c.l.b16 %v10919
    %v10949 = vunpack.c.l.b16 %v10920
    %v10950 = vunpack.c.l.b16 %v10921
    %v10951 = vunpack.c.l.b16 %v10922
    %v10952 = vunpack.c.l.b16 %v10923
    %v10953 = vunpack.c.l.b16 %v10924
    %v10954 = vunpack.c.l.b16 %v10925
    %v10955 = vunpack.c.l.b16 %v10926
    %v10956 = vunpack.c.l.b16 %v10927
    %v10957 = vunpack.c.l.b16 %v10928
    %v10958 = vpack.c.b16 %v10948, %v10947
    %v10959 = vpack.c.b16 %v10950, %v10949
    %v10960 = vpack.c.b16 %v10952, %v10951
    %v10961 = vpack.c.b16 %v10954, %v10953
    %v10962 = vpack.c.b16 %v10956, %v10955
    %v10963 = vpack.c.b16 %v10957, %v10957
    %vm10969 = vcmask 687104
    %v10971 = vsel %vm10969, %v10917, 0
    %vm10973 = vcmask 1041408
    %v10975 = vsel %vm10973, %v10963, 0
    %10977 = vmatprep.subr.bf16.mxu0 0
    %10978 = vmatpush1.bf16.msra.mxu0 %v10958
    %10979 = vmatprep.subr.bf16.mxu0 0
    %10980 = vmatpush1.bf16.msra.mxu0 %v10959
    %10981 = vmatprep.subr.bf16.mxu0 0
    %10982 = vmatpush1.bf16.msra.mxu0 %v10960
    %10983 = vmatprep.subr.bf16.mxu0 0
    %10984 = vmatpush1.bf16.msra.mxu0 %v10961
    %10985 = vmatprep.subr.bf16.mxu0 0
    %10986 = vmatpush1.bf16.msra.mxu0 %v10962
    %10987 = vmatprep.subr.bf16.mxu0 0
    %10988 = vmatpush1.bf16.msra.mxu0 %v10975
    %10989 = vmatprep.subr.bf16.mxu0 0
    %10990 = vmatpush1.bf16.msra.mxu0 0
    %10991 = vmatprep.subr.bf16.mxu0 0
    %10992 = vmatpush1.bf16.msra.mxu0 0
    %10993 = vmatprep.subr.bf16.mxu0 0
    %10994 = vmatpush1.bf16.msra.mxu0 0
    %10995 = vmatprep.subr.bf16.mxu0 0
    %10996 = vmatpush1.bf16.msra.mxu0 0
    %10997 = vmatprep.subr.bf16.mxu0 0
    %10998 = vmatpush1.bf16.msra.mxu0 0
    %10999 = vmatprep.subr.bf16.mxu0 0
    %11000 = vmatpush1.bf16.msra.mxu0 0
    %11001 = vmatprep.subr.bf16.mxu0 0
    %11002 = vmatpush1.bf16.msra.mxu0 0
    %11003 = vmatprep.subr.bf16.mxu0 0
    %11004 = vmatpush1.bf16.msra.mxu0 0
    %11005 = vmatprep.subr.bf16.mxu0 0
    %11006 = vmatpush1.bf16.msra.mxu0 0
    %11007 = vmatprep.subr.bf16.mxu0 0
    %11008 = vmatpush1.bf16.msra.mxu0 0
    %11009 = vmatprep.mubr.bf16.mxu0 0
    %11010 = vmatmul.mubr.bf16.gmra.mrb[0].mxu0 %v10971
    %v11011 = vpop.f32.mrb[0].mxu0
    %v11012 = vadd.f32 %v10934, %v11011
    %v11013 = vpop.f32.mrb[0].mxu0
    %v11014 = vpop.f32.mrb[0].mxu0
    %v11015 = vpop.f32.mrb[0].mxu0
    %11016 = vdwg.mxu0
    %vm11017 = vcmask 15360
    %11018 = vst.msk [vmem:[%s8] sm:$0xff] %vm11017, %v11012
    // Predicated region
    $region38: #{dir_lstm_forward.1} parent=1 // pred_check
      _
    $region39: #{dir_lstm_forward.1} parent=1 // pred_check_branch
      %11020 = sbr.rel (0) target = $region41
    $region40: #{dir_lstm_forward.1} parent=1 // pred_region
      _
    $region41: #{dir_lstm_forward.1} parent=1 // pred_fallthru
      _
    // Predicated region
    $region42: #{dir_lstm_forward.1} parent=1 // pred_check
      _
    $region43: #{dir_lstm_forward.1} parent=1 // pred_check_branch
      %11022 = sbr.rel (0) target = $region45
    $region44: #{dir_lstm_forward.1} parent=1 // pred_region
      _
    $region45: #{dir_lstm_forward.1} parent=1 // pred_fallthru
      _
    %11023 = vsyncpa [#allocation3], 1

</llo_original>
